<compile_context>
chip_gen: v5e
topology: v5e:2x2
jax: 0.10.0
libtpu: 0.0.40
codegen_flags: <defaults>
</compile_context>

<pallas_src>
import math

import jax
import jax.numpy as jnp
import numpy as np
from jax.experimental import pallas as pl
from jax.experimental.pallas import tpu as pltpu

SQRT2 = math.sqrt(2.0)
GN_EPS = 1e-5


def _gelu(x):
    # exact GELU (erf), matching torch.nn.GELU() / F.gelu default
    return 0.5 * x * (1.0 + jax.lax.erf(x / SQRT2))


def _silu(x):
    return x * jax.nn.sigmoid(x)


# ----------------------------- fused Pallas kernel -----------------------------

def down_fused_kernel(x_ref, t_ref,
                      w1_ref, g1_ref, b1_ref,
                      w2_ref, g2_ref, b2_ref,
                      w3_ref, g3_ref, b3_ref,
                      w4_ref, g4_ref, b4_ref,
                      lw_ref, lb_ref,
                      o_ref,
                      pad_a_ref, pad_b_ref, pat_a_ref, pat_b_ref):
    """One grid step == one batch sample.  Everything stays resident in VMEM."""
    _, H, W, cin = x_ref.shape
    Hp, Wp = H // 2, W // 2
    HW = Hp * Wp
    cout = o_ref.shape[2]

    # ---- 2x2 max-pool, in-kernel (no strided XLA slices / extra HBM arrays) ----
    x = x_ref[0]                                     # (H, W, Cin)
    xh = x.reshape(Hp, 2, W, cin)
    xh = jnp.maximum(xh[:, 0], xh[:, 1])             # (Hp, W, Cin)
    xw = xh.reshape(Hp, Wp, 2, cin)
    pooled = jnp.maximum(xw[:, :, 0], xw[:, :, 1])   # (Hp, Wp, Cin)

    # SAME-padding scratches: zero once per sample; only interiors get rewritten.
    pad_a_ref[...] = jnp.zeros_like(pad_a_ref)
    pad_b_ref[...] = jnp.zeros_like(pad_b_ref)

    def conv3x3_gn(inp_hwc, pad_ref, pat_ref, w_ref, g_ref, b_ref):
        """3x3 SAME conv + GroupNorm(1, C) as a single im2col matmul."""
        ci = inp_hwc.shape[-1]
        pad_ref[1:Hp + 1, 1:Wp + 1, :] = inp_hwc               # write interior
        for k in range(9):                                     # pack im2col
            dy, dx = divmod(k, 3)
            tap = pad_ref[dy:dy + Hp, dx:dx + Wp, :]           # (Hp, Wp, Ci)
            pat_ref[:, k * ci:(k + 1) * ci] = tap.reshape(HW, ci)
        y = jnp.dot(pat_ref[...], w_ref[...],
                    preferred_element_type=jnp.float32)        # (HW, Co)
        # GroupNorm(1, C): statistics over all C*H*W elements of this sample.
        mean = jnp.mean(y)
        var = jnp.mean(jnp.square(y - mean))
        y = (y - mean) * jax.lax.rsqrt(var + GN_EPS)
        return y * g_ref[...] + b_ref[...]                     # (HW, Co)

    # DoubleConv(cin, cin, residual=True)
    h = _gelu(conv3x3_gn(pooled, pad_a_ref, pat_a_ref, w1_ref, g1_ref, b1_ref))
    h = conv3x3_gn(h.reshape(Hp, Wp, cin), pad_a_ref, pat_a_ref,
                   w2_ref, g2_ref, b2_ref)
    x1 = _gelu(pooled.reshape(HW, cin) + h)                    # (HW, Cin)

    # DoubleConv(cin, cout)
    h = _gelu(conv3x3_gn(x1.reshape(Hp, Wp, cin), pad_a_ref, pat_a_ref,
                         w3_ref, g3_ref, b3_ref))              # (HW, Cout)
    h = conv3x3_gn(h.reshape(Hp, Wp, cout), pad_b_ref, pat_b_ref,
                   w4_ref, g4_ref, b4_ref)                     # (HW, Cout)

    # Fused time-embedding: SiLU -> Linear -> broadcast-add over spatial.
    emb = jnp.dot(_silu(t_ref[0]), lw_ref[...],
                  preferred_element_type=jnp.float32) + lb_ref[...]   # (1, Cout)
    o_ref[0] = h + emb


# ------------------------------ Wrapper ------------------------------------

def down_forward(x_nchw, t, P):
    """Down.forward(x, t).  x_nchw: (B, Cin, H, W), t: (B, emb_dim)."""
    B, cin, H, W = x_nchw.shape
    Hp, Wp = H // 2, W // 2
    HW = Hp * Wp
    cout = P["w4"].shape[-1]
    E = t.shape[-1]

    x = jnp.transpose(x_nchw, (0, 2, 3, 1))       # NCHW -> NHWC (layout glue only)
    t3 = t.reshape(B, 1, E)

    # conv weights flattened for the single im2col matmul: (9*Ci, Co)
    w1 = P["w1"].reshape(9 * cin, cin)
    w2 = P["w2"].reshape(9 * cin, cin)
    w3 = P["w3"].reshape(9 * cin, cout)
    w4 = P["w4"].reshape(9 * cout, cout)

    def full(shape):
        return pl.BlockSpec(shape, lambda b: (0,) * len(shape))

    out = pl.pallas_call(
        down_fused_kernel,
        out_shape=jax.ShapeDtypeStruct((B, HW, cout), jnp.float32),
        grid=(B,),
        in_specs=[
            pl.BlockSpec((1, H, W, cin), lambda b: (b, 0, 0, 0)),   # x (per-sample)
            pl.BlockSpec((1, 1, E), lambda b: (b, 0, 0)),           # t (per-sample)
            full((9 * cin, cin)), full((1, cin)), full((1, cin)),   # conv1 + GN1
            full((9 * cin, cin)), full((1, cin)), full((1, cin)),   # conv2 + GN2
            full((9 * cin, cout)), full((1, cout)), full((1, cout)),  # conv3 + GN3
            full((9 * cout, cout)), full((1, cout)), full((1, cout)),  # conv4 + GN4
            full((E, cout)), full((1, cout)),                       # emb Linear
        ],
        out_specs=pl.BlockSpec((1, HW, cout), lambda b: (b, 0, 0)),
        scratch_shapes=[
            pltpu.VMEM((Hp + 2, Wp + 2, cin), jnp.float32),    # padded act (Cin)
            pltpu.VMEM((Hp + 2, Wp + 2, cout), jnp.float32),   # padded act (Cout)
            pltpu.VMEM((HW, 9 * cin), jnp.float32),            # im2col (Cin convs)
            pltpu.VMEM((HW, 9 * cout), jnp.float32),           # im2col (Cout conv)
        ],
        compiler_params=pltpu.CompilerParams(
            dimension_semantics=("parallel",)),    # batch across TCs on v7x
    )(x, t3, w1, P["g1"], P["b1"], w2, P["g2"], P["b2"],
      w3, P["g3"], P["b3"], w4, P["g4"], P["b4"], P["lw"], P["lb"])

    # TODO(synk): at realistic UNet sizes (C~256, H=W~64), row-tile the blocks
    # (8-row tiles + 1-row halo), consider bf16 matmul inputs with f32 accum,
    # and set vmem_limit_bytes so the working set fits v7x's 64 MiB VMEM.
    return jnp.transpose(out.reshape(B, Hp, Wp, cout), (0, 3, 1, 2))   # -> NCHW


# ------------------------- Deterministic parameters -------------------------

def init_params(key, cin, cout, emb_dim):
    ks = jax.random.split(key, 14)

    def conv_w(k, ci, co):
        return (1.0 / math.sqrt(9 * ci)) * jax.random.normal(k, (9, ci, co), jnp.float32)

    def affine(kg, kb, c):
        g = 1.0 + 0.1 * jax.random.normal(kg, (1, c), jnp.float32)
        b = 0.1 * jax.random.normal(kb, (1, c), jnp.float32)
        return g, b

    g1, b1 = affine(ks[1], ks[2], cin)
    g2, b2 = affine(ks[4], ks[5], cin)
    g3, b3 = affine(ks[7], ks[8], cout)
    g4, b4 = affine(ks[10], ks[11], cout)
    return dict(
        w1=conv_w(ks[0], cin, cin), g1=g1, b1=b1,
        w2=conv_w(ks[3], cin, cin), g2=g2, b2=b2,
        w3=conv_w(ks[6], cin, cout), g3=g3, b3=b3,
        w4=conv_w(ks[9], cout, cout), g4=g4, b4=b4,
        lw=(1.0 / math.sqrt(emb_dim)) * jax.random.normal(ks[12], (emb_dim, cout), jnp.float32),
        lb=0.1 * jax.random.normal(ks[13], (1, cout), jnp.float32),
    )


# --------------------------- Pure-JAX reference ------------------------------

def ref_down(x_nchw, t, P):
    def conv(x, w9):
        w = w9.reshape(3, 3, w9.shape[1], w9.shape[2])             # HWIO
        return jax.lax.conv_general_dilated(
            x, w, (1, 1), ((1, 1), (1, 1)),
            dimension_numbers=("NCHW", "HWIO", "NCHW"))

    def gn(x, g, b):
        mean = jnp.mean(x, axis=(1, 2, 3), keepdims=True)
        var = jnp.mean(jnp.square(x - mean), axis=(1, 2, 3), keepdims=True)
        xn = (x - mean) * jax.lax.rsqrt(var + GN_EPS)
        return xn * g.reshape(1, -1, 1, 1) + b.reshape(1, -1, 1, 1)

    pool = jax.lax.reduce_window(x_nchw, -jnp.inf, jax.lax.max,
                                 (1, 1, 2, 2), (1, 1, 2, 2), "VALID")
    h = _gelu(gn(conv(pool, P["w1"]), P["g1"], P["b1"]))
    h = gn(conv(h, P["w2"]), P["g2"], P["b2"])
    x1 = _gelu(pool + h)
    h = _gelu(gn(conv(x1, P["w3"]), P["g3"], P["b3"]))
    h = gn(conv(h, P["w4"]), P["g4"], P["b4"])
    emb = _silu(t) @ P["lw"] + P["lb"]
    return h + emb[:, :, None, None]


# --------------------------------- Main --------------------------------------

if __name__ == "__main__":
    B, Cin, Cout, H, W, E = 2, 4, 8, 16, 16, 32
    key = jax.random.PRNGKey(0)
    kx, kt, kp = jax.random.split(key, 3)
    x = jax.random.normal(kx, (B, Cin, H, W), jnp.float32)   # NCHW, like PyTorch
    t = jax.random.normal(kt, (B, E), jnp.float32)
    params = init_params(kp, Cin, Cout, E)

    out = down_forward(x, t, params)
    out = jax.block_until_ready(out)
    assert out.shape == (B, Cout, H // 2, W // 2), out.shape

    ref = ref_down(x, t, params)
    np.testing.assert_allclose(np.asarray(out), np.asarray(ref), rtol=1e-3, atol=1e-3)

    print("KERNEL_OK")
</pallas_src>

<mosaic_0001>
module attributes {stable_mosaic.version = 11 : i64} {
  func.func @down_fused_kernel(%arg0: i32, %arg1: memref<1x16x16x4xf32, #tpu.memory_space<vmem>>, %arg2: memref<1x1x32xf32, #tpu.memory_space<vmem>>, %arg3: memref<36x4xf32, #tpu.memory_space<vmem>>, %arg4: memref<1x4xf32, #tpu.memory_space<vmem>>, %arg5: memref<1x4xf32, #tpu.memory_space<vmem>>, %arg6: memref<36x4xf32, #tpu.memory_space<vmem>>, %arg7: memref<1x4xf32, #tpu.memory_space<vmem>>, %arg8: memref<1x4xf32, #tpu.memory_space<vmem>>, %arg9: memref<36x8xf32, #tpu.memory_space<vmem>>, %arg10: memref<1x8xf32, #tpu.memory_space<vmem>>, %arg11: memref<1x8xf32, #tpu.memory_space<vmem>>, %arg12: memref<72x8xf32, #tpu.memory_space<vmem>>, %arg13: memref<1x8xf32, #tpu.memory_space<vmem>>, %arg14: memref<1x8xf32, #tpu.memory_space<vmem>>, %arg15: memref<32x8xf32, #tpu.memory_space<vmem>>, %arg16: memref<1x8xf32, #tpu.memory_space<vmem>>, %arg17: memref<1x64x8xf32, #tpu.memory_space<vmem>>, %arg18: memref<10x10x4xf32, #tpu.memory_space<vmem>>, %arg19: memref<10x10x8xf32, #tpu.memory_space<vmem>>, %arg20: memref<64x36xf32, #tpu.memory_space<vmem>>, %arg21: memref<64x72xf32, #tpu.memory_space<vmem>>) attributes {dimension_semantics = [#tpu.dimension_semantics<parallel>], iteration_bounds = array<i64: 2>, scalar_prefetch = 0 : i64, scratch_operands = 4 : i64, tpu.core_type = #tpu.core_type<tc>, window_params = [{transform_indices = @transform_0, window_bounds = array<i64: 1, 16, 16, 4>}, {transform_indices = @transform_1, window_bounds = array<i64: 1, 1, 32>}, {pipeline_mode = #tpu.pipeline_mode<synchronous>, transform_indices = @transform_2, window_bounds = array<i64: 36, 4>}, {pipeline_mode = #tpu.pipeline_mode<synchronous>, transform_indices = @transform_3, window_bounds = array<i64: 1, 4>}, {pipeline_mode = #tpu.pipeline_mode<synchronous>, transform_indices = @transform_4, window_bounds = array<i64: 1, 4>}, {pipeline_mode = #tpu.pipeline_mode<synchronous>, transform_indices = @transform_5, window_bounds = array<i64: 36, 4>}, {pipeline_mode = #tpu.pipeline_mode<synchronous>, transform_indices = @transform_6, window_bounds = array<i64: 1, 4>}, {pipeline_mode = #tpu.pipeline_mode<synchronous>, transform_indices = @transform_7, window_bounds = array<i64: 1, 4>}, {pipeline_mode = #tpu.pipeline_mode<synchronous>, transform_indices = @transform_8, window_bounds = array<i64: 36, 8>}, {pipeline_mode = #tpu.pipeline_mode<synchronous>, transform_indices = @transform_9, window_bounds = array<i64: 1, 8>}, {pipeline_mode = #tpu.pipeline_mode<synchronous>, transform_indices = @transform_10, window_bounds = array<i64: 1, 8>}, {pipeline_mode = #tpu.pipeline_mode<synchronous>, transform_indices = @transform_11, window_bounds = array<i64: 72, 8>}, {pipeline_mode = #tpu.pipeline_mode<synchronous>, transform_indices = @transform_12, window_bounds = array<i64: 1, 8>}, {pipeline_mode = #tpu.pipeline_mode<synchronous>, transform_indices = @transform_13, window_bounds = array<i64: 1, 8>}, {pipeline_mode = #tpu.pipeline_mode<synchronous>, transform_indices = @transform_14, window_bounds = array<i64: 32, 8>}, {pipeline_mode = #tpu.pipeline_mode<synchronous>, transform_indices = @transform_15, window_bounds = array<i64: 1, 8>}, {transform_indices = @transform_16, window_bounds = array<i64: 1, 64, 8>}]} {
    %c0 = arith.constant 0 : index
    %c0_0 = arith.constant 0 : index
    %c0_1 = arith.constant 0 : index
    %c0_2 = arith.constant 0 : index
    %0 = vector.load %arg1[%c0, %c0_0, %c0_1, %c0_2] : memref<1x16x16x4xf32, #tpu.memory_space<vmem>>, vector<1x16x16x4xf32>
    %1 = vector.shape_cast %0 : vector<1x16x16x4xf32> to vector<16x16x4xf32>
    %2 = vector.shape_cast %1 : vector<16x16x4xf32> to vector<8x2x16x4xf32>
    %3 = vector.extract_strided_slice %2 {offsets = [0, 0, 0, 0], sizes = [8, 1, 16, 4], strides = [1, 1, 1, 1]} : vector<8x2x16x4xf32> to vector<8x1x16x4xf32>
    %4 = vector.shape_cast %3 : vector<8x1x16x4xf32> to vector<8x16x4xf32>
    %5 = vector.extract_strided_slice %2 {offsets = [0, 1, 0, 0], sizes = [8, 1, 16, 4], strides = [1, 1, 1, 1]} : vector<8x2x16x4xf32> to vector<8x1x16x4xf32>
    %6 = vector.shape_cast %5 : vector<8x1x16x4xf32> to vector<8x16x4xf32>
    %7 = arith.maximumf %4, %6 : vector<8x16x4xf32>
    %8 = vector.shape_cast %7 : vector<8x16x4xf32> to vector<8x8x2x4xf32>
    %9 = vector.extract_strided_slice %8 {offsets = [0, 0, 0, 0], sizes = [8, 8, 1, 4], strides = [1, 1, 1, 1]} : vector<8x8x2x4xf32> to vector<8x8x1x4xf32>
    %10 = vector.shape_cast %9 : vector<8x8x1x4xf32> to vector<8x8x4xf32>
    %11 = vector.extract_strided_slice %8 {offsets = [0, 0, 1, 0], sizes = [8, 8, 1, 4], strides = [1, 1, 1, 1]} : vector<8x8x2x4xf32> to vector<8x8x1x4xf32>
    %12 = vector.shape_cast %11 : vector<8x8x1x4xf32> to vector<8x8x4xf32>
    %13 = arith.maximumf %10, %12 : vector<8x8x4xf32>
    %cst = arith.constant 0.000000e+00 : f32
    %14 = vector.broadcast %cst : f32 to vector<10x10x4xf32>
    %c0_3 = arith.constant 0 : index
    %c0_4 = arith.constant 0 : index
    %c0_5 = arith.constant 0 : index
    %15 = vector.load %arg18[%c0_3, %c0_4, %c0_5] : memref<10x10x4xf32, #tpu.memory_space<vmem>>, vector<10x10x4xf32>
    tpu.vector_store %arg18[%c0_3, %c0_4, %c0_5], %14 {strides = array<i32>} : memref<10x10x4xf32, #tpu.memory_space<vmem>>, vector<10x10x4xf32>,
    %cst_6 = arith.constant 0.000000e+00 : f32
    %16 = vector.broadcast %cst_6 : f32 to vector<10x10x8xf32>
    %c0_7 = arith.constant 0 : index
    %c0_8 = arith.constant 0 : index
    %c0_9 = arith.constant 0 : index
    %17 = vector.load %arg19[%c0_7, %c0_8, %c0_9] : memref<10x10x8xf32, #tpu.memory_space<vmem>>, vector<10x10x8xf32>
    tpu.vector_store %arg19[%c0_7, %c0_8, %c0_9], %16 {strides = array<i32>} : memref<10x10x8xf32, #tpu.memory_space<vmem>>, vector<10x10x8xf32>,
    %c1 = arith.constant 1 : index
    %c1_10 = arith.constant 1 : index
    %c0_11 = arith.constant 0 : index
    %18 = vector.load %arg18[%c1, %c1_10, %c0_11] : memref<10x10x4xf32, #tpu.memory_space<vmem>>, vector<8x8x4xf32>
    tpu.vector_store %arg18[%c1, %c1_10, %c0_11], %13 {strides = array<i32>} : memref<10x10x4xf32, #tpu.memory_space<vmem>>, vector<8x8x4xf32>,
    %c0_12 = arith.constant 0 : index
    %c0_13 = arith.constant 0 : index
    %c0_14 = arith.constant 0 : index
    %19 = vector.load %arg18[%c0_12, %c0_13, %c0_14] : memref<10x10x4xf32, #tpu.memory_space<vmem>>, vector<8x8x4xf32>
    %20 = vector.shape_cast %19 : vector<8x8x4xf32> to vector<64x4xf32>
    %c0_15 = arith.constant 0 : index
    %c0_16 = arith.constant 0 : index
    %21 = vector.load %arg20[%c0_15, %c0_16] : memref<64x36xf32, #tpu.memory_space<vmem>>, vector<64x4xf32>
    tpu.vector_store %arg20[%c0_15, %c0_16], %20 {strides = array<i32>} : memref<64x36xf32, #tpu.memory_space<vmem>>, vector<64x4xf32>,
    %c0_17 = arith.constant 0 : index
    %c1_18 = arith.constant 1 : index
    %c0_19 = arith.constant 0 : index
    %22 = vector.load %arg18[%c0_17, %c1_18, %c0_19] : memref<10x10x4xf32, #tpu.memory_space<vmem>>, vector<8x8x4xf32>
    %23 = vector.shape_cast %22 : vector<8x8x4xf32> to vector<64x4xf32>
    %c0_20 = arith.constant 0 : index
    %c4 = arith.constant 4 : index
    %24 = vector.load %arg20[%c0_20, %c4] : memref<64x36xf32, #tpu.memory_space<vmem>>, vector<64x4xf32>
    tpu.vector_store %arg20[%c0_20, %c4], %23 {strides = array<i32>} : memref<64x36xf32, #tpu.memory_space<vmem>>, vector<64x4xf32>,
    %c0_21 = arith.constant 0 : index
    %c2 = arith.constant 2 : index
    %c0_22 = arith.constant 0 : index
    %25 = vector.load %arg18[%c0_21, %c2, %c0_22] : memref<10x10x4xf32, #tpu.memory_space<vmem>>, vector<8x8x4xf32>
    %26 = vector.shape_cast %25 : vector<8x8x4xf32> to vector<64x4xf32>
    %c0_23 = arith.constant 0 : index
    %c8 = arith.constant 8 : index
    %27 = vector.load %arg20[%c0_23, %c8] : memref<64x36xf32, #tpu.memory_space<vmem>>, vector<64x4xf32>
    tpu.vector_store %arg20[%c0_23, %c8], %26 {strides = array<i32>} : memref<64x36xf32, #tpu.memory_space<vmem>>, vector<64x4xf32>,
    %c1_24 = arith.constant 1 : index
    %c0_25 = arith.constant 0 : index
    %c0_26 = arith.constant 0 : index
    %28 = vector.load %arg18[%c1_24, %c0_25, %c0_26] : memref<10x10x4xf32, #tpu.memory_space<vmem>>, vector<8x8x4xf32>
    %29 = vector.shape_cast %28 : vector<8x8x4xf32> to vector<64x4xf32>
    %c0_27 = arith.constant 0 : index
    %c12 = arith.constant 12 : index
    %30 = vector.load %arg20[%c0_27, %c12] : memref<64x36xf32, #tpu.memory_space<vmem>>, vector<64x4xf32>
    tpu.vector_store %arg20[%c0_27, %c12], %29 {strides = array<i32>} : memref<64x36xf32, #tpu.memory_space<vmem>>, vector<64x4xf32>,
    %c1_28 = arith.constant 1 : index
    %c1_29 = arith.constant 1 : index
    %c0_30 = arith.constant 0 : index
    %31 = vector.load %arg18[%c1_28, %c1_29, %c0_30] : memref<10x10x4xf32, #tpu.memory_space<vmem>>, vector<8x8x4xf32>
    %32 = vector.shape_cast %31 : vector<8x8x4xf32> to vector<64x4xf32>
    %c0_31 = arith.constant 0 : index
    %c16 = arith.constant 16 : index
    %33 = vector.load %arg20[%c0_31, %c16] : memref<64x36xf32, #tpu.memory_space<vmem>>, vector<64x4xf32>
    tpu.vector_store %arg20[%c0_31, %c16], %32 {strides = array<i32>} : memref<64x36xf32, #tpu.memory_space<vmem>>, vector<64x4xf32>,
    %c1_32 = arith.constant 1 : index
    %c2_33 = arith.constant 2 : index
    %c0_34 = arith.constant 0 : index
    %34 = vector.load %arg18[%c1_32, %c2_33, %c0_34] : memref<10x10x4xf32, #tpu.memory_space<vmem>>, vector<8x8x4xf32>
    %35 = vector.shape_cast %34 : vector<8x8x4xf32> to vector<64x4xf32>
    %c0_35 = arith.constant 0 : index
    %c20 = arith.constant 20 : index
    %36 = vector.load %arg20[%c0_35, %c20] : memref<64x36xf32, #tpu.memory_space<vmem>>, vector<64x4xf32>
    tpu.vector_store %arg20[%c0_35, %c20], %35 {strides = array<i32>} : memref<64x36xf32, #tpu.memory_space<vmem>>, vector<64x4xf32>,
    %c2_36 = arith.constant 2 : index
    %c0_37 = arith.constant 0 : index
    %c0_38 = arith.constant 0 : index
    %37 = vector.load %arg18[%c2_36, %c0_37, %c0_38] : memref<10x10x4xf32, #tpu.memory_space<vmem>>, vector<8x8x4xf32>
    %38 = vector.shape_cast %37 : vector<8x8x4xf32> to vector<64x4xf32>
    %c0_39 = arith.constant 0 : index
    %c24 = arith.constant 24 : index
    %39 = vector.load %arg20[%c0_39, %c24] : memref<64x36xf32, #tpu.memory_space<vmem>>, vector<64x4xf32>
    tpu.vector_store %arg20[%c0_39, %c24], %38 {strides = array<i32>} : memref<64x36xf32, #tpu.memory_space<vmem>>, vector<64x4xf32>,
    %c2_40 = arith.constant 2 : index
    %c1_41 = arith.constant 1 : index
    %c0_42 = arith.constant 0 : index
    %40 = vector.load %arg18[%c2_40, %c1_41, %c0_42] : memref<10x10x4xf32, #tpu.memory_space<vmem>>, vector<8x8x4xf32>
    %41 = vector.shape_cast %40 : vector<8x8x4xf32> to vector<64x4xf32>
    %c0_43 = arith.constant 0 : index
    %c28 = arith.constant 28 : index
    %42 = vector.load %arg20[%c0_43, %c28] : memref<64x36xf32, #tpu.memory_space<vmem>>, vector<64x4xf32>
    tpu.vector_store %arg20[%c0_43, %c28], %41 {strides = array<i32>} : memref<64x36xf32, #tpu.memory_space<vmem>>, vector<64x4xf32>,
    %c2_44 = arith.constant 2 : index
    %c2_45 = arith.constant 2 : index
    %c0_46 = arith.constant 0 : index
    %43 = vector.load %arg18[%c2_44, %c2_45, %c0_46] : memref<10x10x4xf32, #tpu.memory_space<vmem>>, vector<8x8x4xf32>
    %44 = vector.shape_cast %43 : vector<8x8x4xf32> to vector<64x4xf32>
    %c0_47 = arith.constant 0 : index
    %c32 = arith.constant 32 : index
    %45 = vector.load %arg20[%c0_47, %c32] : memref<64x36xf32, #tpu.memory_space<vmem>>, vector<64x4xf32>
    tpu.vector_store %arg20[%c0_47, %c32], %44 {strides = array<i32>} : memref<64x36xf32, #tpu.memory_space<vmem>>, vector<64x4xf32>,
    %c0_48 = arith.constant 0 : index
    %c0_49 = arith.constant 0 : index
    %46 = vector.load %arg20[%c0_48, %c0_49] : memref<64x36xf32, #tpu.memory_space<vmem>>, vector<64x36xf32>
    %c0_50 = arith.constant 0 : index
    %c0_51 = arith.constant 0 : index
    %47 = vector.load %arg3[%c0_50, %c0_51] : memref<36x4xf32, #tpu.memory_space<vmem>>, vector<36x4xf32>
    %cst_52 = arith.constant dense<0.000000e+00> : vector<64x4xf32>
    %48 = tpu.matmul %46, %47, %cst_52 {dimension_numbers = #tpu.dot_dimension_numbers<[1], [0], [0], [1], [0, 0, 1, 1], [], []>} : vector<64x36xf32>, vector<36x4xf32>, vector<64x4xf32> -> vector<64x4xf32>
    %49 = vector.shape_cast %48 : vector<64x4xf32> to vector<1x64x4xf32>
    %cst_53 = arith.constant dense<0.000000e+00> : vector<1xf32>
    %50 = vector.multi_reduction <add>, %49, %cst_53 [1, 2] : vector<1x64x4xf32> to vector<1xf32>
    %51 = vector.shape_cast %50 : vector<1xf32> to vector<1x1x1xf32>
    %52 = vector.extract %51[0, 0, 0] : f32 from vector<1x1x1xf32>
    %cst_54 = arith.constant 2.560000e+02 : f32
    %53 = arith.divf %52, %cst_54 : f32
    %54 = vector.broadcast %53 : f32 to vector<64x4xf32>
    %55 = arith.subf %48, %54 : vector<64x4xf32>
    %56 = arith.mulf %55, %55 : vector<64x4xf32>
    %57 = vector.shape_cast %56 : vector<64x4xf32> to vector<1x64x4xf32>
    %cst_55 = arith.constant dense<0.000000e+00> : vector<1xf32>
    %58 = vector.multi_reduction <add>, %57, %cst_55 [1, 2] : vector<1x64x4xf32> to vector<1xf32>
    %59 = vector.shape_cast %58 : vector<1xf32> to vector<1x1x1xf32>
    %60 = vector.extract %59[0, 0, 0] : f32 from vector<1x1x1xf32>
    %cst_56 = arith.constant 2.560000e+02 : f32
    %61 = arith.divf %60, %cst_56 : f32
    %62 = vector.broadcast %53 : f32 to vector<64x4xf32>
    %63 = arith.subf %48, %62 : vector<64x4xf32>
    %cst_57 = arith.constant 9.99999974E-6 : f32
    %64 = arith.addf %61, %cst_57 : f32
    %65 = math.rsqrt %64 : f32
    %66 = vector.broadcast %65 : f32 to vector<64x4xf32>
    %67 = arith.mulf %63, %66 : vector<64x4xf32>
    %c0_58 = arith.constant 0 : index
    %c0_59 = arith.constant 0 : index
    %68 = vector.load %arg4[%c0_58, %c0_59] : memref<1x4xf32, #tpu.memory_space<vmem>>, vector<1x4xf32>
    %69 = vector.broadcast %68 : vector<1x4xf32> to vector<64x4xf32>
    %70 = arith.mulf %67, %69 : vector<64x4xf32>
    %c0_60 = arith.constant 0 : index
    %c0_61 = arith.constant 0 : index
    %71 = vector.load %arg5[%c0_60, %c0_61] : memref<1x4xf32, #tpu.memory_space<vmem>>, vector<1x4xf32>
    %72 = vector.broadcast %71 : vector<1x4xf32> to vector<64x4xf32>
    %73 = arith.addf %70, %72 : vector<64x4xf32>
    %cst_62 = arith.constant 5.000000e-01 : f32
    %74 = vector.broadcast %cst_62 : f32 to vector<64x4xf32>
    %75 = arith.mulf %74, %73 : vector<64x4xf32>
    %cst_63 = arith.constant 1.41421354 : f32
    %76 = vector.broadcast %cst_63 : f32 to vector<64x4xf32>
    %77 = arith.divf %73, %76 : vector<64x4xf32>
    %78 = math.erf %77 : vector<64x4xf32>
    %cst_64 = arith.constant 1.000000e+00 : f32
    %79 = vector.broadcast %cst_64 : f32 to vector<64x4xf32>
    %80 = arith.addf %79, %78 : vector<64x4xf32>
    %81 = arith.mulf %75, %80 : vector<64x4xf32>
    %82 = vector.shape_cast %81 : vector<64x4xf32> to vector<8x8x4xf32>
    %c1_65 = arith.constant 1 : index
    %c1_66 = arith.constant 1 : index
    %c0_67 = arith.constant 0 : index
    %83 = vector.load %arg18[%c1_65, %c1_66, %c0_67] : memref<10x10x4xf32, #tpu.memory_space<vmem>>, vector<8x8x4xf32>
    tpu.vector_store %arg18[%c1_65, %c1_66, %c0_67], %82 {strides = array<i32>} : memref<10x10x4xf32, #tpu.memory_space<vmem>>, vector<8x8x4xf32>,
    %c0_68 = arith.constant 0 : index
    %c0_69 = arith.constant 0 : index
    %c0_70 = arith.constant 0 : index
    %84 = vector.load %arg18[%c0_68, %c0_69, %c0_70] : memref<10x10x4xf32, #tpu.memory_space<vmem>>, vector<8x8x4xf32>
    %85 = vector.shape_cast %84 : vector<8x8x4xf32> to vector<64x4xf32>
    %c0_71 = arith.constant 0 : index
    %c0_72 = arith.constant 0 : index
    %86 = vector.load %arg20[%c0_71, %c0_72] : memref<64x36xf32, #tpu.memory_space<vmem>>, vector<64x4xf32>
    tpu.vector_store %arg20[%c0_71, %c0_72], %85 {strides = array<i32>} : memref<64x36xf32, #tpu.memory_space<vmem>>, vector<64x4xf32>,
    %c0_73 = arith.constant 0 : index
    %c1_74 = arith.constant 1 : index
    %c0_75 = arith.constant 0 : index
    %87 = vector.load %arg18[%c0_73, %c1_74, %c0_75] : memref<10x10x4xf32, #tpu.memory_space<vmem>>, vector<8x8x4xf32>
    %88 = vector.shape_cast %87 : vector<8x8x4xf32> to vector<64x4xf32>
    %c0_76 = arith.constant 0 : index
    %c4_77 = arith.constant 4 : index
    %89 = vector.load %arg20[%c0_76, %c4_77] : memref<64x36xf32, #tpu.memory_space<vmem>>, vector<64x4xf32>
    tpu.vector_store %arg20[%c0_76, %c4_77], %88 {strides = array<i32>} : memref<64x36xf32, #tpu.memory_space<vmem>>, vector<64x4xf32>,
    %c0_78 = arith.constant 0 : index
    %c2_79 = arith.constant 2 : index
    %c0_80 = arith.constant 0 : index
    %90 = vector.load %arg18[%c0_78, %c2_79, %c0_80] : memref<10x10x4xf32, #tpu.memory_space<vmem>>, vector<8x8x4xf32>
    %91 = vector.shape_cast %90 : vector<8x8x4xf32> to vector<64x4xf32>
    %c0_81 = arith.constant 0 : index
    %c8_82 = arith.constant 8 : index
    %92 = vector.load %arg20[%c0_81, %c8_82] : memref<64x36xf32, #tpu.memory_space<vmem>>, vector<64x4xf32>
    tpu.vector_store %arg20[%c0_81, %c8_82], %91 {strides = array<i32>} : memref<64x36xf32, #tpu.memory_space<vmem>>, vector<64x4xf32>,
    %c1_83 = arith.constant 1 : index
    %c0_84 = arith.constant 0 : index
    %c0_85 = arith.constant 0 : index
    %93 = vector.load %arg18[%c1_83, %c0_84, %c0_85] : memref<10x10x4xf32, #tpu.memory_space<vmem>>, vector<8x8x4xf32>
    %94 = vector.shape_cast %93 : vector<8x8x4xf32> to vector<64x4xf32>
    %c0_86 = arith.constant 0 : index
    %c12_87 = arith.constant 12 : index
    %95 = vector.load %arg20[%c0_86, %c12_87] : memref<64x36xf32, #tpu.memory_space<vmem>>, vector<64x4xf32>
    tpu.vector_store %arg20[%c0_86, %c12_87], %94 {strides = array<i32>} : memref<64x36xf32, #tpu.memory_space<vmem>>, vector<64x4xf32>,
    %c1_88 = arith.constant 1 : index
    %c1_89 = arith.constant 1 : index
    %c0_90 = arith.constant 0 : index
    %96 = vector.load %arg18[%c1_88, %c1_89, %c0_90] : memref<10x10x4xf32, #tpu.memory_space<vmem>>, vector<8x8x4xf32>
    %97 = vector.shape_cast %96 : vector<8x8x4xf32> to vector<64x4xf32>
    %c0_91 = arith.constant 0 : index
    %c16_92 = arith.constant 16 : index
    %98 = vector.load %arg20[%c0_91, %c16_92] : memref<64x36xf32, #tpu.memory_space<vmem>>, vector<64x4xf32>
    tpu.vector_store %arg20[%c0_91, %c16_92], %97 {strides = array<i32>} : memref<64x36xf32, #tpu.memory_space<vmem>>, vector<64x4xf32>,
    %c1_93 = arith.constant 1 : index
    %c2_94 = arith.constant 2 : index
    %c0_95 = arith.constant 0 : index
    %99 = vector.load %arg18[%c1_93, %c2_94, %c0_95] : memref<10x10x4xf32, #tpu.memory_space<vmem>>, vector<8x8x4xf32>
    %100 = vector.shape_cast %99 : vector<8x8x4xf32> to vector<64x4xf32>
    %c0_96 = arith.constant 0 : index
    %c20_97 = arith.constant 20 : index
    %101 = vector.load %arg20[%c0_96, %c20_97] : memref<64x36xf32, #tpu.memory_space<vmem>>, vector<64x4xf32>
    tpu.vector_store %arg20[%c0_96, %c20_97], %100 {strides = array<i32>} : memref<64x36xf32, #tpu.memory_space<vmem>>, vector<64x4xf32>,
    %c2_98 = arith.constant 2 : index
    %c0_99 = arith.constant 0 : index
    %c0_100 = arith.constant 0 : index
    %102 = vector.load %arg18[%c2_98, %c0_99, %c0_100] : memref<10x10x4xf32, #tpu.memory_space<vmem>>, vector<8x8x4xf32>
    %103 = vector.shape_cast %102 : vector<8x8x4xf32> to vector<64x4xf32>
    %c0_101 = arith.constant 0 : index
    %c24_102 = arith.constant 24 : index
    %104 = vector.load %arg20[%c0_101, %c24_102] : memref<64x36xf32, #tpu.memory_space<vmem>>, vector<64x4xf32>
    tpu.vector_store %arg20[%c0_101, %c24_102], %103 {strides = array<i32>} : memref<64x36xf32, #tpu.memory_space<vmem>>, vector<64x4xf32>,
    %c2_103 = arith.constant 2 : index
    %c1_104 = arith.constant 1 : index
    %c0_105 = arith.constant 0 : index
    %105 = vector.load %arg18[%c2_103, %c1_104, %c0_105] : memref<10x10x4xf32, #tpu.memory_space<vmem>>, vector<8x8x4xf32>
    %106 = vector.shape_cast %105 : vector<8x8x4xf32> to vector<64x4xf32>
    %c0_106 = arith.constant 0 : index
    %c28_107 = arith.constant 28 : index
    %107 = vector.load %arg20[%c0_106, %c28_107] : memref<64x36xf32, #tpu.memory_space<vmem>>, vector<64x4xf32>
    tpu.vector_store %arg20[%c0_106, %c28_107], %106 {strides = array<i32>} : memref<64x36xf32, #tpu.memory_space<vmem>>, vector<64x4xf32>,
    %c2_108 = arith.constant 2 : index
    %c2_109 = arith.constant 2 : index
    %c0_110 = arith.constant 0 : index
    %108 = vector.load %arg18[%c2_108, %c2_109, %c0_110] : memref<10x10x4xf32, #tpu.memory_space<vmem>>, vector<8x8x4xf32>
    %109 = vector.shape_cast %108 : vector<8x8x4xf32> to vector<64x4xf32>
    %c0_111 = arith.constant 0 : index
    %c32_112 = arith.constant 32 : index
    %110 = vector.load %arg20[%c0_111, %c32_112] : memref<64x36xf32, #tpu.memory_space<vmem>>, vector<64x4xf32>
    tpu.vector_store %arg20[%c0_111, %c32_112], %109 {strides = array<i32>} : memref<64x36xf32, #tpu.memory_space<vmem>>, vector<64x4xf32>,
    %c0_113 = arith.constant 0 : index
    %c0_114 = arith.constant 0 : index
    %111 = vector.load %arg20[%c0_113, %c0_114] : memref<64x36xf32, #tpu.memory_space<vmem>>, vector<64x36xf32>
    %c0_115 = arith.constant 0 : index
    %c0_116 = arith.constant 0 : index
    %112 = vector.load %arg6[%c0_115, %c0_116] : memref<36x4xf32, #tpu.memory_space<vmem>>, vector<36x4xf32>
    %cst_117 = arith.constant dense<0.000000e+00> : vector<64x4xf32>
    %113 = tpu.matmul %111, %112, %cst_117 {dimension_numbers = #tpu.dot_dimension_numbers<[1], [0], [0], [1], [0, 0, 1, 1], [], []>} : vector<64x36xf32>, vector<36x4xf32>, vector<64x4xf32> -> vector<64x4xf32>
    %114 = vector.shape_cast %113 : vector<64x4xf32> to vector<1x64x4xf32>
    %cst_118 = arith.constant dense<0.000000e+00> : vector<1xf32>
    %115 = vector.multi_reduction <add>, %114, %cst_118 [1, 2] : vector<1x64x4xf32> to vector<1xf32>
    %116 = vector.shape_cast %115 : vector<1xf32> to vector<1x1x1xf32>
    %117 = vector.extract %116[0, 0, 0] : f32 from vector<1x1x1xf32>
    %cst_119 = arith.constant 2.560000e+02 : f32
    %118 = arith.divf %117, %cst_119 : f32
    %119 = vector.broadcast %118 : f32 to vector<64x4xf32>
    %120 = arith.subf %113, %119 : vector<64x4xf32>
    %121 = arith.mulf %120, %120 : vector<64x4xf32>
    %122 = vector.shape_cast %121 : vector<64x4xf32> to vector<1x64x4xf32>
    %cst_120 = arith.constant dense<0.000000e+00> : vector<1xf32>
    %123 = vector.multi_reduction <add>, %122, %cst_120 [1, 2] : vector<1x64x4xf32> to vector<1xf32>
    %124 = vector.shape_cast %123 : vector<1xf32> to vector<1x1x1xf32>
    %125 = vector.extract %124[0, 0, 0] : f32 from vector<1x1x1xf32>
    %cst_121 = arith.constant 2.560000e+02 : f32
    %126 = arith.divf %125, %cst_121 : f32
    %127 = vector.broadcast %118 : f32 to vector<64x4xf32>
    %128 = arith.subf %113, %127 : vector<64x4xf32>
    %cst_122 = arith.constant 9.99999974E-6 : f32
    %129 = arith.addf %126, %cst_122 : f32
    %130 = math.rsqrt %129 : f32
    %131 = vector.broadcast %130 : f32 to vector<64x4xf32>
    %132 = arith.mulf %128, %131 : vector<64x4xf32>
    %c0_123 = arith.constant 0 : index
    %c0_124 = arith.constant 0 : index
    %133 = vector.load %arg7[%c0_123, %c0_124] : memref<1x4xf32, #tpu.memory_space<vmem>>, vector<1x4xf32>
    %134 = vector.broadcast %133 : vector<1x4xf32> to vector<64x4xf32>
    %135 = arith.mulf %132, %134 : vector<64x4xf32>
    %c0_125 = arith.constant 0 : index
    %c0_126 = arith.constant 0 : index
    %136 = vector.load %arg8[%c0_125, %c0_126] : memref<1x4xf32, #tpu.memory_space<vmem>>, vector<1x4xf32>
    %137 = vector.broadcast %136 : vector<1x4xf32> to vector<64x4xf32>
    %138 = arith.addf %135, %137 : vector<64x4xf32>
    %139 = vector.shape_cast %13 : vector<8x8x4xf32> to vector<64x4xf32>
    %140 = arith.addf %139, %138 : vector<64x4xf32>
    %cst_127 = arith.constant 5.000000e-01 : f32
    %141 = vector.broadcast %cst_127 : f32 to vector<64x4xf32>
    %142 = arith.mulf %141, %140 : vector<64x4xf32>
    %cst_128 = arith.constant 1.41421354 : f32
    %143 = vector.broadcast %cst_128 : f32 to vector<64x4xf32>
    %144 = arith.divf %140, %143 : vector<64x4xf32>
    %145 = math.erf %144 : vector<64x4xf32>
    %cst_129 = arith.constant 1.000000e+00 : f32
    %146 = vector.broadcast %cst_129 : f32 to vector<64x4xf32>
    %147 = arith.addf %146, %145 : vector<64x4xf32>
    %148 = arith.mulf %142, %147 : vector<64x4xf32>
    %149 = vector.shape_cast %148 : vector<64x4xf32> to vector<8x8x4xf32>
    %c1_130 = arith.constant 1 : index
    %c1_131 = arith.constant 1 : index
    %c0_132 = arith.constant 0 : index
    %150 = vector.load %arg18[%c1_130, %c1_131, %c0_132] : memref<10x10x4xf32, #tpu.memory_space<vmem>>, vector<8x8x4xf32>
    tpu.vector_store %arg18[%c1_130, %c1_131, %c0_132], %149 {strides = array<i32>} : memref<10x10x4xf32, #tpu.memory_space<vmem>>, vector<8x8x4xf32>,
    %c0_133 = arith.constant 0 : index
    %c0_134 = arith.constant 0 : index
    %c0_135 = arith.constant 0 : index
    %151 = vector.load %arg18[%c0_133, %c0_134, %c0_135] : memref<10x10x4xf32, #tpu.memory_space<vmem>>, vector<8x8x4xf32>
    %152 = vector.shape_cast %151 : vector<8x8x4xf32> to vector<64x4xf32>
    %c0_136 = arith.constant 0 : index
    %c0_137 = arith.constant 0 : index
    %153 = vector.load %arg20[%c0_136, %c0_137] : memref<64x36xf32, #tpu.memory_space<vmem>>, vector<64x4xf32>
    tpu.vector_store %arg20[%c0_136, %c0_137], %152 {strides = array<i32>} : memref<64x36xf32, #tpu.memory_space<vmem>>, vector<64x4xf32>,
    %c0_138 = arith.constant 0 : index
    %c1_139 = arith.constant 1 : index
    %c0_140 = arith.constant 0 : index
    %154 = vector.load %arg18[%c0_138, %c1_139, %c0_140] : memref<10x10x4xf32, #tpu.memory_space<vmem>>, vector<8x8x4xf32>
    %155 = vector.shape_cast %154 : vector<8x8x4xf32> to vector<64x4xf32>
    %c0_141 = arith.constant 0 : index
    %c4_142 = arith.constant 4 : index
    %156 = vector.load %arg20[%c0_141, %c4_142] : memref<64x36xf32, #tpu.memory_space<vmem>>, vector<64x4xf32>
    tpu.vector_store %arg20[%c0_141, %c4_142], %155 {strides = array<i32>} : memref<64x36xf32, #tpu.memory_space<vmem>>, vector<64x4xf32>,
    %c0_143 = arith.constant 0 : index
    %c2_144 = arith.constant 2 : index
    %c0_145 = arith.constant 0 : index
    %157 = vector.load %arg18[%c0_143, %c2_144, %c0_145] : memref<10x10x4xf32, #tpu.memory_space<vmem>>, vector<8x8x4xf32>
    %158 = vector.shape_cast %157 : vector<8x8x4xf32> to vector<64x4xf32>
    %c0_146 = arith.constant 0 : index
    %c8_147 = arith.constant 8 : index
    %159 = vector.load %arg20[%c0_146, %c8_147] : memref<64x36xf32, #tpu.memory_space<vmem>>, vector<64x4xf32>
    tpu.vector_store %arg20[%c0_146, %c8_147], %158 {strides = array<i32>} : memref<64x36xf32, #tpu.memory_space<vmem>>, vector<64x4xf32>,
    %c1_148 = arith.constant 1 : index
    %c0_149 = arith.constant 0 : index
    %c0_150 = arith.constant 0 : index
    %160 = vector.load %arg18[%c1_148, %c0_149, %c0_150] : memref<10x10x4xf32, #tpu.memory_space<vmem>>, vector<8x8x4xf32>
    %161 = vector.shape_cast %160 : vector<8x8x4xf32> to vector<64x4xf32>
    %c0_151 = arith.constant 0 : index
    %c12_152 = arith.constant 12 : index
    %162 = vector.load %arg20[%c0_151, %c12_152] : memref<64x36xf32, #tpu.memory_space<vmem>>, vector<64x4xf32>
    tpu.vector_store %arg20[%c0_151, %c12_152], %161 {strides = array<i32>} : memref<64x36xf32, #tpu.memory_space<vmem>>, vector<64x4xf32>,
    %c1_153 = arith.constant 1 : index
    %c1_154 = arith.constant 1 : index
    %c0_155 = arith.constant 0 : index
    %163 = vector.load %arg18[%c1_153, %c1_154, %c0_155] : memref<10x10x4xf32, #tpu.memory_space<vmem>>, vector<8x8x4xf32>
    %164 = vector.shape_cast %163 : vector<8x8x4xf32> to vector<64x4xf32>
    %c0_156 = arith.constant 0 : index
    %c16_157 = arith.constant 16 : index
    %165 = vector.load %arg20[%c0_156, %c16_157] : memref<64x36xf32, #tpu.memory_space<vmem>>, vector<64x4xf32>
    tpu.vector_store %arg20[%c0_156, %c16_157], %164 {strides = array<i32>} : memref<64x36xf32, #tpu.memory_space<vmem>>, vector<64x4xf32>,
    %c1_158 = arith.constant 1 : index
    %c2_159 = arith.constant 2 : index
    %c0_160 = arith.constant 0 : index
    %166 = vector.load %arg18[%c1_158, %c2_159, %c0_160] : memref<10x10x4xf32, #tpu.memory_space<vmem>>, vector<8x8x4xf32>
    %167 = vector.shape_cast %166 : vector<8x8x4xf32> to vector<64x4xf32>
    %c0_161 = arith.constant 0 : index
    %c20_162 = arith.constant 20 : index
    %168 = vector.load %arg20[%c0_161, %c20_162] : memref<64x36xf32, #tpu.memory_space<vmem>>, vector<64x4xf32>
    tpu.vector_store %arg20[%c0_161, %c20_162], %167 {strides = array<i32>} : memref<64x36xf32, #tpu.memory_space<vmem>>, vector<64x4xf32>,
    %c2_163 = arith.constant 2 : index
    %c0_164 = arith.constant 0 : index
    %c0_165 = arith.constant 0 : index
    %169 = vector.load %arg18[%c2_163, %c0_164, %c0_165] : memref<10x10x4xf32, #tpu.memory_space<vmem>>, vector<8x8x4xf32>
    %170 = vector.shape_cast %169 : vector<8x8x4xf32> to vector<64x4xf32>
    %c0_166 = arith.constant 0 : index
    %c24_167 = arith.constant 24 : index
    %171 = vector.load %arg20[%c0_166, %c24_167] : memref<64x36xf32, #tpu.memory_space<vmem>>, vector<64x4xf32>
    tpu.vector_store %arg20[%c0_166, %c24_167], %170 {strides = array<i32>} : memref<64x36xf32, #tpu.memory_space<vmem>>, vector<64x4xf32>,
    %c2_168 = arith.constant 2 : index
    %c1_169 = arith.constant 1 : index
    %c0_170 = arith.constant 0 : index
    %172 = vector.load %arg18[%c2_168, %c1_169, %c0_170] : memref<10x10x4xf32, #tpu.memory_space<vmem>>, vector<8x8x4xf32>
    %173 = vector.shape_cast %172 : vector<8x8x4xf32> to vector<64x4xf32>
    %c0_171 = arith.constant 0 : index
    %c28_172 = arith.constant 28 : index
    %174 = vector.load %arg20[%c0_171, %c28_172] : memref<64x36xf32, #tpu.memory_space<vmem>>, vector<64x4xf32>
    tpu.vector_store %arg20[%c0_171, %c28_172], %173 {strides = array<i32>} : memref<64x36xf32, #tpu.memory_space<vmem>>, vector<64x4xf32>,
    %c2_173 = arith.constant 2 : index
    %c2_174 = arith.constant 2 : index
    %c0_175 = arith.constant 0 : index
    %175 = vector.load %arg18[%c2_173, %c2_174, %c0_175] : memref<10x10x4xf32, #tpu.memory_space<vmem>>, vector<8x8x4xf32>
    %176 = vector.shape_cast %175 : vector<8x8x4xf32> to vector<64x4xf32>
    %c0_176 = arith.constant 0 : index
    %c32_177 = arith.constant 32 : index
    %177 = vector.load %arg20[%c0_176, %c32_177] : memref<64x36xf32, #tpu.memory_space<vmem>>, vector<64x4xf32>
    tpu.vector_store %arg20[%c0_176, %c32_177], %176 {strides = array<i32>} : memref<64x36xf32, #tpu.memory_space<vmem>>, vector<64x4xf32>,
    %c0_178 = arith.constant 0 : index
    %c0_179 = arith.constant 0 : index
    %178 = vector.load %arg20[%c0_178, %c0_179] : memref<64x36xf32, #tpu.memory_space<vmem>>, vector<64x36xf32>
    %c0_180 = arith.constant 0 : index
    %c0_181 = arith.constant 0 : index
    %179 = vector.load %arg9[%c0_180, %c0_181] : memref<36x8xf32, #tpu.memory_space<vmem>>, vector<36x8xf32>
    %cst_182 = arith.constant dense<0.000000e+00> : vector<64x8xf32>
    %180 = tpu.matmul %178, %179, %cst_182 {dimension_numbers = #tpu.dot_dimension_numbers<[1], [0], [0], [1], [0, 0, 1, 1], [], []>} : vector<64x36xf32>, vector<36x8xf32>, vector<64x8xf32> -> vector<64x8xf32>
    %181 = vector.shape_cast %180 : vector<64x8xf32> to vector<1x64x8xf32>
    %cst_183 = arith.constant dense<0.000000e+00> : vector<1xf32>
    %182 = vector.multi_reduction <add>, %181, %cst_183 [1, 2] : vector<1x64x8xf32> to vector<1xf32>
    %183 = vector.shape_cast %182 : vector<1xf32> to vector<1x1x1xf32>
    %184 = vector.extract %183[0, 0, 0] : f32 from vector<1x1x1xf32>
    %cst_184 = arith.constant 5.120000e+02 : f32
    %185 = arith.divf %184, %cst_184 : f32
    %186 = vector.broadcast %185 : f32 to vector<64x8xf32>
    %187 = arith.subf %180, %186 : vector<64x8xf32>
    %188 = arith.mulf %187, %187 : vector<64x8xf32>
    %189 = vector.shape_cast %188 : vector<64x8xf32> to vector<1x64x8xf32>
    %cst_185 = arith.constant dense<0.000000e+00> : vector<1xf32>
    %190 = vector.multi_reduction <add>, %189, %cst_185 [1, 2] : vector<1x64x8xf32> to vector<1xf32>
    %191 = vector.shape_cast %190 : vector<1xf32> to vector<1x1x1xf32>
    %192 = vector.extract %191[0, 0, 0] : f32 from vector<1x1x1xf32>
    %cst_186 = arith.constant 5.120000e+02 : f32
    %193 = arith.divf %192, %cst_186 : f32
    %194 = vector.broadcast %185 : f32 to vector<64x8xf32>
    %195 = arith.subf %180, %194 : vector<64x8xf32>
    %cst_187 = arith.constant 9.99999974E-6 : f32
    %196 = arith.addf %193, %cst_187 : f32
    %197 = math.rsqrt %196 : f32
    %198 = vector.broadcast %197 : f32 to vector<64x8xf32>
    %199 = arith.mulf %195, %198 : vector<64x8xf32>
    %c0_188 = arith.constant 0 : index
    %c0_189 = arith.constant 0 : index
    %200 = vector.load %arg10[%c0_188, %c0_189] : memref<1x8xf32, #tpu.memory_space<vmem>>, vector<1x8xf32>
    %201 = vector.broadcast %200 : vector<1x8xf32> to vector<64x8xf32>
    %202 = arith.mulf %199, %201 : vector<64x8xf32>
    %c0_190 = arith.constant 0 : index
    %c0_191 = arith.constant 0 : index
    %203 = vector.load %arg11[%c0_190, %c0_191] : memref<1x8xf32, #tpu.memory_space<vmem>>, vector<1x8xf32>
    %204 = vector.broadcast %203 : vector<1x8xf32> to vector<64x8xf32>
    %205 = arith.addf %202, %204 : vector<64x8xf32>
    %cst_192 = arith.constant 5.000000e-01 : f32
    %206 = vector.broadcast %cst_192 : f32 to vector<64x8xf32>
    %207 = arith.mulf %206, %205 : vector<64x8xf32>
    %cst_193 = arith.constant 1.41421354 : f32
    %208 = vector.broadcast %cst_193 : f32 to vector<64x8xf32>
    %209 = arith.divf %205, %208 : vector<64x8xf32>
    %210 = math.erf %209 : vector<64x8xf32>
    %cst_194 = arith.constant 1.000000e+00 : f32
    %211 = vector.broadcast %cst_194 : f32 to vector<64x8xf32>
    %212 = arith.addf %211, %210 : vector<64x8xf32>
    %213 = arith.mulf %207, %212 : vector<64x8xf32>
    %214 = vector.shape_cast %213 : vector<64x8xf32> to vector<8x8x8xf32>
    %c1_195 = arith.constant 1 : index
    %c1_196 = arith.constant 1 : index
    %c0_197 = arith.constant 0 : index
    %215 = vector.load %arg19[%c1_195, %c1_196, %c0_197] : memref<10x10x8xf32, #tpu.memory_space<vmem>>, vector<8x8x8xf32>
    tpu.vector_store %arg19[%c1_195, %c1_196, %c0_197], %214 {strides = array<i32>} : memref<10x10x8xf32, #tpu.memory_space<vmem>>, vector<8x8x8xf32>,
    %c0_198 = arith.constant 0 : index
    %c0_199 = arith.constant 0 : index
    %c0_200 = arith.constant 0 : index
    %216 = vector.load %arg19[%c0_198, %c0_199, %c0_200] : memref<10x10x8xf32, #tpu.memory_space<vmem>>, vector<8x8x8xf32>
    %217 = vector.shape_cast %216 : vector<8x8x8xf32> to vector<64x8xf32>
    %c0_201 = arith.constant 0 : index
    %c0_202 = arith.constant 0 : index
    %218 = vector.load %arg21[%c0_201, %c0_202] : memref<64x72xf32, #tpu.memory_space<vmem>>, vector<64x8xf32>
    tpu.vector_store %arg21[%c0_201, %c0_202], %217 {strides = array<i32>} : memref<64x72xf32, #tpu.memory_space<vmem>>, vector<64x8xf32>,
    %c0_203 = arith.constant 0 : index
    %c1_204 = arith.constant 1 : index
    %c0_205 = arith.constant 0 : index
    %219 = vector.load %arg19[%c0_203, %c1_204, %c0_205] : memref<10x10x8xf32, #tpu.memory_space<vmem>>, vector<8x8x8xf32>
    %220 = vector.shape_cast %219 : vector<8x8x8xf32> to vector<64x8xf32>
    %c0_206 = arith.constant 0 : index
    %c8_207 = arith.constant 8 : index
    %221 = vector.load %arg21[%c0_206, %c8_207] : memref<64x72xf32, #tpu.memory_space<vmem>>, vector<64x8xf32>
    tpu.vector_store %arg21[%c0_206, %c8_207], %220 {strides = array<i32>} : memref<64x72xf32, #tpu.memory_space<vmem>>, vector<64x8xf32>,
    %c0_208 = arith.constant 0 : index
    %c2_209 = arith.constant 2 : index
    %c0_210 = arith.constant 0 : index
    %222 = vector.load %arg19[%c0_208, %c2_209, %c0_210] : memref<10x10x8xf32, #tpu.memory_space<vmem>>, vector<8x8x8xf32>
    %223 = vector.shape_cast %222 : vector<8x8x8xf32> to vector<64x8xf32>
    %c0_211 = arith.constant 0 : index
    %c16_212 = arith.constant 16 : index
    %224 = vector.load %arg21[%c0_211, %c16_212] : memref<64x72xf32, #tpu.memory_space<vmem>>, vector<64x8xf32>
    tpu.vector_store %arg21[%c0_211, %c16_212], %223 {strides = array<i32>} : memref<64x72xf32, #tpu.memory_space<vmem>>, vector<64x8xf32>,
    %c1_213 = arith.constant 1 : index
    %c0_214 = arith.constant 0 : index
    %c0_215 = arith.constant 0 : index
    %225 = vector.load %arg19[%c1_213, %c0_214, %c0_215] : memref<10x10x8xf32, #tpu.memory_space<vmem>>, vector<8x8x8xf32>
    %226 = vector.shape_cast %225 : vector<8x8x8xf32> to vector<64x8xf32>
    %c0_216 = arith.constant 0 : index
    %c24_217 = arith.constant 24 : index
    %227 = vector.load %arg21[%c0_216, %c24_217] : memref<64x72xf32, #tpu.memory_space<vmem>>, vector<64x8xf32>
    tpu.vector_store %arg21[%c0_216, %c24_217], %226 {strides = array<i32>} : memref<64x72xf32, #tpu.memory_space<vmem>>, vector<64x8xf32>,
    %c1_218 = arith.constant 1 : index
    %c1_219 = arith.constant 1 : index
    %c0_220 = arith.constant 0 : index
    %228 = vector.load %arg19[%c1_218, %c1_219, %c0_220] : memref<10x10x8xf32, #tpu.memory_space<vmem>>, vector<8x8x8xf32>
    %229 = vector.shape_cast %228 : vector<8x8x8xf32> to vector<64x8xf32>
    %c0_221 = arith.constant 0 : index
    %c32_222 = arith.constant 32 : index
    %230 = vector.load %arg21[%c0_221, %c32_222] : memref<64x72xf32, #tpu.memory_space<vmem>>, vector<64x8xf32>
    tpu.vector_store %arg21[%c0_221, %c32_222], %229 {strides = array<i32>} : memref<64x72xf32, #tpu.memory_space<vmem>>, vector<64x8xf32>,
    %c1_223 = arith.constant 1 : index
    %c2_224 = arith.constant 2 : index
    %c0_225 = arith.constant 0 : index
    %231 = vector.load %arg19[%c1_223, %c2_224, %c0_225] : memref<10x10x8xf32, #tpu.memory_space<vmem>>, vector<8x8x8xf32>
    %232 = vector.shape_cast %231 : vector<8x8x8xf32> to vector<64x8xf32>
    %c0_226 = arith.constant 0 : index
    %c40 = arith.constant 40 : index
    %233 = vector.load %arg21[%c0_226, %c40] : memref<64x72xf32, #tpu.memory_space<vmem>>, vector<64x8xf32>
    tpu.vector_store %arg21[%c0_226, %c40], %232 {strides = array<i32>} : memref<64x72xf32, #tpu.memory_space<vmem>>, vector<64x8xf32>,
    %c2_227 = arith.constant 2 : index
    %c0_228 = arith.constant 0 : index
    %c0_229 = arith.constant 0 : index
    %234 = vector.load %arg19[%c2_227, %c0_228, %c0_229] : memref<10x10x8xf32, #tpu.memory_space<vmem>>, vector<8x8x8xf32>
    %235 = vector.shape_cast %234 : vector<8x8x8xf32> to vector<64x8xf32>
    %c0_230 = arith.constant 0 : index
    %c48 = arith.constant 48 : index
    %236 = vector.load %arg21[%c0_230, %c48] : memref<64x72xf32, #tpu.memory_space<vmem>>, vector<64x8xf32>
    tpu.vector_store %arg21[%c0_230, %c48], %235 {strides = array<i32>} : memref<64x72xf32, #tpu.memory_space<vmem>>, vector<64x8xf32>,
    %c2_231 = arith.constant 2 : index
    %c1_232 = arith.constant 1 : index
    %c0_233 = arith.constant 0 : index
    %237 = vector.load %arg19[%c2_231, %c1_232, %c0_233] : memref<10x10x8xf32, #tpu.memory_space<vmem>>, vector<8x8x8xf32>
    %238 = vector.shape_cast %237 : vector<8x8x8xf32> to vector<64x8xf32>
    %c0_234 = arith.constant 0 : index
    %c56 = arith.constant 56 : index
    %239 = vector.load %arg21[%c0_234, %c56] : memref<64x72xf32, #tpu.memory_space<vmem>>, vector<64x8xf32>
    tpu.vector_store %arg21[%c0_234, %c56], %238 {strides = array<i32>} : memref<64x72xf32, #tpu.memory_space<vmem>>, vector<64x8xf32>,
    %c2_235 = arith.constant 2 : index
    %c2_236 = arith.constant 2 : index
    %c0_237 = arith.constant 0 : index
    %240 = vector.load %arg19[%c2_235, %c2_236, %c0_237] : memref<10x10x8xf32, #tpu.memory_space<vmem>>, vector<8x8x8xf32>
    %241 = vector.shape_cast %240 : vector<8x8x8xf32> to vector<64x8xf32>
    %c0_238 = arith.constant 0 : index
    %c64 = arith.constant 64 : index
    %242 = vector.load %arg21[%c0_238, %c64] : memref<64x72xf32, #tpu.memory_space<vmem>>, vector<64x8xf32>
    tpu.vector_store %arg21[%c0_238, %c64], %241 {strides = array<i32>} : memref<64x72xf32, #tpu.memory_space<vmem>>, vector<64x8xf32>,
    %c0_239 = arith.constant 0 : index
    %c0_240 = arith.constant 0 : index
    %243 = vector.load %arg21[%c0_239, %c0_240] : memref<64x72xf32, #tpu.memory_space<vmem>>, vector<64x72xf32>
    %c0_241 = arith.constant 0 : index
    %c0_242 = arith.constant 0 : index
    %244 = vector.load %arg12[%c0_241, %c0_242] : memref<72x8xf32, #tpu.memory_space<vmem>>, vector<72x8xf32>
    %cst_243 = arith.constant dense<0.000000e+00> : vector<64x8xf32>
    %245 = tpu.matmul %243, %244, %cst_243 {dimension_numbers = #tpu.dot_dimension_numbers<[1], [0], [0], [1], [0, 0, 1, 1], [], []>} : vector<64x72xf32>, vector<72x8xf32>, vector<64x8xf32> -> vector<64x8xf32>
    %246 = vector.shape_cast %245 : vector<64x8xf32> to vector<1x64x8xf32>
    %cst_244 = arith.constant dense<0.000000e+00> : vector<1xf32>
    %247 = vector.multi_reduction <add>, %246, %cst_244 [1, 2] : vector<1x64x8xf32> to vector<1xf32>
    %248 = vector.shape_cast %247 : vector<1xf32> to vector<1x1x1xf32>
    %249 = vector.extract %248[0, 0, 0] : f32 from vector<1x1x1xf32>
    %cst_245 = arith.constant 5.120000e+02 : f32
    %250 = arith.divf %249, %cst_245 : f32
    %251 = vector.broadcast %250 : f32 to vector<64x8xf32>
    %252 = arith.subf %245, %251 : vector<64x8xf32>
    %253 = arith.mulf %252, %252 : vector<64x8xf32>
    %254 = vector.shape_cast %253 : vector<64x8xf32> to vector<1x64x8xf32>
    %cst_246 = arith.constant dense<0.000000e+00> : vector<1xf32>
    %255 = vector.multi_reduction <add>, %254, %cst_246 [1, 2] : vector<1x64x8xf32> to vector<1xf32>
    %256 = vector.shape_cast %255 : vector<1xf32> to vector<1x1x1xf32>
    %257 = vector.extract %256[0, 0, 0] : f32 from vector<1x1x1xf32>
    %cst_247 = arith.constant 5.120000e+02 : f32
    %258 = arith.divf %257, %cst_247 : f32
    %259 = vector.broadcast %250 : f32 to vector<64x8xf32>
    %260 = arith.subf %245, %259 : vector<64x8xf32>
    %cst_248 = arith.constant 9.99999974E-6 : f32
    %261 = arith.addf %258, %cst_248 : f32
    %262 = math.rsqrt %261 : f32
    %263 = vector.broadcast %262 : f32 to vector<64x8xf32>
    %264 = arith.mulf %260, %263 : vector<64x8xf32>
    %c0_249 = arith.constant 0 : index
    %c0_250 = arith.constant 0 : index
    %265 = vector.load %arg13[%c0_249, %c0_250] : memref<1x8xf32, #tpu.memory_space<vmem>>, vector<1x8xf32>
    %266 = vector.broadcast %265 : vector<1x8xf32> to vector<64x8xf32>
    %267 = arith.mulf %264, %266 : vector<64x8xf32>
    %c0_251 = arith.constant 0 : index
    %c0_252 = arith.constant 0 : index
    %268 = vector.load %arg14[%c0_251, %c0_252] : memref<1x8xf32, #tpu.memory_space<vmem>>, vector<1x8xf32>
    %269 = vector.broadcast %268 : vector<1x8xf32> to vector<64x8xf32>
    %270 = arith.addf %267, %269 : vector<64x8xf32>
    %c0_253 = arith.constant 0 : index
    %c0_254 = arith.constant 0 : index
    %c0_255 = arith.constant 0 : index
    %271 = vector.load %arg2[%c0_253, %c0_254, %c0_255] : memref<1x1x32xf32, #tpu.memory_space<vmem>>, vector<1x1x32xf32>
    %272 = vector.shape_cast %271 : vector<1x1x32xf32> to vector<1x32xf32>
    %273 = arith.negf %272 : vector<1x32xf32>
    %274 = math.exp %273 : vector<1x32xf32>
    %cst_256 = arith.constant 1.000000e+00 : f32
    %275 = vector.broadcast %cst_256 : f32 to vector<1x32xf32>
    %276 = arith.addf %275, %274 : vector<1x32xf32>
    %277 = arith.divf %275, %276 : vector<1x32xf32>
    %278 = arith.mulf %272, %277 : vector<1x32xf32>
    %c0_257 = arith.constant 0 : index
    %c0_258 = arith.constant 0 : index
    %279 = vector.load %arg15[%c0_257, %c0_258] : memref<32x8xf32, #tpu.memory_space<vmem>>, vector<32x8xf32>
    %cst_259 = arith.constant dense<0.000000e+00> : vector<1x8xf32>
    %280 = tpu.matmul %278, %279, %cst_259 {dimension_numbers = #tpu.dot_dimension_numbers<[1], [0], [0], [1], [0, 0, 1, 1], [], []>} : vector<1x32xf32>, vector<32x8xf32>, vector<1x8xf32> -> vector<1x8xf32>
    %c0_260 = arith.constant 0 : index
    %c0_261 = arith.constant 0 : index
    %281 = vector.load %arg16[%c0_260, %c0_261] : memref<1x8xf32, #tpu.memory_space<vmem>>, vector<1x8xf32>
    %282 = arith.addf %280, %281 : vector<1x8xf32>
    %283 = vector.broadcast %282 : vector<1x8xf32> to vector<64x8xf32>
    %284 = arith.addf %270, %283 : vector<64x8xf32>
    %c0_262 = arith.constant 0 : index
    %c0_263 = arith.constant 0 : index
    %c0_264 = arith.constant 0 : index
    %285 = vector.load %arg17[%c0_262, %c0_263, %c0_264] : memref<1x64x8xf32, #tpu.memory_space<vmem>>, vector<1x64x8xf32>
    %286 = vector.shape_cast %285 : vector<1x64x8xf32> to vector<64x8xf32>
    %287 = vector.shape_cast %284 : vector<64x8xf32> to vector<1x64x8xf32>
    tpu.vector_store %arg17[%c0_262, %c0_263, %c0_264], %287 {strides = array<i32>} : memref<1x64x8xf32, #tpu.memory_space<vmem>>, vector<1x64x8xf32>,
    return
  }
  func.func @transform_0(%arg0: i32) -> (i32, i32, i32, i32) {
    %c0_i32 = arith.constant 0 : i32
    %c0_i32_0 = arith.constant 0 : i32
    %c0_i32_1 = arith.constant 0 : i32
    %c0_i32_2 = arith.constant 0 : i32
    return %arg0, %c0_i32, %c0_i32_0, %c0_i32_1 : i32, i32, i32, i32
  }
  func.func @transform_1(%arg0: i32) -> (i32, i32, i32) {
    %c0_i32 = arith.constant 0 : i32
    %c0_i32_0 = arith.constant 0 : i32
    %c0_i32_1 = arith.constant 0 : i32
    return %arg0, %c0_i32, %c0_i32_0 : i32, i32, i32
  }
  func.func @transform_2(%arg0: i32) -> (i32, i32) {
    %c0_i32 = arith.constant 0 : i32
    %c0_i32_0 = arith.constant 0 : i32
    %c0_i32_1 = arith.constant 0 : i32
    return %c0_i32, %c0_i32_0 : i32, i32
  }
  func.func @transform_3(%arg0: i32) -> (i32, i32) {
    %c0_i32 = arith.constant 0 : i32
    %c0_i32_0 = arith.constant 0 : i32
    %c0_i32_1 = arith.constant 0 : i32
    return %c0_i32, %c0_i32_0 : i32, i32
  }
  func.func @transform_4(%arg0: i32) -> (i32, i32) {
    %c0_i32 = arith.constant 0 : i32
    %c0_i32_0 = arith.constant 0 : i32
    %c0_i32_1 = arith.constant 0 : i32
    return %c0_i32, %c0_i32_0 : i32, i32
  }
  func.func @transform_5(%arg0: i32) -> (i32, i32) {
    %c0_i32 = arith.constant 0 : i32
    %c0_i32_0 = arith.constant 0 : i32
    %c0_i32_1 = arith.constant 0 : i32
    return %c0_i32, %c0_i32_0 : i32, i32
  }
  func.func @transform_6(%arg0: i32) -> (i32, i32) {
    %c0_i32 = arith.constant 0 : i32
    %c0_i32_0 = arith.constant 0 : i32
    %c0_i32_1 = arith.constant 0 : i32
    return %c0_i32, %c0_i32_0 : i32, i32
  }
  func.func @transform_7(%arg0: i32) -> (i32, i32) {
    %c0_i32 = arith.constant 0 : i32
    %c0_i32_0 = arith.constant 0 : i32
    %c0_i32_1 = arith.constant 0 : i32
    return %c0_i32, %c0_i32_0 : i32, i32
  }
  func.func @transform_8(%arg0: i32) -> (i32, i32) {
    %c0_i32 = arith.constant 0 : i32
    %c0_i32_0 = arith.constant 0 : i32
    %c0_i32_1 = arith.constant 0 : i32
    return %c0_i32, %c0_i32_0 : i32, i32
  }
  func.func @transform_9(%arg0: i32) -> (i32, i32) {
    %c0_i32 = arith.constant 0 : i32
    %c0_i32_0 = arith.constant 0 : i32
    %c0_i32_1 = arith.constant 0 : i32
    return %c0_i32, %c0_i32_0 : i32, i32
  }
  func.func @transform_10(%arg0: i32) -> (i32, i32) {
    %c0_i32 = arith.constant 0 : i32
    %c0_i32_0 = arith.constant 0 : i32
    %c0_i32_1 = arith.constant 0 : i32
    return %c0_i32, %c0_i32_0 : i32, i32
  }
  func.func @transform_11(%arg0: i32) -> (i32, i32) {
    %c0_i32 = arith.constant 0 : i32
    %c0_i32_0 = arith.constant 0 : i32
    %c0_i32_1 = arith.constant 0 : i32
    return %c0_i32, %c0_i32_0 : i32, i32
  }
  func.func @transform_12(%arg0: i32) -> (i32, i32) {
    %c0_i32 = arith.constant 0 : i32
    %c0_i32_0 = arith.constant 0 : i32
    %c0_i32_1 = arith.constant 0 : i32
    return %c0_i32, %c0_i32_0 : i32, i32
  }
  func.func @transform_13(%arg0: i32) -> (i32, i32) {
    %c0_i32 = arith.constant 0 : i32
    %c0_i32_0 = arith.constant 0 : i32
    %c0_i32_1 = arith.constant 0 : i32
    return %c0_i32, %c0_i32_0 : i32, i32
  }
  func.func @transform_14(%arg0: i32) -> (i32, i32) {
    %c0_i32 = arith.constant 0 : i32
    %c0_i32_0 = arith.constant 0 : i32
    %c0_i32_1 = arith.constant 0 : i32
    return %c0_i32, %c0_i32_0 : i32, i32
  }
  func.func @transform_15(%arg0: i32) -> (i32, i32) {
    %c0_i32 = arith.constant 0 : i32
    %c0_i32_0 = arith.constant 0 : i32
    %c0_i32_1 = arith.constant 0 : i32
    return %c0_i32, %c0_i32_0 : i32, i32
  }
  func.func @transform_16(%arg0: i32) -> (i32, i32, i32) {
    %c0_i32 = arith.constant 0 : i32
    %c0_i32_0 = arith.constant 0 : i32
    %c0_i32_1 = arith.constant 0 : i32
    return %arg0, %c0_i32, %c0_i32_0 : i32, i32, i32
  }
}

</mosaic_0001>

<llo_original>
// kernel: tpu_custom_call.1
$region0: #{tpu_custom_call.1}
  #allocation0 [shape = 'u32[]', space=smem, size = 0x4, offset = 0x4, fixed_abs, tag = 'smem constant byte address 0x4 - core index']
  #allocation1 [shape = 'u32[72,128]{1,0:T(1,128)}', space=vmem, size = 0x9000, scoped, tag = 'internal scratch']
  #allocation2 [shape = 'f32[10,10,4]{2,1,0:T(8,128)}', space=vmem, size = 0x14000, scoped, tag = 'scratch operand']
  #allocation3 [shape = 'f32[10,10,8]{2,1,0:T(8,128)}', space=vmem, size = 0x14000, scoped, tag = 'scratch operand']
  #allocation4 [shape = 'f32[64,36]{1,0:T(8,128)}', space=vmem, size = 0x8000, scoped, tag = 'scratch operand']
  #allocation5 [shape = 'f32[64,72]{1,0:T(8,128)}', space=vmem, size = 0x8000, scoped, tag = 'scratch operand']
  %s0 = inlined_call_operand.vmem [shape: f32[2,16,16,4], index: 0, kind: input, shape index: {}]
  %s1 = inlined_call_operand.vmem [shape: f32[2,1,32], index: 1, kind: input, shape index: {}]
  %s2 = inlined_call_operand.vmem [shape: f32[36,4], index: 2, kind: input, shape index: {}]
  %s3 = inlined_call_operand.vmem [shape: f32[1,4], index: 3, kind: input, shape index: {}]
  %s4 = inlined_call_operand.vmem [shape: f32[1,4], index: 4, kind: input, shape index: {}]
  %s5 = inlined_call_operand.vmem [shape: f32[36,4], index: 5, kind: input, shape index: {}]
  %s6 = inlined_call_operand.vmem [shape: f32[1,4], index: 6, kind: input, shape index: {}]
  %s7 = inlined_call_operand.vmem [shape: f32[1,4], index: 7, kind: input, shape index: {}]
  %s8 = inlined_call_operand.vmem [shape: f32[36,8], index: 8, kind: input, shape index: {}]
  %s9 = inlined_call_operand.vmem [shape: f32[1,8], index: 9, kind: input, shape index: {}]
  %s10 = inlined_call_operand.vmem [shape: f32[1,8], index: 10, kind: input, shape index: {}]
  %s11 = inlined_call_operand.vmem [shape: f32[72,8], index: 11, kind: input, shape index: {}]
  %s12 = inlined_call_operand.vmem [shape: f32[1,8], index: 12, kind: input, shape index: {}]
  %s13 = inlined_call_operand.vmem [shape: f32[1,8], index: 13, kind: input, shape index: {}]
  %s14 = inlined_call_operand.vmem [shape: f32[32,8], index: 14, kind: input, shape index: {}]
  %s15 = inlined_call_operand.vmem [shape: f32[1,8], index: 15, kind: input, shape index: {}]
  %s16 = inlined_call_operand.vmem [shape: f32[2,64,8], index: 16, kind: output, shape index: {}]
  %s17 = sld [smem:[#allocation0]]
  $region97: #{tpu_custom_call.1} parent=0
    _
  %s19 = ssub.s32 1, %s17
  %s20 = scalar_select 0, %s19, %s17
  loop: start=0, step=1, limit=4
  $region2: #{tpu_custom_call.1} parent=0 // loop_pre_header
    _
  $region3: #{tpu_custom_call.1} parent=0 // loop_header
    %s22 = sphi 0, %s26
    %p23 = scmp.ge.s32.totalorder %s22, 4
    %s32 = sphi 0, %s34
    %s35 = sphi 0, %s32
    %s36 = sphi 0, %s35
    %s52 = sphi 0, %s36
    %s58 = sphi 0, %s60
    %s61 = sphi 0, %s58
    %s62 = sphi 0, %s61
    %s78 = sphi 0, %s62
    %s82 = sphi 0, %s82
    %s84 = sphi 0, %s82
    %s85 = sphi 0, %s84
    %s99 = sphi 0, %s85
    %s103 = sphi 0, %s103
    %s105 = sphi 0, %s103
    %s106 = sphi 0, %s105
    %s120 = sphi 0, %s106
    %s124 = sphi 0, %s124
    %s126 = sphi 0, %s124
    %s127 = sphi 0, %s126
    %s141 = sphi 0, %s127
    %s145 = sphi 0, %s145
    %s147 = sphi 0, %s145
    %s148 = sphi 0, %s147
    %s162 = sphi 0, %s148
    %s166 = sphi 0, %s166
    %s168 = sphi 0, %s166
    %s169 = sphi 0, %s168
    %s183 = sphi 0, %s169
    %s187 = sphi 0, %s187
    %s189 = sphi 0, %s187
    %s190 = sphi 0, %s189
    %s204 = sphi 0, %s190
    %s208 = sphi 0, %s208
    %s210 = sphi 0, %s208
    %s211 = sphi 0, %s210
    %s225 = sphi 0, %s211
    %s229 = sphi 0, %s229
    %s231 = sphi 0, %s229
    %s232 = sphi 0, %s231
    %s246 = sphi 0, %s232
    %s250 = sphi 0, %s250
    %s252 = sphi 0, %s250
    %s253 = sphi 0, %s252
    %s267 = sphi 0, %s253
    %s271 = sphi 0, %s271
    %s273 = sphi 0, %s271
    %s274 = sphi 0, %s273
    %s288 = sphi 0, %s274
    %s292 = sphi 0, %s292
    %s294 = sphi 0, %s292
    %s295 = sphi 0, %s294
    %s309 = sphi 0, %s295
    %s313 = sphi 0, %s313
    %s315 = sphi 0, %s313
    %s316 = sphi 0, %s315
    %s330 = sphi 0, %s316
    %s334 = sphi 0, %s334
    %s336 = sphi 0, %s334
    %s337 = sphi 0, %s336
    %s351 = sphi 0, %s337
    %s355 = sphi 0, %s355
    %s357 = sphi 0, %s355
    %s358 = sphi 0, %s357
    %s372 = sphi 0, %s358
    %s378 = sphi 0, %s380
    %s381 = sphi 0, %s378
    %s382 = sphi 0, %s381
    %s398 = sphi 0, %s382
  $region4: #{tpu_custom_call.1} parent=0 // loop_header_branch
    %25 = sbr.rel (%p23) target = $region8
  $region5: #{tpu_custom_call.1} parent=0 // loop_body
    %s27 = ssub.s32 %s22, 1
    %s28 = ssub.s32 %s22, 2
    %s29 = sadd.s32 %s22, 1
    %s30 = ssub.s32 %s22, %s29
    %p31 = scmp.eq.s32.totalorder %s30, 0
    %s33 = sadd.s32 %s32, 1
    %s34 = scalar_select %p31, %s32, %s33
    %p37 = pneg %p31
    %p38 = scmp.eq.s32.totalorder %s22, 1
    %p39 = por %p37, %p38
    %p40 = scmp.ne.s32.totalorder %s32, %s35
    %p41 = scmp.eq.s32.totalorder %s22, 0
    %p42 = por %p40, %p41
    %p43 = scmp.ne.s32.totalorder %s32, %s35
    %p44 = scmp.eq.s32.totalorder %s27, 1
    %p45 = por %p43, %p44
    %p46 = scmp.ne.s32.totalorder %s35, %s36
    %p47 = scmp.eq.s32.totalorder %s27, 0
    %p48 = por %p46, %p47
    %p49 = scmp.ne.s32.totalorder %s35, %s36
    %p50 = scmp.eq.s32.totalorder %s28, 1
    %p51 = por %p49, %p50
    %p53 = scmp.ne.s32.totalorder %s36, %s52
    %p54 = scmp.eq.s32.totalorder %s28, 0
    %p55 = por %p53, %p54
    %s56 = ssub.s32 %s22, %s29
    %p57 = scmp.eq.s32.totalorder %s56, 0
    %s59 = sadd.s32 %s58, 1
    %s60 = scalar_select %p57, %s58, %s59
    %p63 = pneg %p57
    %p64 = scmp.eq.s32.totalorder %s22, 1
    %p65 = por %p63, %p64
    %p66 = scmp.ne.s32.totalorder %s58, %s61
    %p67 = scmp.eq.s32.totalorder %s22, 0
    %p68 = por %p66, %p67
    %p69 = scmp.ne.s32.totalorder %s58, %s61
    %p70 = scmp.eq.s32.totalorder %s27, 1
    %p71 = por %p69, %p70
    %p72 = scmp.ne.s32.totalorder %s61, %s62
    %p73 = scmp.eq.s32.totalorder %s27, 0
    %p74 = por %p72, %p73
    %p75 = scmp.ne.s32.totalorder %s61, %s62
    %p76 = scmp.eq.s32.totalorder %s28, 1
    %p77 = por %p75, %p76
    %p79 = scmp.ne.s32.totalorder %s62, %s78
    %p80 = scmp.eq.s32.totalorder %s28, 0
    %p81 = por %p79, %p80
    %s83 = sadd.s32 %s82, 1
    %p86 = scmp.eq.s32.totalorder %s22, 1
    %p87 = scmp.ne.s32.totalorder %s82, %s84
    %p88 = scmp.eq.s32.totalorder %s22, 0
    %p89 = por %p87, %p88
    %p90 = scmp.ne.s32.totalorder %s82, %s84
    %p91 = scmp.eq.s32.totalorder %s27, 1
    %p92 = por %p90, %p91
    %p93 = scmp.ne.s32.totalorder %s84, %s85
    %p94 = scmp.eq.s32.totalorder %s27, 0
    %p95 = por %p93, %p94
    %p96 = scmp.ne.s32.totalorder %s84, %s85
    %p97 = scmp.eq.s32.totalorder %s28, 1
    %p98 = por %p96, %p97
    %p100 = scmp.ne.s32.totalorder %s85, %s99
    %p101 = scmp.eq.s32.totalorder %s28, 0
    %p102 = por %p100, %p101
    %s104 = sadd.s32 %s103, 1
    %p107 = scmp.eq.s32.totalorder %s22, 1
    %p108 = scmp.ne.s32.totalorder %s103, %s105
    %p109 = scmp.eq.s32.totalorder %s22, 0
    %p110 = por %p108, %p109
    %p111 = scmp.ne.s32.totalorder %s103, %s105
    %p112 = scmp.eq.s32.totalorder %s27, 1
    %p113 = por %p111, %p112
    %p114 = scmp.ne.s32.totalorder %s105, %s106
    %p115 = scmp.eq.s32.totalorder %s27, 0
    %p116 = por %p114, %p115
    %p117 = scmp.ne.s32.totalorder %s105, %s106
    %p118 = scmp.eq.s32.totalorder %s28, 1
    %p119 = por %p117, %p118
    %p121 = scmp.ne.s32.totalorder %s106, %s120
    %p122 = scmp.eq.s32.totalorder %s28, 0
    %p123 = por %p121, %p122
    %s125 = sadd.s32 %s124, 1
    %p128 = scmp.eq.s32.totalorder %s22, 1
    %p129 = scmp.ne.s32.totalorder %s124, %s126
    %p130 = scmp.eq.s32.totalorder %s22, 0
    %p131 = por %p129, %p130
    %p132 = scmp.ne.s32.totalorder %s124, %s126
    %p133 = scmp.eq.s32.totalorder %s27, 1
    %p134 = por %p132, %p133
    %p135 = scmp.ne.s32.totalorder %s126, %s127
    %p136 = scmp.eq.s32.totalorder %s27, 0
    %p137 = por %p135, %p136
    %p138 = scmp.ne.s32.totalorder %s126, %s127
    %p139 = scmp.eq.s32.totalorder %s28, 1
    %p140 = por %p138, %p139
    %p142 = scmp.ne.s32.totalorder %s127, %s141
    %p143 = scmp.eq.s32.totalorder %s28, 0
    %p144 = por %p142, %p143
    %s146 = sadd.s32 %s145, 1
    %p149 = scmp.eq.s32.totalorder %s22, 1
    %p150 = scmp.ne.s32.totalorder %s145, %s147
    %p151 = scmp.eq.s32.totalorder %s22, 0
    %p152 = por %p150, %p151
    %p153 = scmp.ne.s32.totalorder %s145, %s147
    %p154 = scmp.eq.s32.totalorder %s27, 1
    %p155 = por %p153, %p154
    %p156 = scmp.ne.s32.totalorder %s147, %s148
    %p157 = scmp.eq.s32.totalorder %s27, 0
    %p158 = por %p156, %p157
    %p159 = scmp.ne.s32.totalorder %s147, %s148
    %p160 = scmp.eq.s32.totalorder %s28, 1
    %p161 = por %p159, %p160
    %p163 = scmp.ne.s32.totalorder %s148, %s162
    %p164 = scmp.eq.s32.totalorder %s28, 0
    %p165 = por %p163, %p164
    %s167 = sadd.s32 %s166, 1
    %p170 = scmp.eq.s32.totalorder %s22, 1
    %p171 = scmp.ne.s32.totalorder %s166, %s168
    %p172 = scmp.eq.s32.totalorder %s22, 0
    %p173 = por %p171, %p172
    %p174 = scmp.ne.s32.totalorder %s166, %s168
    %p175 = scmp.eq.s32.totalorder %s27, 1
    %p176 = por %p174, %p175
    %p177 = scmp.ne.s32.totalorder %s168, %s169
    %p178 = scmp.eq.s32.totalorder %s27, 0
    %p179 = por %p177, %p178
    %p180 = scmp.ne.s32.totalorder %s168, %s169
    %p181 = scmp.eq.s32.totalorder %s28, 1
    %p182 = por %p180, %p181
    %p184 = scmp.ne.s32.totalorder %s169, %s183
    %p185 = scmp.eq.s32.totalorder %s28, 0
    %p186 = por %p184, %p185
    %s188 = sadd.s32 %s187, 1
    %p191 = scmp.eq.s32.totalorder %s22, 1
    %p192 = scmp.ne.s32.totalorder %s187, %s189
    %p193 = scmp.eq.s32.totalorder %s22, 0
    %p194 = por %p192, %p193
    %p195 = scmp.ne.s32.totalorder %s187, %s189
    %p196 = scmp.eq.s32.totalorder %s27, 1
    %p197 = por %p195, %p196
    %p198 = scmp.ne.s32.totalorder %s189, %s190
    %p199 = scmp.eq.s32.totalorder %s27, 0
    %p200 = por %p198, %p199
    %p201 = scmp.ne.s32.totalorder %s189, %s190
    %p202 = scmp.eq.s32.totalorder %s28, 1
    %p203 = por %p201, %p202
    %p205 = scmp.ne.s32.totalorder %s190, %s204
    %p206 = scmp.eq.s32.totalorder %s28, 0
    %p207 = por %p205, %p206
    %s209 = sadd.s32 %s208, 1
    %p212 = scmp.eq.s32.totalorder %s22, 1
    %p213 = scmp.ne.s32.totalorder %s208, %s210
    %p214 = scmp.eq.s32.totalorder %s22, 0
    %p215 = por %p213, %p214
    %p216 = scmp.ne.s32.totalorder %s208, %s210
    %p217 = scmp.eq.s32.totalorder %s27, 1
    %p218 = por %p216, %p217
    %p219 = scmp.ne.s32.totalorder %s210, %s211
    %p220 = scmp.eq.s32.totalorder %s27, 0
    %p221 = por %p219, %p220
    %p222 = scmp.ne.s32.totalorder %s210, %s211
    %p223 = scmp.eq.s32.totalorder %s28, 1
    %p224 = por %p222, %p223
    %p226 = scmp.ne.s32.totalorder %s211, %s225
    %p227 = scmp.eq.s32.totalorder %s28, 0
    %p228 = por %p226, %p227
    %s230 = sadd.s32 %s229, 1
    %p233 = scmp.eq.s32.totalorder %s22, 1
    %p234 = scmp.ne.s32.totalorder %s229, %s231
    %p235 = scmp.eq.s32.totalorder %s22, 0
    %p236 = por %p234, %p235
    %p237 = scmp.ne.s32.totalorder %s229, %s231
    %p238 = scmp.eq.s32.totalorder %s27, 1
    %p239 = por %p237, %p238
    %p240 = scmp.ne.s32.totalorder %s231, %s232
    %p241 = scmp.eq.s32.totalorder %s27, 0
    %p242 = por %p240, %p241
    %p243 = scmp.ne.s32.totalorder %s231, %s232
    %p244 = scmp.eq.s32.totalorder %s28, 1
    %p245 = por %p243, %p244
    %p247 = scmp.ne.s32.totalorder %s232, %s246
    %p248 = scmp.eq.s32.totalorder %s28, 0
    %p249 = por %p247, %p248
    %s251 = sadd.s32 %s250, 1
    %p254 = scmp.eq.s32.totalorder %s22, 1
    %p255 = scmp.ne.s32.totalorder %s250, %s252
    %p256 = scmp.eq.s32.totalorder %s22, 0
    %p257 = por %p255, %p256
    %p258 = scmp.ne.s32.totalorder %s250, %s252
    %p259 = scmp.eq.s32.totalorder %s27, 1
    %p260 = por %p258, %p259
    %p261 = scmp.ne.s32.totalorder %s252, %s253
    %p262 = scmp.eq.s32.totalorder %s27, 0
    %p263 = por %p261, %p262
    %p264 = scmp.ne.s32.totalorder %s252, %s253
    %p265 = scmp.eq.s32.totalorder %s28, 1
    %p266 = por %p264, %p265
    %p268 = scmp.ne.s32.totalorder %s253, %s267
    %p269 = scmp.eq.s32.totalorder %s28, 0
    %p270 = por %p268, %p269
    %s272 = sadd.s32 %s271, 1
    %p275 = scmp.eq.s32.totalorder %s22, 1
    %p276 = scmp.ne.s32.totalorder %s271, %s273
    %p277 = scmp.eq.s32.totalorder %s22, 0
    %p278 = por %p276, %p277
    %p279 = scmp.ne.s32.totalorder %s271, %s273
    %p280 = scmp.eq.s32.totalorder %s27, 1
    %p281 = por %p279, %p280
    %p282 = scmp.ne.s32.totalorder %s273, %s274
    %p283 = scmp.eq.s32.totalorder %s27, 0
    %p284 = por %p282, %p283
    %p285 = scmp.ne.s32.totalorder %s273, %s274
    %p286 = scmp.eq.s32.totalorder %s28, 1
    %p287 = por %p285, %p286
    %p289 = scmp.ne.s32.totalorder %s274, %s288
    %p290 = scmp.eq.s32.totalorder %s28, 0
    %p291 = por %p289, %p290
    %s293 = sadd.s32 %s292, 1
    %p296 = scmp.eq.s32.totalorder %s22, 1
    %p297 = scmp.ne.s32.totalorder %s292, %s294
    %p298 = scmp.eq.s32.totalorder %s22, 0
    %p299 = por %p297, %p298
    %p300 = scmp.ne.s32.totalorder %s292, %s294
    %p301 = scmp.eq.s32.totalorder %s27, 1
    %p302 = por %p300, %p301
    %p303 = scmp.ne.s32.totalorder %s294, %s295
    %p304 = scmp.eq.s32.totalorder %s27, 0
    %p305 = por %p303, %p304
    %p306 = scmp.ne.s32.totalorder %s294, %s295
    %p307 = scmp.eq.s32.totalorder %s28, 1
    %p308 = por %p306, %p307
    %p310 = scmp.ne.s32.totalorder %s295, %s309
    %p311 = scmp.eq.s32.totalorder %s28, 0
    %p312 = por %p310, %p311
    %s314 = sadd.s32 %s313, 1
    %p317 = scmp.eq.s32.totalorder %s22, 1
    %p318 = scmp.ne.s32.totalorder %s313, %s315
    %p319 = scmp.eq.s32.totalorder %s22, 0
    %p320 = por %p318, %p319
    %p321 = scmp.ne.s32.totalorder %s313, %s315
    %p322 = scmp.eq.s32.totalorder %s27, 1
    %p323 = por %p321, %p322
    %p324 = scmp.ne.s32.totalorder %s315, %s316
    %p325 = scmp.eq.s32.totalorder %s27, 0
    %p326 = por %p324, %p325
    %p327 = scmp.ne.s32.totalorder %s315, %s316
    %p328 = scmp.eq.s32.totalorder %s28, 1
    %p329 = por %p327, %p328
    %p331 = scmp.ne.s32.totalorder %s316, %s330
    %p332 = scmp.eq.s32.totalorder %s28, 0
    %p333 = por %p331, %p332
    %s335 = sadd.s32 %s334, 1
    %p338 = scmp.eq.s32.totalorder %s22, 1
    %p339 = scmp.ne.s32.totalorder %s334, %s336
    %p340 = scmp.eq.s32.totalorder %s22, 0
    %p341 = por %p339, %p340
    %p342 = scmp.ne.s32.totalorder %s334, %s336
    %p343 = scmp.eq.s32.totalorder %s27, 1
    %p344 = por %p342, %p343
    %p345 = scmp.ne.s32.totalorder %s336, %s337
    %p346 = scmp.eq.s32.totalorder %s27, 0
    %p347 = por %p345, %p346
    %p348 = scmp.ne.s32.totalorder %s336, %s337
    %p349 = scmp.eq.s32.totalorder %s28, 1
    %p350 = por %p348, %p349
    %p352 = scmp.ne.s32.totalorder %s337, %s351
    %p353 = scmp.eq.s32.totalorder %s28, 0
    %p354 = por %p352, %p353
    %s356 = sadd.s32 %s355, 1
    %p359 = scmp.eq.s32.totalorder %s22, 1
    %p360 = scmp.ne.s32.totalorder %s355, %s357
    %p361 = scmp.eq.s32.totalorder %s22, 0
    %p362 = por %p360, %p361
    %p363 = scmp.ne.s32.totalorder %s355, %s357
    %p364 = scmp.eq.s32.totalorder %s27, 1
    %p365 = por %p363, %p364
    %p366 = scmp.ne.s32.totalorder %s357, %s358
    %p367 = scmp.eq.s32.totalorder %s27, 0
    %p368 = por %p366, %p367
    %p369 = scmp.ne.s32.totalorder %s357, %s358
    %p370 = scmp.eq.s32.totalorder %s28, 1
    %p371 = por %p369, %p370
    %p373 = scmp.ne.s32.totalorder %s358, %s372
    %p374 = scmp.eq.s32.totalorder %s28, 0
    %p375 = por %p373, %p374
    %s376 = ssub.s32 %s22, %s29
    %p377 = scmp.eq.s32.totalorder %s376, 0
    %s379 = sadd.s32 %s378, 1
    %s380 = scalar_select %p377, %s378, %s379
    %p383 = pneg %p377
    %p384 = scmp.eq.s32.totalorder %s22, 1
    %p385 = por %p383, %p384
    %p386 = scmp.ne.s32.totalorder %s378, %s381
    %p387 = scmp.eq.s32.totalorder %s22, 0
    %p388 = por %p386, %p387
    %p389 = scmp.ne.s32.totalorder %s378, %s381
    %p390 = scmp.eq.s32.totalorder %s27, 1
    %p391 = por %p389, %p390
    %p392 = scmp.ne.s32.totalorder %s381, %s382
    %p393 = scmp.eq.s32.totalorder %s27, 0
    %p394 = por %p392, %p393
    %p395 = scmp.ne.s32.totalorder %s381, %s382
    %p396 = scmp.eq.s32.totalorder %s28, 1
    %p397 = por %p395, %p396
    %p399 = scmp.ne.s32.totalorder %s382, %s398
    %p400 = scmp.eq.s32.totalorder %s28, 0
    %p401 = por %p399, %p400
    %p402 = scmp.le.s32.totalorder 1, %s22
    %p403 = scmp.lt.s32.totalorder %s22, 3
    %p404 = pnand %p402, %p403
    %p405 = pneg %p404
    // Predicated region
    $region9: #{tpu_custom_call.1} parent=5 // pred_check
      _
    $region10: #{tpu_custom_call.1} parent=5 // pred_check_branch
      %407 = sbr.rel (%p404) target = $region12
    $region11: #{tpu_custom_call.1} parent=5 // pred_region
      %s408 = ssub.s32 %s22, 1
      // Predicated region
      $region13: #{tpu_custom_call.1} parent=11 // pred_check
        %p409 = pneg %p95
      $region14: #{tpu_custom_call.1} parent=11 // pred_check_branch
        %411 = sbr.rel (%p409) target = $region16
      $region15: #{tpu_custom_call.1} parent=11 // pred_region
        _
      $region16: #{tpu_custom_call.1} parent=11 // pred_fallthru
        _
      // Predicated region
      $region17: #{tpu_custom_call.1} parent=11 // pred_check
        %p412 = pneg %p116
      $region18: #{tpu_custom_call.1} parent=11 // pred_check_branch
        %414 = sbr.rel (%p412) target = $region20
      $region19: #{tpu_custom_call.1} parent=11 // pred_region
        _
      $region20: #{tpu_custom_call.1} parent=11 // pred_fallthru
        _
      // Predicated region
      $region21: #{tpu_custom_call.1} parent=11 // pred_check
        %p415 = pneg %p137
      $region22: #{tpu_custom_call.1} parent=11 // pred_check_branch
        %417 = sbr.rel (%p415) target = $region24
      $region23: #{tpu_custom_call.1} parent=11 // pred_region
        _
      $region24: #{tpu_custom_call.1} parent=11 // pred_fallthru
        _
      // Predicated region
      $region25: #{tpu_custom_call.1} parent=11 // pred_check
        %p418 = pneg %p158
      $region26: #{tpu_custom_call.1} parent=11 // pred_check_branch
        %420 = sbr.rel (%p418) target = $region28
      $region27: #{tpu_custom_call.1} parent=11 // pred_region
        _
      $region28: #{tpu_custom_call.1} parent=11 // pred_fallthru
        _
      // Predicated region
      $region29: #{tpu_custom_call.1} parent=11 // pred_check
        %p421 = pneg %p179
      $region30: #{tpu_custom_call.1} parent=11 // pred_check_branch
        %423 = sbr.rel (%p421) target = $region32
      $region31: #{tpu_custom_call.1} parent=11 // pred_region
        _
      $region32: #{tpu_custom_call.1} parent=11 // pred_fallthru
        _
      // Predicated region
      $region33: #{tpu_custom_call.1} parent=11 // pred_check
        %p424 = pneg %p200
      $region34: #{tpu_custom_call.1} parent=11 // pred_check_branch
        %426 = sbr.rel (%p424) target = $region36
      $region35: #{tpu_custom_call.1} parent=11 // pred_region
        _
      $region36: #{tpu_custom_call.1} parent=11 // pred_fallthru
        _
      // Predicated region
      $region37: #{tpu_custom_call.1} parent=11 // pred_check
        %p427 = pneg %p221
      $region38: #{tpu_custom_call.1} parent=11 // pred_check_branch
        %429 = sbr.rel (%p427) target = $region40
      $region39: #{tpu_custom_call.1} parent=11 // pred_region
        _
      $region40: #{tpu_custom_call.1} parent=11 // pred_fallthru
        _
      // Predicated region
      $region41: #{tpu_custom_call.1} parent=11 // pred_check
        %p430 = pneg %p242
      $region42: #{tpu_custom_call.1} parent=11 // pred_check_branch
        %432 = sbr.rel (%p430) target = $region44
      $region43: #{tpu_custom_call.1} parent=11 // pred_region
        _
      $region44: #{tpu_custom_call.1} parent=11 // pred_fallthru
        _
      // Predicated region
      $region45: #{tpu_custom_call.1} parent=11 // pred_check
        %p433 = pneg %p263
      $region46: #{tpu_custom_call.1} parent=11 // pred_check_branch
        %435 = sbr.rel (%p433) target = $region48
      $region47: #{tpu_custom_call.1} parent=11 // pred_region
        _
      $region48: #{tpu_custom_call.1} parent=11 // pred_fallthru
        _
      // Predicated region
      $region49: #{tpu_custom_call.1} parent=11 // pred_check
        %p436 = pneg %p284
      $region50: #{tpu_custom_call.1} parent=11 // pred_check_branch
        %438 = sbr.rel (%p436) target = $region52
      $region51: #{tpu_custom_call.1} parent=11 // pred_region
        _
      $region52: #{tpu_custom_call.1} parent=11 // pred_fallthru
        _
      // Predicated region
      $region53: #{tpu_custom_call.1} parent=11 // pred_check
        %p439 = pneg %p305
      $region54: #{tpu_custom_call.1} parent=11 // pred_check_branch
        %441 = sbr.rel (%p439) target = $region56
      $region55: #{tpu_custom_call.1} parent=11 // pred_region
        _
      $region56: #{tpu_custom_call.1} parent=11 // pred_fallthru
        _
      // Predicated region
      $region57: #{tpu_custom_call.1} parent=11 // pred_check
        %p442 = pneg %p326
      $region58: #{tpu_custom_call.1} parent=11 // pred_check_branch
        %444 = sbr.rel (%p442) target = $region60
      $region59: #{tpu_custom_call.1} parent=11 // pred_region
        _
      $region60: #{tpu_custom_call.1} parent=11 // pred_fallthru
        _
      // Predicated region
      $region61: #{tpu_custom_call.1} parent=11 // pred_check
        %p445 = pneg %p347
      $region62: #{tpu_custom_call.1} parent=11 // pred_check_branch
        %447 = sbr.rel (%p445) target = $region64
      $region63: #{tpu_custom_call.1} parent=11 // pred_region
        _
      $region64: #{tpu_custom_call.1} parent=11 // pred_fallthru
        _
      // Predicated region
      $region65: #{tpu_custom_call.1} parent=11 // pred_check
        %p448 = pneg %p368
      $region66: #{tpu_custom_call.1} parent=11 // pred_check_branch
        %450 = sbr.rel (%p448) target = $region68
      $region67: #{tpu_custom_call.1} parent=11 // pred_region
        _
      $region68: #{tpu_custom_call.1} parent=11 // pred_fallthru
        _
    $region12: #{tpu_custom_call.1} parent=5 // pred_fallthru
      _
    %p451 = scmp.lt.s32.totalorder %s22, 2
    // Predicated region
    $region69: #{tpu_custom_call.1} parent=5 // pred_check
      %p452 = pneg %p451
    $region70: #{tpu_custom_call.1} parent=5 // pred_check_branch
      %454 = sbr.rel (%p452) target = $region72
    $region71: #{tpu_custom_call.1} parent=5 // pred_region
      // Predicated region
      $region73: #{tpu_custom_call.1} parent=71 // pred_check
        %p455 = pneg %p42
      $region74: #{tpu_custom_call.1} parent=71 // pred_check_branch
        %457 = sbr.rel (%p455) target = $region76
      $region75: #{tpu_custom_call.1} parent=71 // pred_region
        %p458 = scmp.lt.s32.totalorder %s22, 1
        %s459 = scalar_select %p458, %s22, 1
        %s460 = smul.addr %s459, 32
        %s461 = smul.addr %s460, 8
        %s462 = scalar_lea.vmem %s0, %s461
      $region76: #{tpu_custom_call.1} parent=71 // pred_fallthru
        _
      // Predicated region
      $region77: #{tpu_custom_call.1} parent=71 // pred_check
        %p463 = pneg %p68
      $region78: #{tpu_custom_call.1} parent=71 // pred_check_branch
        %465 = sbr.rel (%p463) target = $region80
      $region79: #{tpu_custom_call.1} parent=71 // pred_region
        %p466 = scmp.lt.s32.totalorder %s22, 1
        %s467 = scalar_select %p466, %s22, 1
        %s468 = scalar_lea.vmem %s1, %s467
      $region80: #{tpu_custom_call.1} parent=71 // pred_fallthru
        _
    $region72: #{tpu_custom_call.1} parent=5 // pred_fallthru
      _
    %p469 = scmp.le.s32.totalorder 1, %s22
    %p470 = scmp.lt.s32.totalorder %s22, 3
    %p471 = pnand %p469, %p470
    %p472 = pneg %p471
    // Predicated region
    $region81: #{tpu_custom_call.1} parent=5 // pred_check
      _
    $region82: #{tpu_custom_call.1} parent=5 // pred_check_branch
      %474 = sbr.rel (%p471) target = $region84
    $region83: #{tpu_custom_call.1} parent=5 // pred_region
      %s475 = ssub.s32 %s22, 1
      %p476 = scmp.lt.s32.totalorder %s27, 1
      %s477 = scalar_select %p476, %s27, 1
      %s478 = smul.addr %s477, 32
      %s479 = smul.addr %s478, 8
      %s480 = scalar_lea.vmem %s0, %s479
      %p481 = pneg %p48
      %p482 = pneg %p45
      %p483 = scmp.lt.s32.totalorder %s27, 1
      %s484 = scalar_select %p483, %s27, 1
      %s485 = scalar_lea.vmem %s1, %s484
      %p486 = pneg %p74
      %p487 = pneg %p71
      %p488 = pneg %p95
      %p489 = pneg %p92
      %p490 = pneg %p116
      %p491 = pneg %p113
      %p492 = pneg %p137
      %p493 = pneg %p134
      %p494 = pneg %p158
      %p495 = pneg %p155
      %p496 = pneg %p179
      %p497 = pneg %p176
      %p498 = pneg %p200
      %p499 = pneg %p197
      %p500 = pneg %p221
      %p501 = pneg %p218
      %p502 = pneg %p242
      %p503 = pneg %p239
      %p504 = pneg %p263
      %p505 = pneg %p260
      %p506 = pneg %p284
      %p507 = pneg %p281
      %p508 = pneg %p305
      %p509 = pneg %p302
      %p510 = pneg %p326
      %p511 = pneg %p323
      %p512 = pneg %p347
      %p513 = pneg %p344
      %p514 = pneg %p368
      %p515 = pneg %p365
      %p516 = pneg %p394
      %p517 = pneg %p391
      %p518 = scmp.lt.s32.totalorder %s27, 1
      %s519 = scalar_select %p518, %s27, 1
      %s520 = smul.addr %s519, 8
      %s521 = smul.addr %s520, 8
      %s522 = scalar_lea.vmem %s16, %s521
      %p523 = scmp.lt.s32.totalorder %s27, 1
      %s524 = scalar_select %p523, %s27, 1
      %s525 = smul.addr %s524, 32
      %s526 = smul.addr %s525, 8
      %s527 = scalar_lea.vmem %s0, %s526
      %p528 = scmp.lt.s32.totalorder %s27, 1
      %s529 = scalar_select %p528, %s27, 1
      %s530 = scalar_lea.vmem %s1, %s529
      %p531 = scmp.lt.s32.totalorder %s27, 1
      %s532 = scalar_select %p531, %s27, 1
      %s533 = smul.addr %s532, 8
      %s534 = smul.addr %s533, 8
      %s535 = scalar_lea.vmem %s16, %s534
      %v536 = vld [vmem:[%s527] sm:$0xff]
      %v537 = vld [vmem:[%s527 + $0x8] sm:$0xff]
      %v538 = vld [vmem:[%s527 + $0x10] sm:$0xff]
      %v539 = vld [vmem:[%s527 + $0x18] sm:$0xff]
      %v540 = vld [vmem:[%s527 + $0x20] sm:$0xff]
      %v541 = vld [vmem:[%s527 + $0x28] sm:$0xff]
      %v542 = vld [vmem:[%s527 + $0x30] sm:$0xff]
      %v543 = vld [vmem:[%s527 + $0x38] sm:$0xff]
      %v544 = vld [vmem:[%s527 + $0x40] sm:$0xff]
      %v545 = vld [vmem:[%s527 + $0x48] sm:$0xff]
      %v546 = vld [vmem:[%s527 + $0x50] sm:$0xff]
      %v547 = vld [vmem:[%s527 + $0x58] sm:$0xff]
      %v548 = vld [vmem:[%s527 + $0x60] sm:$0xff]
      %v549 = vld [vmem:[%s527 + $0x68] sm:$0xff]
      %v550 = vld [vmem:[%s527 + $0x70] sm:$0xff]
      %v551 = vld [vmem:[%s527 + $0x78] sm:$0xff]
      %v552 = vld [vmem:[%s527 + $0x80] sm:$0xff]
      %v553 = vld [vmem:[%s527 + $0x88] sm:$0xff]
      %v554 = vld [vmem:[%s527 + $0x90] sm:$0xff]
      %v555 = vld [vmem:[%s527 + $0x98] sm:$0xff]
      %v556 = vld [vmem:[%s527 + $0xa0] sm:$0xff]
      %v557 = vld [vmem:[%s527 + $0xa8] sm:$0xff]
      %v558 = vld [vmem:[%s527 + $0xb0] sm:$0xff]
      %v559 = vld [vmem:[%s527 + $0xb8] sm:$0xff]
      %v560 = vld [vmem:[%s527 + $0xc0] sm:$0xff]
      %v561 = vld [vmem:[%s527 + $0xc8] sm:$0xff]
      %v562 = vld [vmem:[%s527 + $0xd0] sm:$0xff]
      %v563 = vld [vmem:[%s527 + $0xd8] sm:$0xff]
      %v564 = vld [vmem:[%s527 + $0xe0] sm:$0xff]
      %v565 = vld [vmem:[%s527 + $0xe8] sm:$0xff]
      %v566 = vld [vmem:[%s527 + $0xf0] sm:$0xff]
      %v567 = vld [vmem:[%s527 + $0xf8] sm:$0xff]
      %v568 = vmax.f32 %v536, %v538
      %v569 = vmax.f32 %v537, %v539
      %v570 = vmax.f32 %v540, %v542
      %v571 = vmax.f32 %v541, %v543
      %v572 = vmax.f32 %v544, %v546
      %v573 = vmax.f32 %v545, %v547
      %v574 = vmax.f32 %v548, %v550
      %v575 = vmax.f32 %v549, %v551
      %v576 = vmax.f32 %v552, %v554
      %v577 = vmax.f32 %v553, %v555
      %v578 = vmax.f32 %v556, %v558
      %v579 = vmax.f32 %v557, %v559
      %v580 = vmax.f32 %v560, %v562
      %v581 = vmax.f32 %v561, %v563
      %v582 = vmax.f32 %v564, %v566
      %v583 = vmax.f32 %v565, %v567
      %v600 = vrot.slane %v568, 2
      %v601 = vrot.slane %v568, 4
      %v602 = vrot.slane %v568, 6
      %v603 = vrot.slane %v569, 2
      %v604 = vrot.slane %v569, 4
      %v605 = vrot.slane %v569, 6
      %v606 = vrot.slane %v570, 2
      %v607 = vrot.slane %v570, 4
      %v608 = vrot.slane %v570, 6
      %v609 = vrot.slane %v571, 2
      %v610 = vrot.slane %v571, 4
      %v611 = vrot.slane %v571, 6
      %v612 = vrot.slane %v572, 2
      %v613 = vrot.slane %v572, 4
      %v614 = vrot.slane %v572, 6
      %v615 = vrot.slane %v573, 2
      %v616 = vrot.slane %v573, 4
      %v617 = vrot.slane %v573, 6
      %v618 = vrot.slane %v574, 2
      %v619 = vrot.slane %v574, 4
      %v620 = vrot.slane %v574, 6
      %v621 = vrot.slane %v575, 2
      %v622 = vrot.slane %v575, 4
      %v623 = vrot.slane %v575, 6
      %v624 = vrot.slane %v576, 2
      %v625 = vrot.slane %v576, 4
      %v626 = vrot.slane %v576, 6
      %v627 = vrot.slane %v577, 2
      %v628 = vrot.slane %v577, 4
      %v629 = vrot.slane %v577, 6
      %v630 = vrot.slane %v578, 2
      %v631 = vrot.slane %v578, 4
      %v632 = vrot.slane %v578, 6
      %v633 = vrot.slane %v579, 2
      %v634 = vrot.slane %v579, 4
      %v635 = vrot.slane %v579, 6
      %v636 = vrot.slane %v580, 2
      %v637 = vrot.slane %v580, 4
      %v638 = vrot.slane %v580, 6
      %v639 = vrot.slane %v581, 2
      %v640 = vrot.slane %v581, 4
      %v641 = vrot.slane %v581, 6
      %v642 = vrot.slane %v582, 2
      %v643 = vrot.slane %v582, 4
      %v644 = vrot.slane %v582, 6
      %v645 = vrot.slane %v583, 2
      %v646 = vrot.slane %v583, 4
      %v647 = vrot.slane %v583, 6
      %v696 = vrot.slane %v568, 7
      %v697 = vrot.slane %v696, 2
      %v698 = vrot.slane %v600, 7
      %v699 = vrot.slane %v698, 2
      %v700 = vrot.slane %v601, 7
      %v701 = vrot.slane %v700, 2
      %v702 = vrot.slane %v602, 7
      %v703 = vrot.slane %v702, 2
      %v704 = vrot.slane %v569, 7
      %v705 = vrot.slane %v704, 2
      %v706 = vrot.slane %v603, 7
      %v707 = vrot.slane %v706, 2
      %v708 = vrot.slane %v604, 7
      %v709 = vrot.slane %v708, 2
      %v710 = vrot.slane %v605, 7
      %v711 = vrot.slane %v710, 2
      %v712 = vrot.slane %v570, 7
      %v713 = vrot.slane %v712, 2
      %v714 = vrot.slane %v606, 7
      %v715 = vrot.slane %v714, 2
      %v716 = vrot.slane %v607, 7
      %v717 = vrot.slane %v716, 2
      %v718 = vrot.slane %v608, 7
      %v719 = vrot.slane %v718, 2
      %v720 = vrot.slane %v571, 7
      %v721 = vrot.slane %v720, 2
      %v722 = vrot.slane %v609, 7
      %v723 = vrot.slane %v722, 2
      %v724 = vrot.slane %v610, 7
      %v725 = vrot.slane %v724, 2
      %v726 = vrot.slane %v611, 7
      %v727 = vrot.slane %v726, 2
      %v728 = vrot.slane %v572, 7
      %v729 = vrot.slane %v728, 2
      %v730 = vrot.slane %v612, 7
      %v731 = vrot.slane %v730, 2
      %v732 = vrot.slane %v613, 7
      %v733 = vrot.slane %v732, 2
      %v734 = vrot.slane %v614, 7
      %v735 = vrot.slane %v734, 2
      %v736 = vrot.slane %v573, 7
      %v737 = vrot.slane %v736, 2
      %v738 = vrot.slane %v615, 7
      %v739 = vrot.slane %v738, 2
      %v740 = vrot.slane %v616, 7
      %v741 = vrot.slane %v740, 2
      %v742 = vrot.slane %v617, 7
      %v743 = vrot.slane %v742, 2
      %v744 = vrot.slane %v574, 7
      %v745 = vrot.slane %v744, 2
      %v746 = vrot.slane %v618, 7
      %v747 = vrot.slane %v746, 2
      %v748 = vrot.slane %v619, 7
      %v749 = vrot.slane %v748, 2
      %v750 = vrot.slane %v620, 7
      %v751 = vrot.slane %v750, 2
      %v752 = vrot.slane %v575, 7
      %v753 = vrot.slane %v752, 2
      %v754 = vrot.slane %v621, 7
      %v755 = vrot.slane %v754, 2
      %v756 = vrot.slane %v622, 7
      %v757 = vrot.slane %v756, 2
      %v758 = vrot.slane %v623, 7
      %v759 = vrot.slane %v758, 2
      %v760 = vrot.slane %v576, 7
      %v761 = vrot.slane %v760, 2
      %v762 = vrot.slane %v624, 7
      %v763 = vrot.slane %v762, 2
      %v764 = vrot.slane %v625, 7
      %v765 = vrot.slane %v764, 2
      %v766 = vrot.slane %v626, 7
      %v767 = vrot.slane %v766, 2
      %v768 = vrot.slane %v577, 7
      %v769 = vrot.slane %v768, 2
      %v770 = vrot.slane %v627, 7
      %v771 = vrot.slane %v770, 2
      %v772 = vrot.slane %v628, 7
      %v773 = vrot.slane %v772, 2
      %v774 = vrot.slane %v629, 7
      %v775 = vrot.slane %v774, 2
      %v776 = vrot.slane %v578, 7
      %v777 = vrot.slane %v776, 2
      %v778 = vrot.slane %v630, 7
      %v779 = vrot.slane %v778, 2
      %v780 = vrot.slane %v631, 7
      %v781 = vrot.slane %v780, 2
      %v782 = vrot.slane %v632, 7
      %v783 = vrot.slane %v782, 2
      %v784 = vrot.slane %v579, 7
      %v785 = vrot.slane %v784, 2
      %v786 = vrot.slane %v633, 7
      %v787 = vrot.slane %v786, 2
      %v788 = vrot.slane %v634, 7
      %v789 = vrot.slane %v788, 2
      %v790 = vrot.slane %v635, 7
      %v791 = vrot.slane %v790, 2
      %v792 = vrot.slane %v580, 7
      %v793 = vrot.slane %v792, 2
      %v794 = vrot.slane %v636, 7
      %v795 = vrot.slane %v794, 2
      %v796 = vrot.slane %v637, 7
      %v797 = vrot.slane %v796, 2
      %v798 = vrot.slane %v638, 7
      %v799 = vrot.slane %v798, 2
      %v800 = vrot.slane %v581, 7
      %v801 = vrot.slane %v800, 2
      %v802 = vrot.slane %v639, 7
      %v803 = vrot.slane %v802, 2
      %v804 = vrot.slane %v640, 7
      %v805 = vrot.slane %v804, 2
      %v806 = vrot.slane %v641, 7
      %v807 = vrot.slane %v806, 2
      %v808 = vrot.slane %v582, 7
      %v809 = vrot.slane %v808, 2
      %v810 = vrot.slane %v642, 7
      %v811 = vrot.slane %v810, 2
      %v812 = vrot.slane %v643, 7
      %v813 = vrot.slane %v812, 2
      %v814 = vrot.slane %v644, 7
      %v815 = vrot.slane %v814, 2
      %v816 = vrot.slane %v583, 7
      %v817 = vrot.slane %v816, 2
      %v818 = vrot.slane %v645, 7
      %v819 = vrot.slane %v818, 2
      %v820 = vrot.slane %v646, 7
      %v821 = vrot.slane %v820, 2
      %v822 = vrot.slane %v647, 7
      %v823 = vrot.slane %v822, 2
      %v888 = vmax.f32 %v568, %v697
      %v889 = vmax.f32 %v600, %v699
      %v890 = vmax.f32 %v601, %v701
      %v891 = vmax.f32 %v602, %v703
      %v892 = vmax.f32 %v569, %v705
      %v893 = vmax.f32 %v603, %v707
      %v894 = vmax.f32 %v604, %v709
      %v895 = vmax.f32 %v605, %v711
      %v896 = vmax.f32 %v570, %v713
      %v897 = vmax.f32 %v606, %v715
      %v898 = vmax.f32 %v607, %v717
      %v899 = vmax.f32 %v608, %v719
      %v900 = vmax.f32 %v571, %v721
      %v901 = vmax.f32 %v609, %v723
      %v902 = vmax.f32 %v610, %v725
      %v903 = vmax.f32 %v611, %v727
      %v904 = vmax.f32 %v572, %v729
      %v905 = vmax.f32 %v612, %v731
      %v906 = vmax.f32 %v613, %v733
      %v907 = vmax.f32 %v614, %v735
      %v908 = vmax.f32 %v573, %v737
      %v909 = vmax.f32 %v615, %v739
      %v910 = vmax.f32 %v616, %v741
      %v911 = vmax.f32 %v617, %v743
      %v912 = vmax.f32 %v574, %v745
      %v913 = vmax.f32 %v618, %v747
      %v914 = vmax.f32 %v619, %v749
      %v915 = vmax.f32 %v620, %v751
      %v916 = vmax.f32 %v575, %v753
      %v917 = vmax.f32 %v621, %v755
      %v918 = vmax.f32 %v622, %v757
      %v919 = vmax.f32 %v623, %v759
      %v920 = vmax.f32 %v576, %v761
      %v921 = vmax.f32 %v624, %v763
      %v922 = vmax.f32 %v625, %v765
      %v923 = vmax.f32 %v626, %v767
      %v924 = vmax.f32 %v577, %v769
      %v925 = vmax.f32 %v627, %v771
      %v926 = vmax.f32 %v628, %v773
      %v927 = vmax.f32 %v629, %v775
      %v928 = vmax.f32 %v578, %v777
      %v929 = vmax.f32 %v630, %v779
      %v930 = vmax.f32 %v631, %v781
      %v931 = vmax.f32 %v632, %v783
      %v932 = vmax.f32 %v579, %v785
      %v933 = vmax.f32 %v633, %v787
      %v934 = vmax.f32 %v634, %v789
      %v935 = vmax.f32 %v635, %v791
      %v936 = vmax.f32 %v580, %v793
      %v937 = vmax.f32 %v636, %v795
      %v938 = vmax.f32 %v637, %v797
      %v939 = vmax.f32 %v638, %v799
      %v940 = vmax.f32 %v581, %v801
      %v941 = vmax.f32 %v639, %v803
      %v942 = vmax.f32 %v640, %v805
      %v943 = vmax.f32 %v641, %v807
      %v944 = vmax.f32 %v582, %v809
      %v945 = vmax.f32 %v642, %v811
      %v946 = vmax.f32 %v643, %v813
      %v947 = vmax.f32 %v644, %v815
      %v948 = vmax.f32 %v583, %v817
      %v949 = vmax.f32 %v645, %v819
      %v950 = vmax.f32 %v646, %v821
      %v951 = vmax.f32 %v647, %v823
      %vm952 = vcmask 31744
      %953 = vst.msk [vmem:[#allocation2] sm:$0xff] %vm952, 0.0
      %vm954 = vcmask 25600
      %955 = vst.msk [vmem:[#allocation2 + $0x8] sm:$0x3] %vm954, 0.0
      %956 = vst.msk [vmem:[#allocation2 + $0x10] sm:$0xff] %vm952, 0.0
      %957 = vst.msk [vmem:[#allocation2 + $0x18] sm:$0x3] %vm954, 0.0
      %958 = vst.msk [vmem:[#allocation2 + $0x20] sm:$0xff] %vm952, 0.0
      %959 = vst.msk [vmem:[#allocation2 + $0x28] sm:$0x3] %vm954, 0.0
      %960 = vst.msk [vmem:[#allocation2 + $0x30] sm:$0xff] %vm952, 0.0
      %961 = vst.msk [vmem:[#allocation2 + $0x38] sm:$0x3] %vm954, 0.0
      %962 = vst.msk [vmem:[#allocation2 + $0x40] sm:$0xff] %vm952, 0.0
      %963 = vst.msk [vmem:[#allocation2 + $0x48] sm:$0x3] %vm954, 0.0
      %964 = vst.msk [vmem:[#allocation2 + $0x50] sm:$0xff] %vm952, 0.0
      %965 = vst.msk [vmem:[#allocation2 + $0x58] sm:$0x3] %vm954, 0.0
      %966 = vst.msk [vmem:[#allocation2 + $0x60] sm:$0xff] %vm952, 0.0
      %967 = vst.msk [vmem:[#allocation2 + $0x68] sm:$0x3] %vm954, 0.0
      %968 = vst.msk [vmem:[#allocation2 + $0x70] sm:$0xff] %vm952, 0.0
      %969 = vst.msk [vmem:[#allocation2 + $0x78] sm:$0x3] %vm954, 0.0
      %970 = vst.msk [vmem:[#allocation2 + $0x80] sm:$0xff] %vm952, 0.0
      %971 = vst.msk [vmem:[#allocation2 + $0x88] sm:$0x3] %vm954, 0.0
      %972 = vst.msk [vmem:[#allocation2 + $0x90] sm:$0xff] %vm952, 0.0
      %973 = vst.msk [vmem:[#allocation2 + $0x98] sm:$0x3] %vm954, 0.0
      %vm974 = vcmask 64512
      %975 = vst.msk [vmem:[#allocation3] sm:$0xff] %vm974, 0.0
      %vm976 = vcmask 58368
      %977 = vst.msk [vmem:[#allocation3 + $0x8] sm:$0x3] %vm976, 0.0
      %978 = vst.msk [vmem:[#allocation3 + $0x10] sm:$0xff] %vm974, 0.0
      %979 = vst.msk [vmem:[#allocation3 + $0x18] sm:$0x3] %vm976, 0.0
      %980 = vst.msk [vmem:[#allocation3 + $0x20] sm:$0xff] %vm974, 0.0
      %981 = vst.msk [vmem:[#allocation3 + $0x28] sm:$0x3] %vm976, 0.0
      %982 = vst.msk [vmem:[#allocation3 + $0x30] sm:$0xff] %vm974, 0.0
      %983 = vst.msk [vmem:[#allocation3 + $0x38] sm:$0x3] %vm976, 0.0
      %984 = vst.msk [vmem:[#allocation3 + $0x40] sm:$0xff] %vm974, 0.0
      %985 = vst.msk [vmem:[#allocation3 + $0x48] sm:$0x3] %vm976, 0.0
      %986 = vst.msk [vmem:[#allocation3 + $0x50] sm:$0xff] %vm974, 0.0
      %987 = vst.msk [vmem:[#allocation3 + $0x58] sm:$0x3] %vm976, 0.0
      %988 = vst.msk [vmem:[#allocation3 + $0x60] sm:$0xff] %vm974, 0.0
      %989 = vst.msk [vmem:[#allocation3 + $0x68] sm:$0x3] %vm976, 0.0
      %990 = vst.msk [vmem:[#allocation3 + $0x70] sm:$0xff] %vm974, 0.0
      %991 = vst.msk [vmem:[#allocation3 + $0x78] sm:$0x3] %vm976, 0.0
      %992 = vst.msk [vmem:[#allocation3 + $0x80] sm:$0xff] %vm974, 0.0
      %993 = vst.msk [vmem:[#allocation3 + $0x88] sm:$0x3] %vm976, 0.0
      %994 = vst.msk [vmem:[#allocation3 + $0x90] sm:$0xff] %vm974, 0.0
      %995 = vst.msk [vmem:[#allocation3 + $0x98] sm:$0x3] %vm976, 0.0
      %v1060 = vperm.slane %v888, 0
      %v1061 = vperm.slane %v889, 0
      %v1062 = vperm.slane %v890, 0
      %v1063 = vperm.slane %v891, 0
      %v1064 = vperm.slane %v892, 0
      %v1065 = vperm.slane %v893, 0
      %v1066 = vperm.slane %v894, 0
      %v1067 = vperm.slane %v895, 0
      %v1068 = vperm.slane %v896, 0
      %v1069 = vperm.slane %v897, 0
      %v1070 = vperm.slane %v898, 0
      %v1071 = vperm.slane %v899, 0
      %v1072 = vperm.slane %v900, 0
      %v1073 = vperm.slane %v901, 0
      %v1074 = vperm.slane %v902, 0
      %v1075 = vperm.slane %v903, 0
      %v1076 = vperm.slane %v904, 0
      %v1077 = vperm.slane %v905, 0
      %v1078 = vperm.slane %v906, 0
      %v1079 = vperm.slane %v907, 0
      %v1080 = vperm.slane %v908, 0
      %v1081 = vperm.slane %v909, 0
      %v1082 = vperm.slane %v910, 0
      %v1083 = vperm.slane %v911, 0
      %v1084 = vperm.slane %v912, 0
      %v1085 = vperm.slane %v913, 0
      %v1086 = vperm.slane %v914, 0
      %v1087 = vperm.slane %v915, 0
      %v1088 = vperm.slane %v916, 0
      %v1089 = vperm.slane %v917, 0
      %v1090 = vperm.slane %v918, 0
      %v1091 = vperm.slane %v919, 0
      %v1092 = vperm.slane %v920, 0
      %v1093 = vperm.slane %v921, 0
      %v1094 = vperm.slane %v922, 0
      %v1095 = vperm.slane %v923, 0
      %v1096 = vperm.slane %v924, 0
      %v1097 = vperm.slane %v925, 0
      %v1098 = vperm.slane %v926, 0
      %v1099 = vperm.slane %v927, 0
      %v1100 = vperm.slane %v928, 0
      %v1101 = vperm.slane %v929, 0
      %v1102 = vperm.slane %v930, 0
      %v1103 = vperm.slane %v931, 0
      %v1104 = vperm.slane %v932, 0
      %v1105 = vperm.slane %v933, 0
      %v1106 = vperm.slane %v934, 0
      %v1107 = vperm.slane %v935, 0
      %v1108 = vperm.slane %v936, 0
      %v1109 = vperm.slane %v937, 0
      %v1110 = vperm.slane %v938, 0
      %v1111 = vperm.slane %v939, 0
      %v1112 = vperm.slane %v940, 0
      %v1113 = vperm.slane %v941, 0
      %v1114 = vperm.slane %v942, 0
      %v1115 = vperm.slane %v943, 0
      %v1116 = vperm.slane %v944, 0
      %v1117 = vperm.slane %v945, 0
      %v1118 = vperm.slane %v946, 0
      %v1119 = vperm.slane %v947, 0
      %v1120 = vperm.slane %v948, 0
      %v1121 = vperm.slane %v949, 0
      %v1122 = vperm.slane %v950, 0
      %v1123 = vperm.slane %v951, 0
      %vm1124 = vcmask 1041409
      %v1125 = vsel %vm1124, %v1061, %v1060
      %vm1126 = vcmask 1042434
      %v1127 = vsel %vm1126, %v1062, %v1125
      %vm1128 = vcmask 1043459
      %v1129 = vsel %vm1128, %v1063, %v1127
      %vm1130 = vcmask 1044484
      %v1131 = vsel %vm1130, %v1064, %v1129
      %vm1132 = vcmask 1045509
      %v1133 = vsel %vm1132, %v1065, %v1131
      %vm1134 = vcmask 1046534
      %v1135 = vsel %vm1134, %v1066, %v1133
      %vm1136 = vcmask 1047559
      %v1137 = vsel %vm1136, %v1067, %v1135
      %v1138 = vsel %vm1124, %v1069, %v1068
      %v1139 = vsel %vm1126, %v1070, %v1138
      %v1140 = vsel %vm1128, %v1071, %v1139
      %v1141 = vsel %vm1130, %v1072, %v1140
      %v1142 = vsel %vm1132, %v1073, %v1141
      %v1143 = vsel %vm1134, %v1074, %v1142
      %v1144 = vsel %vm1136, %v1075, %v1143
      %v1145 = vsel %vm1124, %v1077, %v1076
      %v1146 = vsel %vm1126, %v1078, %v1145
      %v1147 = vsel %vm1128, %v1079, %v1146
      %v1148 = vsel %vm1130, %v1080, %v1147
      %v1149 = vsel %vm1132, %v1081, %v1148
      %v1150 = vsel %vm1134, %v1082, %v1149
      %v1151 = vsel %vm1136, %v1083, %v1150
      %v1152 = vsel %vm1124, %v1085, %v1084
      %v1153 = vsel %vm1126, %v1086, %v1152
      %v1154 = vsel %vm1128, %v1087, %v1153
      %v1155 = vsel %vm1130, %v1088, %v1154
      %v1156 = vsel %vm1132, %v1089, %v1155
      %v1157 = vsel %vm1134, %v1090, %v1156
      %v1158 = vsel %vm1136, %v1091, %v1157
      %v1159 = vsel %vm1124, %v1093, %v1092
      %v1160 = vsel %vm1126, %v1094, %v1159
      %v1161 = vsel %vm1128, %v1095, %v1160
      %v1162 = vsel %vm1130, %v1096, %v1161
      %v1163 = vsel %vm1132, %v1097, %v1162
      %v1164 = vsel %vm1134, %v1098, %v1163
      %v1165 = vsel %vm1136, %v1099, %v1164
      %v1166 = vsel %vm1124, %v1101, %v1100
      %v1167 = vsel %vm1126, %v1102, %v1166
      %v1168 = vsel %vm1128, %v1103, %v1167
      %v1169 = vsel %vm1130, %v1104, %v1168
      %v1170 = vsel %vm1132, %v1105, %v1169
      %v1171 = vsel %vm1134, %v1106, %v1170
      %v1172 = vsel %vm1136, %v1107, %v1171
      %v1173 = vsel %vm1124, %v1109, %v1108
      %v1174 = vsel %vm1126, %v1110, %v1173
      %v1175 = vsel %vm1128, %v1111, %v1174
      %v1176 = vsel %vm1130, %v1112, %v1175
      %v1177 = vsel %vm1132, %v1113, %v1176
      %v1178 = vsel %vm1134, %v1114, %v1177
      %v1179 = vsel %vm1136, %v1115, %v1178
      %v1180 = vsel %vm1124, %v1117, %v1116
      %v1181 = vsel %vm1126, %v1118, %v1180
      %v1182 = vsel %vm1128, %v1119, %v1181
      %v1183 = vsel %vm1130, %v1120, %v1182
      %v1184 = vsel %vm1132, %v1121, %v1183
      %v1185 = vsel %vm1134, %v1122, %v1184
      %v1186 = vsel %vm1136, %v1123, %v1185
      %s1195 = scalar_lea.vmem [#allocation2], 16
      %1196 = vst.msk [vmem:[%s1195 + $0x1] sm:$0xff] %vm952, %v1137
      %1197 = vst.msk [vmem:[%s1195 + $0x11] sm:$0xff] %vm952, %v1144
      %1198 = vst.msk [vmem:[%s1195 + $0x21] sm:$0xff] %vm952, %v1151
      %1199 = vst.msk [vmem:[%s1195 + $0x31] sm:$0xff] %vm952, %v1158
      %1200 = vst.msk [vmem:[%s1195 + $0x41] sm:$0xff] %vm952, %v1165
      %1201 = vst.msk [vmem:[%s1195 + $0x51] sm:$0xff] %vm952, %v1172
      %1202 = vst.msk [vmem:[%s1195 + $0x61] sm:$0xff] %vm952, %v1179
      %1203 = vst.msk [vmem:[%s1195 + $0x71] sm:$0xff] %vm952, %v1186
      %v1204 = vld [vmem:[#allocation2] sm:$0xff]
      %v1205 = vld [vmem:[#allocation2 + $0x10] sm:$0xff]
      %v1206 = vld [vmem:[#allocation2 + $0x20] sm:$0xff]
      %v1207 = vld [vmem:[#allocation2 + $0x30] sm:$0xff]
      %v1208 = vld [vmem:[#allocation2 + $0x40] sm:$0xff]
      %v1209 = vld [vmem:[#allocation2 + $0x50] sm:$0xff]
      %v1210 = vld [vmem:[#allocation2 + $0x60] sm:$0xff]
      %v1211 = vld [vmem:[#allocation2 + $0x70] sm:$0xff]
      %1212 = vst.msk [vmem:[#allocation4] sm:$0xff] %vm952, %v1204
      %1213 = vst.msk [vmem:[#allocation4 + $0x8] sm:$0xff] %vm952, %v1205
      %1214 = vst.msk [vmem:[#allocation4 + $0x10] sm:$0xff] %vm952, %v1206
      %1215 = vst.msk [vmem:[#allocation4 + $0x18] sm:$0xff] %vm952, %v1207
      %1216 = vst.msk [vmem:[#allocation4 + $0x20] sm:$0xff] %vm952, %v1208
      %1217 = vst.msk [vmem:[#allocation4 + $0x28] sm:$0xff] %vm952, %v1209
      %1218 = vst.msk [vmem:[#allocation4 + $0x30] sm:$0xff] %vm952, %v1210
      %1219 = vst.msk [vmem:[#allocation4 + $0x38] sm:$0xff] %vm952, %v1211
      %v1220 = vld [vmem:[#allocation2 + $0x1] sm:$0xff]
      %v1221 = vld [vmem:[#allocation2 + $0x11] sm:$0xff]
      %v1222 = vld [vmem:[#allocation2 + $0x21] sm:$0xff]
      %v1223 = vld [vmem:[#allocation2 + $0x31] sm:$0xff]
      %v1224 = vld [vmem:[#allocation2 + $0x41] sm:$0xff]
      %v1225 = vld [vmem:[#allocation2 + $0x51] sm:$0xff]
      %v1226 = vld [vmem:[#allocation2 + $0x61] sm:$0xff]
      %v1227 = vld [vmem:[#allocation2 + $0x71] sm:$0xff]
      %1236 = vrot.lane.b32.xlu0 %v1220, 4
      %v1237 = vpop.permute.xlu0 %1236
      %1238 = vrot.lane.b32.xlu0 %v1221, 4
      %v1239 = vpop.permute.xlu0 %1238
      %1240 = vrot.lane.b32.xlu0 %v1222, 4
      %v1241 = vpop.permute.xlu0 %1240
      %1242 = vrot.lane.b32.xlu0 %v1223, 4
      %v1243 = vpop.permute.xlu0 %1242
      %1244 = vrot.lane.b32.xlu0 %v1224, 4
      %v1245 = vpop.permute.xlu0 %1244
      %1246 = vrot.lane.b32.xlu0 %v1225, 4
      %v1247 = vpop.permute.xlu0 %1246
      %1248 = vrot.lane.b32.xlu0 %v1226, 4
      %v1249 = vpop.permute.xlu0 %1248
      %1250 = vrot.lane.b32.xlu0 %v1227, 4
      %v1251 = vpop.permute.xlu0 %1250
      %vm1260 = vcmask 64544
      %1261 = vst.msk [vmem:[#allocation4] sm:$0xff] %vm1260, %v1237
      %1262 = vst.msk [vmem:[#allocation4 + $0x8] sm:$0xff] %vm1260, %v1239
      %1263 = vst.msk [vmem:[#allocation4 + $0x10] sm:$0xff] %vm1260, %v1241
      %1264 = vst.msk [vmem:[#allocation4 + $0x18] sm:$0xff] %vm1260, %v1243
      %1265 = vst.msk [vmem:[#allocation4 + $0x20] sm:$0xff] %vm1260, %v1245
      %1266 = vst.msk [vmem:[#allocation4 + $0x28] sm:$0xff] %vm1260, %v1247
      %1267 = vst.msk [vmem:[#allocation4 + $0x30] sm:$0xff] %vm1260, %v1249
      %1268 = vst.msk [vmem:[#allocation4 + $0x38] sm:$0xff] %vm1260, %v1251
      %v1269 = vld [vmem:[#allocation2 + $0x2] sm:$0xff]
      %v1270 = vld [vmem:[#allocation2 + $0x12] sm:$0xff]
      %v1271 = vld [vmem:[#allocation2 + $0x22] sm:$0xff]
      %v1272 = vld [vmem:[#allocation2 + $0x32] sm:$0xff]
      %v1273 = vld [vmem:[#allocation2 + $0x42] sm:$0xff]
      %v1274 = vld [vmem:[#allocation2 + $0x52] sm:$0xff]
      %v1275 = vld [vmem:[#allocation2 + $0x62] sm:$0xff]
      %v1276 = vld [vmem:[#allocation2 + $0x72] sm:$0xff]
      %1285 = vrot.lane.b32.xlu0 %v1269, 8
      %v1286 = vpop.permute.xlu0 %1285
      %1287 = vrot.lane.b32.xlu0 %v1270, 8
      %v1288 = vpop.permute.xlu0 %1287
      %1289 = vrot.lane.b32.xlu0 %v1271, 8
      %v1290 = vpop.permute.xlu0 %1289
      %1291 = vrot.lane.b32.xlu0 %v1272, 8
      %v1292 = vpop.permute.xlu0 %1291
      %1293 = vrot.lane.b32.xlu0 %v1273, 8
      %v1294 = vpop.permute.xlu0 %1293
      %1295 = vrot.lane.b32.xlu0 %v1274, 8
      %v1296 = vpop.permute.xlu0 %1295
      %1297 = vrot.lane.b32.xlu0 %v1275, 8
      %v1298 = vpop.permute.xlu0 %1297
      %1299 = vrot.lane.b32.xlu0 %v1276, 8
      %v1300 = vpop.permute.xlu0 %1299
      %vm1309 = vcmask 97344
      %1310 = vst.msk [vmem:[#allocation4] sm:$0xff] %vm1309, %v1286
      %1311 = vst.msk [vmem:[#allocation4 + $0x8] sm:$0xff] %vm1309, %v1288
      %1312 = vst.msk [vmem:[#allocation4 + $0x10] sm:$0xff] %vm1309, %v1290
      %1313 = vst.msk [vmem:[#allocation4 + $0x18] sm:$0xff] %vm1309, %v1292
      %1314 = vst.msk [vmem:[#allocation4 + $0x20] sm:$0xff] %vm1309, %v1294
      %1315 = vst.msk [vmem:[#allocation4 + $0x28] sm:$0xff] %vm1309, %v1296
      %1316 = vst.msk [vmem:[#allocation4 + $0x30] sm:$0xff] %vm1309, %v1298
      %1317 = vst.msk [vmem:[#allocation4 + $0x38] sm:$0xff] %vm1309, %v1300
      %v1318 = vld [vmem:[%s1195] sm:$0xff]
      %v1319 = vld [vmem:[%s1195 + $0x10] sm:$0xff]
      %v1320 = vld [vmem:[%s1195 + $0x20] sm:$0xff]
      %v1321 = vld [vmem:[%s1195 + $0x30] sm:$0xff]
      %v1322 = vld [vmem:[%s1195 + $0x40] sm:$0xff]
      %v1323 = vld [vmem:[%s1195 + $0x50] sm:$0xff]
      %v1324 = vld [vmem:[%s1195 + $0x60] sm:$0xff]
      %v1325 = vld [vmem:[%s1195 + $0x70] sm:$0xff]
      %1334 = vrot.lane.b32.xlu0 %v1318, 12
      %v1335 = vpop.permute.xlu0 %1334
      %1336 = vrot.lane.b32.xlu0 %v1319, 12
      %v1337 = vpop.permute.xlu0 %1336
      %1338 = vrot.lane.b32.xlu0 %v1320, 12
      %v1339 = vpop.permute.xlu0 %1338
      %1340 = vrot.lane.b32.xlu0 %v1321, 12
      %v1341 = vpop.permute.xlu0 %1340
      %1342 = vrot.lane.b32.xlu0 %v1322, 12
      %v1343 = vpop.permute.xlu0 %1342
      %1344 = vrot.lane.b32.xlu0 %v1323, 12
      %v1345 = vpop.permute.xlu0 %1344
      %1346 = vrot.lane.b32.xlu0 %v1324, 12
      %v1347 = vpop.permute.xlu0 %1346
      %1348 = vrot.lane.b32.xlu0 %v1325, 12
      %v1349 = vpop.permute.xlu0 %1348
      %vm1358 = vcmask 130144
      %1359 = vst.msk [vmem:[#allocation4] sm:$0xff] %vm1358, %v1335
      %1360 = vst.msk [vmem:[#allocation4 + $0x8] sm:$0xff] %vm1358, %v1337
      %1361 = vst.msk [vmem:[#allocation4 + $0x10] sm:$0xff] %vm1358, %v1339
      %1362 = vst.msk [vmem:[#allocation4 + $0x18] sm:$0xff] %vm1358, %v1341
      %1363 = vst.msk [vmem:[#allocation4 + $0x20] sm:$0xff] %vm1358, %v1343
      %1364 = vst.msk [vmem:[#allocation4 + $0x28] sm:$0xff] %vm1358, %v1345
      %1365 = vst.msk [vmem:[#allocation4 + $0x30] sm:$0xff] %vm1358, %v1347
      %1366 = vst.msk [vmem:[#allocation4 + $0x38] sm:$0xff] %vm1358, %v1349
      %v1367 = vld [vmem:[%s1195 + $0x1] sm:$0xff]
      %v1368 = vld [vmem:[%s1195 + $0x11] sm:$0xff]
      %v1369 = vld [vmem:[%s1195 + $0x21] sm:$0xff]
      %v1370 = vld [vmem:[%s1195 + $0x31] sm:$0xff]
      %v1371 = vld [vmem:[%s1195 + $0x41] sm:$0xff]
      %v1372 = vld [vmem:[%s1195 + $0x51] sm:$0xff]
      %v1373 = vld [vmem:[%s1195 + $0x61] sm:$0xff]
      %v1374 = vld [vmem:[%s1195 + $0x71] sm:$0xff]
      %1383 = vrot.lane.b32.xlu0 %v1367, 16
      %v1384 = vpop.permute.xlu0 %1383
      %1385 = vrot.lane.b32.xlu0 %v1368, 16
      %v1386 = vpop.permute.xlu0 %1385
      %1387 = vrot.lane.b32.xlu0 %v1369, 16
      %v1388 = vpop.permute.xlu0 %1387
      %1389 = vrot.lane.b32.xlu0 %v1370, 16
      %v1390 = vpop.permute.xlu0 %1389
      %1391 = vrot.lane.b32.xlu0 %v1371, 16
      %v1392 = vpop.permute.xlu0 %1391
      %1393 = vrot.lane.b32.xlu0 %v1372, 16
      %v1394 = vpop.permute.xlu0 %1393
      %1395 = vrot.lane.b32.xlu0 %v1373, 16
      %v1396 = vpop.permute.xlu0 %1395
      %1397 = vrot.lane.b32.xlu0 %v1374, 16
      %v1398 = vpop.permute.xlu0 %1397
      %vm1407 = vcmask 162944
      %1408 = vst.msk [vmem:[#allocation4] sm:$0xff] %vm1407, %v1384
      %1409 = vst.msk [vmem:[#allocation4 + $0x8] sm:$0xff] %vm1407, %v1386
      %1410 = vst.msk [vmem:[#allocation4 + $0x10] sm:$0xff] %vm1407, %v1388
      %1411 = vst.msk [vmem:[#allocation4 + $0x18] sm:$0xff] %vm1407, %v1390
      %1412 = vst.msk [vmem:[#allocation4 + $0x20] sm:$0xff] %vm1407, %v1392
      %1413 = vst.msk [vmem:[#allocation4 + $0x28] sm:$0xff] %vm1407, %v1394
      %1414 = vst.msk [vmem:[#allocation4 + $0x30] sm:$0xff] %vm1407, %v1396
      %1415 = vst.msk [vmem:[#allocation4 + $0x38] sm:$0xff] %vm1407, %v1398
      %v1416 = vld [vmem:[%s1195 + $0x2] sm:$0xff]
      %v1417 = vld [vmem:[%s1195 + $0x12] sm:$0xff]
      %v1418 = vld [vmem:[%s1195 + $0x22] sm:$0xff]
      %v1419 = vld [vmem:[%s1195 + $0x32] sm:$0xff]
      %v1420 = vld [vmem:[%s1195 + $0x42] sm:$0xff]
      %v1421 = vld [vmem:[%s1195 + $0x52] sm:$0xff]
      %v1422 = vld [vmem:[%s1195 + $0x62] sm:$0xff]
      %v1423 = vld [vmem:[%s1195 + $0x72] sm:$0xff]
      %1432 = vrot.lane.b32.xlu0 %v1416, 20
      %v1433 = vpop.permute.xlu0 %1432
      %1434 = vrot.lane.b32.xlu0 %v1417, 20
      %v1435 = vpop.permute.xlu0 %1434
      %1436 = vrot.lane.b32.xlu0 %v1418, 20
      %v1437 = vpop.permute.xlu0 %1436
      %1438 = vrot.lane.b32.xlu0 %v1419, 20
      %v1439 = vpop.permute.xlu0 %1438
      %1440 = vrot.lane.b32.xlu0 %v1420, 20
      %v1441 = vpop.permute.xlu0 %1440
      %1442 = vrot.lane.b32.xlu0 %v1421, 20
      %v1443 = vpop.permute.xlu0 %1442
      %1444 = vrot.lane.b32.xlu0 %v1422, 20
      %v1445 = vpop.permute.xlu0 %1444
      %1446 = vrot.lane.b32.xlu0 %v1423, 20
      %v1447 = vpop.permute.xlu0 %1446
      %vm1456 = vcmask 195744
      %1457 = vst.msk [vmem:[#allocation4] sm:$0xff] %vm1456, %v1433
      %1458 = vst.msk [vmem:[#allocation4 + $0x8] sm:$0xff] %vm1456, %v1435
      %1459 = vst.msk [vmem:[#allocation4 + $0x10] sm:$0xff] %vm1456, %v1437
      %1460 = vst.msk [vmem:[#allocation4 + $0x18] sm:$0xff] %vm1456, %v1439
      %1461 = vst.msk [vmem:[#allocation4 + $0x20] sm:$0xff] %vm1456, %v1441
      %1462 = vst.msk [vmem:[#allocation4 + $0x28] sm:$0xff] %vm1456, %v1443
      %1463 = vst.msk [vmem:[#allocation4 + $0x30] sm:$0xff] %vm1456, %v1445
      %1464 = vst.msk [vmem:[#allocation4 + $0x38] sm:$0xff] %vm1456, %v1447
      %s1465 = scalar_lea.vmem [#allocation2], 32
      %v1466 = vld [vmem:[%s1465] sm:$0xff]
      %v1467 = vld [vmem:[%s1465 + $0x10] sm:$0xff]
      %v1468 = vld [vmem:[%s1465 + $0x20] sm:$0xff]
      %v1469 = vld [vmem:[%s1465 + $0x30] sm:$0xff]
      %v1470 = vld [vmem:[%s1465 + $0x40] sm:$0xff]
      %v1471 = vld [vmem:[%s1465 + $0x50] sm:$0xff]
      %v1472 = vld [vmem:[%s1465 + $0x60] sm:$0xff]
      %v1473 = vld [vmem:[%s1465 + $0x70] sm:$0xff]
      %1482 = vrot.lane.b32.xlu0 %v1466, 24
      %v1483 = vpop.permute.xlu0 %1482
      %1484 = vrot.lane.b32.xlu0 %v1467, 24
      %v1485 = vpop.permute.xlu0 %1484
      %1486 = vrot.lane.b32.xlu0 %v1468, 24
      %v1487 = vpop.permute.xlu0 %1486
      %1488 = vrot.lane.b32.xlu0 %v1469, 24
      %v1489 = vpop.permute.xlu0 %1488
      %1490 = vrot.lane.b32.xlu0 %v1470, 24
      %v1491 = vpop.permute.xlu0 %1490
      %1492 = vrot.lane.b32.xlu0 %v1471, 24
      %v1493 = vpop.permute.xlu0 %1492
      %1494 = vrot.lane.b32.xlu0 %v1472, 24
      %v1495 = vpop.permute.xlu0 %1494
      %1496 = vrot.lane.b32.xlu0 %v1473, 24
      %v1497 = vpop.permute.xlu0 %1496
      %vm1506 = vcmask 228544
      %1507 = vst.msk [vmem:[#allocation4] sm:$0xff] %vm1506, %v1483
      %1508 = vst.msk [vmem:[#allocation4 + $0x8] sm:$0xff] %vm1506, %v1485
      %1509 = vst.msk [vmem:[#allocation4 + $0x10] sm:$0xff] %vm1506, %v1487
      %1510 = vst.msk [vmem:[#allocation4 + $0x18] sm:$0xff] %vm1506, %v1489
      %1511 = vst.msk [vmem:[#allocation4 + $0x20] sm:$0xff] %vm1506, %v1491
      %1512 = vst.msk [vmem:[#allocation4 + $0x28] sm:$0xff] %vm1506, %v1493
      %1513 = vst.msk [vmem:[#allocation4 + $0x30] sm:$0xff] %vm1506, %v1495
      %1514 = vst.msk [vmem:[#allocation4 + $0x38] sm:$0xff] %vm1506, %v1497
      %v1515 = vld [vmem:[%s1465 + $0x1] sm:$0xff]
      %v1516 = vld [vmem:[%s1465 + $0x11] sm:$0xff]
      %v1517 = vld [vmem:[%s1465 + $0x21] sm:$0xff]
      %v1518 = vld [vmem:[%s1465 + $0x31] sm:$0xff]
      %v1519 = vld [vmem:[%s1465 + $0x41] sm:$0xff]
      %v1520 = vld [vmem:[%s1465 + $0x51] sm:$0xff]
      %v1521 = vld [vmem:[%s1465 + $0x61] sm:$0xff]
      %v1522 = vld [vmem:[%s1465 + $0x71] sm:$0xff]
      %1531 = vrot.lane.b32.xlu0 %v1515, 28
      %v1532 = vpop.permute.xlu0 %1531
      %1533 = vrot.lane.b32.xlu0 %v1516, 28
      %v1534 = vpop.permute.xlu0 %1533
      %1535 = vrot.lane.b32.xlu0 %v1517, 28
      %v1536 = vpop.permute.xlu0 %1535
      %1537 = vrot.lane.b32.xlu0 %v1518, 28
      %v1538 = vpop.permute.xlu0 %1537
      %1539 = vrot.lane.b32.xlu0 %v1519, 28
      %v1540 = vpop.permute.xlu0 %1539
      %1541 = vrot.lane.b32.xlu0 %v1520, 28
      %v1542 = vpop.permute.xlu0 %1541
      %1543 = vrot.lane.b32.xlu0 %v1521, 28
      %v1544 = vpop.permute.xlu0 %1543
      %1545 = vrot.lane.b32.xlu0 %v1522, 28
      %v1546 = vpop.permute.xlu0 %1545
      %vm1555 = vcmask 261344
      %1556 = vst.msk [vmem:[#allocation4] sm:$0xff] %vm1555, %v1532
      %1557 = vst.msk [vmem:[#allocation4 + $0x8] sm:$0xff] %vm1555, %v1534
      %1558 = vst.msk [vmem:[#allocation4 + $0x10] sm:$0xff] %vm1555, %v1536
      %1559 = vst.msk [vmem:[#allocation4 + $0x18] sm:$0xff] %vm1555, %v1538
      %1560 = vst.msk [vmem:[#allocation4 + $0x20] sm:$0xff] %vm1555, %v1540
      %1561 = vst.msk [vmem:[#allocation4 + $0x28] sm:$0xff] %vm1555, %v1542
      %1562 = vst.msk [vmem:[#allocation4 + $0x30] sm:$0xff] %vm1555, %v1544
      %1563 = vst.msk [vmem:[#allocation4 + $0x38] sm:$0xff] %vm1555, %v1546
      %v1564 = vld [vmem:[%s1465 + $0x2] sm:$0xff]
      %v1565 = vld [vmem:[%s1465 + $0x12] sm:$0xff]
      %v1566 = vld [vmem:[%s1465 + $0x22] sm:$0xff]
      %v1567 = vld [vmem:[%s1465 + $0x32] sm:$0xff]
      %v1568 = vld [vmem:[%s1465 + $0x42] sm:$0xff]
      %v1569 = vld [vmem:[%s1465 + $0x52] sm:$0xff]
      %v1570 = vld [vmem:[%s1465 + $0x62] sm:$0xff]
      %v1571 = vld [vmem:[%s1465 + $0x72] sm:$0xff]
      %1580 = vrot.lane.b32.xlu0 %v1564, 32
      %v1581 = vpop.permute.xlu0 %1580
      %1582 = vrot.lane.b32.xlu0 %v1565, 32
      %v1583 = vpop.permute.xlu0 %1582
      %1584 = vrot.lane.b32.xlu0 %v1566, 32
      %v1585 = vpop.permute.xlu0 %1584
      %1586 = vrot.lane.b32.xlu0 %v1567, 32
      %v1587 = vpop.permute.xlu0 %1586
      %1588 = vrot.lane.b32.xlu0 %v1568, 32
      %v1589 = vpop.permute.xlu0 %1588
      %1590 = vrot.lane.b32.xlu0 %v1569, 32
      %v1591 = vpop.permute.xlu0 %1590
      %1592 = vrot.lane.b32.xlu0 %v1570, 32
      %v1593 = vpop.permute.xlu0 %1592
      %1594 = vrot.lane.b32.xlu0 %v1571, 32
      %v1595 = vpop.permute.xlu0 %1594
      %vm1604 = vcmask 294144
      %1605 = vst.msk [vmem:[#allocation4] sm:$0xff] %vm1604, %v1581
      %1606 = vst.msk [vmem:[#allocation4 + $0x8] sm:$0xff] %vm1604, %v1583
      %1607 = vst.msk [vmem:[#allocation4 + $0x10] sm:$0xff] %vm1604, %v1585
      %1608 = vst.msk [vmem:[#allocation4 + $0x18] sm:$0xff] %vm1604, %v1587
      %1609 = vst.msk [vmem:[#allocation4 + $0x20] sm:$0xff] %vm1604, %v1589
      %1610 = vst.msk [vmem:[#allocation4 + $0x28] sm:$0xff] %vm1604, %v1591
      %1611 = vst.msk [vmem:[#allocation4 + $0x30] sm:$0xff] %vm1604, %v1593
      %1612 = vst.msk [vmem:[#allocation4 + $0x38] sm:$0xff] %vm1604, %v1595
      %v1613 = vld [vmem:[#allocation4] sm:$0xff]
      %v1614 = vld [vmem:[#allocation4 + $0x8] sm:$0xff]
      %v1615 = vld [vmem:[#allocation4 + $0x10] sm:$0xff]
      %v1616 = vld [vmem:[#allocation4 + $0x18] sm:$0xff]
      %v1617 = vld [vmem:[#allocation4 + $0x20] sm:$0xff]
      %v1618 = vld [vmem:[#allocation4 + $0x28] sm:$0xff]
      %v1619 = vld [vmem:[#allocation4 + $0x30] sm:$0xff]
      %v1620 = vld [vmem:[#allocation4 + $0x38] sm:$0xff]
      %v1621 = vld [vmem:[%s2] sm:$0xff]
      %v1622 = vld [vmem:[%s2 + $0x8] sm:$0xff]
      %v1623 = vld [vmem:[%s2 + $0x10] sm:$0xff]
      %v1624 = vld [vmem:[%s2 + $0x18] sm:$0xff]
      %v1625 = vld [vmem:[%s2 + $0x20] sm:$0xf]
      %vm1626 = vcmask 293888
      %v1628 = vsel %vm1626, %v1613, 0
      %v1631 = vsel %vm1626, %v1614, 0
      %v1634 = vsel %vm1626, %v1615, 0
      %v1637 = vsel %vm1626, %v1616, 0
      %v1640 = vsel %vm1626, %v1617, 0
      %v1643 = vsel %vm1626, %v1618, 0
      %v1646 = vsel %vm1626, %v1619, 0
      %v1649 = vsel %vm1626, %v1620, 0
      %vm1651 = vcmask 1043456
      %v1653 = vsel %vm1651, %v1625, 0
      %1655 = vmatpush.msra.mxu0 0.0
      %1656 = vmatpush.msra.mxu0 0.0
      %1657 = vmatpush.msra.mxu0 0.0
      %1658 = vmatpush.msra.mxu0 0.0
      %1659 = vmatpush.msra.mxu0 0.0
      %1660 = vmatpush.msra.mxu0 0.0
      %1661 = vmatpush.msra.mxu0 0.0
      %1662 = vmatpush.msra.mxu0 0.0
      %1663 = vmatpush.msra.mxu0 0.0
      %1664 = vmatpush.msra.mxu0 0.0
      %1665 = vmatpush.msra.mxu0 0.0
      %1666 = vmatpush.msra.mxu0 %v1653
      %1667 = vmatpush.msra.mxu0 %v1624
      %1668 = vmatpush.msra.mxu0 %v1623
      %1669 = vmatpush.msra.mxu0 %v1622
      %1670 = vmatpush.msra.mxu0 %v1621
      %1671 = vmatmul.f32.gmra.mxu0 %v1628
      %v1672 = vpop.f32.mrf.mxu0
      %v1673 = vadd.f32 0.0, %v1672
      %1674 = vmatmul.f32.gmra.mxu0 %v1631
      %v1675 = vpop.f32.mrf.mxu0
      %v1676 = vadd.f32 0.0, %v1675
      %1677 = vmatmul.f32.gmra.mxu0 %v1634
      %v1678 = vpop.f32.mrf.mxu0
      %v1679 = vadd.f32 0.0, %v1678
      %1680 = vmatmul.f32.gmra.mxu0 %v1637
      %v1681 = vpop.f32.mrf.mxu0
      %v1682 = vadd.f32 0.0, %v1681
      %1683 = vmatmul.f32.gmra.mxu0 %v1640
      %v1684 = vpop.f32.mrf.mxu0
      %v1685 = vadd.f32 0.0, %v1684
      %1686 = vmatmul.f32.gmra.mxu0 %v1643
      %v1687 = vpop.f32.mrf.mxu0
      %v1688 = vadd.f32 0.0, %v1687
      %1689 = vmatmul.f32.gmra.mxu0 %v1646
      %v1690 = vpop.f32.mrf.mxu0
      %v1691 = vadd.f32 0.0, %v1690
      %1692 = vmatmul.f32.gmra.mxu0 %v1649
      %v1693 = vpop.f32.mrf.mxu0
      %v1694 = vadd.f32 0.0, %v1693
      %1695 = vdwg.mxu0
      %v1696 = vsel %vm952, %v1673, 0.0
      %v1697 = vsel %vm952, %v1676, 0.0
      %v1698 = vadd.f32 %v1696, %v1697
      %v1699 = vsel %vm952, %v1679, 0.0
      %v1700 = vadd.f32 %v1698, %v1699
      %v1701 = vsel %vm952, %v1682, 0.0
      %v1702 = vadd.f32 %v1700, %v1701
      %v1703 = vsel %vm952, %v1685, 0.0
      %v1704 = vadd.f32 %v1702, %v1703
      %v1705 = vsel %vm952, %v1688, 0.0
      %v1706 = vadd.f32 %v1704, %v1705
      %v1707 = vsel %vm952, %v1691, 0.0
      %v1708 = vadd.f32 %v1706, %v1707
      %v1709 = vsel %vm952, %v1694, 0.0
      %v1710 = vadd.f32 %v1708, %v1709
      %1711 = vadd.xlane.f32.xlu0 %v1710
      %v1712 = vpop.xlane.xlu0 %1711
      %v1713 = vrot.slane %v1712, 4
      %v1714 = vadd.f32 %v1712, %v1713
      %v1715 = vrot.slane %v1714, 2
      %v1716 = vadd.f32 %v1714, %v1715
      %v1717 = vrot.slane %v1716, 1
      %v1718 = vadd.f32 %v1716, %v1717
      %s1719 = vtos %v1718
      %v1720 = vrcp.pop 256.0
      %v1721 = vmul.f32 256.0, %v1720
      %v1722 = vsub.f32 1.0, %v1721
      %v1723 = vmul.f32 %v1720, %v1722
      %v1724 = vadd.f32 %v1720, %v1723
      %vm1725 = vweird.f32 %v1720
      %v1726 = vsel %vm1725, %v1720, %v1724
      %s1727 = vtos %v1726
      %s1728 = smul.f32 %s1719, %s1727
      %v1729 = vstv %s1728
      %v1730 = vsub.f32 %v1673, %v1729
      %v1731 = vsub.f32 %v1676, %v1729
      %v1732 = vsub.f32 %v1679, %v1729
      %v1733 = vsub.f32 %v1682, %v1729
      %v1734 = vsub.f32 %v1685, %v1729
      %v1735 = vsub.f32 %v1688, %v1729
      %v1736 = vsub.f32 %v1691, %v1729
      %v1737 = vsub.f32 %v1694, %v1729
      %v1738 = vmul.f32 %v1730, %v1730
      %v1739 = vmul.f32 %v1731, %v1731
      %v1740 = vmul.f32 %v1732, %v1732
      %v1741 = vmul.f32 %v1733, %v1733
      %v1742 = vmul.f32 %v1734, %v1734
      %v1743 = vmul.f32 %v1735, %v1735
      %v1744 = vmul.f32 %v1736, %v1736
      %v1745 = vmul.f32 %v1737, %v1737
      %v1746 = vsel %vm952, %v1738, 0.0
      %v1747 = vsel %vm952, %v1739, 0.0
      %v1748 = vadd.f32 %v1746, %v1747
      %v1749 = vsel %vm952, %v1740, 0.0
      %v1750 = vadd.f32 %v1748, %v1749
      %v1751 = vsel %vm952, %v1741, 0.0
      %v1752 = vadd.f32 %v1750, %v1751
      %v1753 = vsel %vm952, %v1742, 0.0
      %v1754 = vadd.f32 %v1752, %v1753
      %v1755 = vsel %vm952, %v1743, 0.0
      %v1756 = vadd.f32 %v1754, %v1755
      %v1757 = vsel %vm952, %v1744, 0.0
      %v1758 = vadd.f32 %v1756, %v1757
      %v1759 = vsel %vm952, %v1745, 0.0
      %v1760 = vadd.f32 %v1758, %v1759
      %1761 = vadd.xlane.f32.xlu0 %v1760
      %v1762 = vpop.xlane.xlu0 %1761
      %v1763 = vrot.slane %v1762, 4
      %v1764 = vadd.f32 %v1762, %v1763
      %v1765 = vrot.slane %v1764, 2
      %v1766 = vadd.f32 %v1764, %v1765
      %v1767 = vrot.slane %v1766, 1
      %v1768 = vadd.f32 %v1766, %v1767
      %s1769 = vtos %v1768
      %v1770 = vrcp.pop 256.0
      %v1771 = vmul.f32 256.0, %v1770
      %v1772 = vsub.f32 1.0, %v1771
      %v1773 = vmul.f32 %v1770, %v1772
      %v1774 = vadd.f32 %v1770, %v1773
      %vm1775 = vweird.f32 %v1770
      %v1776 = vsel %vm1775, %v1770, %v1774
      %s1777 = vtos %v1776
      %s1778 = smul.f32 %s1769, %s1777
      %s1779 = sadd.f32 %s1778, 1e-05
      %v1780 = vstv %s1779
      %v1781 = vrsqrt.pop %v1780
      %v1782 = vmul.f32 %v1781, %v1780
      %v1783 = vmul.f32 %v1782, %v1781
      %v1784 = vmul.f32 0.5, %v1783
      %v1785 = vsub.f32 1.5, %v1784
      %v1786 = vmul.f32 %v1781, %v1785
      %vm1787 = vweird.f32 %v1780
      %vm1788 = vweird.f32 %v1781
      %vm1789 = vmor %vm1787, %vm1788
      %v1790 = vsel %vm1789, %v1781, %v1786
      %s1791 = vtos %v1790
      %v1792 = vstv %s1791
      %v1793 = vmul.f32 %v1730, %v1792
      %v1794 = vmul.f32 %v1731, %v1792
      %v1795 = vmul.f32 %v1732, %v1792
      %v1796 = vmul.f32 %v1733, %v1792
      %v1797 = vmul.f32 %v1734, %v1792
      %v1798 = vmul.f32 %v1735, %v1792
      %v1799 = vmul.f32 %v1736, %v1792
      %v1800 = vmul.f32 %v1737, %v1792
      %v1801 = vld [vmem:[%s3] sm:$0x1]
      %v1803 = vperm.slane %v1801, 0
      %v1805 = vmul.f32 %v1793, %v1803
      %v1806 = vmul.f32 %v1794, %v1803
      %v1807 = vmul.f32 %v1795, %v1803
      %v1808 = vmul.f32 %v1796, %v1803
      %v1809 = vmul.f32 %v1797, %v1803
      %v1810 = vmul.f32 %v1798, %v1803
      %v1811 = vmul.f32 %v1799, %v1803
      %v1812 = vmul.f32 %v1800, %v1803
      %v1813 = vld [vmem:[%s4] sm:$0x1]
      %v1815 = vperm.slane %v1813, 0
      %v1817 = vadd.f32 %v1805, %v1815
      %v1818 = vadd.f32 %v1806, %v1815
      %v1819 = vadd.f32 %v1807, %v1815
      %v1820 = vadd.f32 %v1808, %v1815
      %v1821 = vadd.f32 %v1809, %v1815
      %v1822 = vadd.f32 %v1810, %v1815
      %v1823 = vadd.f32 %v1811, %v1815
      %v1824 = vadd.f32 %v1812, %v1815
      %v1825 = vmul.f32 %v1817, 0.5
      %v1826 = vmul.f32 %v1818, 0.5
      %v1827 = vmul.f32 %v1819, 0.5
      %v1828 = vmul.f32 %v1820, 0.5
      %v1829 = vmul.f32 %v1821, 0.5
      %v1830 = vmul.f32 %v1822, 0.5
      %v1831 = vmul.f32 %v1823, 0.5
      %v1832 = vmul.f32 %v1824, 0.5
      %v1833 = vrcp.pop 1.4142135
      %v1834 = vmul.f32 1.4142135, %v1833
      %v1835 = vsub.f32 1.0, %v1834
      %v1836 = vmul.f32 %v1833, %v1835
      %v1837 = vadd.f32 %v1833, %v1836
      %vm1838 = vweird.f32 %v1833
      %v1839 = vsel %vm1838, %v1833, %v1837
      %v1840 = vmul.f32 %v1817, %v1839
      %v1841 = vmul.f32 %v1818, %v1839
      %v1842 = vmul.f32 %v1819, %v1839
      %v1843 = vmul.f32 %v1820, %v1839
      %v1844 = vmul.f32 %v1821, %v1839
      %v1845 = vmul.f32 %v1822, %v1839
      %v1846 = vmul.f32 %v1823, %v1839
      %v1847 = vmul.f32 %v1824, %v1839
      %v1848 = vmul.f32 %v1840, %v1840
      %v1849 = vmin.f32 16.0, %v1848
      %v1850 = vmul.f32 %v1849, 2.1237322e-06
      %v1851 = vadd.f32 %v1850, 0.00028619796
      %v1852 = vmul.f32 %v1849, %v1851
      %v1853 = vadd.f32 %v1852, 0.0036580483
      %v1854 = vmul.f32 %v1849, %v1853
      %v1855 = vadd.f32 %v1854, 0.05243302
      %v1856 = vmul.f32 %v1849, %v1855
      %v1857 = vadd.f32 %v1856, 0.18741608
      %v1858 = vmul.f32 %v1849, %v1857
      %v1859 = vadd.f32 %v1858, 1.1283791
      %v1860 = vmul.f32 %v1840, %v1859
      %v1861 = vmul.f32 %v1849, 3.8918573e-05
      %v1862 = vadd.f32 %v1861, 0.001143296
      %v1863 = vmul.f32 %v1849, %v1862
      %v1864 = vadd.f32 %v1863, 0.014752088
      %v1865 = vmul.f32 %v1849, %v1864
      %v1866 = vadd.f32 %v1865, 0.112945676
      %v1867 = vmul.f32 %v1849, %v1866
      %v1868 = vadd.f32 %v1867, 0.4994258
      %v1869 = vmul.f32 %v1849, %v1868
      %v1870 = vadd.f32 %v1869, 1.0
      %v1871 = vrcp.pop %v1870
      %v1872 = vmul.f32 %v1870, %v1871
      %v1873 = vsub.f32 1.0, %v1872
      %v1874 = vmul.f32 %v1871, %v1873
      %v1875 = vadd.f32 %v1871, %v1874
      %vm1876 = vweird.f32 %v1870
      %vm1877 = vweird.f32 %v1871
      %vm1878 = vmor %vm1876, %vm1877
      %v1879 = vsel %vm1878, %v1871, %v1875
      %v1880 = vand.u32 2147483647, %v1870
      %vm1881 = vcmp.eq.f32.partialorder %v1880, 8.507059e+37
      %v1882 = vand.u32 %v1870, 2147483648
      %v1883 = vor.u32 1.1754944e-38, %v1882
      %v1884 = vsel %vm1881, %v1883, %v1879
      %v1885 = vmul.f32 %v1860, %v1884
      %v1886 = vmin.f32 %v1885, 1.0
      %v1887 = vmax.f32 %v1886, -1.0
      %v1888 = vmul.f32 %v1841, %v1841
      %v1889 = vmin.f32 16.0, %v1888
      %v1890 = vmul.f32 %v1889, 2.1237322e-06
      %v1891 = vadd.f32 %v1890, 0.00028619796
      %v1892 = vmul.f32 %v1889, %v1891
      %v1893 = vadd.f32 %v1892, 0.0036580483
      %v1894 = vmul.f32 %v1889, %v1893
      %v1895 = vadd.f32 %v1894, 0.05243302
      %v1896 = vmul.f32 %v1889, %v1895
      %v1897 = vadd.f32 %v1896, 0.18741608
      %v1898 = vmul.f32 %v1889, %v1897
      %v1899 = vadd.f32 %v1898, 1.1283791
      %v1900 = vmul.f32 %v1841, %v1899
      %v1901 = vmul.f32 %v1889, 3.8918573e-05
      %v1902 = vadd.f32 %v1901, 0.001143296
      %v1903 = vmul.f32 %v1889, %v1902
      %v1904 = vadd.f32 %v1903, 0.014752088
      %v1905 = vmul.f32 %v1889, %v1904
      %v1906 = vadd.f32 %v1905, 0.112945676
      %v1907 = vmul.f32 %v1889, %v1906
      %v1908 = vadd.f32 %v1907, 0.4994258
      %v1909 = vmul.f32 %v1889, %v1908
      %v1910 = vadd.f32 %v1909, 1.0
      %v1911 = vrcp.pop %v1910
      %v1912 = vmul.f32 %v1910, %v1911
      %v1913 = vsub.f32 1.0, %v1912
      %v1914 = vmul.f32 %v1911, %v1913
      %v1915 = vadd.f32 %v1911, %v1914
      %vm1916 = vweird.f32 %v1910
      %vm1917 = vweird.f32 %v1911
      %vm1918 = vmor %vm1916, %vm1917
      %v1919 = vsel %vm1918, %v1911, %v1915
      %v1920 = vand.u32 2147483647, %v1910
      %vm1921 = vcmp.eq.f32.partialorder %v1920, 8.507059e+37
      %v1922 = vand.u32 %v1910, 2147483648
      %v1923 = vor.u32 1.1754944e-38, %v1922
      %v1924 = vsel %vm1921, %v1923, %v1919
      %v1925 = vmul.f32 %v1900, %v1924
      %v1926 = vmin.f32 %v1925, 1.0
      %v1927 = vmax.f32 %v1926, -1.0
      %v1928 = vmul.f32 %v1842, %v1842
      %v1929 = vmin.f32 16.0, %v1928
      %v1930 = vmul.f32 %v1929, 2.1237322e-06
      %v1931 = vadd.f32 %v1930, 0.00028619796
      %v1932 = vmul.f32 %v1929, %v1931
      %v1933 = vadd.f32 %v1932, 0.0036580483
      %v1934 = vmul.f32 %v1929, %v1933
      %v1935 = vadd.f32 %v1934, 0.05243302
      %v1936 = vmul.f32 %v1929, %v1935
      %v1937 = vadd.f32 %v1936, 0.18741608
      %v1938 = vmul.f32 %v1929, %v1937
      %v1939 = vadd.f32 %v1938, 1.1283791
      %v1940 = vmul.f32 %v1842, %v1939
      %v1941 = vmul.f32 %v1929, 3.8918573e-05
      %v1942 = vadd.f32 %v1941, 0.001143296
      %v1943 = vmul.f32 %v1929, %v1942
      %v1944 = vadd.f32 %v1943, 0.014752088
      %v1945 = vmul.f32 %v1929, %v1944
      %v1946 = vadd.f32 %v1945, 0.112945676
      %v1947 = vmul.f32 %v1929, %v1946
      %v1948 = vadd.f32 %v1947, 0.4994258
      %v1949 = vmul.f32 %v1929, %v1948
      %v1950 = vadd.f32 %v1949, 1.0
      %v1951 = vrcp.pop %v1950
      %v1952 = vmul.f32 %v1950, %v1951
      %v1953 = vsub.f32 1.0, %v1952
      %v1954 = vmul.f32 %v1951, %v1953
      %v1955 = vadd.f32 %v1951, %v1954
      %vm1956 = vweird.f32 %v1950
      %vm1957 = vweird.f32 %v1951
      %vm1958 = vmor %vm1956, %vm1957
      %v1959 = vsel %vm1958, %v1951, %v1955
      %v1960 = vand.u32 2147483647, %v1950
      %vm1961 = vcmp.eq.f32.partialorder %v1960, 8.507059e+37
      %v1962 = vand.u32 %v1950, 2147483648
      %v1963 = vor.u32 1.1754944e-38, %v1962
      %v1964 = vsel %vm1961, %v1963, %v1959
      %v1965 = vmul.f32 %v1940, %v1964
      %v1966 = vmin.f32 %v1965, 1.0
      %v1967 = vmax.f32 %v1966, -1.0
      %v1968 = vmul.f32 %v1843, %v1843
      %v1969 = vmin.f32 16.0, %v1968
      %v1970 = vmul.f32 %v1969, 2.1237322e-06
      %v1971 = vadd.f32 %v1970, 0.00028619796
      %v1972 = vmul.f32 %v1969, %v1971
      %v1973 = vadd.f32 %v1972, 0.0036580483
      %v1974 = vmul.f32 %v1969, %v1973
      %v1975 = vadd.f32 %v1974, 0.05243302
      %v1976 = vmul.f32 %v1969, %v1975
      %v1977 = vadd.f32 %v1976, 0.18741608
      %v1978 = vmul.f32 %v1969, %v1977
      %v1979 = vadd.f32 %v1978, 1.1283791
      %v1980 = vmul.f32 %v1843, %v1979
      %v1981 = vmul.f32 %v1969, 3.8918573e-05
      %v1982 = vadd.f32 %v1981, 0.001143296
      %v1983 = vmul.f32 %v1969, %v1982
      %v1984 = vadd.f32 %v1983, 0.014752088
      %v1985 = vmul.f32 %v1969, %v1984
      %v1986 = vadd.f32 %v1985, 0.112945676
      %v1987 = vmul.f32 %v1969, %v1986
      %v1988 = vadd.f32 %v1987, 0.4994258
      %v1989 = vmul.f32 %v1969, %v1988
      %v1990 = vadd.f32 %v1989, 1.0
      %v1991 = vrcp.pop %v1990
      %v1992 = vmul.f32 %v1990, %v1991
      %v1993 = vsub.f32 1.0, %v1992
      %v1994 = vmul.f32 %v1991, %v1993
      %v1995 = vadd.f32 %v1991, %v1994
      %vm1996 = vweird.f32 %v1990
      %vm1997 = vweird.f32 %v1991
      %vm1998 = vmor %vm1996, %vm1997
      %v1999 = vsel %vm1998, %v1991, %v1995
      %v2000 = vand.u32 2147483647, %v1990
      %vm2001 = vcmp.eq.f32.partialorder %v2000, 8.507059e+37
      %v2002 = vand.u32 %v1990, 2147483648
      %v2003 = vor.u32 1.1754944e-38, %v2002
      %v2004 = vsel %vm2001, %v2003, %v1999
      %v2005 = vmul.f32 %v1980, %v2004
      %v2006 = vmin.f32 %v2005, 1.0
      %v2007 = vmax.f32 %v2006, -1.0
      %v2008 = vmul.f32 %v1844, %v1844
      %v2009 = vmin.f32 16.0, %v2008
      %v2010 = vmul.f32 %v2009, 2.1237322e-06
      %v2011 = vadd.f32 %v2010, 0.00028619796
      %v2012 = vmul.f32 %v2009, %v2011
      %v2013 = vadd.f32 %v2012, 0.0036580483
      %v2014 = vmul.f32 %v2009, %v2013
      %v2015 = vadd.f32 %v2014, 0.05243302
      %v2016 = vmul.f32 %v2009, %v2015
      %v2017 = vadd.f32 %v2016, 0.18741608
      %v2018 = vmul.f32 %v2009, %v2017
      %v2019 = vadd.f32 %v2018, 1.1283791
      %v2020 = vmul.f32 %v1844, %v2019
      %v2021 = vmul.f32 %v2009, 3.8918573e-05
      %v2022 = vadd.f32 %v2021, 0.001143296
      %v2023 = vmul.f32 %v2009, %v2022
      %v2024 = vadd.f32 %v2023, 0.014752088
      %v2025 = vmul.f32 %v2009, %v2024
      %v2026 = vadd.f32 %v2025, 0.112945676
      %v2027 = vmul.f32 %v2009, %v2026
      %v2028 = vadd.f32 %v2027, 0.4994258
      %v2029 = vmul.f32 %v2009, %v2028
      %v2030 = vadd.f32 %v2029, 1.0
      %v2031 = vrcp.pop %v2030
      %v2032 = vmul.f32 %v2030, %v2031
      %v2033 = vsub.f32 1.0, %v2032
      %v2034 = vmul.f32 %v2031, %v2033
      %v2035 = vadd.f32 %v2031, %v2034
      %vm2036 = vweird.f32 %v2030
      %vm2037 = vweird.f32 %v2031
      %vm2038 = vmor %vm2036, %vm2037
      %v2039 = vsel %vm2038, %v2031, %v2035
      %v2040 = vand.u32 2147483647, %v2030
      %vm2041 = vcmp.eq.f32.partialorder %v2040, 8.507059e+37
      %v2042 = vand.u32 %v2030, 2147483648
      %v2043 = vor.u32 1.1754944e-38, %v2042
      %v2044 = vsel %vm2041, %v2043, %v2039
      %v2045 = vmul.f32 %v2020, %v2044
      %v2046 = vmin.f32 %v2045, 1.0
      %v2047 = vmax.f32 %v2046, -1.0
      %v2048 = vmul.f32 %v1845, %v1845
      %v2049 = vmin.f32 16.0, %v2048
      %v2050 = vmul.f32 %v2049, 2.1237322e-06
      %v2051 = vadd.f32 %v2050, 0.00028619796
      %v2052 = vmul.f32 %v2049, %v2051
      %v2053 = vadd.f32 %v2052, 0.0036580483
      %v2054 = vmul.f32 %v2049, %v2053
      %v2055 = vadd.f32 %v2054, 0.05243302
      %v2056 = vmul.f32 %v2049, %v2055
      %v2057 = vadd.f32 %v2056, 0.18741608
      %v2058 = vmul.f32 %v2049, %v2057
      %v2059 = vadd.f32 %v2058, 1.1283791
      %v2060 = vmul.f32 %v1845, %v2059
      %v2061 = vmul.f32 %v2049, 3.8918573e-05
      %v2062 = vadd.f32 %v2061, 0.001143296
      %v2063 = vmul.f32 %v2049, %v2062
      %v2064 = vadd.f32 %v2063, 0.014752088
      %v2065 = vmul.f32 %v2049, %v2064
      %v2066 = vadd.f32 %v2065, 0.112945676
      %v2067 = vmul.f32 %v2049, %v2066
      %v2068 = vadd.f32 %v2067, 0.4994258
      %v2069 = vmul.f32 %v2049, %v2068
      %v2070 = vadd.f32 %v2069, 1.0
      %v2071 = vrcp.pop %v2070
      %v2072 = vmul.f32 %v2070, %v2071
      %v2073 = vsub.f32 1.0, %v2072
      %v2074 = vmul.f32 %v2071, %v2073
      %v2075 = vadd.f32 %v2071, %v2074
      %vm2076 = vweird.f32 %v2070
      %vm2077 = vweird.f32 %v2071
      %vm2078 = vmor %vm2076, %vm2077
      %v2079 = vsel %vm2078, %v2071, %v2075
      %v2080 = vand.u32 2147483647, %v2070
      %vm2081 = vcmp.eq.f32.partialorder %v2080, 8.507059e+37
      %v2082 = vand.u32 %v2070, 2147483648
      %v2083 = vor.u32 1.1754944e-38, %v2082
      %v2084 = vsel %vm2081, %v2083, %v2079
      %v2085 = vmul.f32 %v2060, %v2084
      %v2086 = vmin.f32 %v2085, 1.0
      %v2087 = vmax.f32 %v2086, -1.0
      %v2088 = vmul.f32 %v1846, %v1846
      %v2089 = vmin.f32 16.0, %v2088
      %v2090 = vmul.f32 %v2089, 2.1237322e-06
      %v2091 = vadd.f32 %v2090, 0.00028619796
      %v2092 = vmul.f32 %v2089, %v2091
      %v2093 = vadd.f32 %v2092, 0.0036580483
      %v2094 = vmul.f32 %v2089, %v2093
      %v2095 = vadd.f32 %v2094, 0.05243302
      %v2096 = vmul.f32 %v2089, %v2095
      %v2097 = vadd.f32 %v2096, 0.18741608
      %v2098 = vmul.f32 %v2089, %v2097
      %v2099 = vadd.f32 %v2098, 1.1283791
      %v2100 = vmul.f32 %v1846, %v2099
      %v2101 = vmul.f32 %v2089, 3.8918573e-05
      %v2102 = vadd.f32 %v2101, 0.001143296
      %v2103 = vmul.f32 %v2089, %v2102
      %v2104 = vadd.f32 %v2103, 0.014752088
      %v2105 = vmul.f32 %v2089, %v2104
      %v2106 = vadd.f32 %v2105, 0.112945676
      %v2107 = vmul.f32 %v2089, %v2106
      %v2108 = vadd.f32 %v2107, 0.4994258
      %v2109 = vmul.f32 %v2089, %v2108
      %v2110 = vadd.f32 %v2109, 1.0
      %v2111 = vrcp.pop %v2110
      %v2112 = vmul.f32 %v2110, %v2111
      %v2113 = vsub.f32 1.0, %v2112
      %v2114 = vmul.f32 %v2111, %v2113
      %v2115 = vadd.f32 %v2111, %v2114
      %vm2116 = vweird.f32 %v2110
      %vm2117 = vweird.f32 %v2111
      %vm2118 = vmor %vm2116, %vm2117
      %v2119 = vsel %vm2118, %v2111, %v2115
      %v2120 = vand.u32 2147483647, %v2110
      %vm2121 = vcmp.eq.f32.partialorder %v2120, 8.507059e+37
      %v2122 = vand.u32 %v2110, 2147483648
      %v2123 = vor.u32 1.1754944e-38, %v2122
      %v2124 = vsel %vm2121, %v2123, %v2119
      %v2125 = vmul.f32 %v2100, %v2124
      %v2126 = vmin.f32 %v2125, 1.0
      %v2127 = vmax.f32 %v2126, -1.0
      %v2128 = vmul.f32 %v1847, %v1847
      %v2129 = vmin.f32 16.0, %v2128
      %v2130 = vmul.f32 %v2129, 2.1237322e-06
      %v2131 = vadd.f32 %v2130, 0.00028619796
      %v2132 = vmul.f32 %v2129, %v2131
      %v2133 = vadd.f32 %v2132, 0.0036580483
      %v2134 = vmul.f32 %v2129, %v2133
      %v2135 = vadd.f32 %v2134, 0.05243302
      %v2136 = vmul.f32 %v2129, %v2135
      %v2137 = vadd.f32 %v2136, 0.18741608
      %v2138 = vmul.f32 %v2129, %v2137
      %v2139 = vadd.f32 %v2138, 1.1283791
      %v2140 = vmul.f32 %v1847, %v2139
      %v2141 = vmul.f32 %v2129, 3.8918573e-05
      %v2142 = vadd.f32 %v2141, 0.001143296
      %v2143 = vmul.f32 %v2129, %v2142
      %v2144 = vadd.f32 %v2143, 0.014752088
      %v2145 = vmul.f32 %v2129, %v2144
      %v2146 = vadd.f32 %v2145, 0.112945676
      %v2147 = vmul.f32 %v2129, %v2146
      %v2148 = vadd.f32 %v2147, 0.4994258
      %v2149 = vmul.f32 %v2129, %v2148
      %v2150 = vadd.f32 %v2149, 1.0
      %v2151 = vrcp.pop %v2150
      %v2152 = vmul.f32 %v2150, %v2151
      %v2153 = vsub.f32 1.0, %v2152
      %v2154 = vmul.f32 %v2151, %v2153
      %v2155 = vadd.f32 %v2151, %v2154
      %vm2156 = vweird.f32 %v2150
      %vm2157 = vweird.f32 %v2151
      %vm2158 = vmor %vm2156, %vm2157
      %v2159 = vsel %vm2158, %v2151, %v2155
      %v2160 = vand.u32 2147483647, %v2150
      %vm2161 = vcmp.eq.f32.partialorder %v2160, 8.507059e+37
      %v2162 = vand.u32 %v2150, 2147483648
      %v2163 = vor.u32 1.1754944e-38, %v2162
      %v2164 = vsel %vm2161, %v2163, %v2159
      %v2165 = vmul.f32 %v2140, %v2164
      %v2166 = vmin.f32 %v2165, 1.0
      %v2167 = vmax.f32 %v2166, -1.0
      %v2168 = vadd.f32 %v1887, 1.0
      %v2169 = vadd.f32 %v1927, 1.0
      %v2170 = vadd.f32 %v1967, 1.0
      %v2171 = vadd.f32 %v2007, 1.0
      %v2172 = vadd.f32 %v2047, 1.0
      %v2173 = vadd.f32 %v2087, 1.0
      %v2174 = vadd.f32 %v2127, 1.0
      %v2175 = vadd.f32 %v2167, 1.0
      %v2176 = vmul.f32 %v1825, %v2168
      %v2177 = vmul.f32 %v1826, %v2169
      %v2178 = vmul.f32 %v1827, %v2170
      %v2179 = vmul.f32 %v1828, %v2171
      %v2180 = vmul.f32 %v1829, %v2172
      %v2181 = vmul.f32 %v1830, %v2173
      %v2182 = vmul.f32 %v1831, %v2174
      %v2183 = vmul.f32 %v1832, %v2175
      %2184 = vst.msk [vmem:[%s1195 + $0x1] sm:$0xff] %vm952, %v2176
      %2185 = vst.msk [vmem:[%s1195 + $0x11] sm:$0xff] %vm952, %v2177
      %2186 = vst.msk [vmem:[%s1195 + $0x21] sm:$0xff] %vm952, %v2178
      %2187 = vst.msk [vmem:[%s1195 + $0x31] sm:$0xff] %vm952, %v2179
      %2188 = vst.msk [vmem:[%s1195 + $0x41] sm:$0xff] %vm952, %v2180
      %2189 = vst.msk [vmem:[%s1195 + $0x51] sm:$0xff] %vm952, %v2181
      %2190 = vst.msk [vmem:[%s1195 + $0x61] sm:$0xff] %vm952, %v2182
      %2191 = vst.msk [vmem:[%s1195 + $0x71] sm:$0xff] %vm952, %v2183
      %v2192 = vld [vmem:[#allocation2] sm:$0xff]
      %v2193 = vld [vmem:[#allocation2 + $0x10] sm:$0xff]
      %v2194 = vld [vmem:[#allocation2 + $0x20] sm:$0xff]
      %v2195 = vld [vmem:[#allocation2 + $0x30] sm:$0xff]
      %v2196 = vld [vmem:[#allocation2 + $0x40] sm:$0xff]
      %v2197 = vld [vmem:[#allocation2 + $0x50] sm:$0xff]
      %v2198 = vld [vmem:[#allocation2 + $0x60] sm:$0xff]
      %v2199 = vld [vmem:[#allocation2 + $0x70] sm:$0xff]
      %2200 = vst.msk [vmem:[#allocation4] sm:$0xff] %vm952, %v2192
      %2201 = vst.msk [vmem:[#allocation4 + $0x8] sm:$0xff] %vm952, %v2193
      %2202 = vst.msk [vmem:[#allocation4 + $0x10] sm:$0xff] %vm952, %v2194
      %2203 = vst.msk [vmem:[#allocation4 + $0x18] sm:$0xff] %vm952, %v2195
      %2204 = vst.msk [vmem:[#allocation4 + $0x20] sm:$0xff] %vm952, %v2196
      %2205 = vst.msk [vmem:[#allocation4 + $0x28] sm:$0xff] %vm952, %v2197
      %2206 = vst.msk [vmem:[#allocation4 + $0x30] sm:$0xff] %vm952, %v2198
      %2207 = vst.msk [vmem:[#allocation4 + $0x38] sm:$0xff] %vm952, %v2199
      %v2208 = vld [vmem:[#allocation2 + $0x1] sm:$0xff]
      %v2209 = vld [vmem:[#allocation2 + $0x11] sm:$0xff]
      %v2210 = vld [vmem:[#allocation2 + $0x21] sm:$0xff]
      %v2211 = vld [vmem:[#allocation2 + $0x31] sm:$0xff]
      %v2212 = vld [vmem:[#allocation2 + $0x41] sm:$0xff]
      %v2213 = vld [vmem:[#allocation2 + $0x51] sm:$0xff]
      %v2214 = vld [vmem:[#allocation2 + $0x61] sm:$0xff]
      %v2215 = vld [vmem:[#allocation2 + $0x71] sm:$0xff]
      %2224 = vrot.lane.b32.xlu0 %v2208, 4
      %v2225 = vpop.permute.xlu0 %2224
      %2226 = vrot.lane.b32.xlu0 %v2209, 4
      %v2227 = vpop.permute.xlu0 %2226
      %2228 = vrot.lane.b32.xlu0 %v2210, 4
      %v2229 = vpop.permute.xlu0 %2228
      %2230 = vrot.lane.b32.xlu0 %v2211, 4
      %v2231 = vpop.permute.xlu0 %2230
      %2232 = vrot.lane.b32.xlu0 %v2212, 4
      %v2233 = vpop.permute.xlu0 %2232
      %2234 = vrot.lane.b32.xlu0 %v2213, 4
      %v2235 = vpop.permute.xlu0 %2234
      %2236 = vrot.lane.b32.xlu0 %v2214, 4
      %v2237 = vpop.permute.xlu0 %2236
      %2238 = vrot.lane.b32.xlu0 %v2215, 4
      %v2239 = vpop.permute.xlu0 %2238
      %2248 = vst.msk [vmem:[#allocation4] sm:$0xff] %vm1260, %v2225
      %2249 = vst.msk [vmem:[#allocation4 + $0x8] sm:$0xff] %vm1260, %v2227
      %2250 = vst.msk [vmem:[#allocation4 + $0x10] sm:$0xff] %vm1260, %v2229
      %2251 = vst.msk [vmem:[#allocation4 + $0x18] sm:$0xff] %vm1260, %v2231
      %2252 = vst.msk [vmem:[#allocation4 + $0x20] sm:$0xff] %vm1260, %v2233
      %2253 = vst.msk [vmem:[#allocation4 + $0x28] sm:$0xff] %vm1260, %v2235
      %2254 = vst.msk [vmem:[#allocation4 + $0x30] sm:$0xff] %vm1260, %v2237
      %2255 = vst.msk [vmem:[#allocation4 + $0x38] sm:$0xff] %vm1260, %v2239
      %v2256 = vld [vmem:[#allocation2 + $0x2] sm:$0xff]
      %v2257 = vld [vmem:[#allocation2 + $0x12] sm:$0xff]
      %v2258 = vld [vmem:[#allocation2 + $0x22] sm:$0xff]
      %v2259 = vld [vmem:[#allocation2 + $0x32] sm:$0xff]
      %v2260 = vld [vmem:[#allocation2 + $0x42] sm:$0xff]
      %v2261 = vld [vmem:[#allocation2 + $0x52] sm:$0xff]
      %v2262 = vld [vmem:[#allocation2 + $0x62] sm:$0xff]
      %v2263 = vld [vmem:[#allocation2 + $0x72] sm:$0xff]
      %2272 = vrot.lane.b32.xlu0 %v2256, 8
      %v2273 = vpop.permute.xlu0 %2272
      %2274 = vrot.lane.b32.xlu0 %v2257, 8
      %v2275 = vpop.permute.xlu0 %2274
      %2276 = vrot.lane.b32.xlu0 %v2258, 8
      %v2277 = vpop.permute.xlu0 %2276
      %2278 = vrot.lane.b32.xlu0 %v2259, 8
      %v2279 = vpop.permute.xlu0 %2278
      %2280 = vrot.lane.b32.xlu0 %v2260, 8
      %v2281 = vpop.permute.xlu0 %2280
      %2282 = vrot.lane.b32.xlu0 %v2261, 8
      %v2283 = vpop.permute.xlu0 %2282
      %2284 = vrot.lane.b32.xlu0 %v2262, 8
      %v2285 = vpop.permute.xlu0 %2284
      %2286 = vrot.lane.b32.xlu0 %v2263, 8
      %v2287 = vpop.permute.xlu0 %2286
      %2296 = vst.msk [vmem:[#allocation4] sm:$0xff] %vm1309, %v2273
      %2297 = vst.msk [vmem:[#allocation4 + $0x8] sm:$0xff] %vm1309, %v2275
      %2298 = vst.msk [vmem:[#allocation4 + $0x10] sm:$0xff] %vm1309, %v2277
      %2299 = vst.msk [vmem:[#allocation4 + $0x18] sm:$0xff] %vm1309, %v2279
      %2300 = vst.msk [vmem:[#allocation4 + $0x20] sm:$0xff] %vm1309, %v2281
      %2301 = vst.msk [vmem:[#allocation4 + $0x28] sm:$0xff] %vm1309, %v2283
      %2302 = vst.msk [vmem:[#allocation4 + $0x30] sm:$0xff] %vm1309, %v2285
      %2303 = vst.msk [vmem:[#allocation4 + $0x38] sm:$0xff] %vm1309, %v2287
      %v2304 = vld [vmem:[%s1195] sm:$0xff]
      %v2305 = vld [vmem:[%s1195 + $0x10] sm:$0xff]
      %v2306 = vld [vmem:[%s1195 + $0x20] sm:$0xff]
      %v2307 = vld [vmem:[%s1195 + $0x30] sm:$0xff]
      %v2308 = vld [vmem:[%s1195 + $0x40] sm:$0xff]
      %v2309 = vld [vmem:[%s1195 + $0x50] sm:$0xff]
      %v2310 = vld [vmem:[%s1195 + $0x60] sm:$0xff]
      %v2311 = vld [vmem:[%s1195 + $0x70] sm:$0xff]
      %2320 = vrot.lane.b32.xlu0 %v2304, 12
      %v2321 = vpop.permute.xlu0 %2320
      %2322 = vrot.lane.b32.xlu0 %v2305, 12
      %v2323 = vpop.permute.xlu0 %2322
      %2324 = vrot.lane.b32.xlu0 %v2306, 12
      %v2325 = vpop.permute.xlu0 %2324
      %2326 = vrot.lane.b32.xlu0 %v2307, 12
      %v2327 = vpop.permute.xlu0 %2326
      %2328 = vrot.lane.b32.xlu0 %v2308, 12
      %v2329 = vpop.permute.xlu0 %2328
      %2330 = vrot.lane.b32.xlu0 %v2309, 12
      %v2331 = vpop.permute.xlu0 %2330
      %2332 = vrot.lane.b32.xlu0 %v2310, 12
      %v2333 = vpop.permute.xlu0 %2332
      %2334 = vrot.lane.b32.xlu0 %v2311, 12
      %v2335 = vpop.permute.xlu0 %2334
      %2344 = vst.msk [vmem:[#allocation4] sm:$0xff] %vm1358, %v2321
      %2345 = vst.msk [vmem:[#allocation4 + $0x8] sm:$0xff] %vm1358, %v2323
      %2346 = vst.msk [vmem:[#allocation4 + $0x10] sm:$0xff] %vm1358, %v2325
      %2347 = vst.msk [vmem:[#allocation4 + $0x18] sm:$0xff] %vm1358, %v2327
      %2348 = vst.msk [vmem:[#allocation4 + $0x20] sm:$0xff] %vm1358, %v2329
      %2349 = vst.msk [vmem:[#allocation4 + $0x28] sm:$0xff] %vm1358, %v2331
      %2350 = vst.msk [vmem:[#allocation4 + $0x30] sm:$0xff] %vm1358, %v2333
      %2351 = vst.msk [vmem:[#allocation4 + $0x38] sm:$0xff] %vm1358, %v2335
      %v2352 = vld [vmem:[%s1195 + $0x1] sm:$0xff]
      %v2353 = vld [vmem:[%s1195 + $0x11] sm:$0xff]
      %v2354 = vld [vmem:[%s1195 + $0x21] sm:$0xff]
      %v2355 = vld [vmem:[%s1195 + $0x31] sm:$0xff]
      %v2356 = vld [vmem:[%s1195 + $0x41] sm:$0xff]
      %v2357 = vld [vmem:[%s1195 + $0x51] sm:$0xff]
      %v2358 = vld [vmem:[%s1195 + $0x61] sm:$0xff]
      %v2359 = vld [vmem:[%s1195 + $0x71] sm:$0xff]
      %2368 = vrot.lane.b32.xlu0 %v2352, 16
      %v2369 = vpop.permute.xlu0 %2368
      %2370 = vrot.lane.b32.xlu0 %v2353, 16
      %v2371 = vpop.permute.xlu0 %2370
      %2372 = vrot.lane.b32.xlu0 %v2354, 16
      %v2373 = vpop.permute.xlu0 %2372
      %2374 = vrot.lane.b32.xlu0 %v2355, 16
      %v2375 = vpop.permute.xlu0 %2374
      %2376 = vrot.lane.b32.xlu0 %v2356, 16
      %v2377 = vpop.permute.xlu0 %2376
      %2378 = vrot.lane.b32.xlu0 %v2357, 16
      %v2379 = vpop.permute.xlu0 %2378
      %2380 = vrot.lane.b32.xlu0 %v2358, 16
      %v2381 = vpop.permute.xlu0 %2380
      %2382 = vrot.lane.b32.xlu0 %v2359, 16
      %v2383 = vpop.permute.xlu0 %2382
      %2392 = vst.msk [vmem:[#allocation4] sm:$0xff] %vm1407, %v2369
      %2393 = vst.msk [vmem:[#allocation4 + $0x8] sm:$0xff] %vm1407, %v2371
      %2394 = vst.msk [vmem:[#allocation4 + $0x10] sm:$0xff] %vm1407, %v2373
      %2395 = vst.msk [vmem:[#allocation4 + $0x18] sm:$0xff] %vm1407, %v2375
      %2396 = vst.msk [vmem:[#allocation4 + $0x20] sm:$0xff] %vm1407, %v2377
      %2397 = vst.msk [vmem:[#allocation4 + $0x28] sm:$0xff] %vm1407, %v2379
      %2398 = vst.msk [vmem:[#allocation4 + $0x30] sm:$0xff] %vm1407, %v2381
      %2399 = vst.msk [vmem:[#allocation4 + $0x38] sm:$0xff] %vm1407, %v2383
      %v2400 = vld [vmem:[%s1195 + $0x2] sm:$0xff]
      %v2401 = vld [vmem:[%s1195 + $0x12] sm:$0xff]
      %v2402 = vld [vmem:[%s1195 + $0x22] sm:$0xff]
      %v2403 = vld [vmem:[%s1195 + $0x32] sm:$0xff]
      %v2404 = vld [vmem:[%s1195 + $0x42] sm:$0xff]
      %v2405 = vld [vmem:[%s1195 + $0x52] sm:$0xff]
      %v2406 = vld [vmem:[%s1195 + $0x62] sm:$0xff]
      %v2407 = vld [vmem:[%s1195 + $0x72] sm:$0xff]
      %2416 = vrot.lane.b32.xlu0 %v2400, 20
      %v2417 = vpop.permute.xlu0 %2416
      %2418 = vrot.lane.b32.xlu0 %v2401, 20
      %v2419 = vpop.permute.xlu0 %2418
      %2420 = vrot.lane.b32.xlu0 %v2402, 20
      %v2421 = vpop.permute.xlu0 %2420
      %2422 = vrot.lane.b32.xlu0 %v2403, 20
      %v2423 = vpop.permute.xlu0 %2422
      %2424 = vrot.lane.b32.xlu0 %v2404, 20
      %v2425 = vpop.permute.xlu0 %2424
      %2426 = vrot.lane.b32.xlu0 %v2405, 20
      %v2427 = vpop.permute.xlu0 %2426
      %2428 = vrot.lane.b32.xlu0 %v2406, 20
      %v2429 = vpop.permute.xlu0 %2428
      %2430 = vrot.lane.b32.xlu0 %v2407, 20
      %v2431 = vpop.permute.xlu0 %2430
      %2440 = vst.msk [vmem:[#allocation4] sm:$0xff] %vm1456, %v2417
      %2441 = vst.msk [vmem:[#allocation4 + $0x8] sm:$0xff] %vm1456, %v2419
      %2442 = vst.msk [vmem:[#allocation4 + $0x10] sm:$0xff] %vm1456, %v2421
      %2443 = vst.msk [vmem:[#allocation4 + $0x18] sm:$0xff] %vm1456, %v2423
      %2444 = vst.msk [vmem:[#allocation4 + $0x20] sm:$0xff] %vm1456, %v2425
      %2445 = vst.msk [vmem:[#allocation4 + $0x28] sm:$0xff] %vm1456, %v2427
      %2446 = vst.msk [vmem:[#allocation4 + $0x30] sm:$0xff] %vm1456, %v2429
      %2447 = vst.msk [vmem:[#allocation4 + $0x38] sm:$0xff] %vm1456, %v2431
      %v2448 = vld [vmem:[%s1465] sm:$0xff]
      %v2449 = vld [vmem:[%s1465 + $0x10] sm:$0xff]
      %v2450 = vld [vmem:[%s1465 + $0x20] sm:$0xff]
      %v2451 = vld [vmem:[%s1465 + $0x30] sm:$0xff]
      %v2452 = vld [vmem:[%s1465 + $0x40] sm:$0xff]
      %v2453 = vld [vmem:[%s1465 + $0x50] sm:$0xff]
      %v2454 = vld [vmem:[%s1465 + $0x60] sm:$0xff]
      %v2455 = vld [vmem:[%s1465 + $0x70] sm:$0xff]
      %2464 = vrot.lane.b32.xlu0 %v2448, 24
      %v2465 = vpop.permute.xlu0 %2464
      %2466 = vrot.lane.b32.xlu0 %v2449, 24
      %v2467 = vpop.permute.xlu0 %2466
      %2468 = vrot.lane.b32.xlu0 %v2450, 24
      %v2469 = vpop.permute.xlu0 %2468
      %2470 = vrot.lane.b32.xlu0 %v2451, 24
      %v2471 = vpop.permute.xlu0 %2470
      %2472 = vrot.lane.b32.xlu0 %v2452, 24
      %v2473 = vpop.permute.xlu0 %2472
      %2474 = vrot.lane.b32.xlu0 %v2453, 24
      %v2475 = vpop.permute.xlu0 %2474
      %2476 = vrot.lane.b32.xlu0 %v2454, 24
      %v2477 = vpop.permute.xlu0 %2476
      %2478 = vrot.lane.b32.xlu0 %v2455, 24
      %v2479 = vpop.permute.xlu0 %2478
      %2488 = vst.msk [vmem:[#allocation4] sm:$0xff] %vm1506, %v2465
      %2489 = vst.msk [vmem:[#allocation4 + $0x8] sm:$0xff] %vm1506, %v2467
      %2490 = vst.msk [vmem:[#allocation4 + $0x10] sm:$0xff] %vm1506, %v2469
      %2491 = vst.msk [vmem:[#allocation4 + $0x18] sm:$0xff] %vm1506, %v2471
      %2492 = vst.msk [vmem:[#allocation4 + $0x20] sm:$0xff] %vm1506, %v2473
      %2493 = vst.msk [vmem:[#allocation4 + $0x28] sm:$0xff] %vm1506, %v2475
      %2494 = vst.msk [vmem:[#allocation4 + $0x30] sm:$0xff] %vm1506, %v2477
      %2495 = vst.msk [vmem:[#allocation4 + $0x38] sm:$0xff] %vm1506, %v2479
      %v2496 = vld [vmem:[%s1465 + $0x1] sm:$0xff]
      %v2497 = vld [vmem:[%s1465 + $0x11] sm:$0xff]
      %v2498 = vld [vmem:[%s1465 + $0x21] sm:$0xff]
      %v2499 = vld [vmem:[%s1465 + $0x31] sm:$0xff]
      %v2500 = vld [vmem:[%s1465 + $0x41] sm:$0xff]
      %v2501 = vld [vmem:[%s1465 + $0x51] sm:$0xff]
      %v2502 = vld [vmem:[%s1465 + $0x61] sm:$0xff]
      %v2503 = vld [vmem:[%s1465 + $0x71] sm:$0xff]
      %2512 = vrot.lane.b32.xlu0 %v2496, 28
      %v2513 = vpop.permute.xlu0 %2512
      %2514 = vrot.lane.b32.xlu0 %v2497, 28
      %v2515 = vpop.permute.xlu0 %2514
      %2516 = vrot.lane.b32.xlu0 %v2498, 28
      %v2517 = vpop.permute.xlu0 %2516
      %2518 = vrot.lane.b32.xlu0 %v2499, 28
      %v2519 = vpop.permute.xlu0 %2518
      %2520 = vrot.lane.b32.xlu0 %v2500, 28
      %v2521 = vpop.permute.xlu0 %2520
      %2522 = vrot.lane.b32.xlu0 %v2501, 28
      %v2523 = vpop.permute.xlu0 %2522
      %2524 = vrot.lane.b32.xlu0 %v2502, 28
      %v2525 = vpop.permute.xlu0 %2524
      %2526 = vrot.lane.b32.xlu0 %v2503, 28
      %v2527 = vpop.permute.xlu0 %2526
      %2536 = vst.msk [vmem:[#allocation4] sm:$0xff] %vm1555, %v2513
      %2537 = vst.msk [vmem:[#allocation4 + $0x8] sm:$0xff] %vm1555, %v2515
      %2538 = vst.msk [vmem:[#allocation4 + $0x10] sm:$0xff] %vm1555, %v2517
      %2539 = vst.msk [vmem:[#allocation4 + $0x18] sm:$0xff] %vm1555, %v2519
      %2540 = vst.msk [vmem:[#allocation4 + $0x20] sm:$0xff] %vm1555, %v2521
      %2541 = vst.msk [vmem:[#allocation4 + $0x28] sm:$0xff] %vm1555, %v2523
      %2542 = vst.msk [vmem:[#allocation4 + $0x30] sm:$0xff] %vm1555, %v2525
      %2543 = vst.msk [vmem:[#allocation4 + $0x38] sm:$0xff] %vm1555, %v2527
      %v2544 = vld [vmem:[%s1465 + $0x2] sm:$0xff]
      %v2545 = vld [vmem:[%s1465 + $0x12] sm:$0xff]
      %v2546 = vld [vmem:[%s1465 + $0x22] sm:$0xff]
      %v2547 = vld [vmem:[%s1465 + $0x32] sm:$0xff]
      %v2548 = vld [vmem:[%s1465 + $0x42] sm:$0xff]
      %v2549 = vld [vmem:[%s1465 + $0x52] sm:$0xff]
      %v2550 = vld [vmem:[%s1465 + $0x62] sm:$0xff]
      %v2551 = vld [vmem:[%s1465 + $0x72] sm:$0xff]
      %2560 = vrot.lane.b32.xlu0 %v2544, 32
      %v2561 = vpop.permute.xlu0 %2560
      %2562 = vrot.lane.b32.xlu0 %v2545, 32
      %v2563 = vpop.permute.xlu0 %2562
      %2564 = vrot.lane.b32.xlu0 %v2546, 32
      %v2565 = vpop.permute.xlu0 %2564
      %2566 = vrot.lane.b32.xlu0 %v2547, 32
      %v2567 = vpop.permute.xlu0 %2566
      %2568 = vrot.lane.b32.xlu0 %v2548, 32
      %v2569 = vpop.permute.xlu0 %2568
      %2570 = vrot.lane.b32.xlu0 %v2549, 32
      %v2571 = vpop.permute.xlu0 %2570
      %2572 = vrot.lane.b32.xlu0 %v2550, 32
      %v2573 = vpop.permute.xlu0 %2572
      %2574 = vrot.lane.b32.xlu0 %v2551, 32
      %v2575 = vpop.permute.xlu0 %2574
      %2584 = vst.msk [vmem:[#allocation4] sm:$0xff] %vm1604, %v2561
      %2585 = vst.msk [vmem:[#allocation4 + $0x8] sm:$0xff] %vm1604, %v2563
      %2586 = vst.msk [vmem:[#allocation4 + $0x10] sm:$0xff] %vm1604, %v2565
      %2587 = vst.msk [vmem:[#allocation4 + $0x18] sm:$0xff] %vm1604, %v2567
      %2588 = vst.msk [vmem:[#allocation4 + $0x20] sm:$0xff] %vm1604, %v2569
      %2589 = vst.msk [vmem:[#allocation4 + $0x28] sm:$0xff] %vm1604, %v2571
      %2590 = vst.msk [vmem:[#allocation4 + $0x30] sm:$0xff] %vm1604, %v2573
      %2591 = vst.msk [vmem:[#allocation4 + $0x38] sm:$0xff] %vm1604, %v2575
      %v2592 = vld [vmem:[#allocation4] sm:$0xff]
      %v2593 = vld [vmem:[#allocation4 + $0x8] sm:$0xff]
      %v2594 = vld [vmem:[#allocation4 + $0x10] sm:$0xff]
      %v2595 = vld [vmem:[#allocation4 + $0x18] sm:$0xff]
      %v2596 = vld [vmem:[#allocation4 + $0x20] sm:$0xff]
      %v2597 = vld [vmem:[#allocation4 + $0x28] sm:$0xff]
      %v2598 = vld [vmem:[#allocation4 + $0x30] sm:$0xff]
      %v2599 = vld [vmem:[#allocation4 + $0x38] sm:$0xff]
      %v2600 = vld [vmem:[%s5] sm:$0xff]
      %v2601 = vld [vmem:[%s5 + $0x8] sm:$0xff]
      %v2602 = vld [vmem:[%s5 + $0x10] sm:$0xff]
      %v2603 = vld [vmem:[%s5 + $0x18] sm:$0xff]
      %v2604 = vld [vmem:[%s5 + $0x20] sm:$0xf]
      %v2606 = vsel %vm1626, %v2592, 0
      %v2609 = vsel %vm1626, %v2593, 0
      %v2612 = vsel %vm1626, %v2594, 0
      %v2615 = vsel %vm1626, %v2595, 0
      %v2618 = vsel %vm1626, %v2596, 0
      %v2621 = vsel %vm1626, %v2597, 0
      %v2624 = vsel %vm1626, %v2598, 0
      %v2627 = vsel %vm1626, %v2599, 0
      %v2630 = vsel %vm1651, %v2604, 0
      %2632 = vmatpush.msra.mxu0 0.0
      %2633 = vmatpush.msra.mxu0 0.0
      %2634 = vmatpush.msra.mxu0 0.0
      %2635 = vmatpush.msra.mxu0 0.0
      %2636 = vmatpush.msra.mxu0 0.0
      %2637 = vmatpush.msra.mxu0 0.0
      %2638 = vmatpush.msra.mxu0 0.0
      %2639 = vmatpush.msra.mxu0 0.0
      %2640 = vmatpush.msra.mxu0 0.0
      %2641 = vmatpush.msra.mxu0 0.0
      %2642 = vmatpush.msra.mxu0 0.0
      %2643 = vmatpush.msra.mxu0 %v2630
      %2644 = vmatpush.msra.mxu0 %v2603
      %2645 = vmatpush.msra.mxu0 %v2602
      %2646 = vmatpush.msra.mxu0 %v2601
      %2647 = vmatpush.msra.mxu0 %v2600
      %2648 = vmatmul.f32.gmra.mxu0 %v2606
      %v2649 = vpop.f32.mrf.mxu0
      %v2650 = vadd.f32 0.0, %v2649
      %2651 = vmatmul.f32.gmra.mxu0 %v2609
      %v2652 = vpop.f32.mrf.mxu0
      %v2653 = vadd.f32 0.0, %v2652
      %2654 = vmatmul.f32.gmra.mxu0 %v2612
      %v2655 = vpop.f32.mrf.mxu0
      %v2656 = vadd.f32 0.0, %v2655
      %2657 = vmatmul.f32.gmra.mxu0 %v2615
      %v2658 = vpop.f32.mrf.mxu0
      %v2659 = vadd.f32 0.0, %v2658
      %2660 = vmatmul.f32.gmra.mxu0 %v2618
      %v2661 = vpop.f32.mrf.mxu0
      %v2662 = vadd.f32 0.0, %v2661
      %2663 = vmatmul.f32.gmra.mxu0 %v2621
      %v2664 = vpop.f32.mrf.mxu0
      %v2665 = vadd.f32 0.0, %v2664
      %2666 = vmatmul.f32.gmra.mxu0 %v2624
      %v2667 = vpop.f32.mrf.mxu0
      %v2668 = vadd.f32 0.0, %v2667
      %2669 = vmatmul.f32.gmra.mxu0 %v2627
      %v2670 = vpop.f32.mrf.mxu0
      %v2671 = vadd.f32 0.0, %v2670
      %2672 = vdwg.mxu0
      %v2673 = vsel %vm952, %v2650, 0.0
      %v2674 = vsel %vm952, %v2653, 0.0
      %v2675 = vadd.f32 %v2673, %v2674
      %v2676 = vsel %vm952, %v2656, 0.0
      %v2677 = vadd.f32 %v2675, %v2676
      %v2678 = vsel %vm952, %v2659, 0.0
      %v2679 = vadd.f32 %v2677, %v2678
      %v2680 = vsel %vm952, %v2662, 0.0
      %v2681 = vadd.f32 %v2679, %v2680
      %v2682 = vsel %vm952, %v2665, 0.0
      %v2683 = vadd.f32 %v2681, %v2682
      %v2684 = vsel %vm952, %v2668, 0.0
      %v2685 = vadd.f32 %v2683, %v2684
      %v2686 = vsel %vm952, %v2671, 0.0
      %v2687 = vadd.f32 %v2685, %v2686
      %2688 = vadd.xlane.f32.xlu0 %v2687
      %v2689 = vpop.xlane.xlu0 %2688
      %v2690 = vrot.slane %v2689, 4
      %v2691 = vadd.f32 %v2689, %v2690
      %v2692 = vrot.slane %v2691, 2
      %v2693 = vadd.f32 %v2691, %v2692
      %v2694 = vrot.slane %v2693, 1
      %v2695 = vadd.f32 %v2693, %v2694
      %s2696 = vtos %v2695
      %v2697 = vrcp.pop 256.0
      %v2698 = vmul.f32 256.0, %v2697
      %v2699 = vsub.f32 1.0, %v2698
      %v2700 = vmul.f32 %v2697, %v2699
      %v2701 = vadd.f32 %v2697, %v2700
      %vm2702 = vweird.f32 %v2697
      %v2703 = vsel %vm2702, %v2697, %v2701
      %s2704 = vtos %v2703
      %s2705 = smul.f32 %s2696, %s2704
      %v2706 = vstv %s2705
      %v2707 = vsub.f32 %v2650, %v2706
      %v2708 = vsub.f32 %v2653, %v2706
      %v2709 = vsub.f32 %v2656, %v2706
      %v2710 = vsub.f32 %v2659, %v2706
      %v2711 = vsub.f32 %v2662, %v2706
      %v2712 = vsub.f32 %v2665, %v2706
      %v2713 = vsub.f32 %v2668, %v2706
      %v2714 = vsub.f32 %v2671, %v2706
      %v2715 = vmul.f32 %v2707, %v2707
      %v2716 = vmul.f32 %v2708, %v2708
      %v2717 = vmul.f32 %v2709, %v2709
      %v2718 = vmul.f32 %v2710, %v2710
      %v2719 = vmul.f32 %v2711, %v2711
      %v2720 = vmul.f32 %v2712, %v2712
      %v2721 = vmul.f32 %v2713, %v2713
      %v2722 = vmul.f32 %v2714, %v2714
      %v2723 = vsel %vm952, %v2715, 0.0
      %v2724 = vsel %vm952, %v2716, 0.0
      %v2725 = vadd.f32 %v2723, %v2724
      %v2726 = vsel %vm952, %v2717, 0.0
      %v2727 = vadd.f32 %v2725, %v2726
      %v2728 = vsel %vm952, %v2718, 0.0
      %v2729 = vadd.f32 %v2727, %v2728
      %v2730 = vsel %vm952, %v2719, 0.0
      %v2731 = vadd.f32 %v2729, %v2730
      %v2732 = vsel %vm952, %v2720, 0.0
      %v2733 = vadd.f32 %v2731, %v2732
      %v2734 = vsel %vm952, %v2721, 0.0
      %v2735 = vadd.f32 %v2733, %v2734
      %v2736 = vsel %vm952, %v2722, 0.0
      %v2737 = vadd.f32 %v2735, %v2736
      %2738 = vadd.xlane.f32.xlu0 %v2737
      %v2739 = vpop.xlane.xlu0 %2738
      %v2740 = vrot.slane %v2739, 4
      %v2741 = vadd.f32 %v2739, %v2740
      %v2742 = vrot.slane %v2741, 2
      %v2743 = vadd.f32 %v2741, %v2742
      %v2744 = vrot.slane %v2743, 1
      %v2745 = vadd.f32 %v2743, %v2744
      %s2746 = vtos %v2745
      %v2747 = vrcp.pop 256.0
      %v2748 = vmul.f32 256.0, %v2747
      %v2749 = vsub.f32 1.0, %v2748
      %v2750 = vmul.f32 %v2747, %v2749
      %v2751 = vadd.f32 %v2747, %v2750
      %vm2752 = vweird.f32 %v2747
      %v2753 = vsel %vm2752, %v2747, %v2751
      %s2754 = vtos %v2753
      %s2755 = smul.f32 %s2746, %s2754
      %s2756 = sadd.f32 %s2755, 1e-05
      %v2757 = vstv %s2756
      %v2758 = vrsqrt.pop %v2757
      %v2759 = vmul.f32 %v2758, %v2757
      %v2760 = vmul.f32 %v2759, %v2758
      %v2761 = vmul.f32 0.5, %v2760
      %v2762 = vsub.f32 1.5, %v2761
      %v2763 = vmul.f32 %v2758, %v2762
      %vm2764 = vweird.f32 %v2757
      %vm2765 = vweird.f32 %v2758
      %vm2766 = vmor %vm2764, %vm2765
      %v2767 = vsel %vm2766, %v2758, %v2763
      %s2768 = vtos %v2767
      %v2769 = vstv %s2768
      %v2770 = vmul.f32 %v2707, %v2769
      %v2771 = vmul.f32 %v2708, %v2769
      %v2772 = vmul.f32 %v2709, %v2769
      %v2773 = vmul.f32 %v2710, %v2769
      %v2774 = vmul.f32 %v2711, %v2769
      %v2775 = vmul.f32 %v2712, %v2769
      %v2776 = vmul.f32 %v2713, %v2769
      %v2777 = vmul.f32 %v2714, %v2769
      %v2778 = vld [vmem:[%s6] sm:$0x1]
      %v2780 = vperm.slane %v2778, 0
      %v2782 = vmul.f32 %v2770, %v2780
      %v2783 = vmul.f32 %v2771, %v2780
      %v2784 = vmul.f32 %v2772, %v2780
      %v2785 = vmul.f32 %v2773, %v2780
      %v2786 = vmul.f32 %v2774, %v2780
      %v2787 = vmul.f32 %v2775, %v2780
      %v2788 = vmul.f32 %v2776, %v2780
      %v2789 = vmul.f32 %v2777, %v2780
      %v2790 = vld [vmem:[%s7] sm:$0x1]
      %v2792 = vperm.slane %v2790, 0
      %v2794 = vadd.f32 %v2782, %v2792
      %v2795 = vadd.f32 %v2783, %v2792
      %v2796 = vadd.f32 %v2784, %v2792
      %v2797 = vadd.f32 %v2785, %v2792
      %v2798 = vadd.f32 %v2786, %v2792
      %v2799 = vadd.f32 %v2787, %v2792
      %v2800 = vadd.f32 %v2788, %v2792
      %v2801 = vadd.f32 %v2789, %v2792
      %v2810 = vrot.slane %v2794, 2
      %v2811 = vrot.slane %v2794, 4
      %v2812 = vrot.slane %v2794, 6
      %v2813 = vrot.slane %v2795, 2
      %v2814 = vrot.slane %v2795, 4
      %v2815 = vrot.slane %v2795, 6
      %v2816 = vrot.slane %v2796, 2
      %v2817 = vrot.slane %v2796, 4
      %v2818 = vrot.slane %v2796, 6
      %v2819 = vrot.slane %v2797, 2
      %v2820 = vrot.slane %v2797, 4
      %v2821 = vrot.slane %v2797, 6
      %v2822 = vrot.slane %v2798, 2
      %v2823 = vrot.slane %v2798, 4
      %v2824 = vrot.slane %v2798, 6
      %v2825 = vrot.slane %v2799, 2
      %v2826 = vrot.slane %v2799, 4
      %v2827 = vrot.slane %v2799, 6
      %v2828 = vrot.slane %v2800, 2
      %v2829 = vrot.slane %v2800, 4
      %v2830 = vrot.slane %v2800, 6
      %v2831 = vrot.slane %v2801, 2
      %v2832 = vrot.slane %v2801, 4
      %v2833 = vrot.slane %v2801, 6
      %v2834 = vrot.slane %v2794, 1
      %v2835 = vrot.slane %v2810, 1
      %v2836 = vrot.slane %v2811, 1
      %v2837 = vrot.slane %v2812, 1
      %v2838 = vrot.slane %v2795, 1
      %v2839 = vrot.slane %v2813, 1
      %v2840 = vrot.slane %v2814, 1
      %v2841 = vrot.slane %v2815, 1
      %v2842 = vrot.slane %v2796, 1
      %v2843 = vrot.slane %v2816, 1
      %v2844 = vrot.slane %v2817, 1
      %v2845 = vrot.slane %v2818, 1
      %v2846 = vrot.slane %v2797, 1
      %v2847 = vrot.slane %v2819, 1
      %v2848 = vrot.slane %v2820, 1
      %v2849 = vrot.slane %v2821, 1
      %v2850 = vrot.slane %v2798, 1
      %v2851 = vrot.slane %v2822, 1
      %v2852 = vrot.slane %v2823, 1
      %v2853 = vrot.slane %v2824, 1
      %v2854 = vrot.slane %v2799, 1
      %v2855 = vrot.slane %v2825, 1
      %v2856 = vrot.slane %v2826, 1
      %v2857 = vrot.slane %v2827, 1
      %v2858 = vrot.slane %v2800, 1
      %v2859 = vrot.slane %v2828, 1
      %v2860 = vrot.slane %v2829, 1
      %v2861 = vrot.slane %v2830, 1
      %v2862 = vrot.slane %v2801, 1
      %v2863 = vrot.slane %v2831, 1
      %v2864 = vrot.slane %v2832, 1
      %v2865 = vrot.slane %v2833, 1
      %v2930 = vadd.f32 %v888, %v2794
      %v2931 = vadd.f32 %v889, %v2834
      %v2932 = vadd.f32 %v890, %v2810
      %v2933 = vadd.f32 %v891, %v2835
      %v2934 = vadd.f32 %v892, %v2811
      %v2935 = vadd.f32 %v893, %v2836
      %v2936 = vadd.f32 %v894, %v2812
      %v2937 = vadd.f32 %v895, %v2837
      %v2938 = vadd.f32 %v896, %v2795
      %v2939 = vadd.f32 %v897, %v2838
      %v2940 = vadd.f32 %v898, %v2813
      %v2941 = vadd.f32 %v899, %v2839
      %v2942 = vadd.f32 %v900, %v2814
      %v2943 = vadd.f32 %v901, %v2840
      %v2944 = vadd.f32 %v902, %v2815
      %v2945 = vadd.f32 %v903, %v2841
      %v2946 = vadd.f32 %v904, %v2796
      %v2947 = vadd.f32 %v905, %v2842
      %v2948 = vadd.f32 %v906, %v2816
      %v2949 = vadd.f32 %v907, %v2843
      %v2950 = vadd.f32 %v908, %v2817
      %v2951 = vadd.f32 %v909, %v2844
      %v2952 = vadd.f32 %v910, %v2818
      %v2953 = vadd.f32 %v911, %v2845
      %v2954 = vadd.f32 %v912, %v2797
      %v2955 = vadd.f32 %v913, %v2846
      %v2956 = vadd.f32 %v914, %v2819
      %v2957 = vadd.f32 %v915, %v2847
      %v2958 = vadd.f32 %v916, %v2820
      %v2959 = vadd.f32 %v917, %v2848
      %v2960 = vadd.f32 %v918, %v2821
      %v2961 = vadd.f32 %v919, %v2849
      %v2962 = vadd.f32 %v920, %v2798
      %v2963 = vadd.f32 %v921, %v2850
      %v2964 = vadd.f32 %v922, %v2822
      %v2965 = vadd.f32 %v923, %v2851
      %v2966 = vadd.f32 %v924, %v2823
      %v2967 = vadd.f32 %v925, %v2852
      %v2968 = vadd.f32 %v926, %v2824
      %v2969 = vadd.f32 %v927, %v2853
      %v2970 = vadd.f32 %v928, %v2799
      %v2971 = vadd.f32 %v929, %v2854
      %v2972 = vadd.f32 %v930, %v2825
      %v2973 = vadd.f32 %v931, %v2855
      %v2974 = vadd.f32 %v932, %v2826
      %v2975 = vadd.f32 %v933, %v2856
      %v2976 = vadd.f32 %v934, %v2827
      %v2977 = vadd.f32 %v935, %v2857
      %v2978 = vadd.f32 %v936, %v2800
      %v2979 = vadd.f32 %v937, %v2858
      %v2980 = vadd.f32 %v938, %v2828
      %v2981 = vadd.f32 %v939, %v2859
      %v2982 = vadd.f32 %v940, %v2829
      %v2983 = vadd.f32 %v941, %v2860
      %v2984 = vadd.f32 %v942, %v2830
      %v2985 = vadd.f32 %v943, %v2861
      %v2986 = vadd.f32 %v944, %v2801
      %v2987 = vadd.f32 %v945, %v2862
      %v2988 = vadd.f32 %v946, %v2831
      %v2989 = vadd.f32 %v947, %v2863
      %v2990 = vadd.f32 %v948, %v2832
      %v2991 = vadd.f32 %v949, %v2864
      %v2992 = vadd.f32 %v950, %v2833
      %v2993 = vadd.f32 %v951, %v2865
      %v2994 = vmul.f32 %v2930, 0.5
      %v2995 = vmul.f32 %v2931, 0.5
      %v2996 = vmul.f32 %v2932, 0.5
      %v2997 = vmul.f32 %v2933, 0.5
      %v2998 = vmul.f32 %v2934, 0.5
      %v2999 = vmul.f32 %v2935, 0.5
      %v3000 = vmul.f32 %v2936, 0.5
      %v3001 = vmul.f32 %v2937, 0.5
      %v3002 = vmul.f32 %v2938, 0.5
      %v3003 = vmul.f32 %v2939, 0.5
      %v3004 = vmul.f32 %v2940, 0.5
      %v3005 = vmul.f32 %v2941, 0.5
      %v3006 = vmul.f32 %v2942, 0.5
      %v3007 = vmul.f32 %v2943, 0.5
      %v3008 = vmul.f32 %v2944, 0.5
      %v3009 = vmul.f32 %v2945, 0.5
      %v3010 = vmul.f32 %v2946, 0.5
      %v3011 = vmul.f32 %v2947, 0.5
      %v3012 = vmul.f32 %v2948, 0.5
      %v3013 = vmul.f32 %v2949, 0.5
      %v3014 = vmul.f32 %v2950, 0.5
      %v3015 = vmul.f32 %v2951, 0.5
      %v3016 = vmul.f32 %v2952, 0.5
      %v3017 = vmul.f32 %v2953, 0.5
      %v3018 = vmul.f32 %v2954, 0.5
      %v3019 = vmul.f32 %v2955, 0.5
      %v3020 = vmul.f32 %v2956, 0.5
      %v3021 = vmul.f32 %v2957, 0.5
      %v3022 = vmul.f32 %v2958, 0.5
      %v3023 = vmul.f32 %v2959, 0.5
      %v3024 = vmul.f32 %v2960, 0.5
      %v3025 = vmul.f32 %v2961, 0.5
      %v3026 = vmul.f32 %v2962, 0.5
      %v3027 = vmul.f32 %v2963, 0.5
      %v3028 = vmul.f32 %v2964, 0.5
      %v3029 = vmul.f32 %v2965, 0.5
      %v3030 = vmul.f32 %v2966, 0.5
      %v3031 = vmul.f32 %v2967, 0.5
      %v3032 = vmul.f32 %v2968, 0.5
      %v3033 = vmul.f32 %v2969, 0.5
      %v3034 = vmul.f32 %v2970, 0.5
      %v3035 = vmul.f32 %v2971, 0.5
      %v3036 = vmul.f32 %v2972, 0.5
      %v3037 = vmul.f32 %v2973, 0.5
      %v3038 = vmul.f32 %v2974, 0.5
      %v3039 = vmul.f32 %v2975, 0.5
      %v3040 = vmul.f32 %v2976, 0.5
      %v3041 = vmul.f32 %v2977, 0.5
      %v3042 = vmul.f32 %v2978, 0.5
      %v3043 = vmul.f32 %v2979, 0.5
      %v3044 = vmul.f32 %v2980, 0.5
      %v3045 = vmul.f32 %v2981, 0.5
      %v3046 = vmul.f32 %v2982, 0.5
      %v3047 = vmul.f32 %v2983, 0.5
      %v3048 = vmul.f32 %v2984, 0.5
      %v3049 = vmul.f32 %v2985, 0.5
      %v3050 = vmul.f32 %v2986, 0.5
      %v3051 = vmul.f32 %v2987, 0.5
      %v3052 = vmul.f32 %v2988, 0.5
      %v3053 = vmul.f32 %v2989, 0.5
      %v3054 = vmul.f32 %v2990, 0.5
      %v3055 = vmul.f32 %v2991, 0.5
      %v3056 = vmul.f32 %v2992, 0.5
      %v3057 = vmul.f32 %v2993, 0.5
      %v3058 = vmul.f32 %v2930, %v1839
      %v3059 = vmul.f32 %v2931, %v1839
      %v3060 = vmul.f32 %v2932, %v1839
      %v3061 = vmul.f32 %v2933, %v1839
      %v3062 = vmul.f32 %v2934, %v1839
      %v3063 = vmul.f32 %v2935, %v1839
      %v3064 = vmul.f32 %v2936, %v1839
      %v3065 = vmul.f32 %v2937, %v1839
      %v3066 = vmul.f32 %v2938, %v1839
      %v3067 = vmul.f32 %v2939, %v1839
      %v3068 = vmul.f32 %v2940, %v1839
      %v3069 = vmul.f32 %v2941, %v1839
      %v3070 = vmul.f32 %v2942, %v1839
      %v3071 = vmul.f32 %v2943, %v1839
      %v3072 = vmul.f32 %v2944, %v1839
      %v3073 = vmul.f32 %v2945, %v1839
      %v3074 = vmul.f32 %v2946, %v1839
      %v3075 = vmul.f32 %v2947, %v1839
      %v3076 = vmul.f32 %v2948, %v1839
      %v3077 = vmul.f32 %v2949, %v1839
      %v3078 = vmul.f32 %v2950, %v1839
      %v3079 = vmul.f32 %v2951, %v1839
      %v3080 = vmul.f32 %v2952, %v1839
      %v3081 = vmul.f32 %v2953, %v1839
      %v3082 = vmul.f32 %v2954, %v1839
      %v3083 = vmul.f32 %v2955, %v1839
      %v3084 = vmul.f32 %v2956, %v1839
      %v3085 = vmul.f32 %v2957, %v1839
      %v3086 = vmul.f32 %v2958, %v1839
      %v3087 = vmul.f32 %v2959, %v1839
      %v3088 = vmul.f32 %v2960, %v1839
      %v3089 = vmul.f32 %v2961, %v1839
      %v3090 = vmul.f32 %v2962, %v1839
      %v3091 = vmul.f32 %v2963, %v1839
      %v3092 = vmul.f32 %v2964, %v1839
      %v3093 = vmul.f32 %v2965, %v1839
      %v3094 = vmul.f32 %v2966, %v1839
      %v3095 = vmul.f32 %v2967, %v1839
      %v3096 = vmul.f32 %v2968, %v1839
      %v3097 = vmul.f32 %v2969, %v1839
      %v3098 = vmul.f32 %v2970, %v1839
      %v3099 = vmul.f32 %v2971, %v1839
      %v3100 = vmul.f32 %v2972, %v1839
      %v3101 = vmul.f32 %v2973, %v1839
      %v3102 = vmul.f32 %v2974, %v1839
      %v3103 = vmul.f32 %v2975, %v1839
      %v3104 = vmul.f32 %v2976, %v1839
      %v3105 = vmul.f32 %v2977, %v1839
      %v3106 = vmul.f32 %v2978, %v1839
      %v3107 = vmul.f32 %v2979, %v1839
      %v3108 = vmul.f32 %v2980, %v1839
      %v3109 = vmul.f32 %v2981, %v1839
      %v3110 = vmul.f32 %v2982, %v1839
      %v3111 = vmul.f32 %v2983, %v1839
      %v3112 = vmul.f32 %v2984, %v1839
      %v3113 = vmul.f32 %v2985, %v1839
      %v3114 = vmul.f32 %v2986, %v1839
      %v3115 = vmul.f32 %v2987, %v1839
      %v3116 = vmul.f32 %v2988, %v1839
      %v3117 = vmul.f32 %v2989, %v1839
      %v3118 = vmul.f32 %v2990, %v1839
      %v3119 = vmul.f32 %v2991, %v1839
      %v3120 = vmul.f32 %v2992, %v1839
      %v3121 = vmul.f32 %v2993, %v1839
      %v3122 = vmul.f32 %v3058, %v3058
      %v3123 = vmin.f32 16.0, %v3122
      %v3124 = vmul.f32 %v3123, 2.1237322e-06
      %v3125 = vadd.f32 %v3124, 0.00028619796
      %v3126 = vmul.f32 %v3123, %v3125
      %v3127 = vadd.f32 %v3126, 0.0036580483
      %v3128 = vmul.f32 %v3123, %v3127
      %v3129 = vadd.f32 %v3128, 0.05243302
      %v3130 = vmul.f32 %v3123, %v3129
      %v3131 = vadd.f32 %v3130, 0.18741608
      %v3132 = vmul.f32 %v3123, %v3131
      %v3133 = vadd.f32 %v3132, 1.1283791
      %v3134 = vmul.f32 %v3058, %v3133
      %v3135 = vmul.f32 %v3123, 3.8918573e-05
      %v3136 = vadd.f32 %v3135, 0.001143296
      %v3137 = vmul.f32 %v3123, %v3136
      %v3138 = vadd.f32 %v3137, 0.014752088
      %v3139 = vmul.f32 %v3123, %v3138
      %v3140 = vadd.f32 %v3139, 0.112945676
      %v3141 = vmul.f32 %v3123, %v3140
      %v3142 = vadd.f32 %v3141, 0.4994258
      %v3143 = vmul.f32 %v3123, %v3142
      %v3144 = vadd.f32 %v3143, 1.0
      %v3145 = vrcp.pop %v3144
      %v3146 = vmul.f32 %v3144, %v3145
      %v3147 = vsub.f32 1.0, %v3146
      %v3148 = vmul.f32 %v3145, %v3147
      %v3149 = vadd.f32 %v3145, %v3148
      %vm3150 = vweird.f32 %v3144
      %vm3151 = vweird.f32 %v3145
      %vm3152 = vmor %vm3150, %vm3151
      %v3153 = vsel %vm3152, %v3145, %v3149
      %v3154 = vand.u32 2147483647, %v3144
      %vm3155 = vcmp.eq.f32.partialorder %v3154, 8.507059e+37
      %v3156 = vand.u32 %v3144, 2147483648
      %v3157 = vor.u32 1.1754944e-38, %v3156
      %v3158 = vsel %vm3155, %v3157, %v3153
      %v3159 = vmul.f32 %v3134, %v3158
      %v3160 = vmin.f32 %v3159, 1.0
      %v3161 = vmax.f32 %v3160, -1.0
      %v3162 = vmul.f32 %v3059, %v3059
      %v3163 = vmin.f32 16.0, %v3162
      %v3164 = vmul.f32 %v3163, 2.1237322e-06
      %v3165 = vadd.f32 %v3164, 0.00028619796
      %v3166 = vmul.f32 %v3163, %v3165
      %v3167 = vadd.f32 %v3166, 0.0036580483
      %v3168 = vmul.f32 %v3163, %v3167
      %v3169 = vadd.f32 %v3168, 0.05243302
      %v3170 = vmul.f32 %v3163, %v3169
      %v3171 = vadd.f32 %v3170, 0.18741608
      %v3172 = vmul.f32 %v3163, %v3171
      %v3173 = vadd.f32 %v3172, 1.1283791
      %v3174 = vmul.f32 %v3059, %v3173
      %v3175 = vmul.f32 %v3163, 3.8918573e-05
      %v3176 = vadd.f32 %v3175, 0.001143296
      %v3177 = vmul.f32 %v3163, %v3176
      %v3178 = vadd.f32 %v3177, 0.014752088
      %v3179 = vmul.f32 %v3163, %v3178
      %v3180 = vadd.f32 %v3179, 0.112945676
      %v3181 = vmul.f32 %v3163, %v3180
      %v3182 = vadd.f32 %v3181, 0.4994258
      %v3183 = vmul.f32 %v3163, %v3182
      %v3184 = vadd.f32 %v3183, 1.0
      %v3185 = vrcp.pop %v3184
      %v3186 = vmul.f32 %v3184, %v3185
      %v3187 = vsub.f32 1.0, %v3186
      %v3188 = vmul.f32 %v3185, %v3187
      %v3189 = vadd.f32 %v3185, %v3188
      %vm3190 = vweird.f32 %v3184
      %vm3191 = vweird.f32 %v3185
      %vm3192 = vmor %vm3190, %vm3191
      %v3193 = vsel %vm3192, %v3185, %v3189
      %v3194 = vand.u32 2147483647, %v3184
      %vm3195 = vcmp.eq.f32.partialorder %v3194, 8.507059e+37
      %v3196 = vand.u32 %v3184, 2147483648
      %v3197 = vor.u32 1.1754944e-38, %v3196
      %v3198 = vsel %vm3195, %v3197, %v3193
      %v3199 = vmul.f32 %v3174, %v3198
      %v3200 = vmin.f32 %v3199, 1.0
      %v3201 = vmax.f32 %v3200, -1.0
      %v3202 = vmul.f32 %v3060, %v3060
      %v3203 = vmin.f32 16.0, %v3202
      %v3204 = vmul.f32 %v3203, 2.1237322e-06
      %v3205 = vadd.f32 %v3204, 0.00028619796
      %v3206 = vmul.f32 %v3203, %v3205
      %v3207 = vadd.f32 %v3206, 0.0036580483
      %v3208 = vmul.f32 %v3203, %v3207
      %v3209 = vadd.f32 %v3208, 0.05243302
      %v3210 = vmul.f32 %v3203, %v3209
      %v3211 = vadd.f32 %v3210, 0.18741608
      %v3212 = vmul.f32 %v3203, %v3211
      %v3213 = vadd.f32 %v3212, 1.1283791
      %v3214 = vmul.f32 %v3060, %v3213
      %v3215 = vmul.f32 %v3203, 3.8918573e-05
      %v3216 = vadd.f32 %v3215, 0.001143296
      %v3217 = vmul.f32 %v3203, %v3216
      %v3218 = vadd.f32 %v3217, 0.014752088
      %v3219 = vmul.f32 %v3203, %v3218
      %v3220 = vadd.f32 %v3219, 0.112945676
      %v3221 = vmul.f32 %v3203, %v3220
      %v3222 = vadd.f32 %v3221, 0.4994258
      %v3223 = vmul.f32 %v3203, %v3222
      %v3224 = vadd.f32 %v3223, 1.0
      %v3225 = vrcp.pop %v3224
      %v3226 = vmul.f32 %v3224, %v3225
      %v3227 = vsub.f32 1.0, %v3226
      %v3228 = vmul.f32 %v3225, %v3227
      %v3229 = vadd.f32 %v3225, %v3228
      %vm3230 = vweird.f32 %v3224
      %vm3231 = vweird.f32 %v3225
      %vm3232 = vmor %vm3230, %vm3231
      %v3233 = vsel %vm3232, %v3225, %v3229
      %v3234 = vand.u32 2147483647, %v3224
      %vm3235 = vcmp.eq.f32.partialorder %v3234, 8.507059e+37
      %v3236 = vand.u32 %v3224, 2147483648
      %v3237 = vor.u32 1.1754944e-38, %v3236
      %v3238 = vsel %vm3235, %v3237, %v3233
      %v3239 = vmul.f32 %v3214, %v3238
      %v3240 = vmin.f32 %v3239, 1.0
      %v3241 = vmax.f32 %v3240, -1.0
      %v3242 = vmul.f32 %v3061, %v3061
      %v3243 = vmin.f32 16.0, %v3242
      %v3244 = vmul.f32 %v3243, 2.1237322e-06
      %v3245 = vadd.f32 %v3244, 0.00028619796
      %v3246 = vmul.f32 %v3243, %v3245
      %v3247 = vadd.f32 %v3246, 0.0036580483
      %v3248 = vmul.f32 %v3243, %v3247
      %v3249 = vadd.f32 %v3248, 0.05243302
      %v3250 = vmul.f32 %v3243, %v3249
      %v3251 = vadd.f32 %v3250, 0.18741608
      %v3252 = vmul.f32 %v3243, %v3251
      %v3253 = vadd.f32 %v3252, 1.1283791
      %v3254 = vmul.f32 %v3061, %v3253
      %v3255 = vmul.f32 %v3243, 3.8918573e-05
      %v3256 = vadd.f32 %v3255, 0.001143296
      %v3257 = vmul.f32 %v3243, %v3256
      %v3258 = vadd.f32 %v3257, 0.014752088
      %v3259 = vmul.f32 %v3243, %v3258
      %v3260 = vadd.f32 %v3259, 0.112945676
      %v3261 = vmul.f32 %v3243, %v3260
      %v3262 = vadd.f32 %v3261, 0.4994258
      %v3263 = vmul.f32 %v3243, %v3262
      %v3264 = vadd.f32 %v3263, 1.0
      %v3265 = vrcp.pop %v3264
      %v3266 = vmul.f32 %v3264, %v3265
      %v3267 = vsub.f32 1.0, %v3266
      %v3268 = vmul.f32 %v3265, %v3267
      %v3269 = vadd.f32 %v3265, %v3268
      %vm3270 = vweird.f32 %v3264
      %vm3271 = vweird.f32 %v3265
      %vm3272 = vmor %vm3270, %vm3271
      %v3273 = vsel %vm3272, %v3265, %v3269
      %v3274 = vand.u32 2147483647, %v3264
      %vm3275 = vcmp.eq.f32.partialorder %v3274, 8.507059e+37
      %v3276 = vand.u32 %v3264, 2147483648
      %v3277 = vor.u32 1.1754944e-38, %v3276
      %v3278 = vsel %vm3275, %v3277, %v3273
      %v3279 = vmul.f32 %v3254, %v3278
      %v3280 = vmin.f32 %v3279, 1.0
      %v3281 = vmax.f32 %v3280, -1.0
      %v3282 = vmul.f32 %v3062, %v3062
      %v3283 = vmin.f32 16.0, %v3282
      %v3284 = vmul.f32 %v3283, 2.1237322e-06
      %v3285 = vadd.f32 %v3284, 0.00028619796
      %v3286 = vmul.f32 %v3283, %v3285
      %v3287 = vadd.f32 %v3286, 0.0036580483
      %v3288 = vmul.f32 %v3283, %v3287
      %v3289 = vadd.f32 %v3288, 0.05243302
      %v3290 = vmul.f32 %v3283, %v3289
      %v3291 = vadd.f32 %v3290, 0.18741608
      %v3292 = vmul.f32 %v3283, %v3291
      %v3293 = vadd.f32 %v3292, 1.1283791
      %v3294 = vmul.f32 %v3062, %v3293
      %v3295 = vmul.f32 %v3283, 3.8918573e-05
      %v3296 = vadd.f32 %v3295, 0.001143296
      %v3297 = vmul.f32 %v3283, %v3296
      %v3298 = vadd.f32 %v3297, 0.014752088
      %v3299 = vmul.f32 %v3283, %v3298
      %v3300 = vadd.f32 %v3299, 0.112945676
      %v3301 = vmul.f32 %v3283, %v3300
      %v3302 = vadd.f32 %v3301, 0.4994258
      %v3303 = vmul.f32 %v3283, %v3302
      %v3304 = vadd.f32 %v3303, 1.0
      %v3305 = vrcp.pop %v3304
      %v3306 = vmul.f32 %v3304, %v3305
      %v3307 = vsub.f32 1.0, %v3306
      %v3308 = vmul.f32 %v3305, %v3307
      %v3309 = vadd.f32 %v3305, %v3308
      %vm3310 = vweird.f32 %v3304
      %vm3311 = vweird.f32 %v3305
      %vm3312 = vmor %vm3310, %vm3311
      %v3313 = vsel %vm3312, %v3305, %v3309
      %v3314 = vand.u32 2147483647, %v3304
      %vm3315 = vcmp.eq.f32.partialorder %v3314, 8.507059e+37
      %v3316 = vand.u32 %v3304, 2147483648
      %v3317 = vor.u32 1.1754944e-38, %v3316
      %v3318 = vsel %vm3315, %v3317, %v3313
      %v3319 = vmul.f32 %v3294, %v3318
      %v3320 = vmin.f32 %v3319, 1.0
      %v3321 = vmax.f32 %v3320, -1.0
      %v3322 = vmul.f32 %v3063, %v3063
      %v3323 = vmin.f32 16.0, %v3322
      %v3324 = vmul.f32 %v3323, 2.1237322e-06
      %v3325 = vadd.f32 %v3324, 0.00028619796
      %v3326 = vmul.f32 %v3323, %v3325
      %v3327 = vadd.f32 %v3326, 0.0036580483
      %v3328 = vmul.f32 %v3323, %v3327
      %v3329 = vadd.f32 %v3328, 0.05243302
      %v3330 = vmul.f32 %v3323, %v3329
      %v3331 = vadd.f32 %v3330, 0.18741608
      %v3332 = vmul.f32 %v3323, %v3331
      %v3333 = vadd.f32 %v3332, 1.1283791
      %v3334 = vmul.f32 %v3063, %v3333
      %v3335 = vmul.f32 %v3323, 3.8918573e-05
      %v3336 = vadd.f32 %v3335, 0.001143296
      %v3337 = vmul.f32 %v3323, %v3336
      %v3338 = vadd.f32 %v3337, 0.014752088
      %v3339 = vmul.f32 %v3323, %v3338
      %v3340 = vadd.f32 %v3339, 0.112945676
      %v3341 = vmul.f32 %v3323, %v3340
      %v3342 = vadd.f32 %v3341, 0.4994258
      %v3343 = vmul.f32 %v3323, %v3342
      %v3344 = vadd.f32 %v3343, 1.0
      %v3345 = vrcp.pop %v3344
      %v3346 = vmul.f32 %v3344, %v3345
      %v3347 = vsub.f32 1.0, %v3346
      %v3348 = vmul.f32 %v3345, %v3347
      %v3349 = vadd.f32 %v3345, %v3348
      %vm3350 = vweird.f32 %v3344
      %vm3351 = vweird.f32 %v3345
      %vm3352 = vmor %vm3350, %vm3351
      %v3353 = vsel %vm3352, %v3345, %v3349
      %v3354 = vand.u32 2147483647, %v3344
      %vm3355 = vcmp.eq.f32.partialorder %v3354, 8.507059e+37
      %v3356 = vand.u32 %v3344, 2147483648
      %v3357 = vor.u32 1.1754944e-38, %v3356
      %v3358 = vsel %vm3355, %v3357, %v3353
      %v3359 = vmul.f32 %v3334, %v3358
      %v3360 = vmin.f32 %v3359, 1.0
      %v3361 = vmax.f32 %v3360, -1.0
      %v3362 = vmul.f32 %v3064, %v3064
      %v3363 = vmin.f32 16.0, %v3362
      %v3364 = vmul.f32 %v3363, 2.1237322e-06
      %v3365 = vadd.f32 %v3364, 0.00028619796
      %v3366 = vmul.f32 %v3363, %v3365
      %v3367 = vadd.f32 %v3366, 0.0036580483
      %v3368 = vmul.f32 %v3363, %v3367
      %v3369 = vadd.f32 %v3368, 0.05243302
      %v3370 = vmul.f32 %v3363, %v3369
      %v3371 = vadd.f32 %v3370, 0.18741608
      %v3372 = vmul.f32 %v3363, %v3371
      %v3373 = vadd.f32 %v3372, 1.1283791
      %v3374 = vmul.f32 %v3064, %v3373
      %v3375 = vmul.f32 %v3363, 3.8918573e-05
      %v3376 = vadd.f32 %v3375, 0.001143296
      %v3377 = vmul.f32 %v3363, %v3376
      %v3378 = vadd.f32 %v3377, 0.014752088
      %v3379 = vmul.f32 %v3363, %v3378
      %v3380 = vadd.f32 %v3379, 0.112945676
      %v3381 = vmul.f32 %v3363, %v3380
      %v3382 = vadd.f32 %v3381, 0.4994258
      %v3383 = vmul.f32 %v3363, %v3382
      %v3384 = vadd.f32 %v3383, 1.0
      %v3385 = vrcp.pop %v3384
      %v3386 = vmul.f32 %v3384, %v3385
      %v3387 = vsub.f32 1.0, %v3386
      %v3388 = vmul.f32 %v3385, %v3387
      %v3389 = vadd.f32 %v3385, %v3388
      %vm3390 = vweird.f32 %v3384
      %vm3391 = vweird.f32 %v3385
      %vm3392 = vmor %vm3390, %vm3391
      %v3393 = vsel %vm3392, %v3385, %v3389
      %v3394 = vand.u32 2147483647, %v3384
      %vm3395 = vcmp.eq.f32.partialorder %v3394, 8.507059e+37
      %v3396 = vand.u32 %v3384, 2147483648
      %v3397 = vor.u32 1.1754944e-38, %v3396
      %v3398 = vsel %vm3395, %v3397, %v3393
      %v3399 = vmul.f32 %v3374, %v3398
      %v3400 = vmin.f32 %v3399, 1.0
      %v3401 = vmax.f32 %v3400, -1.0
      %v3402 = vmul.f32 %v3065, %v3065
      %v3403 = vmin.f32 16.0, %v3402
      %v3404 = vmul.f32 %v3403, 2.1237322e-06
      %v3405 = vadd.f32 %v3404, 0.00028619796
      %v3406 = vmul.f32 %v3403, %v3405
      %v3407 = vadd.f32 %v3406, 0.0036580483
      %v3408 = vmul.f32 %v3403, %v3407
      %v3409 = vadd.f32 %v3408, 0.05243302
      %v3410 = vmul.f32 %v3403, %v3409
      %v3411 = vadd.f32 %v3410, 0.18741608
      %v3412 = vmul.f32 %v3403, %v3411
      %v3413 = vadd.f32 %v3412, 1.1283791
      %v3414 = vmul.f32 %v3065, %v3413
      %v3415 = vmul.f32 %v3403, 3.8918573e-05
      %v3416 = vadd.f32 %v3415, 0.001143296
      %v3417 = vmul.f32 %v3403, %v3416
      %v3418 = vadd.f32 %v3417, 0.014752088
      %v3419 = vmul.f32 %v3403, %v3418
      %v3420 = vadd.f32 %v3419, 0.112945676
      %v3421 = vmul.f32 %v3403, %v3420
      %v3422 = vadd.f32 %v3421, 0.4994258
      %v3423 = vmul.f32 %v3403, %v3422
      %v3424 = vadd.f32 %v3423, 1.0
      %v3425 = vrcp.pop %v3424
      %v3426 = vmul.f32 %v3424, %v3425
      %v3427 = vsub.f32 1.0, %v3426
      %v3428 = vmul.f32 %v3425, %v3427
      %v3429 = vadd.f32 %v3425, %v3428
      %vm3430 = vweird.f32 %v3424
      %vm3431 = vweird.f32 %v3425
      %vm3432 = vmor %vm3430, %vm3431
      %v3433 = vsel %vm3432, %v3425, %v3429
      %v3434 = vand.u32 2147483647, %v3424
      %vm3435 = vcmp.eq.f32.partialorder %v3434, 8.507059e+37
      %v3436 = vand.u32 %v3424, 2147483648
      %v3437 = vor.u32 1.1754944e-38, %v3436
      %v3438 = vsel %vm3435, %v3437, %v3433
      %v3439 = vmul.f32 %v3414, %v3438
      %v3440 = vmin.f32 %v3439, 1.0
      %v3441 = vmax.f32 %v3440, -1.0
      %v3442 = vmul.f32 %v3066, %v3066
      %v3443 = vmin.f32 16.0, %v3442
      %v3444 = vmul.f32 %v3443, 2.1237322e-06
      %v3445 = vadd.f32 %v3444, 0.00028619796
      %v3446 = vmul.f32 %v3443, %v3445
      %v3447 = vadd.f32 %v3446, 0.0036580483
      %v3448 = vmul.f32 %v3443, %v3447
      %v3449 = vadd.f32 %v3448, 0.05243302
      %v3450 = vmul.f32 %v3443, %v3449
      %v3451 = vadd.f32 %v3450, 0.18741608
      %v3452 = vmul.f32 %v3443, %v3451
      %v3453 = vadd.f32 %v3452, 1.1283791
      %v3454 = vmul.f32 %v3066, %v3453
      %v3455 = vmul.f32 %v3443, 3.8918573e-05
      %v3456 = vadd.f32 %v3455, 0.001143296
      %v3457 = vmul.f32 %v3443, %v3456
      %v3458 = vadd.f32 %v3457, 0.014752088
      %v3459 = vmul.f32 %v3443, %v3458
      %v3460 = vadd.f32 %v3459, 0.112945676
      %v3461 = vmul.f32 %v3443, %v3460
      %v3462 = vadd.f32 %v3461, 0.4994258
      %v3463 = vmul.f32 %v3443, %v3462
      %v3464 = vadd.f32 %v3463, 1.0
      %v3465 = vrcp.pop %v3464
      %v3466 = vmul.f32 %v3464, %v3465
      %v3467 = vsub.f32 1.0, %v3466
      %v3468 = vmul.f32 %v3465, %v3467
      %v3469 = vadd.f32 %v3465, %v3468
      %vm3470 = vweird.f32 %v3464
      %vm3471 = vweird.f32 %v3465
      %vm3472 = vmor %vm3470, %vm3471
      %v3473 = vsel %vm3472, %v3465, %v3469
      %v3474 = vand.u32 2147483647, %v3464
      %vm3475 = vcmp.eq.f32.partialorder %v3474, 8.507059e+37
      %v3476 = vand.u32 %v3464, 2147483648
      %v3477 = vor.u32 1.1754944e-38, %v3476
      %v3478 = vsel %vm3475, %v3477, %v3473
      %v3479 = vmul.f32 %v3454, %v3478
      %v3480 = vmin.f32 %v3479, 1.0
      %v3481 = vmax.f32 %v3480, -1.0
      %v3482 = vmul.f32 %v3067, %v3067
      %v3483 = vmin.f32 16.0, %v3482
      %v3484 = vmul.f32 %v3483, 2.1237322e-06
      %v3485 = vadd.f32 %v3484, 0.00028619796
      %v3486 = vmul.f32 %v3483, %v3485
      %v3487 = vadd.f32 %v3486, 0.0036580483
      %v3488 = vmul.f32 %v3483, %v3487
      %v3489 = vadd.f32 %v3488, 0.05243302
      %v3490 = vmul.f32 %v3483, %v3489
      %v3491 = vadd.f32 %v3490, 0.18741608
      %v3492 = vmul.f32 %v3483, %v3491
      %v3493 = vadd.f32 %v3492, 1.1283791
      %v3494 = vmul.f32 %v3067, %v3493
      %v3495 = vmul.f32 %v3483, 3.8918573e-05
      %v3496 = vadd.f32 %v3495, 0.001143296
      %v3497 = vmul.f32 %v3483, %v3496
      %v3498 = vadd.f32 %v3497, 0.014752088
      %v3499 = vmul.f32 %v3483, %v3498
      %v3500 = vadd.f32 %v3499, 0.112945676
      %v3501 = vmul.f32 %v3483, %v3500
      %v3502 = vadd.f32 %v3501, 0.4994258
      %v3503 = vmul.f32 %v3483, %v3502
      %v3504 = vadd.f32 %v3503, 1.0
      %v3505 = vrcp.pop %v3504
      %v3506 = vmul.f32 %v3504, %v3505
      %v3507 = vsub.f32 1.0, %v3506
      %v3508 = vmul.f32 %v3505, %v3507
      %v3509 = vadd.f32 %v3505, %v3508
      %vm3510 = vweird.f32 %v3504
      %vm3511 = vweird.f32 %v3505
      %vm3512 = vmor %vm3510, %vm3511
      %v3513 = vsel %vm3512, %v3505, %v3509
      %v3514 = vand.u32 2147483647, %v3504
      %vm3515 = vcmp.eq.f32.partialorder %v3514, 8.507059e+37
      %v3516 = vand.u32 %v3504, 2147483648
      %v3517 = vor.u32 1.1754944e-38, %v3516
      %v3518 = vsel %vm3515, %v3517, %v3513
      %v3519 = vmul.f32 %v3494, %v3518
      %v3520 = vmin.f32 %v3519, 1.0
      %v3521 = vmax.f32 %v3520, -1.0
      %v3522 = vmul.f32 %v3068, %v3068
      %v3523 = vmin.f32 16.0, %v3522
      %v3524 = vmul.f32 %v3523, 2.1237322e-06
      %v3525 = vadd.f32 %v3524, 0.00028619796
      %v3526 = vmul.f32 %v3523, %v3525
      %v3527 = vadd.f32 %v3526, 0.0036580483
      %v3528 = vmul.f32 %v3523, %v3527
      %v3529 = vadd.f32 %v3528, 0.05243302
      %v3530 = vmul.f32 %v3523, %v3529
      %v3531 = vadd.f32 %v3530, 0.18741608
      %v3532 = vmul.f32 %v3523, %v3531
      %v3533 = vadd.f32 %v3532, 1.1283791
      %v3534 = vmul.f32 %v3068, %v3533
      %v3535 = vmul.f32 %v3523, 3.8918573e-05
      %v3536 = vadd.f32 %v3535, 0.001143296
      %v3537 = vmul.f32 %v3523, %v3536
      %v3538 = vadd.f32 %v3537, 0.014752088
      %v3539 = vmul.f32 %v3523, %v3538
      %v3540 = vadd.f32 %v3539, 0.112945676
      %v3541 = vmul.f32 %v3523, %v3540
      %v3542 = vadd.f32 %v3541, 0.4994258
      %v3543 = vmul.f32 %v3523, %v3542
      %v3544 = vadd.f32 %v3543, 1.0
      %v3545 = vrcp.pop %v3544
      %v3546 = vmul.f32 %v3544, %v3545
      %v3547 = vsub.f32 1.0, %v3546
      %v3548 = vmul.f32 %v3545, %v3547
      %v3549 = vadd.f32 %v3545, %v3548
      %vm3550 = vweird.f32 %v3544
      %vm3551 = vweird.f32 %v3545
      %vm3552 = vmor %vm3550, %vm3551
      %v3553 = vsel %vm3552, %v3545, %v3549
      %v3554 = vand.u32 2147483647, %v3544
      %vm3555 = vcmp.eq.f32.partialorder %v3554, 8.507059e+37
      %v3556 = vand.u32 %v3544, 2147483648
      %v3557 = vor.u32 1.1754944e-38, %v3556
      %v3558 = vsel %vm3555, %v3557, %v3553
      %v3559 = vmul.f32 %v3534, %v3558
      %v3560 = vmin.f32 %v3559, 1.0
      %v3561 = vmax.f32 %v3560, -1.0
      %v3562 = vmul.f32 %v3069, %v3069
      %v3563 = vmin.f32 16.0, %v3562
      %v3564 = vmul.f32 %v3563, 2.1237322e-06
      %v3565 = vadd.f32 %v3564, 0.00028619796
      %v3566 = vmul.f32 %v3563, %v3565
      %v3567 = vadd.f32 %v3566, 0.0036580483
      %v3568 = vmul.f32 %v3563, %v3567
      %v3569 = vadd.f32 %v3568, 0.05243302
      %v3570 = vmul.f32 %v3563, %v3569
      %v3571 = vadd.f32 %v3570, 0.18741608
      %v3572 = vmul.f32 %v3563, %v3571
      %v3573 = vadd.f32 %v3572, 1.1283791
      %v3574 = vmul.f32 %v3069, %v3573
      %v3575 = vmul.f32 %v3563, 3.8918573e-05
      %v3576 = vadd.f32 %v3575, 0.001143296
      %v3577 = vmul.f32 %v3563, %v3576
      %v3578 = vadd.f32 %v3577, 0.014752088
      %v3579 = vmul.f32 %v3563, %v3578
      %v3580 = vadd.f32 %v3579, 0.112945676
      %v3581 = vmul.f32 %v3563, %v3580
      %v3582 = vadd.f32 %v3581, 0.4994258
      %v3583 = vmul.f32 %v3563, %v3582
      %v3584 = vadd.f32 %v3583, 1.0
      %v3585 = vrcp.pop %v3584
      %v3586 = vmul.f32 %v3584, %v3585
      %v3587 = vsub.f32 1.0, %v3586
      %v3588 = vmul.f32 %v3585, %v3587
      %v3589 = vadd.f32 %v3585, %v3588
      %vm3590 = vweird.f32 %v3584
      %vm3591 = vweird.f32 %v3585
      %vm3592 = vmor %vm3590, %vm3591
      %v3593 = vsel %vm3592, %v3585, %v3589
      %v3594 = vand.u32 2147483647, %v3584
      %vm3595 = vcmp.eq.f32.partialorder %v3594, 8.507059e+37
      %v3596 = vand.u32 %v3584, 2147483648
      %v3597 = vor.u32 1.1754944e-38, %v3596
      %v3598 = vsel %vm3595, %v3597, %v3593
      %v3599 = vmul.f32 %v3574, %v3598
      %v3600 = vmin.f32 %v3599, 1.0
      %v3601 = vmax.f32 %v3600, -1.0
      %v3602 = vmul.f32 %v3070, %v3070
      %v3603 = vmin.f32 16.0, %v3602
      %v3604 = vmul.f32 %v3603, 2.1237322e-06
      %v3605 = vadd.f32 %v3604, 0.00028619796
      %v3606 = vmul.f32 %v3603, %v3605
      %v3607 = vadd.f32 %v3606, 0.0036580483
      %v3608 = vmul.f32 %v3603, %v3607
      %v3609 = vadd.f32 %v3608, 0.05243302
      %v3610 = vmul.f32 %v3603, %v3609
      %v3611 = vadd.f32 %v3610, 0.18741608
      %v3612 = vmul.f32 %v3603, %v3611
      %v3613 = vadd.f32 %v3612, 1.1283791
      %v3614 = vmul.f32 %v3070, %v3613
      %v3615 = vmul.f32 %v3603, 3.8918573e-05
      %v3616 = vadd.f32 %v3615, 0.001143296
      %v3617 = vmul.f32 %v3603, %v3616
      %v3618 = vadd.f32 %v3617, 0.014752088
      %v3619 = vmul.f32 %v3603, %v3618
      %v3620 = vadd.f32 %v3619, 0.112945676
      %v3621 = vmul.f32 %v3603, %v3620
      %v3622 = vadd.f32 %v3621, 0.4994258
      %v3623 = vmul.f32 %v3603, %v3622
      %v3624 = vadd.f32 %v3623, 1.0
      %v3625 = vrcp.pop %v3624
      %v3626 = vmul.f32 %v3624, %v3625
      %v3627 = vsub.f32 1.0, %v3626
      %v3628 = vmul.f32 %v3625, %v3627
      %v3629 = vadd.f32 %v3625, %v3628
      %vm3630 = vweird.f32 %v3624
      %vm3631 = vweird.f32 %v3625
      %vm3632 = vmor %vm3630, %vm3631
      %v3633 = vsel %vm3632, %v3625, %v3629
      %v3634 = vand.u32 2147483647, %v3624
      %vm3635 = vcmp.eq.f32.partialorder %v3634, 8.507059e+37
      %v3636 = vand.u32 %v3624, 2147483648
      %v3637 = vor.u32 1.1754944e-38, %v3636
      %v3638 = vsel %vm3635, %v3637, %v3633
      %v3639 = vmul.f32 %v3614, %v3638
      %v3640 = vmin.f32 %v3639, 1.0
      %v3641 = vmax.f32 %v3640, -1.0
      %v3642 = vmul.f32 %v3071, %v3071
      %v3643 = vmin.f32 16.0, %v3642
      %v3644 = vmul.f32 %v3643, 2.1237322e-06
      %v3645 = vadd.f32 %v3644, 0.00028619796
      %v3646 = vmul.f32 %v3643, %v3645
      %v3647 = vadd.f32 %v3646, 0.0036580483
      %v3648 = vmul.f32 %v3643, %v3647
      %v3649 = vadd.f32 %v3648, 0.05243302
      %v3650 = vmul.f32 %v3643, %v3649
      %v3651 = vadd.f32 %v3650, 0.18741608
      %v3652 = vmul.f32 %v3643, %v3651
      %v3653 = vadd.f32 %v3652, 1.1283791
      %v3654 = vmul.f32 %v3071, %v3653
      %v3655 = vmul.f32 %v3643, 3.8918573e-05
      %v3656 = vadd.f32 %v3655, 0.001143296
      %v3657 = vmul.f32 %v3643, %v3656
      %v3658 = vadd.f32 %v3657, 0.014752088
      %v3659 = vmul.f32 %v3643, %v3658
      %v3660 = vadd.f32 %v3659, 0.112945676
      %v3661 = vmul.f32 %v3643, %v3660
      %v3662 = vadd.f32 %v3661, 0.4994258
      %v3663 = vmul.f32 %v3643, %v3662
      %v3664 = vadd.f32 %v3663, 1.0
      %v3665 = vrcp.pop %v3664
      %v3666 = vmul.f32 %v3664, %v3665
      %v3667 = vsub.f32 1.0, %v3666
      %v3668 = vmul.f32 %v3665, %v3667
      %v3669 = vadd.f32 %v3665, %v3668
      %vm3670 = vweird.f32 %v3664
      %vm3671 = vweird.f32 %v3665
      %vm3672 = vmor %vm3670, %vm3671
      %v3673 = vsel %vm3672, %v3665, %v3669
      %v3674 = vand.u32 2147483647, %v3664
      %vm3675 = vcmp.eq.f32.partialorder %v3674, 8.507059e+37
      %v3676 = vand.u32 %v3664, 2147483648
      %v3677 = vor.u32 1.1754944e-38, %v3676
      %v3678 = vsel %vm3675, %v3677, %v3673
      %v3679 = vmul.f32 %v3654, %v3678
      %v3680 = vmin.f32 %v3679, 1.0
      %v3681 = vmax.f32 %v3680, -1.0
      %v3682 = vmul.f32 %v3072, %v3072
      %v3683 = vmin.f32 16.0, %v3682
      %v3684 = vmul.f32 %v3683, 2.1237322e-06
      %v3685 = vadd.f32 %v3684, 0.00028619796
      %v3686 = vmul.f32 %v3683, %v3685
      %v3687 = vadd.f32 %v3686, 0.0036580483
      %v3688 = vmul.f32 %v3683, %v3687
      %v3689 = vadd.f32 %v3688, 0.05243302
      %v3690 = vmul.f32 %v3683, %v3689
      %v3691 = vadd.f32 %v3690, 0.18741608
      %v3692 = vmul.f32 %v3683, %v3691
      %v3693 = vadd.f32 %v3692, 1.1283791
      %v3694 = vmul.f32 %v3072, %v3693
      %v3695 = vmul.f32 %v3683, 3.8918573e-05
      %v3696 = vadd.f32 %v3695, 0.001143296
      %v3697 = vmul.f32 %v3683, %v3696
      %v3698 = vadd.f32 %v3697, 0.014752088
      %v3699 = vmul.f32 %v3683, %v3698
      %v3700 = vadd.f32 %v3699, 0.112945676
      %v3701 = vmul.f32 %v3683, %v3700
      %v3702 = vadd.f32 %v3701, 0.4994258
      %v3703 = vmul.f32 %v3683, %v3702
      %v3704 = vadd.f32 %v3703, 1.0
      %v3705 = vrcp.pop %v3704
      %v3706 = vmul.f32 %v3704, %v3705
      %v3707 = vsub.f32 1.0, %v3706
      %v3708 = vmul.f32 %v3705, %v3707
      %v3709 = vadd.f32 %v3705, %v3708
      %vm3710 = vweird.f32 %v3704
      %vm3711 = vweird.f32 %v3705
      %vm3712 = vmor %vm3710, %vm3711
      %v3713 = vsel %vm3712, %v3705, %v3709
      %v3714 = vand.u32 2147483647, %v3704
      %vm3715 = vcmp.eq.f32.partialorder %v3714, 8.507059e+37
      %v3716 = vand.u32 %v3704, 2147483648
      %v3717 = vor.u32 1.1754944e-38, %v3716
      %v3718 = vsel %vm3715, %v3717, %v3713
      %v3719 = vmul.f32 %v3694, %v3718
      %v3720 = vmin.f32 %v3719, 1.0
      %v3721 = vmax.f32 %v3720, -1.0
      %v3722 = vmul.f32 %v3073, %v3073
      %v3723 = vmin.f32 16.0, %v3722
      %v3724 = vmul.f32 %v3723, 2.1237322e-06
      %v3725 = vadd.f32 %v3724, 0.00028619796
      %v3726 = vmul.f32 %v3723, %v3725
      %v3727 = vadd.f32 %v3726, 0.0036580483
      %v3728 = vmul.f32 %v3723, %v3727
      %v3729 = vadd.f32 %v3728, 0.05243302
      %v3730 = vmul.f32 %v3723, %v3729
      %v3731 = vadd.f32 %v3730, 0.18741608
      %v3732 = vmul.f32 %v3723, %v3731
      %v3733 = vadd.f32 %v3732, 1.1283791
      %v3734 = vmul.f32 %v3073, %v3733
      %v3735 = vmul.f32 %v3723, 3.8918573e-05
      %v3736 = vadd.f32 %v3735, 0.001143296
      %v3737 = vmul.f32 %v3723, %v3736
      %v3738 = vadd.f32 %v3737, 0.014752088
      %v3739 = vmul.f32 %v3723, %v3738
      %v3740 = vadd.f32 %v3739, 0.112945676
      %v3741 = vmul.f32 %v3723, %v3740
      %v3742 = vadd.f32 %v3741, 0.4994258
      %v3743 = vmul.f32 %v3723, %v3742
      %v3744 = vadd.f32 %v3743, 1.0
      %v3745 = vrcp.pop %v3744
      %v3746 = vmul.f32 %v3744, %v3745
      %v3747 = vsub.f32 1.0, %v3746
      %v3748 = vmul.f32 %v3745, %v3747
      %v3749 = vadd.f32 %v3745, %v3748
      %vm3750 = vweird.f32 %v3744
      %vm3751 = vweird.f32 %v3745
      %vm3752 = vmor %vm3750, %vm3751
      %v3753 = vsel %vm3752, %v3745, %v3749
      %v3754 = vand.u32 2147483647, %v3744
      %vm3755 = vcmp.eq.f32.partialorder %v3754, 8.507059e+37
      %v3756 = vand.u32 %v3744, 2147483648
      %v3757 = vor.u32 1.1754944e-38, %v3756
      %v3758 = vsel %vm3755, %v3757, %v3753
      %v3759 = vmul.f32 %v3734, %v3758
      %v3760 = vmin.f32 %v3759, 1.0
      %v3761 = vmax.f32 %v3760, -1.0
      %v3762 = vmul.f32 %v3074, %v3074
      %v3763 = vmin.f32 16.0, %v3762
      %v3764 = vmul.f32 %v3763, 2.1237322e-06
      %v3765 = vadd.f32 %v3764, 0.00028619796
      %v3766 = vmul.f32 %v3763, %v3765
      %v3767 = vadd.f32 %v3766, 0.0036580483
      %v3768 = vmul.f32 %v3763, %v3767
      %v3769 = vadd.f32 %v3768, 0.05243302
      %v3770 = vmul.f32 %v3763, %v3769
      %v3771 = vadd.f32 %v3770, 0.18741608
      %v3772 = vmul.f32 %v3763, %v3771
      %v3773 = vadd.f32 %v3772, 1.1283791
      %v3774 = vmul.f32 %v3074, %v3773
      %v3775 = vmul.f32 %v3763, 3.8918573e-05
      %v3776 = vadd.f32 %v3775, 0.001143296
      %v3777 = vmul.f32 %v3763, %v3776
      %v3778 = vadd.f32 %v3777, 0.014752088
      %v3779 = vmul.f32 %v3763, %v3778
      %v3780 = vadd.f32 %v3779, 0.112945676
      %v3781 = vmul.f32 %v3763, %v3780
      %v3782 = vadd.f32 %v3781, 0.4994258
      %v3783 = vmul.f32 %v3763, %v3782
      %v3784 = vadd.f32 %v3783, 1.0
      %v3785 = vrcp.pop %v3784
      %v3786 = vmul.f32 %v3784, %v3785
      %v3787 = vsub.f32 1.0, %v3786
      %v3788 = vmul.f32 %v3785, %v3787
      %v3789 = vadd.f32 %v3785, %v3788
      %vm3790 = vweird.f32 %v3784
      %vm3791 = vweird.f32 %v3785
      %vm3792 = vmor %vm3790, %vm3791
      %v3793 = vsel %vm3792, %v3785, %v3789
      %v3794 = vand.u32 2147483647, %v3784
      %vm3795 = vcmp.eq.f32.partialorder %v3794, 8.507059e+37
      %v3796 = vand.u32 %v3784, 2147483648
      %v3797 = vor.u32 1.1754944e-38, %v3796
      %v3798 = vsel %vm3795, %v3797, %v3793
      %v3799 = vmul.f32 %v3774, %v3798
      %v3800 = vmin.f32 %v3799, 1.0
      %v3801 = vmax.f32 %v3800, -1.0
      %v3802 = vmul.f32 %v3075, %v3075
      %v3803 = vmin.f32 16.0, %v3802
      %v3804 = vmul.f32 %v3803, 2.1237322e-06
      %v3805 = vadd.f32 %v3804, 0.00028619796
      %v3806 = vmul.f32 %v3803, %v3805
      %v3807 = vadd.f32 %v3806, 0.0036580483
      %v3808 = vmul.f32 %v3803, %v3807
      %v3809 = vadd.f32 %v3808, 0.05243302
      %v3810 = vmul.f32 %v3803, %v3809
      %v3811 = vadd.f32 %v3810, 0.18741608
      %v3812 = vmul.f32 %v3803, %v3811
      %v3813 = vadd.f32 %v3812, 1.1283791
      %v3814 = vmul.f32 %v3075, %v3813
      %v3815 = vmul.f32 %v3803, 3.8918573e-05
      %v3816 = vadd.f32 %v3815, 0.001143296
      %v3817 = vmul.f32 %v3803, %v3816
      %v3818 = vadd.f32 %v3817, 0.014752088
      %v3819 = vmul.f32 %v3803, %v3818
      %v3820 = vadd.f32 %v3819, 0.112945676
      %v3821 = vmul.f32 %v3803, %v3820
      %v3822 = vadd.f32 %v3821, 0.4994258
      %v3823 = vmul.f32 %v3803, %v3822
      %v3824 = vadd.f32 %v3823, 1.0
      %v3825 = vrcp.pop %v3824
      %v3826 = vmul.f32 %v3824, %v3825
      %v3827 = vsub.f32 1.0, %v3826
      %v3828 = vmul.f32 %v3825, %v3827
      %v3829 = vadd.f32 %v3825, %v3828
      %vm3830 = vweird.f32 %v3824
      %vm3831 = vweird.f32 %v3825
      %vm3832 = vmor %vm3830, %vm3831
      %v3833 = vsel %vm3832, %v3825, %v3829
      %v3834 = vand.u32 2147483647, %v3824
      %vm3835 = vcmp.eq.f32.partialorder %v3834, 8.507059e+37
      %v3836 = vand.u32 %v3824, 2147483648
      %v3837 = vor.u32 1.1754944e-38, %v3836
      %v3838 = vsel %vm3835, %v3837, %v3833
      %v3839 = vmul.f32 %v3814, %v3838
      %v3840 = vmin.f32 %v3839, 1.0
      %v3841 = vmax.f32 %v3840, -1.0
      %v3842 = vmul.f32 %v3076, %v3076
      %v3843 = vmin.f32 16.0, %v3842
      %v3844 = vmul.f32 %v3843, 2.1237322e-06
      %v3845 = vadd.f32 %v3844, 0.00028619796
      %v3846 = vmul.f32 %v3843, %v3845
      %v3847 = vadd.f32 %v3846, 0.0036580483
      %v3848 = vmul.f32 %v3843, %v3847
      %v3849 = vadd.f32 %v3848, 0.05243302
      %v3850 = vmul.f32 %v3843, %v3849
      %v3851 = vadd.f32 %v3850, 0.18741608
      %v3852 = vmul.f32 %v3843, %v3851
      %v3853 = vadd.f32 %v3852, 1.1283791
      %v3854 = vmul.f32 %v3076, %v3853
      %v3855 = vmul.f32 %v3843, 3.8918573e-05
      %v3856 = vadd.f32 %v3855, 0.001143296
      %v3857 = vmul.f32 %v3843, %v3856
      %v3858 = vadd.f32 %v3857, 0.014752088
      %v3859 = vmul.f32 %v3843, %v3858
      %v3860 = vadd.f32 %v3859, 0.112945676
      %v3861 = vmul.f32 %v3843, %v3860
      %v3862 = vadd.f32 %v3861, 0.4994258
      %v3863 = vmul.f32 %v3843, %v3862
      %v3864 = vadd.f32 %v3863, 1.0
      %v3865 = vrcp.pop %v3864
      %v3866 = vmul.f32 %v3864, %v3865
      %v3867 = vsub.f32 1.0, %v3866
      %v3868 = vmul.f32 %v3865, %v3867
      %v3869 = vadd.f32 %v3865, %v3868
      %vm3870 = vweird.f32 %v3864
      %vm3871 = vweird.f32 %v3865
      %vm3872 = vmor %vm3870, %vm3871
      %v3873 = vsel %vm3872, %v3865, %v3869
      %v3874 = vand.u32 2147483647, %v3864
      %vm3875 = vcmp.eq.f32.partialorder %v3874, 8.507059e+37
      %v3876 = vand.u32 %v3864, 2147483648
      %v3877 = vor.u32 1.1754944e-38, %v3876
      %v3878 = vsel %vm3875, %v3877, %v3873
      %v3879 = vmul.f32 %v3854, %v3878
      %v3880 = vmin.f32 %v3879, 1.0
      %v3881 = vmax.f32 %v3880, -1.0
      %v3882 = vmul.f32 %v3077, %v3077
      %v3883 = vmin.f32 16.0, %v3882
      %v3884 = vmul.f32 %v3883, 2.1237322e-06
      %v3885 = vadd.f32 %v3884, 0.00028619796
      %v3886 = vmul.f32 %v3883, %v3885
      %v3887 = vadd.f32 %v3886, 0.0036580483
      %v3888 = vmul.f32 %v3883, %v3887
      %v3889 = vadd.f32 %v3888, 0.05243302
      %v3890 = vmul.f32 %v3883, %v3889
      %v3891 = vadd.f32 %v3890, 0.18741608
      %v3892 = vmul.f32 %v3883, %v3891
      %v3893 = vadd.f32 %v3892, 1.1283791
      %v3894 = vmul.f32 %v3077, %v3893
      %v3895 = vmul.f32 %v3883, 3.8918573e-05
      %v3896 = vadd.f32 %v3895, 0.001143296
      %v3897 = vmul.f32 %v3883, %v3896
      %v3898 = vadd.f32 %v3897, 0.014752088
      %v3899 = vmul.f32 %v3883, %v3898
      %v3900 = vadd.f32 %v3899, 0.112945676
      %v3901 = vmul.f32 %v3883, %v3900
      %v3902 = vadd.f32 %v3901, 0.4994258
      %v3903 = vmul.f32 %v3883, %v3902
      %v3904 = vadd.f32 %v3903, 1.0
      %v3905 = vrcp.pop %v3904
      %v3906 = vmul.f32 %v3904, %v3905
      %v3907 = vsub.f32 1.0, %v3906
      %v3908 = vmul.f32 %v3905, %v3907
      %v3909 = vadd.f32 %v3905, %v3908
      %vm3910 = vweird.f32 %v3904
      %vm3911 = vweird.f32 %v3905
      %vm3912 = vmor %vm3910, %vm3911
      %v3913 = vsel %vm3912, %v3905, %v3909
      %v3914 = vand.u32 2147483647, %v3904
      %vm3915 = vcmp.eq.f32.partialorder %v3914, 8.507059e+37
      %v3916 = vand.u32 %v3904, 2147483648
      %v3917 = vor.u32 1.1754944e-38, %v3916
      %v3918 = vsel %vm3915, %v3917, %v3913
      %v3919 = vmul.f32 %v3894, %v3918
      %v3920 = vmin.f32 %v3919, 1.0
      %v3921 = vmax.f32 %v3920, -1.0
      %v3922 = vmul.f32 %v3078, %v3078
      %v3923 = vmin.f32 16.0, %v3922
      %v3924 = vmul.f32 %v3923, 2.1237322e-06
      %v3925 = vadd.f32 %v3924, 0.00028619796
      %v3926 = vmul.f32 %v3923, %v3925
      %v3927 = vadd.f32 %v3926, 0.0036580483
      %v3928 = vmul.f32 %v3923, %v3927
      %v3929 = vadd.f32 %v3928, 0.05243302
      %v3930 = vmul.f32 %v3923, %v3929
      %v3931 = vadd.f32 %v3930, 0.18741608
      %v3932 = vmul.f32 %v3923, %v3931
      %v3933 = vadd.f32 %v3932, 1.1283791
      %v3934 = vmul.f32 %v3078, %v3933
      %v3935 = vmul.f32 %v3923, 3.8918573e-05
      %v3936 = vadd.f32 %v3935, 0.001143296
      %v3937 = vmul.f32 %v3923, %v3936
      %v3938 = vadd.f32 %v3937, 0.014752088
      %v3939 = vmul.f32 %v3923, %v3938
      %v3940 = vadd.f32 %v3939, 0.112945676
      %v3941 = vmul.f32 %v3923, %v3940
      %v3942 = vadd.f32 %v3941, 0.4994258
      %v3943 = vmul.f32 %v3923, %v3942
      %v3944 = vadd.f32 %v3943, 1.0
      %v3945 = vrcp.pop %v3944
      %v3946 = vmul.f32 %v3944, %v3945
      %v3947 = vsub.f32 1.0, %v3946
      %v3948 = vmul.f32 %v3945, %v3947
      %v3949 = vadd.f32 %v3945, %v3948
      %vm3950 = vweird.f32 %v3944
      %vm3951 = vweird.f32 %v3945
      %vm3952 = vmor %vm3950, %vm3951
      %v3953 = vsel %vm3952, %v3945, %v3949
      %v3954 = vand.u32 2147483647, %v3944
      %vm3955 = vcmp.eq.f32.partialorder %v3954, 8.507059e+37
      %v3956 = vand.u32 %v3944, 2147483648
      %v3957 = vor.u32 1.1754944e-38, %v3956
      %v3958 = vsel %vm3955, %v3957, %v3953
      %v3959 = vmul.f32 %v3934, %v3958
      %v3960 = vmin.f32 %v3959, 1.0
      %v3961 = vmax.f32 %v3960, -1.0
      %v3962 = vmul.f32 %v3079, %v3079
      %v3963 = vmin.f32 16.0, %v3962
      %v3964 = vmul.f32 %v3963, 2.1237322e-06
      %v3965 = vadd.f32 %v3964, 0.00028619796
      %v3966 = vmul.f32 %v3963, %v3965
      %v3967 = vadd.f32 %v3966, 0.0036580483
      %v3968 = vmul.f32 %v3963, %v3967
      %v3969 = vadd.f32 %v3968, 0.05243302
      %v3970 = vmul.f32 %v3963, %v3969
      %v3971 = vadd.f32 %v3970, 0.18741608
      %v3972 = vmul.f32 %v3963, %v3971
      %v3973 = vadd.f32 %v3972, 1.1283791
      %v3974 = vmul.f32 %v3079, %v3973
      %v3975 = vmul.f32 %v3963, 3.8918573e-05
      %v3976 = vadd.f32 %v3975, 0.001143296
      %v3977 = vmul.f32 %v3963, %v3976
      %v3978 = vadd.f32 %v3977, 0.014752088
      %v3979 = vmul.f32 %v3963, %v3978
      %v3980 = vadd.f32 %v3979, 0.112945676
      %v3981 = vmul.f32 %v3963, %v3980
      %v3982 = vadd.f32 %v3981, 0.4994258
      %v3983 = vmul.f32 %v3963, %v3982
      %v3984 = vadd.f32 %v3983, 1.0
      %v3985 = vrcp.pop %v3984
      %v3986 = vmul.f32 %v3984, %v3985
      %v3987 = vsub.f32 1.0, %v3986
      %v3988 = vmul.f32 %v3985, %v3987
      %v3989 = vadd.f32 %v3985, %v3988
      %vm3990 = vweird.f32 %v3984
      %vm3991 = vweird.f32 %v3985
      %vm3992 = vmor %vm3990, %vm3991
      %v3993 = vsel %vm3992, %v3985, %v3989
      %v3994 = vand.u32 2147483647, %v3984
      %vm3995 = vcmp.eq.f32.partialorder %v3994, 8.507059e+37
      %v3996 = vand.u32 %v3984, 2147483648
      %v3997 = vor.u32 1.1754944e-38, %v3996
      %v3998 = vsel %vm3995, %v3997, %v3993
      %v3999 = vmul.f32 %v3974, %v3998
      %v4000 = vmin.f32 %v3999, 1.0
      %v4001 = vmax.f32 %v4000, -1.0
      %v4002 = vmul.f32 %v3080, %v3080
      %v4003 = vmin.f32 16.0, %v4002
      %v4004 = vmul.f32 %v4003, 2.1237322e-06
      %v4005 = vadd.f32 %v4004, 0.00028619796
      %v4006 = vmul.f32 %v4003, %v4005
      %v4007 = vadd.f32 %v4006, 0.0036580483
      %v4008 = vmul.f32 %v4003, %v4007
      %v4009 = vadd.f32 %v4008, 0.05243302
      %v4010 = vmul.f32 %v4003, %v4009
      %v4011 = vadd.f32 %v4010, 0.18741608
      %v4012 = vmul.f32 %v4003, %v4011
      %v4013 = vadd.f32 %v4012, 1.1283791
      %v4014 = vmul.f32 %v3080, %v4013
      %v4015 = vmul.f32 %v4003, 3.8918573e-05
      %v4016 = vadd.f32 %v4015, 0.001143296
      %v4017 = vmul.f32 %v4003, %v4016
      %v4018 = vadd.f32 %v4017, 0.014752088
      %v4019 = vmul.f32 %v4003, %v4018
      %v4020 = vadd.f32 %v4019, 0.112945676
      %v4021 = vmul.f32 %v4003, %v4020
      %v4022 = vadd.f32 %v4021, 0.4994258
      %v4023 = vmul.f32 %v4003, %v4022
      %v4024 = vadd.f32 %v4023, 1.0
      %v4025 = vrcp.pop %v4024
      %v4026 = vmul.f32 %v4024, %v4025
      %v4027 = vsub.f32 1.0, %v4026
      %v4028 = vmul.f32 %v4025, %v4027
      %v4029 = vadd.f32 %v4025, %v4028
      %vm4030 = vweird.f32 %v4024
      %vm4031 = vweird.f32 %v4025
      %vm4032 = vmor %vm4030, %vm4031
      %v4033 = vsel %vm4032, %v4025, %v4029
      %v4034 = vand.u32 2147483647, %v4024
      %vm4035 = vcmp.eq.f32.partialorder %v4034, 8.507059e+37
      %v4036 = vand.u32 %v4024, 2147483648
      %v4037 = vor.u32 1.1754944e-38, %v4036
      %v4038 = vsel %vm4035, %v4037, %v4033
      %v4039 = vmul.f32 %v4014, %v4038
      %v4040 = vmin.f32 %v4039, 1.0
      %v4041 = vmax.f32 %v4040, -1.0
      %v4042 = vmul.f32 %v3081, %v3081
      %v4043 = vmin.f32 16.0, %v4042
      %v4044 = vmul.f32 %v4043, 2.1237322e-06
      %v4045 = vadd.f32 %v4044, 0.00028619796
      %v4046 = vmul.f32 %v4043, %v4045
      %v4047 = vadd.f32 %v4046, 0.0036580483
      %v4048 = vmul.f32 %v4043, %v4047
      %v4049 = vadd.f32 %v4048, 0.05243302
      %v4050 = vmul.f32 %v4043, %v4049
      %v4051 = vadd.f32 %v4050, 0.18741608
      %v4052 = vmul.f32 %v4043, %v4051
      %v4053 = vadd.f32 %v4052, 1.1283791
      %v4054 = vmul.f32 %v3081, %v4053
      %v4055 = vmul.f32 %v4043, 3.8918573e-05
      %v4056 = vadd.f32 %v4055, 0.001143296
      %v4057 = vmul.f32 %v4043, %v4056
      %v4058 = vadd.f32 %v4057, 0.014752088
      %v4059 = vmul.f32 %v4043, %v4058
      %v4060 = vadd.f32 %v4059, 0.112945676
      %v4061 = vmul.f32 %v4043, %v4060
      %v4062 = vadd.f32 %v4061, 0.4994258
      %v4063 = vmul.f32 %v4043, %v4062
      %v4064 = vadd.f32 %v4063, 1.0
      %v4065 = vrcp.pop %v4064
      %v4066 = vmul.f32 %v4064, %v4065
      %v4067 = vsub.f32 1.0, %v4066
      %v4068 = vmul.f32 %v4065, %v4067
      %v4069 = vadd.f32 %v4065, %v4068
      %vm4070 = vweird.f32 %v4064
      %vm4071 = vweird.f32 %v4065
      %vm4072 = vmor %vm4070, %vm4071
      %v4073 = vsel %vm4072, %v4065, %v4069
      %v4074 = vand.u32 2147483647, %v4064
      %vm4075 = vcmp.eq.f32.partialorder %v4074, 8.507059e+37
      %v4076 = vand.u32 %v4064, 2147483648
      %v4077 = vor.u32 1.1754944e-38, %v4076
      %v4078 = vsel %vm4075, %v4077, %v4073
      %v4079 = vmul.f32 %v4054, %v4078
      %v4080 = vmin.f32 %v4079, 1.0
      %v4081 = vmax.f32 %v4080, -1.0
      %v4082 = vmul.f32 %v3082, %v3082
      %v4083 = vmin.f32 16.0, %v4082
      %v4084 = vmul.f32 %v4083, 2.1237322e-06
      %v4085 = vadd.f32 %v4084, 0.00028619796
      %v4086 = vmul.f32 %v4083, %v4085
      %v4087 = vadd.f32 %v4086, 0.0036580483
      %v4088 = vmul.f32 %v4083, %v4087
      %v4089 = vadd.f32 %v4088, 0.05243302
      %v4090 = vmul.f32 %v4083, %v4089
      %v4091 = vadd.f32 %v4090, 0.18741608
      %v4092 = vmul.f32 %v4083, %v4091
      %v4093 = vadd.f32 %v4092, 1.1283791
      %v4094 = vmul.f32 %v3082, %v4093
      %v4095 = vmul.f32 %v4083, 3.8918573e-05
      %v4096 = vadd.f32 %v4095, 0.001143296
      %v4097 = vmul.f32 %v4083, %v4096
      %v4098 = vadd.f32 %v4097, 0.014752088
      %v4099 = vmul.f32 %v4083, %v4098
      %v4100 = vadd.f32 %v4099, 0.112945676
      %v4101 = vmul.f32 %v4083, %v4100
      %v4102 = vadd.f32 %v4101, 0.4994258
      %v4103 = vmul.f32 %v4083, %v4102
      %v4104 = vadd.f32 %v4103, 1.0
      %v4105 = vrcp.pop %v4104
      %v4106 = vmul.f32 %v4104, %v4105
      %v4107 = vsub.f32 1.0, %v4106
      %v4108 = vmul.f32 %v4105, %v4107
      %v4109 = vadd.f32 %v4105, %v4108
      %vm4110 = vweird.f32 %v4104
      %vm4111 = vweird.f32 %v4105
      %vm4112 = vmor %vm4110, %vm4111
      %v4113 = vsel %vm4112, %v4105, %v4109
      %v4114 = vand.u32 2147483647, %v4104
      %vm4115 = vcmp.eq.f32.partialorder %v4114, 8.507059e+37
      %v4116 = vand.u32 %v4104, 2147483648
      %v4117 = vor.u32 1.1754944e-38, %v4116
      %v4118 = vsel %vm4115, %v4117, %v4113
      %v4119 = vmul.f32 %v4094, %v4118
      %v4120 = vmin.f32 %v4119, 1.0
      %v4121 = vmax.f32 %v4120, -1.0
      %v4122 = vmul.f32 %v3083, %v3083
      %v4123 = vmin.f32 16.0, %v4122
      %v4124 = vmul.f32 %v4123, 2.1237322e-06
      %v4125 = vadd.f32 %v4124, 0.00028619796
      %v4126 = vmul.f32 %v4123, %v4125
      %v4127 = vadd.f32 %v4126, 0.0036580483
      %v4128 = vmul.f32 %v4123, %v4127
      %v4129 = vadd.f32 %v4128, 0.05243302
      %v4130 = vmul.f32 %v4123, %v4129
      %v4131 = vadd.f32 %v4130, 0.18741608
      %v4132 = vmul.f32 %v4123, %v4131
      %v4133 = vadd.f32 %v4132, 1.1283791
      %v4134 = vmul.f32 %v3083, %v4133
      %v4135 = vmul.f32 %v4123, 3.8918573e-05
      %v4136 = vadd.f32 %v4135, 0.001143296
      %v4137 = vmul.f32 %v4123, %v4136
      %v4138 = vadd.f32 %v4137, 0.014752088
      %v4139 = vmul.f32 %v4123, %v4138
      %v4140 = vadd.f32 %v4139, 0.112945676
      %v4141 = vmul.f32 %v4123, %v4140
      %v4142 = vadd.f32 %v4141, 0.4994258
      %v4143 = vmul.f32 %v4123, %v4142
      %v4144 = vadd.f32 %v4143, 1.0
      %v4145 = vrcp.pop %v4144
      %v4146 = vmul.f32 %v4144, %v4145
      %v4147 = vsub.f32 1.0, %v4146
      %v4148 = vmul.f32 %v4145, %v4147
      %v4149 = vadd.f32 %v4145, %v4148
      %vm4150 = vweird.f32 %v4144
      %vm4151 = vweird.f32 %v4145
      %vm4152 = vmor %vm4150, %vm4151
      %v4153 = vsel %vm4152, %v4145, %v4149
      %v4154 = vand.u32 2147483647, %v4144
      %vm4155 = vcmp.eq.f32.partialorder %v4154, 8.507059e+37
      %v4156 = vand.u32 %v4144, 2147483648
      %v4157 = vor.u32 1.1754944e-38, %v4156
      %v4158 = vsel %vm4155, %v4157, %v4153
      %v4159 = vmul.f32 %v4134, %v4158
      %v4160 = vmin.f32 %v4159, 1.0
      %v4161 = vmax.f32 %v4160, -1.0
      %v4162 = vmul.f32 %v3084, %v3084
      %v4163 = vmin.f32 16.0, %v4162
      %v4164 = vmul.f32 %v4163, 2.1237322e-06
      %v4165 = vadd.f32 %v4164, 0.00028619796
      %v4166 = vmul.f32 %v4163, %v4165
      %v4167 = vadd.f32 %v4166, 0.0036580483
      %v4168 = vmul.f32 %v4163, %v4167
      %v4169 = vadd.f32 %v4168, 0.05243302
      %v4170 = vmul.f32 %v4163, %v4169
      %v4171 = vadd.f32 %v4170, 0.18741608
      %v4172 = vmul.f32 %v4163, %v4171
      %v4173 = vadd.f32 %v4172, 1.1283791
      %v4174 = vmul.f32 %v3084, %v4173
      %v4175 = vmul.f32 %v4163, 3.8918573e-05
      %v4176 = vadd.f32 %v4175, 0.001143296
      %v4177 = vmul.f32 %v4163, %v4176
      %v4178 = vadd.f32 %v4177, 0.014752088
      %v4179 = vmul.f32 %v4163, %v4178
      %v4180 = vadd.f32 %v4179, 0.112945676
      %v4181 = vmul.f32 %v4163, %v4180
      %v4182 = vadd.f32 %v4181, 0.4994258
      %v4183 = vmul.f32 %v4163, %v4182
      %v4184 = vadd.f32 %v4183, 1.0
      %v4185 = vrcp.pop %v4184
      %v4186 = vmul.f32 %v4184, %v4185
      %v4187 = vsub.f32 1.0, %v4186
      %v4188 = vmul.f32 %v4185, %v4187
      %v4189 = vadd.f32 %v4185, %v4188
      %vm4190 = vweird.f32 %v4184
      %vm4191 = vweird.f32 %v4185
      %vm4192 = vmor %vm4190, %vm4191
      %v4193 = vsel %vm4192, %v4185, %v4189
      %v4194 = vand.u32 2147483647, %v4184
      %vm4195 = vcmp.eq.f32.partialorder %v4194, 8.507059e+37
      %v4196 = vand.u32 %v4184, 2147483648
      %v4197 = vor.u32 1.1754944e-38, %v4196
      %v4198 = vsel %vm4195, %v4197, %v4193
      %v4199 = vmul.f32 %v4174, %v4198
      %v4200 = vmin.f32 %v4199, 1.0
      %v4201 = vmax.f32 %v4200, -1.0
      %v4202 = vmul.f32 %v3085, %v3085
      %v4203 = vmin.f32 16.0, %v4202
      %v4204 = vmul.f32 %v4203, 2.1237322e-06
      %v4205 = vadd.f32 %v4204, 0.00028619796
      %v4206 = vmul.f32 %v4203, %v4205
      %v4207 = vadd.f32 %v4206, 0.0036580483
      %v4208 = vmul.f32 %v4203, %v4207
      %v4209 = vadd.f32 %v4208, 0.05243302
      %v4210 = vmul.f32 %v4203, %v4209
      %v4211 = vadd.f32 %v4210, 0.18741608
      %v4212 = vmul.f32 %v4203, %v4211
      %v4213 = vadd.f32 %v4212, 1.1283791
      %v4214 = vmul.f32 %v3085, %v4213
      %v4215 = vmul.f32 %v4203, 3.8918573e-05
      %v4216 = vadd.f32 %v4215, 0.001143296
      %v4217 = vmul.f32 %v4203, %v4216
      %v4218 = vadd.f32 %v4217, 0.014752088
      %v4219 = vmul.f32 %v4203, %v4218
      %v4220 = vadd.f32 %v4219, 0.112945676
      %v4221 = vmul.f32 %v4203, %v4220
      %v4222 = vadd.f32 %v4221, 0.4994258
      %v4223 = vmul.f32 %v4203, %v4222
      %v4224 = vadd.f32 %v4223, 1.0
      %v4225 = vrcp.pop %v4224
      %v4226 = vmul.f32 %v4224, %v4225
      %v4227 = vsub.f32 1.0, %v4226
      %v4228 = vmul.f32 %v4225, %v4227
      %v4229 = vadd.f32 %v4225, %v4228
      %vm4230 = vweird.f32 %v4224
      %vm4231 = vweird.f32 %v4225
      %vm4232 = vmor %vm4230, %vm4231
      %v4233 = vsel %vm4232, %v4225, %v4229
      %v4234 = vand.u32 2147483647, %v4224
      %vm4235 = vcmp.eq.f32.partialorder %v4234, 8.507059e+37
      %v4236 = vand.u32 %v4224, 2147483648
      %v4237 = vor.u32 1.1754944e-38, %v4236
      %v4238 = vsel %vm4235, %v4237, %v4233
      %v4239 = vmul.f32 %v4214, %v4238
      %v4240 = vmin.f32 %v4239, 1.0
      %v4241 = vmax.f32 %v4240, -1.0
      %v4242 = vmul.f32 %v3086, %v3086
      %v4243 = vmin.f32 16.0, %v4242
      %v4244 = vmul.f32 %v4243, 2.1237322e-06
      %v4245 = vadd.f32 %v4244, 0.00028619796
      %v4246 = vmul.f32 %v4243, %v4245
      %v4247 = vadd.f32 %v4246, 0.0036580483
      %v4248 = vmul.f32 %v4243, %v4247
      %v4249 = vadd.f32 %v4248, 0.05243302
      %v4250 = vmul.f32 %v4243, %v4249
      %v4251 = vadd.f32 %v4250, 0.18741608
      %v4252 = vmul.f32 %v4243, %v4251
      %v4253 = vadd.f32 %v4252, 1.1283791
      %v4254 = vmul.f32 %v3086, %v4253
      %v4255 = vmul.f32 %v4243, 3.8918573e-05
      %v4256 = vadd.f32 %v4255, 0.001143296
      %v4257 = vmul.f32 %v4243, %v4256
      %v4258 = vadd.f32 %v4257, 0.014752088
      %v4259 = vmul.f32 %v4243, %v4258
      %v4260 = vadd.f32 %v4259, 0.112945676
      %v4261 = vmul.f32 %v4243, %v4260
      %v4262 = vadd.f32 %v4261, 0.4994258
      %v4263 = vmul.f32 %v4243, %v4262
      %v4264 = vadd.f32 %v4263, 1.0
      %v4265 = vrcp.pop %v4264
      %v4266 = vmul.f32 %v4264, %v4265
      %v4267 = vsub.f32 1.0, %v4266
      %v4268 = vmul.f32 %v4265, %v4267
      %v4269 = vadd.f32 %v4265, %v4268
      %vm4270 = vweird.f32 %v4264
      %vm4271 = vweird.f32 %v4265
      %vm4272 = vmor %vm4270, %vm4271
      %v4273 = vsel %vm4272, %v4265, %v4269
      %v4274 = vand.u32 2147483647, %v4264
      %vm4275 = vcmp.eq.f32.partialorder %v4274, 8.507059e+37
      %v4276 = vand.u32 %v4264, 2147483648
      %v4277 = vor.u32 1.1754944e-38, %v4276
      %v4278 = vsel %vm4275, %v4277, %v4273
      %v4279 = vmul.f32 %v4254, %v4278
      %v4280 = vmin.f32 %v4279, 1.0
      %v4281 = vmax.f32 %v4280, -1.0
      %v4282 = vmul.f32 %v3087, %v3087
      %v4283 = vmin.f32 16.0, %v4282
      %v4284 = vmul.f32 %v4283, 2.1237322e-06
      %v4285 = vadd.f32 %v4284, 0.00028619796
      %v4286 = vmul.f32 %v4283, %v4285
      %v4287 = vadd.f32 %v4286, 0.0036580483
      %v4288 = vmul.f32 %v4283, %v4287
      %v4289 = vadd.f32 %v4288, 0.05243302
      %v4290 = vmul.f32 %v4283, %v4289
      %v4291 = vadd.f32 %v4290, 0.18741608
      %v4292 = vmul.f32 %v4283, %v4291
      %v4293 = vadd.f32 %v4292, 1.1283791
      %v4294 = vmul.f32 %v3087, %v4293
      %v4295 = vmul.f32 %v4283, 3.8918573e-05
      %v4296 = vadd.f32 %v4295, 0.001143296
      %v4297 = vmul.f32 %v4283, %v4296
      %v4298 = vadd.f32 %v4297, 0.014752088
      %v4299 = vmul.f32 %v4283, %v4298
      %v4300 = vadd.f32 %v4299, 0.112945676
      %v4301 = vmul.f32 %v4283, %v4300
      %v4302 = vadd.f32 %v4301, 0.4994258
      %v4303 = vmul.f32 %v4283, %v4302
      %v4304 = vadd.f32 %v4303, 1.0
      %v4305 = vrcp.pop %v4304
      %v4306 = vmul.f32 %v4304, %v4305
      %v4307 = vsub.f32 1.0, %v4306
      %v4308 = vmul.f32 %v4305, %v4307
      %v4309 = vadd.f32 %v4305, %v4308
      %vm4310 = vweird.f32 %v4304
      %vm4311 = vweird.f32 %v4305
      %vm4312 = vmor %vm4310, %vm4311
      %v4313 = vsel %vm4312, %v4305, %v4309
      %v4314 = vand.u32 2147483647, %v4304
      %vm4315 = vcmp.eq.f32.partialorder %v4314, 8.507059e+37
      %v4316 = vand.u32 %v4304, 2147483648
      %v4317 = vor.u32 1.1754944e-38, %v4316
      %v4318 = vsel %vm4315, %v4317, %v4313
      %v4319 = vmul.f32 %v4294, %v4318
      %v4320 = vmin.f32 %v4319, 1.0
      %v4321 = vmax.f32 %v4320, -1.0
      %v4322 = vmul.f32 %v3088, %v3088
      %v4323 = vmin.f32 16.0, %v4322
      %v4324 = vmul.f32 %v4323, 2.1237322e-06
      %v4325 = vadd.f32 %v4324, 0.00028619796
      %v4326 = vmul.f32 %v4323, %v4325
      %v4327 = vadd.f32 %v4326, 0.0036580483
      %v4328 = vmul.f32 %v4323, %v4327
      %v4329 = vadd.f32 %v4328, 0.05243302
      %v4330 = vmul.f32 %v4323, %v4329
      %v4331 = vadd.f32 %v4330, 0.18741608
      %v4332 = vmul.f32 %v4323, %v4331
      %v4333 = vadd.f32 %v4332, 1.1283791
      %v4334 = vmul.f32 %v3088, %v4333
      %v4335 = vmul.f32 %v4323, 3.8918573e-05
      %v4336 = vadd.f32 %v4335, 0.001143296
      %v4337 = vmul.f32 %v4323, %v4336
      %v4338 = vadd.f32 %v4337, 0.014752088
      %v4339 = vmul.f32 %v4323, %v4338
      %v4340 = vadd.f32 %v4339, 0.112945676
      %v4341 = vmul.f32 %v4323, %v4340
      %v4342 = vadd.f32 %v4341, 0.4994258
      %v4343 = vmul.f32 %v4323, %v4342
      %v4344 = vadd.f32 %v4343, 1.0
      %v4345 = vrcp.pop %v4344
      %v4346 = vmul.f32 %v4344, %v4345
      %v4347 = vsub.f32 1.0, %v4346
      %v4348 = vmul.f32 %v4345, %v4347
      %v4349 = vadd.f32 %v4345, %v4348
      %vm4350 = vweird.f32 %v4344
      %vm4351 = vweird.f32 %v4345
      %vm4352 = vmor %vm4350, %vm4351
      %v4353 = vsel %vm4352, %v4345, %v4349
      %v4354 = vand.u32 2147483647, %v4344
      %vm4355 = vcmp.eq.f32.partialorder %v4354, 8.507059e+37
      %v4356 = vand.u32 %v4344, 2147483648
      %v4357 = vor.u32 1.1754944e-38, %v4356
      %v4358 = vsel %vm4355, %v4357, %v4353
      %v4359 = vmul.f32 %v4334, %v4358
      %v4360 = vmin.f32 %v4359, 1.0
      %v4361 = vmax.f32 %v4360, -1.0
      %v4362 = vmul.f32 %v3089, %v3089
      %v4363 = vmin.f32 16.0, %v4362
      %v4364 = vmul.f32 %v4363, 2.1237322e-06
      %v4365 = vadd.f32 %v4364, 0.00028619796
      %v4366 = vmul.f32 %v4363, %v4365
      %v4367 = vadd.f32 %v4366, 0.0036580483
      %v4368 = vmul.f32 %v4363, %v4367
      %v4369 = vadd.f32 %v4368, 0.05243302
      %v4370 = vmul.f32 %v4363, %v4369
      %v4371 = vadd.f32 %v4370, 0.18741608
      %v4372 = vmul.f32 %v4363, %v4371
      %v4373 = vadd.f32 %v4372, 1.1283791
      %v4374 = vmul.f32 %v3089, %v4373
      %v4375 = vmul.f32 %v4363, 3.8918573e-05
      %v4376 = vadd.f32 %v4375, 0.001143296
      %v4377 = vmul.f32 %v4363, %v4376
      %v4378 = vadd.f32 %v4377, 0.014752088
      %v4379 = vmul.f32 %v4363, %v4378
      %v4380 = vadd.f32 %v4379, 0.112945676
      %v4381 = vmul.f32 %v4363, %v4380
      %v4382 = vadd.f32 %v4381, 0.4994258
      %v4383 = vmul.f32 %v4363, %v4382
      %v4384 = vadd.f32 %v4383, 1.0
      %v4385 = vrcp.pop %v4384
      %v4386 = vmul.f32 %v4384, %v4385
      %v4387 = vsub.f32 1.0, %v4386
      %v4388 = vmul.f32 %v4385, %v4387
      %v4389 = vadd.f32 %v4385, %v4388
      %vm4390 = vweird.f32 %v4384
      %vm4391 = vweird.f32 %v4385
      %vm4392 = vmor %vm4390, %vm4391
      %v4393 = vsel %vm4392, %v4385, %v4389
      %v4394 = vand.u32 2147483647, %v4384
      %vm4395 = vcmp.eq.f32.partialorder %v4394, 8.507059e+37
      %v4396 = vand.u32 %v4384, 2147483648
      %v4397 = vor.u32 1.1754944e-38, %v4396
      %v4398 = vsel %vm4395, %v4397, %v4393
      %v4399 = vmul.f32 %v4374, %v4398
      %v4400 = vmin.f32 %v4399, 1.0
      %v4401 = vmax.f32 %v4400, -1.0
      %v4402 = vmul.f32 %v3090, %v3090
      %v4403 = vmin.f32 16.0, %v4402
      %v4404 = vmul.f32 %v4403, 2.1237322e-06
      %v4405 = vadd.f32 %v4404, 0.00028619796
      %v4406 = vmul.f32 %v4403, %v4405
      %v4407 = vadd.f32 %v4406, 0.0036580483
      %v4408 = vmul.f32 %v4403, %v4407
      %v4409 = vadd.f32 %v4408, 0.05243302
      %v4410 = vmul.f32 %v4403, %v4409
      %v4411 = vadd.f32 %v4410, 0.18741608
      %v4412 = vmul.f32 %v4403, %v4411
      %v4413 = vadd.f32 %v4412, 1.1283791
      %v4414 = vmul.f32 %v3090, %v4413
      %v4415 = vmul.f32 %v4403, 3.8918573e-05
      %v4416 = vadd.f32 %v4415, 0.001143296
      %v4417 = vmul.f32 %v4403, %v4416
      %v4418 = vadd.f32 %v4417, 0.014752088
      %v4419 = vmul.f32 %v4403, %v4418
      %v4420 = vadd.f32 %v4419, 0.112945676
      %v4421 = vmul.f32 %v4403, %v4420
      %v4422 = vadd.f32 %v4421, 0.4994258
      %v4423 = vmul.f32 %v4403, %v4422
      %v4424 = vadd.f32 %v4423, 1.0
      %v4425 = vrcp.pop %v4424
      %v4426 = vmul.f32 %v4424, %v4425
      %v4427 = vsub.f32 1.0, %v4426
      %v4428 = vmul.f32 %v4425, %v4427
      %v4429 = vadd.f32 %v4425, %v4428
      %vm4430 = vweird.f32 %v4424
      %vm4431 = vweird.f32 %v4425
      %vm4432 = vmor %vm4430, %vm4431
      %v4433 = vsel %vm4432, %v4425, %v4429
      %v4434 = vand.u32 2147483647, %v4424
      %vm4435 = vcmp.eq.f32.partialorder %v4434, 8.507059e+37
      %v4436 = vand.u32 %v4424, 2147483648
      %v4437 = vor.u32 1.1754944e-38, %v4436
      %v4438 = vsel %vm4435, %v4437, %v4433
      %v4439 = vmul.f32 %v4414, %v4438
      %v4440 = vmin.f32 %v4439, 1.0
      %v4441 = vmax.f32 %v4440, -1.0
      %v4442 = vmul.f32 %v3091, %v3091
      %v4443 = vmin.f32 16.0, %v4442
      %v4444 = vmul.f32 %v4443, 2.1237322e-06
      %v4445 = vadd.f32 %v4444, 0.00028619796
      %v4446 = vmul.f32 %v4443, %v4445
      %v4447 = vadd.f32 %v4446, 0.0036580483
      %v4448 = vmul.f32 %v4443, %v4447
      %v4449 = vadd.f32 %v4448, 0.05243302
      %v4450 = vmul.f32 %v4443, %v4449
      %v4451 = vadd.f32 %v4450, 0.18741608
      %v4452 = vmul.f32 %v4443, %v4451
      %v4453 = vadd.f32 %v4452, 1.1283791
      %v4454 = vmul.f32 %v3091, %v4453
      %v4455 = vmul.f32 %v4443, 3.8918573e-05
      %v4456 = vadd.f32 %v4455, 0.001143296
      %v4457 = vmul.f32 %v4443, %v4456
      %v4458 = vadd.f32 %v4457, 0.014752088
      %v4459 = vmul.f32 %v4443, %v4458
      %v4460 = vadd.f32 %v4459, 0.112945676
      %v4461 = vmul.f32 %v4443, %v4460
      %v4462 = vadd.f32 %v4461, 0.4994258
      %v4463 = vmul.f32 %v4443, %v4462
      %v4464 = vadd.f32 %v4463, 1.0
      %v4465 = vrcp.pop %v4464
      %v4466 = vmul.f32 %v4464, %v4465
      %v4467 = vsub.f32 1.0, %v4466
      %v4468 = vmul.f32 %v4465, %v4467
      %v4469 = vadd.f32 %v4465, %v4468
      %vm4470 = vweird.f32 %v4464
      %vm4471 = vweird.f32 %v4465
      %vm4472 = vmor %vm4470, %vm4471
      %v4473 = vsel %vm4472, %v4465, %v4469
      %v4474 = vand.u32 2147483647, %v4464
      %vm4475 = vcmp.eq.f32.partialorder %v4474, 8.507059e+37
      %v4476 = vand.u32 %v4464, 2147483648
      %v4477 = vor.u32 1.1754944e-38, %v4476
      %v4478 = vsel %vm4475, %v4477, %v4473
      %v4479 = vmul.f32 %v4454, %v4478
      %v4480 = vmin.f32 %v4479, 1.0
      %v4481 = vmax.f32 %v4480, -1.0
      %v4482 = vmul.f32 %v3092, %v3092
      %v4483 = vmin.f32 16.0, %v4482
      %v4484 = vmul.f32 %v4483, 2.1237322e-06
      %v4485 = vadd.f32 %v4484, 0.00028619796
      %v4486 = vmul.f32 %v4483, %v4485
      %v4487 = vadd.f32 %v4486, 0.0036580483
      %v4488 = vmul.f32 %v4483, %v4487
      %v4489 = vadd.f32 %v4488, 0.05243302
      %v4490 = vmul.f32 %v4483, %v4489
      %v4491 = vadd.f32 %v4490, 0.18741608
      %v4492 = vmul.f32 %v4483, %v4491
      %v4493 = vadd.f32 %v4492, 1.1283791
      %v4494 = vmul.f32 %v3092, %v4493
      %v4495 = vmul.f32 %v4483, 3.8918573e-05
      %v4496 = vadd.f32 %v4495, 0.001143296
      %v4497 = vmul.f32 %v4483, %v4496
      %v4498 = vadd.f32 %v4497, 0.014752088
      %v4499 = vmul.f32 %v4483, %v4498
      %v4500 = vadd.f32 %v4499, 0.112945676
      %v4501 = vmul.f32 %v4483, %v4500
      %v4502 = vadd.f32 %v4501, 0.4994258
      %v4503 = vmul.f32 %v4483, %v4502
      %v4504 = vadd.f32 %v4503, 1.0
      %v4505 = vrcp.pop %v4504
      %v4506 = vmul.f32 %v4504, %v4505
      %v4507 = vsub.f32 1.0, %v4506
      %v4508 = vmul.f32 %v4505, %v4507
      %v4509 = vadd.f32 %v4505, %v4508
      %vm4510 = vweird.f32 %v4504
      %vm4511 = vweird.f32 %v4505
      %vm4512 = vmor %vm4510, %vm4511
      %v4513 = vsel %vm4512, %v4505, %v4509
      %v4514 = vand.u32 2147483647, %v4504
      %vm4515 = vcmp.eq.f32.partialorder %v4514, 8.507059e+37
      %v4516 = vand.u32 %v4504, 2147483648
      %v4517 = vor.u32 1.1754944e-38, %v4516
      %v4518 = vsel %vm4515, %v4517, %v4513
      %v4519 = vmul.f32 %v4494, %v4518
      %v4520 = vmin.f32 %v4519, 1.0
      %v4521 = vmax.f32 %v4520, -1.0
      %v4522 = vmul.f32 %v3093, %v3093
      %v4523 = vmin.f32 16.0, %v4522
      %v4524 = vmul.f32 %v4523, 2.1237322e-06
      %v4525 = vadd.f32 %v4524, 0.00028619796
      %v4526 = vmul.f32 %v4523, %v4525
      %v4527 = vadd.f32 %v4526, 0.0036580483
      %v4528 = vmul.f32 %v4523, %v4527
      %v4529 = vadd.f32 %v4528, 0.05243302
      %v4530 = vmul.f32 %v4523, %v4529
      %v4531 = vadd.f32 %v4530, 0.18741608
      %v4532 = vmul.f32 %v4523, %v4531
      %v4533 = vadd.f32 %v4532, 1.1283791
      %v4534 = vmul.f32 %v3093, %v4533
      %v4535 = vmul.f32 %v4523, 3.8918573e-05
      %v4536 = vadd.f32 %v4535, 0.001143296
      %v4537 = vmul.f32 %v4523, %v4536
      %v4538 = vadd.f32 %v4537, 0.014752088
      %v4539 = vmul.f32 %v4523, %v4538
      %v4540 = vadd.f32 %v4539, 0.112945676
      %v4541 = vmul.f32 %v4523, %v4540
      %v4542 = vadd.f32 %v4541, 0.4994258
      %v4543 = vmul.f32 %v4523, %v4542
      %v4544 = vadd.f32 %v4543, 1.0
      %v4545 = vrcp.pop %v4544
      %v4546 = vmul.f32 %v4544, %v4545
      %v4547 = vsub.f32 1.0, %v4546
      %v4548 = vmul.f32 %v4545, %v4547
      %v4549 = vadd.f32 %v4545, %v4548
      %vm4550 = vweird.f32 %v4544
      %vm4551 = vweird.f32 %v4545
      %vm4552 = vmor %vm4550, %vm4551
      %v4553 = vsel %vm4552, %v4545, %v4549
      %v4554 = vand.u32 2147483647, %v4544
      %vm4555 = vcmp.eq.f32.partialorder %v4554, 8.507059e+37
      %v4556 = vand.u32 %v4544, 2147483648
      %v4557 = vor.u32 1.1754944e-38, %v4556
      %v4558 = vsel %vm4555, %v4557, %v4553
      %v4559 = vmul.f32 %v4534, %v4558
      %v4560 = vmin.f32 %v4559, 1.0
      %v4561 = vmax.f32 %v4560, -1.0
      %v4562 = vmul.f32 %v3094, %v3094
      %v4563 = vmin.f32 16.0, %v4562
      %v4564 = vmul.f32 %v4563, 2.1237322e-06
      %v4565 = vadd.f32 %v4564, 0.00028619796
      %v4566 = vmul.f32 %v4563, %v4565
      %v4567 = vadd.f32 %v4566, 0.0036580483
      %v4568 = vmul.f32 %v4563, %v4567
      %v4569 = vadd.f32 %v4568, 0.05243302
      %v4570 = vmul.f32 %v4563, %v4569
      %v4571 = vadd.f32 %v4570, 0.18741608
      %v4572 = vmul.f32 %v4563, %v4571
      %v4573 = vadd.f32 %v4572, 1.1283791
      %v4574 = vmul.f32 %v3094, %v4573
      %v4575 = vmul.f32 %v4563, 3.8918573e-05
      %v4576 = vadd.f32 %v4575, 0.001143296
      %v4577 = vmul.f32 %v4563, %v4576
      %v4578 = vadd.f32 %v4577, 0.014752088
      %v4579 = vmul.f32 %v4563, %v4578
      %v4580 = vadd.f32 %v4579, 0.112945676
      %v4581 = vmul.f32 %v4563, %v4580
      %v4582 = vadd.f32 %v4581, 0.4994258
      %v4583 = vmul.f32 %v4563, %v4582
      %v4584 = vadd.f32 %v4583, 1.0
      %v4585 = vrcp.pop %v4584
      %v4586 = vmul.f32 %v4584, %v4585
      %v4587 = vsub.f32 1.0, %v4586
      %v4588 = vmul.f32 %v4585, %v4587
      %v4589 = vadd.f32 %v4585, %v4588
      %vm4590 = vweird.f32 %v4584
      %vm4591 = vweird.f32 %v4585
      %vm4592 = vmor %vm4590, %vm4591
      %v4593 = vsel %vm4592, %v4585, %v4589
      %v4594 = vand.u32 2147483647, %v4584
      %vm4595 = vcmp.eq.f32.partialorder %v4594, 8.507059e+37
      %v4596 = vand.u32 %v4584, 2147483648
      %v4597 = vor.u32 1.1754944e-38, %v4596
      %v4598 = vsel %vm4595, %v4597, %v4593
      %v4599 = vmul.f32 %v4574, %v4598
      %v4600 = vmin.f32 %v4599, 1.0
      %v4601 = vmax.f32 %v4600, -1.0
      %v4602 = vmul.f32 %v3095, %v3095
      %v4603 = vmin.f32 16.0, %v4602
      %v4604 = vmul.f32 %v4603, 2.1237322e-06
      %v4605 = vadd.f32 %v4604, 0.00028619796
      %v4606 = vmul.f32 %v4603, %v4605
      %v4607 = vadd.f32 %v4606, 0.0036580483
      %v4608 = vmul.f32 %v4603, %v4607
      %v4609 = vadd.f32 %v4608, 0.05243302
      %v4610 = vmul.f32 %v4603, %v4609
      %v4611 = vadd.f32 %v4610, 0.18741608
      %v4612 = vmul.f32 %v4603, %v4611
      %v4613 = vadd.f32 %v4612, 1.1283791
      %v4614 = vmul.f32 %v3095, %v4613
      %v4615 = vmul.f32 %v4603, 3.8918573e-05
      %v4616 = vadd.f32 %v4615, 0.001143296
      %v4617 = vmul.f32 %v4603, %v4616
      %v4618 = vadd.f32 %v4617, 0.014752088
      %v4619 = vmul.f32 %v4603, %v4618
      %v4620 = vadd.f32 %v4619, 0.112945676
      %v4621 = vmul.f32 %v4603, %v4620
      %v4622 = vadd.f32 %v4621, 0.4994258
      %v4623 = vmul.f32 %v4603, %v4622
      %v4624 = vadd.f32 %v4623, 1.0
      %v4625 = vrcp.pop %v4624
      %v4626 = vmul.f32 %v4624, %v4625
      %v4627 = vsub.f32 1.0, %v4626
      %v4628 = vmul.f32 %v4625, %v4627
      %v4629 = vadd.f32 %v4625, %v4628
      %vm4630 = vweird.f32 %v4624
      %vm4631 = vweird.f32 %v4625
      %vm4632 = vmor %vm4630, %vm4631
      %v4633 = vsel %vm4632, %v4625, %v4629
      %v4634 = vand.u32 2147483647, %v4624
      %vm4635 = vcmp.eq.f32.partialorder %v4634, 8.507059e+37
      %v4636 = vand.u32 %v4624, 2147483648
      %v4637 = vor.u32 1.1754944e-38, %v4636
      %v4638 = vsel %vm4635, %v4637, %v4633
      %v4639 = vmul.f32 %v4614, %v4638
      %v4640 = vmin.f32 %v4639, 1.0
      %v4641 = vmax.f32 %v4640, -1.0
      %v4642 = vmul.f32 %v3096, %v3096
      %v4643 = vmin.f32 16.0, %v4642
      %v4644 = vmul.f32 %v4643, 2.1237322e-06
      %v4645 = vadd.f32 %v4644, 0.00028619796
      %v4646 = vmul.f32 %v4643, %v4645
      %v4647 = vadd.f32 %v4646, 0.0036580483
      %v4648 = vmul.f32 %v4643, %v4647
      %v4649 = vadd.f32 %v4648, 0.05243302
      %v4650 = vmul.f32 %v4643, %v4649
      %v4651 = vadd.f32 %v4650, 0.18741608
      %v4652 = vmul.f32 %v4643, %v4651
      %v4653 = vadd.f32 %v4652, 1.1283791
      %v4654 = vmul.f32 %v3096, %v4653
      %v4655 = vmul.f32 %v4643, 3.8918573e-05
      %v4656 = vadd.f32 %v4655, 0.001143296
      %v4657 = vmul.f32 %v4643, %v4656
      %v4658 = vadd.f32 %v4657, 0.014752088
      %v4659 = vmul.f32 %v4643, %v4658
      %v4660 = vadd.f32 %v4659, 0.112945676
      %v4661 = vmul.f32 %v4643, %v4660
      %v4662 = vadd.f32 %v4661, 0.4994258
      %v4663 = vmul.f32 %v4643, %v4662
      %v4664 = vadd.f32 %v4663, 1.0
      %v4665 = vrcp.pop %v4664
      %v4666 = vmul.f32 %v4664, %v4665
      %v4667 = vsub.f32 1.0, %v4666
      %v4668 = vmul.f32 %v4665, %v4667
      %v4669 = vadd.f32 %v4665, %v4668
      %vm4670 = vweird.f32 %v4664
      %vm4671 = vweird.f32 %v4665
      %vm4672 = vmor %vm4670, %vm4671
      %v4673 = vsel %vm4672, %v4665, %v4669
      %v4674 = vand.u32 2147483647, %v4664
      %vm4675 = vcmp.eq.f32.partialorder %v4674, 8.507059e+37
      %v4676 = vand.u32 %v4664, 2147483648
      %v4677 = vor.u32 1.1754944e-38, %v4676
      %v4678 = vsel %vm4675, %v4677, %v4673
      %v4679 = vmul.f32 %v4654, %v4678
      %v4680 = vmin.f32 %v4679, 1.0
      %v4681 = vmax.f32 %v4680, -1.0
      %v4682 = vmul.f32 %v3097, %v3097
      %v4683 = vmin.f32 16.0, %v4682
      %v4684 = vmul.f32 %v4683, 2.1237322e-06
      %v4685 = vadd.f32 %v4684, 0.00028619796
      %v4686 = vmul.f32 %v4683, %v4685
      %v4687 = vadd.f32 %v4686, 0.0036580483
      %v4688 = vmul.f32 %v4683, %v4687
      %v4689 = vadd.f32 %v4688, 0.05243302
      %v4690 = vmul.f32 %v4683, %v4689
      %v4691 = vadd.f32 %v4690, 0.18741608
      %v4692 = vmul.f32 %v4683, %v4691
      %v4693 = vadd.f32 %v4692, 1.1283791
      %v4694 = vmul.f32 %v3097, %v4693
      %v4695 = vmul.f32 %v4683, 3.8918573e-05
      %v4696 = vadd.f32 %v4695, 0.001143296
      %v4697 = vmul.f32 %v4683, %v4696
      %v4698 = vadd.f32 %v4697, 0.014752088
      %v4699 = vmul.f32 %v4683, %v4698
      %v4700 = vadd.f32 %v4699, 0.112945676
      %v4701 = vmul.f32 %v4683, %v4700
      %v4702 = vadd.f32 %v4701, 0.4994258
      %v4703 = vmul.f32 %v4683, %v4702
      %v4704 = vadd.f32 %v4703, 1.0
      %v4705 = vrcp.pop %v4704
      %v4706 = vmul.f32 %v4704, %v4705
      %v4707 = vsub.f32 1.0, %v4706
      %v4708 = vmul.f32 %v4705, %v4707
      %v4709 = vadd.f32 %v4705, %v4708
      %vm4710 = vweird.f32 %v4704
      %vm4711 = vweird.f32 %v4705
      %vm4712 = vmor %vm4710, %vm4711
      %v4713 = vsel %vm4712, %v4705, %v4709
      %v4714 = vand.u32 2147483647, %v4704
      %vm4715 = vcmp.eq.f32.partialorder %v4714, 8.507059e+37
      %v4716 = vand.u32 %v4704, 2147483648
      %v4717 = vor.u32 1.1754944e-38, %v4716
      %v4718 = vsel %vm4715, %v4717, %v4713
      %v4719 = vmul.f32 %v4694, %v4718
      %v4720 = vmin.f32 %v4719, 1.0
      %v4721 = vmax.f32 %v4720, -1.0
      %v4722 = vmul.f32 %v3098, %v3098
      %v4723 = vmin.f32 16.0, %v4722
      %v4724 = vmul.f32 %v4723, 2.1237322e-06
      %v4725 = vadd.f32 %v4724, 0.00028619796
      %v4726 = vmul.f32 %v4723, %v4725
      %v4727 = vadd.f32 %v4726, 0.0036580483
      %v4728 = vmul.f32 %v4723, %v4727
      %v4729 = vadd.f32 %v4728, 0.05243302
      %v4730 = vmul.f32 %v4723, %v4729
      %v4731 = vadd.f32 %v4730, 0.18741608
      %v4732 = vmul.f32 %v4723, %v4731
      %v4733 = vadd.f32 %v4732, 1.1283791
      %v4734 = vmul.f32 %v3098, %v4733
      %v4735 = vmul.f32 %v4723, 3.8918573e-05
      %v4736 = vadd.f32 %v4735, 0.001143296
      %v4737 = vmul.f32 %v4723, %v4736
      %v4738 = vadd.f32 %v4737, 0.014752088
      %v4739 = vmul.f32 %v4723, %v4738
      %v4740 = vadd.f32 %v4739, 0.112945676
      %v4741 = vmul.f32 %v4723, %v4740
      %v4742 = vadd.f32 %v4741, 0.4994258
      %v4743 = vmul.f32 %v4723, %v4742
      %v4744 = vadd.f32 %v4743, 1.0
      %v4745 = vrcp.pop %v4744
      %v4746 = vmul.f32 %v4744, %v4745
      %v4747 = vsub.f32 1.0, %v4746
      %v4748 = vmul.f32 %v4745, %v4747
      %v4749 = vadd.f32 %v4745, %v4748
      %vm4750 = vweird.f32 %v4744
      %vm4751 = vweird.f32 %v4745
      %vm4752 = vmor %vm4750, %vm4751
      %v4753 = vsel %vm4752, %v4745, %v4749
      %v4754 = vand.u32 2147483647, %v4744
      %vm4755 = vcmp.eq.f32.partialorder %v4754, 8.507059e+37
      %v4756 = vand.u32 %v4744, 2147483648
      %v4757 = vor.u32 1.1754944e-38, %v4756
      %v4758 = vsel %vm4755, %v4757, %v4753
      %v4759 = vmul.f32 %v4734, %v4758
      %v4760 = vmin.f32 %v4759, 1.0
      %v4761 = vmax.f32 %v4760, -1.0
      %v4762 = vmul.f32 %v3099, %v3099
      %v4763 = vmin.f32 16.0, %v4762
      %v4764 = vmul.f32 %v4763, 2.1237322e-06
      %v4765 = vadd.f32 %v4764, 0.00028619796
      %v4766 = vmul.f32 %v4763, %v4765
      %v4767 = vadd.f32 %v4766, 0.0036580483
      %v4768 = vmul.f32 %v4763, %v4767
      %v4769 = vadd.f32 %v4768, 0.05243302
      %v4770 = vmul.f32 %v4763, %v4769
      %v4771 = vadd.f32 %v4770, 0.18741608
      %v4772 = vmul.f32 %v4763, %v4771
      %v4773 = vadd.f32 %v4772, 1.1283791
      %v4774 = vmul.f32 %v3099, %v4773
      %v4775 = vmul.f32 %v4763, 3.8918573e-05
      %v4776 = vadd.f32 %v4775, 0.001143296
      %v4777 = vmul.f32 %v4763, %v4776
      %v4778 = vadd.f32 %v4777, 0.014752088
      %v4779 = vmul.f32 %v4763, %v4778
      %v4780 = vadd.f32 %v4779, 0.112945676
      %v4781 = vmul.f32 %v4763, %v4780
      %v4782 = vadd.f32 %v4781, 0.4994258
      %v4783 = vmul.f32 %v4763, %v4782
      %v4784 = vadd.f32 %v4783, 1.0
      %v4785 = vrcp.pop %v4784
      %v4786 = vmul.f32 %v4784, %v4785
      %v4787 = vsub.f32 1.0, %v4786
      %v4788 = vmul.f32 %v4785, %v4787
      %v4789 = vadd.f32 %v4785, %v4788
      %vm4790 = vweird.f32 %v4784
      %vm4791 = vweird.f32 %v4785
      %vm4792 = vmor %vm4790, %vm4791
      %v4793 = vsel %vm4792, %v4785, %v4789
      %v4794 = vand.u32 2147483647, %v4784
      %vm4795 = vcmp.eq.f32.partialorder %v4794, 8.507059e+37
      %v4796 = vand.u32 %v4784, 2147483648
      %v4797 = vor.u32 1.1754944e-38, %v4796
      %v4798 = vsel %vm4795, %v4797, %v4793
      %v4799 = vmul.f32 %v4774, %v4798
      %v4800 = vmin.f32 %v4799, 1.0
      %v4801 = vmax.f32 %v4800, -1.0
      %v4802 = vmul.f32 %v3100, %v3100
      %v4803 = vmin.f32 16.0, %v4802
      %v4804 = vmul.f32 %v4803, 2.1237322e-06
      %v4805 = vadd.f32 %v4804, 0.00028619796
      %v4806 = vmul.f32 %v4803, %v4805
      %v4807 = vadd.f32 %v4806, 0.0036580483
      %v4808 = vmul.f32 %v4803, %v4807
      %v4809 = vadd.f32 %v4808, 0.05243302
      %v4810 = vmul.f32 %v4803, %v4809
      %v4811 = vadd.f32 %v4810, 0.18741608
      %v4812 = vmul.f32 %v4803, %v4811
      %v4813 = vadd.f32 %v4812, 1.1283791
      %v4814 = vmul.f32 %v3100, %v4813
      %v4815 = vmul.f32 %v4803, 3.8918573e-05
      %v4816 = vadd.f32 %v4815, 0.001143296
      %v4817 = vmul.f32 %v4803, %v4816
      %v4818 = vadd.f32 %v4817, 0.014752088
      %v4819 = vmul.f32 %v4803, %v4818
      %v4820 = vadd.f32 %v4819, 0.112945676
      %v4821 = vmul.f32 %v4803, %v4820
      %v4822 = vadd.f32 %v4821, 0.4994258
      %v4823 = vmul.f32 %v4803, %v4822
      %v4824 = vadd.f32 %v4823, 1.0
      %v4825 = vrcp.pop %v4824
      %v4826 = vmul.f32 %v4824, %v4825
      %v4827 = vsub.f32 1.0, %v4826
      %v4828 = vmul.f32 %v4825, %v4827
      %v4829 = vadd.f32 %v4825, %v4828
      %vm4830 = vweird.f32 %v4824
      %vm4831 = vweird.f32 %v4825
      %vm4832 = vmor %vm4830, %vm4831
      %v4833 = vsel %vm4832, %v4825, %v4829
      %v4834 = vand.u32 2147483647, %v4824
      %vm4835 = vcmp.eq.f32.partialorder %v4834, 8.507059e+37
      %v4836 = vand.u32 %v4824, 2147483648
      %v4837 = vor.u32 1.1754944e-38, %v4836
      %v4838 = vsel %vm4835, %v4837, %v4833
      %v4839 = vmul.f32 %v4814, %v4838
      %v4840 = vmin.f32 %v4839, 1.0
      %v4841 = vmax.f32 %v4840, -1.0
      %v4842 = vmul.f32 %v3101, %v3101
      %v4843 = vmin.f32 16.0, %v4842
      %v4844 = vmul.f32 %v4843, 2.1237322e-06
      %v4845 = vadd.f32 %v4844, 0.00028619796
      %v4846 = vmul.f32 %v4843, %v4845
      %v4847 = vadd.f32 %v4846, 0.0036580483
      %v4848 = vmul.f32 %v4843, %v4847
      %v4849 = vadd.f32 %v4848, 0.05243302
      %v4850 = vmul.f32 %v4843, %v4849
      %v4851 = vadd.f32 %v4850, 0.18741608
      %v4852 = vmul.f32 %v4843, %v4851
      %v4853 = vadd.f32 %v4852, 1.1283791
      %v4854 = vmul.f32 %v3101, %v4853
      %v4855 = vmul.f32 %v4843, 3.8918573e-05
      %v4856 = vadd.f32 %v4855, 0.001143296
      %v4857 = vmul.f32 %v4843, %v4856
      %v4858 = vadd.f32 %v4857, 0.014752088
      %v4859 = vmul.f32 %v4843, %v4858
      %v4860 = vadd.f32 %v4859, 0.112945676
      %v4861 = vmul.f32 %v4843, %v4860
      %v4862 = vadd.f32 %v4861, 0.4994258
      %v4863 = vmul.f32 %v4843, %v4862
      %v4864 = vadd.f32 %v4863, 1.0
      %v4865 = vrcp.pop %v4864
      %v4866 = vmul.f32 %v4864, %v4865
      %v4867 = vsub.f32 1.0, %v4866
      %v4868 = vmul.f32 %v4865, %v4867
      %v4869 = vadd.f32 %v4865, %v4868
      %vm4870 = vweird.f32 %v4864
      %vm4871 = vweird.f32 %v4865
      %vm4872 = vmor %vm4870, %vm4871
      %v4873 = vsel %vm4872, %v4865, %v4869
      %v4874 = vand.u32 2147483647, %v4864
      %vm4875 = vcmp.eq.f32.partialorder %v4874, 8.507059e+37
      %v4876 = vand.u32 %v4864, 2147483648
      %v4877 = vor.u32 1.1754944e-38, %v4876
      %v4878 = vsel %vm4875, %v4877, %v4873
      %v4879 = vmul.f32 %v4854, %v4878
      %v4880 = vmin.f32 %v4879, 1.0
      %v4881 = vmax.f32 %v4880, -1.0
      %v4882 = vmul.f32 %v3102, %v3102
      %v4883 = vmin.f32 16.0, %v4882
      %v4884 = vmul.f32 %v4883, 2.1237322e-06
      %v4885 = vadd.f32 %v4884, 0.00028619796
      %v4886 = vmul.f32 %v4883, %v4885
      %v4887 = vadd.f32 %v4886, 0.0036580483
      %v4888 = vmul.f32 %v4883, %v4887
      %v4889 = vadd.f32 %v4888, 0.05243302
      %v4890 = vmul.f32 %v4883, %v4889
      %v4891 = vadd.f32 %v4890, 0.18741608
      %v4892 = vmul.f32 %v4883, %v4891
      %v4893 = vadd.f32 %v4892, 1.1283791
      %v4894 = vmul.f32 %v3102, %v4893
      %v4895 = vmul.f32 %v4883, 3.8918573e-05
      %v4896 = vadd.f32 %v4895, 0.001143296
      %v4897 = vmul.f32 %v4883, %v4896
      %v4898 = vadd.f32 %v4897, 0.014752088
      %v4899 = vmul.f32 %v4883, %v4898
      %v4900 = vadd.f32 %v4899, 0.112945676
      %v4901 = vmul.f32 %v4883, %v4900
      %v4902 = vadd.f32 %v4901, 0.4994258
      %v4903 = vmul.f32 %v4883, %v4902
      %v4904 = vadd.f32 %v4903, 1.0
      %v4905 = vrcp.pop %v4904
      %v4906 = vmul.f32 %v4904, %v4905
      %v4907 = vsub.f32 1.0, %v4906
      %v4908 = vmul.f32 %v4905, %v4907
      %v4909 = vadd.f32 %v4905, %v4908
      %vm4910 = vweird.f32 %v4904
      %vm4911 = vweird.f32 %v4905
      %vm4912 = vmor %vm4910, %vm4911
      %v4913 = vsel %vm4912, %v4905, %v4909
      %v4914 = vand.u32 2147483647, %v4904
      %vm4915 = vcmp.eq.f32.partialorder %v4914, 8.507059e+37
      %v4916 = vand.u32 %v4904, 2147483648
      %v4917 = vor.u32 1.1754944e-38, %v4916
      %v4918 = vsel %vm4915, %v4917, %v4913
      %v4919 = vmul.f32 %v4894, %v4918
      %v4920 = vmin.f32 %v4919, 1.0
      %v4921 = vmax.f32 %v4920, -1.0
      %v4922 = vmul.f32 %v3103, %v3103
      %v4923 = vmin.f32 16.0, %v4922
      %v4924 = vmul.f32 %v4923, 2.1237322e-06
      %v4925 = vadd.f32 %v4924, 0.00028619796
      %v4926 = vmul.f32 %v4923, %v4925
      %v4927 = vadd.f32 %v4926, 0.0036580483
      %v4928 = vmul.f32 %v4923, %v4927
      %v4929 = vadd.f32 %v4928, 0.05243302
      %v4930 = vmul.f32 %v4923, %v4929
      %v4931 = vadd.f32 %v4930, 0.18741608
      %v4932 = vmul.f32 %v4923, %v4931
      %v4933 = vadd.f32 %v4932, 1.1283791
      %v4934 = vmul.f32 %v3103, %v4933
      %v4935 = vmul.f32 %v4923, 3.8918573e-05
      %v4936 = vadd.f32 %v4935, 0.001143296
      %v4937 = vmul.f32 %v4923, %v4936
      %v4938 = vadd.f32 %v4937, 0.014752088
      %v4939 = vmul.f32 %v4923, %v4938
      %v4940 = vadd.f32 %v4939, 0.112945676
      %v4941 = vmul.f32 %v4923, %v4940
      %v4942 = vadd.f32 %v4941, 0.4994258
      %v4943 = vmul.f32 %v4923, %v4942
      %v4944 = vadd.f32 %v4943, 1.0
      %v4945 = vrcp.pop %v4944
      %v4946 = vmul.f32 %v4944, %v4945
      %v4947 = vsub.f32 1.0, %v4946
      %v4948 = vmul.f32 %v4945, %v4947
      %v4949 = vadd.f32 %v4945, %v4948
      %vm4950 = vweird.f32 %v4944
      %vm4951 = vweird.f32 %v4945
      %vm4952 = vmor %vm4950, %vm4951
      %v4953 = vsel %vm4952, %v4945, %v4949
      %v4954 = vand.u32 2147483647, %v4944
      %vm4955 = vcmp.eq.f32.partialorder %v4954, 8.507059e+37
      %v4956 = vand.u32 %v4944, 2147483648
      %v4957 = vor.u32 1.1754944e-38, %v4956
      %v4958 = vsel %vm4955, %v4957, %v4953
      %v4959 = vmul.f32 %v4934, %v4958
      %v4960 = vmin.f32 %v4959, 1.0
      %v4961 = vmax.f32 %v4960, -1.0
      %v4962 = vmul.f32 %v3104, %v3104
      %v4963 = vmin.f32 16.0, %v4962
      %v4964 = vmul.f32 %v4963, 2.1237322e-06
      %v4965 = vadd.f32 %v4964, 0.00028619796
      %v4966 = vmul.f32 %v4963, %v4965
      %v4967 = vadd.f32 %v4966, 0.0036580483
      %v4968 = vmul.f32 %v4963, %v4967
      %v4969 = vadd.f32 %v4968, 0.05243302
      %v4970 = vmul.f32 %v4963, %v4969
      %v4971 = vadd.f32 %v4970, 0.18741608
      %v4972 = vmul.f32 %v4963, %v4971
      %v4973 = vadd.f32 %v4972, 1.1283791
      %v4974 = vmul.f32 %v3104, %v4973
      %v4975 = vmul.f32 %v4963, 3.8918573e-05
      %v4976 = vadd.f32 %v4975, 0.001143296
      %v4977 = vmul.f32 %v4963, %v4976
      %v4978 = vadd.f32 %v4977, 0.014752088
      %v4979 = vmul.f32 %v4963, %v4978
      %v4980 = vadd.f32 %v4979, 0.112945676
      %v4981 = vmul.f32 %v4963, %v4980
      %v4982 = vadd.f32 %v4981, 0.4994258
      %v4983 = vmul.f32 %v4963, %v4982
      %v4984 = vadd.f32 %v4983, 1.0
      %v4985 = vrcp.pop %v4984
      %v4986 = vmul.f32 %v4984, %v4985
      %v4987 = vsub.f32 1.0, %v4986
      %v4988 = vmul.f32 %v4985, %v4987
      %v4989 = vadd.f32 %v4985, %v4988
      %vm4990 = vweird.f32 %v4984
      %vm4991 = vweird.f32 %v4985
      %vm4992 = vmor %vm4990, %vm4991
      %v4993 = vsel %vm4992, %v4985, %v4989
      %v4994 = vand.u32 2147483647, %v4984
      %vm4995 = vcmp.eq.f32.partialorder %v4994, 8.507059e+37
      %v4996 = vand.u32 %v4984, 2147483648
      %v4997 = vor.u32 1.1754944e-38, %v4996
      %v4998 = vsel %vm4995, %v4997, %v4993
      %v4999 = vmul.f32 %v4974, %v4998
      %v5000 = vmin.f32 %v4999, 1.0
      %v5001 = vmax.f32 %v5000, -1.0
      %v5002 = vmul.f32 %v3105, %v3105
      %v5003 = vmin.f32 16.0, %v5002
      %v5004 = vmul.f32 %v5003, 2.1237322e-06
      %v5005 = vadd.f32 %v5004, 0.00028619796
      %v5006 = vmul.f32 %v5003, %v5005
      %v5007 = vadd.f32 %v5006, 0.0036580483
      %v5008 = vmul.f32 %v5003, %v5007
      %v5009 = vadd.f32 %v5008, 0.05243302
      %v5010 = vmul.f32 %v5003, %v5009
      %v5011 = vadd.f32 %v5010, 0.18741608
      %v5012 = vmul.f32 %v5003, %v5011
      %v5013 = vadd.f32 %v5012, 1.1283791
      %v5014 = vmul.f32 %v3105, %v5013
      %v5015 = vmul.f32 %v5003, 3.8918573e-05
      %v5016 = vadd.f32 %v5015, 0.001143296
      %v5017 = vmul.f32 %v5003, %v5016
      %v5018 = vadd.f32 %v5017, 0.014752088
      %v5019 = vmul.f32 %v5003, %v5018
      %v5020 = vadd.f32 %v5019, 0.112945676
      %v5021 = vmul.f32 %v5003, %v5020
      %v5022 = vadd.f32 %v5021, 0.4994258
      %v5023 = vmul.f32 %v5003, %v5022
      %v5024 = vadd.f32 %v5023, 1.0
      %v5025 = vrcp.pop %v5024
      %v5026 = vmul.f32 %v5024, %v5025
      %v5027 = vsub.f32 1.0, %v5026
      %v5028 = vmul.f32 %v5025, %v5027
      %v5029 = vadd.f32 %v5025, %v5028
      %vm5030 = vweird.f32 %v5024
      %vm5031 = vweird.f32 %v5025
      %vm5032 = vmor %vm5030, %vm5031
      %v5033 = vsel %vm5032, %v5025, %v5029
      %v5034 = vand.u32 2147483647, %v5024
      %vm5035 = vcmp.eq.f32.partialorder %v5034, 8.507059e+37
      %v5036 = vand.u32 %v5024, 2147483648
      %v5037 = vor.u32 1.1754944e-38, %v5036
      %v5038 = vsel %vm5035, %v5037, %v5033
      %v5039 = vmul.f32 %v5014, %v5038
      %v5040 = vmin.f32 %v5039, 1.0
      %v5041 = vmax.f32 %v5040, -1.0
      %v5042 = vmul.f32 %v3106, %v3106
      %v5043 = vmin.f32 16.0, %v5042
      %v5044 = vmul.f32 %v5043, 2.1237322e-06
      %v5045 = vadd.f32 %v5044, 0.00028619796
      %v5046 = vmul.f32 %v5043, %v5045
      %v5047 = vadd.f32 %v5046, 0.0036580483
      %v5048 = vmul.f32 %v5043, %v5047
      %v5049 = vadd.f32 %v5048, 0.05243302
      %v5050 = vmul.f32 %v5043, %v5049
      %v5051 = vadd.f32 %v5050, 0.18741608
      %v5052 = vmul.f32 %v5043, %v5051
      %v5053 = vadd.f32 %v5052, 1.1283791
      %v5054 = vmul.f32 %v3106, %v5053
      %v5055 = vmul.f32 %v5043, 3.8918573e-05
      %v5056 = vadd.f32 %v5055, 0.001143296
      %v5057 = vmul.f32 %v5043, %v5056
      %v5058 = vadd.f32 %v5057, 0.014752088
      %v5059 = vmul.f32 %v5043, %v5058
      %v5060 = vadd.f32 %v5059, 0.112945676
      %v5061 = vmul.f32 %v5043, %v5060
      %v5062 = vadd.f32 %v5061, 0.4994258
      %v5063 = vmul.f32 %v5043, %v5062
      %v5064 = vadd.f32 %v5063, 1.0
      %v5065 = vrcp.pop %v5064
      %v5066 = vmul.f32 %v5064, %v5065
      %v5067 = vsub.f32 1.0, %v5066
      %v5068 = vmul.f32 %v5065, %v5067
      %v5069 = vadd.f32 %v5065, %v5068
      %vm5070 = vweird.f32 %v5064
      %vm5071 = vweird.f32 %v5065
      %vm5072 = vmor %vm5070, %vm5071
      %v5073 = vsel %vm5072, %v5065, %v5069
      %v5074 = vand.u32 2147483647, %v5064
      %vm5075 = vcmp.eq.f32.partialorder %v5074, 8.507059e+37
      %v5076 = vand.u32 %v5064, 2147483648
      %v5077 = vor.u32 1.1754944e-38, %v5076
      %v5078 = vsel %vm5075, %v5077, %v5073
      %v5079 = vmul.f32 %v5054, %v5078
      %v5080 = vmin.f32 %v5079, 1.0
      %v5081 = vmax.f32 %v5080, -1.0
      %v5082 = vmul.f32 %v3107, %v3107
      %v5083 = vmin.f32 16.0, %v5082
      %v5084 = vmul.f32 %v5083, 2.1237322e-06
      %v5085 = vadd.f32 %v5084, 0.00028619796
      %v5086 = vmul.f32 %v5083, %v5085
      %v5087 = vadd.f32 %v5086, 0.0036580483
      %v5088 = vmul.f32 %v5083, %v5087
      %v5089 = vadd.f32 %v5088, 0.05243302
      %v5090 = vmul.f32 %v5083, %v5089
      %v5091 = vadd.f32 %v5090, 0.18741608
      %v5092 = vmul.f32 %v5083, %v5091
      %v5093 = vadd.f32 %v5092, 1.1283791
      %v5094 = vmul.f32 %v3107, %v5093
      %v5095 = vmul.f32 %v5083, 3.8918573e-05
      %v5096 = vadd.f32 %v5095, 0.001143296
      %v5097 = vmul.f32 %v5083, %v5096
      %v5098 = vadd.f32 %v5097, 0.014752088
      %v5099 = vmul.f32 %v5083, %v5098
      %v5100 = vadd.f32 %v5099, 0.112945676
      %v5101 = vmul.f32 %v5083, %v5100
      %v5102 = vadd.f32 %v5101, 0.4994258
      %v5103 = vmul.f32 %v5083, %v5102
      %v5104 = vadd.f32 %v5103, 1.0
      %v5105 = vrcp.pop %v5104
      %v5106 = vmul.f32 %v5104, %v5105
      %v5107 = vsub.f32 1.0, %v5106
      %v5108 = vmul.f32 %v5105, %v5107
      %v5109 = vadd.f32 %v5105, %v5108
      %vm5110 = vweird.f32 %v5104
      %vm5111 = vweird.f32 %v5105
      %vm5112 = vmor %vm5110, %vm5111
      %v5113 = vsel %vm5112, %v5105, %v5109
      %v5114 = vand.u32 2147483647, %v5104
      %vm5115 = vcmp.eq.f32.partialorder %v5114, 8.507059e+37
      %v5116 = vand.u32 %v5104, 2147483648
      %v5117 = vor.u32 1.1754944e-38, %v5116
      %v5118 = vsel %vm5115, %v5117, %v5113
      %v5119 = vmul.f32 %v5094, %v5118
      %v5120 = vmin.f32 %v5119, 1.0
      %v5121 = vmax.f32 %v5120, -1.0
      %v5122 = vmul.f32 %v3108, %v3108
      %v5123 = vmin.f32 16.0, %v5122
      %v5124 = vmul.f32 %v5123, 2.1237322e-06
      %v5125 = vadd.f32 %v5124, 0.00028619796
      %v5126 = vmul.f32 %v5123, %v5125
      %v5127 = vadd.f32 %v5126, 0.0036580483
      %v5128 = vmul.f32 %v5123, %v5127
      %v5129 = vadd.f32 %v5128, 0.05243302
      %v5130 = vmul.f32 %v5123, %v5129
      %v5131 = vadd.f32 %v5130, 0.18741608
      %v5132 = vmul.f32 %v5123, %v5131
      %v5133 = vadd.f32 %v5132, 1.1283791
      %v5134 = vmul.f32 %v3108, %v5133
      %v5135 = vmul.f32 %v5123, 3.8918573e-05
      %v5136 = vadd.f32 %v5135, 0.001143296
      %v5137 = vmul.f32 %v5123, %v5136
      %v5138 = vadd.f32 %v5137, 0.014752088
      %v5139 = vmul.f32 %v5123, %v5138
      %v5140 = vadd.f32 %v5139, 0.112945676
      %v5141 = vmul.f32 %v5123, %v5140
      %v5142 = vadd.f32 %v5141, 0.4994258
      %v5143 = vmul.f32 %v5123, %v5142
      %v5144 = vadd.f32 %v5143, 1.0
      %v5145 = vrcp.pop %v5144
      %v5146 = vmul.f32 %v5144, %v5145
      %v5147 = vsub.f32 1.0, %v5146
      %v5148 = vmul.f32 %v5145, %v5147
      %v5149 = vadd.f32 %v5145, %v5148
      %vm5150 = vweird.f32 %v5144
      %vm5151 = vweird.f32 %v5145
      %vm5152 = vmor %vm5150, %vm5151
      %v5153 = vsel %vm5152, %v5145, %v5149
      %v5154 = vand.u32 2147483647, %v5144
      %vm5155 = vcmp.eq.f32.partialorder %v5154, 8.507059e+37
      %v5156 = vand.u32 %v5144, 2147483648
      %v5157 = vor.u32 1.1754944e-38, %v5156
      %v5158 = vsel %vm5155, %v5157, %v5153
      %v5159 = vmul.f32 %v5134, %v5158
      %v5160 = vmin.f32 %v5159, 1.0
      %v5161 = vmax.f32 %v5160, -1.0
      %v5162 = vmul.f32 %v3109, %v3109
      %v5163 = vmin.f32 16.0, %v5162
      %v5164 = vmul.f32 %v5163, 2.1237322e-06
      %v5165 = vadd.f32 %v5164, 0.00028619796
      %v5166 = vmul.f32 %v5163, %v5165
      %v5167 = vadd.f32 %v5166, 0.0036580483
      %v5168 = vmul.f32 %v5163, %v5167
      %v5169 = vadd.f32 %v5168, 0.05243302
      %v5170 = vmul.f32 %v5163, %v5169
      %v5171 = vadd.f32 %v5170, 0.18741608
      %v5172 = vmul.f32 %v5163, %v5171
      %v5173 = vadd.f32 %v5172, 1.1283791
      %v5174 = vmul.f32 %v3109, %v5173
      %v5175 = vmul.f32 %v5163, 3.8918573e-05
      %v5176 = vadd.f32 %v5175, 0.001143296
      %v5177 = vmul.f32 %v5163, %v5176
      %v5178 = vadd.f32 %v5177, 0.014752088
      %v5179 = vmul.f32 %v5163, %v5178
      %v5180 = vadd.f32 %v5179, 0.112945676
      %v5181 = vmul.f32 %v5163, %v5180
      %v5182 = vadd.f32 %v5181, 0.4994258
      %v5183 = vmul.f32 %v5163, %v5182
      %v5184 = vadd.f32 %v5183, 1.0
      %v5185 = vrcp.pop %v5184
      %v5186 = vmul.f32 %v5184, %v5185
      %v5187 = vsub.f32 1.0, %v5186
      %v5188 = vmul.f32 %v5185, %v5187
      %v5189 = vadd.f32 %v5185, %v5188
      %vm5190 = vweird.f32 %v5184
      %vm5191 = vweird.f32 %v5185
      %vm5192 = vmor %vm5190, %vm5191
      %v5193 = vsel %vm5192, %v5185, %v5189
      %v5194 = vand.u32 2147483647, %v5184
      %vm5195 = vcmp.eq.f32.partialorder %v5194, 8.507059e+37
      %v5196 = vand.u32 %v5184, 2147483648
      %v5197 = vor.u32 1.1754944e-38, %v5196
      %v5198 = vsel %vm5195, %v5197, %v5193
      %v5199 = vmul.f32 %v5174, %v5198
      %v5200 = vmin.f32 %v5199, 1.0
      %v5201 = vmax.f32 %v5200, -1.0
      %v5202 = vmul.f32 %v3110, %v3110
      %v5203 = vmin.f32 16.0, %v5202
      %v5204 = vmul.f32 %v5203, 2.1237322e-06
      %v5205 = vadd.f32 %v5204, 0.00028619796
      %v5206 = vmul.f32 %v5203, %v5205
      %v5207 = vadd.f32 %v5206, 0.0036580483
      %v5208 = vmul.f32 %v5203, %v5207
      %v5209 = vadd.f32 %v5208, 0.05243302
      %v5210 = vmul.f32 %v5203, %v5209
      %v5211 = vadd.f32 %v5210, 0.18741608
      %v5212 = vmul.f32 %v5203, %v5211
      %v5213 = vadd.f32 %v5212, 1.1283791
      %v5214 = vmul.f32 %v3110, %v5213
      %v5215 = vmul.f32 %v5203, 3.8918573e-05
      %v5216 = vadd.f32 %v5215, 0.001143296
      %v5217 = vmul.f32 %v5203, %v5216
      %v5218 = vadd.f32 %v5217, 0.014752088
      %v5219 = vmul.f32 %v5203, %v5218
      %v5220 = vadd.f32 %v5219, 0.112945676
      %v5221 = vmul.f32 %v5203, %v5220
      %v5222 = vadd.f32 %v5221, 0.4994258
      %v5223 = vmul.f32 %v5203, %v5222
      %v5224 = vadd.f32 %v5223, 1.0
      %v5225 = vrcp.pop %v5224
      %v5226 = vmul.f32 %v5224, %v5225
      %v5227 = vsub.f32 1.0, %v5226
      %v5228 = vmul.f32 %v5225, %v5227
      %v5229 = vadd.f32 %v5225, %v5228
      %vm5230 = vweird.f32 %v5224
      %vm5231 = vweird.f32 %v5225
      %vm5232 = vmor %vm5230, %vm5231
      %v5233 = vsel %vm5232, %v5225, %v5229
      %v5234 = vand.u32 2147483647, %v5224
      %vm5235 = vcmp.eq.f32.partialorder %v5234, 8.507059e+37
      %v5236 = vand.u32 %v5224, 2147483648
      %v5237 = vor.u32 1.1754944e-38, %v5236
      %v5238 = vsel %vm5235, %v5237, %v5233
      %v5239 = vmul.f32 %v5214, %v5238
      %v5240 = vmin.f32 %v5239, 1.0
      %v5241 = vmax.f32 %v5240, -1.0
      %v5242 = vmul.f32 %v3111, %v3111
      %v5243 = vmin.f32 16.0, %v5242
      %v5244 = vmul.f32 %v5243, 2.1237322e-06
      %v5245 = vadd.f32 %v5244, 0.00028619796
      %v5246 = vmul.f32 %v5243, %v5245
      %v5247 = vadd.f32 %v5246, 0.0036580483
      %v5248 = vmul.f32 %v5243, %v5247
      %v5249 = vadd.f32 %v5248, 0.05243302
      %v5250 = vmul.f32 %v5243, %v5249
      %v5251 = vadd.f32 %v5250, 0.18741608
      %v5252 = vmul.f32 %v5243, %v5251
      %v5253 = vadd.f32 %v5252, 1.1283791
      %v5254 = vmul.f32 %v3111, %v5253
      %v5255 = vmul.f32 %v5243, 3.8918573e-05
      %v5256 = vadd.f32 %v5255, 0.001143296
      %v5257 = vmul.f32 %v5243, %v5256
      %v5258 = vadd.f32 %v5257, 0.014752088
      %v5259 = vmul.f32 %v5243, %v5258
      %v5260 = vadd.f32 %v5259, 0.112945676
      %v5261 = vmul.f32 %v5243, %v5260
      %v5262 = vadd.f32 %v5261, 0.4994258
      %v5263 = vmul.f32 %v5243, %v5262
      %v5264 = vadd.f32 %v5263, 1.0
      %v5265 = vrcp.pop %v5264
      %v5266 = vmul.f32 %v5264, %v5265
      %v5267 = vsub.f32 1.0, %v5266
      %v5268 = vmul.f32 %v5265, %v5267
      %v5269 = vadd.f32 %v5265, %v5268
      %vm5270 = vweird.f32 %v5264
      %vm5271 = vweird.f32 %v5265
      %vm5272 = vmor %vm5270, %vm5271
      %v5273 = vsel %vm5272, %v5265, %v5269
      %v5274 = vand.u32 2147483647, %v5264
      %vm5275 = vcmp.eq.f32.partialorder %v5274, 8.507059e+37
      %v5276 = vand.u32 %v5264, 2147483648
      %v5277 = vor.u32 1.1754944e-38, %v5276
      %v5278 = vsel %vm5275, %v5277, %v5273
      %v5279 = vmul.f32 %v5254, %v5278
      %v5280 = vmin.f32 %v5279, 1.0
      %v5281 = vmax.f32 %v5280, -1.0
      %v5282 = vmul.f32 %v3112, %v3112
      %v5283 = vmin.f32 16.0, %v5282
      %v5284 = vmul.f32 %v5283, 2.1237322e-06
      %v5285 = vadd.f32 %v5284, 0.00028619796
      %v5286 = vmul.f32 %v5283, %v5285
      %v5287 = vadd.f32 %v5286, 0.0036580483
      %v5288 = vmul.f32 %v5283, %v5287
      %v5289 = vadd.f32 %v5288, 0.05243302
      %v5290 = vmul.f32 %v5283, %v5289
      %v5291 = vadd.f32 %v5290, 0.18741608
      %v5292 = vmul.f32 %v5283, %v5291
      %v5293 = vadd.f32 %v5292, 1.1283791
      %v5294 = vmul.f32 %v3112, %v5293
      %v5295 = vmul.f32 %v5283, 3.8918573e-05
      %v5296 = vadd.f32 %v5295, 0.001143296
      %v5297 = vmul.f32 %v5283, %v5296
      %v5298 = vadd.f32 %v5297, 0.014752088
      %v5299 = vmul.f32 %v5283, %v5298
      %v5300 = vadd.f32 %v5299, 0.112945676
      %v5301 = vmul.f32 %v5283, %v5300
      %v5302 = vadd.f32 %v5301, 0.4994258
      %v5303 = vmul.f32 %v5283, %v5302
      %v5304 = vadd.f32 %v5303, 1.0
      %v5305 = vrcp.pop %v5304
      %v5306 = vmul.f32 %v5304, %v5305
      %v5307 = vsub.f32 1.0, %v5306
      %v5308 = vmul.f32 %v5305, %v5307
      %v5309 = vadd.f32 %v5305, %v5308
      %vm5310 = vweird.f32 %v5304
      %vm5311 = vweird.f32 %v5305
      %vm5312 = vmor %vm5310, %vm5311
      %v5313 = vsel %vm5312, %v5305, %v5309
      %v5314 = vand.u32 2147483647, %v5304
      %vm5315 = vcmp.eq.f32.partialorder %v5314, 8.507059e+37
      %v5316 = vand.u32 %v5304, 2147483648
      %v5317 = vor.u32 1.1754944e-38, %v5316
      %v5318 = vsel %vm5315, %v5317, %v5313
      %v5319 = vmul.f32 %v5294, %v5318
      %v5320 = vmin.f32 %v5319, 1.0
      %v5321 = vmax.f32 %v5320, -1.0
      %v5322 = vmul.f32 %v3113, %v3113
      %v5323 = vmin.f32 16.0, %v5322
      %v5324 = vmul.f32 %v5323, 2.1237322e-06
      %v5325 = vadd.f32 %v5324, 0.00028619796
      %v5326 = vmul.f32 %v5323, %v5325
      %v5327 = vadd.f32 %v5326, 0.0036580483
      %v5328 = vmul.f32 %v5323, %v5327
      %v5329 = vadd.f32 %v5328, 0.05243302
      %v5330 = vmul.f32 %v5323, %v5329
      %v5331 = vadd.f32 %v5330, 0.18741608
      %v5332 = vmul.f32 %v5323, %v5331
      %v5333 = vadd.f32 %v5332, 1.1283791
      %v5334 = vmul.f32 %v3113, %v5333
      %v5335 = vmul.f32 %v5323, 3.8918573e-05
      %v5336 = vadd.f32 %v5335, 0.001143296
      %v5337 = vmul.f32 %v5323, %v5336
      %v5338 = vadd.f32 %v5337, 0.014752088
      %v5339 = vmul.f32 %v5323, %v5338
      %v5340 = vadd.f32 %v5339, 0.112945676
      %v5341 = vmul.f32 %v5323, %v5340
      %v5342 = vadd.f32 %v5341, 0.4994258
      %v5343 = vmul.f32 %v5323, %v5342
      %v5344 = vadd.f32 %v5343, 1.0
      %v5345 = vrcp.pop %v5344
      %v5346 = vmul.f32 %v5344, %v5345
      %v5347 = vsub.f32 1.0, %v5346
      %v5348 = vmul.f32 %v5345, %v5347
      %v5349 = vadd.f32 %v5345, %v5348
      %vm5350 = vweird.f32 %v5344
      %vm5351 = vweird.f32 %v5345
      %vm5352 = vmor %vm5350, %vm5351
      %v5353 = vsel %vm5352, %v5345, %v5349
      %v5354 = vand.u32 2147483647, %v5344
      %vm5355 = vcmp.eq.f32.partialorder %v5354, 8.507059e+37
      %v5356 = vand.u32 %v5344, 2147483648
      %v5357 = vor.u32 1.1754944e-38, %v5356
      %v5358 = vsel %vm5355, %v5357, %v5353
      %v5359 = vmul.f32 %v5334, %v5358
      %v5360 = vmin.f32 %v5359, 1.0
      %v5361 = vmax.f32 %v5360, -1.0
      %v5362 = vmul.f32 %v3114, %v3114
      %v5363 = vmin.f32 16.0, %v5362
      %v5364 = vmul.f32 %v5363, 2.1237322e-06
      %v5365 = vadd.f32 %v5364, 0.00028619796
      %v5366 = vmul.f32 %v5363, %v5365
      %v5367 = vadd.f32 %v5366, 0.0036580483
      %v5368 = vmul.f32 %v5363, %v5367
      %v5369 = vadd.f32 %v5368, 0.05243302
      %v5370 = vmul.f32 %v5363, %v5369
      %v5371 = vadd.f32 %v5370, 0.18741608
      %v5372 = vmul.f32 %v5363, %v5371
      %v5373 = vadd.f32 %v5372, 1.1283791
      %v5374 = vmul.f32 %v3114, %v5373
      %v5375 = vmul.f32 %v5363, 3.8918573e-05
      %v5376 = vadd.f32 %v5375, 0.001143296
      %v5377 = vmul.f32 %v5363, %v5376
      %v5378 = vadd.f32 %v5377, 0.014752088
      %v5379 = vmul.f32 %v5363, %v5378
      %v5380 = vadd.f32 %v5379, 0.112945676
      %v5381 = vmul.f32 %v5363, %v5380
      %v5382 = vadd.f32 %v5381, 0.4994258
      %v5383 = vmul.f32 %v5363, %v5382
      %v5384 = vadd.f32 %v5383, 1.0
      %v5385 = vrcp.pop %v5384
      %v5386 = vmul.f32 %v5384, %v5385
      %v5387 = vsub.f32 1.0, %v5386
      %v5388 = vmul.f32 %v5385, %v5387
      %v5389 = vadd.f32 %v5385, %v5388
      %vm5390 = vweird.f32 %v5384
      %vm5391 = vweird.f32 %v5385
      %vm5392 = vmor %vm5390, %vm5391
      %v5393 = vsel %vm5392, %v5385, %v5389
      %v5394 = vand.u32 2147483647, %v5384
      %vm5395 = vcmp.eq.f32.partialorder %v5394, 8.507059e+37
      %v5396 = vand.u32 %v5384, 2147483648
      %v5397 = vor.u32 1.1754944e-38, %v5396
      %v5398 = vsel %vm5395, %v5397, %v5393
      %v5399 = vmul.f32 %v5374, %v5398
      %v5400 = vmin.f32 %v5399, 1.0
      %v5401 = vmax.f32 %v5400, -1.0
      %v5402 = vmul.f32 %v3115, %v3115
      %v5403 = vmin.f32 16.0, %v5402
      %v5404 = vmul.f32 %v5403, 2.1237322e-06
      %v5405 = vadd.f32 %v5404, 0.00028619796
      %v5406 = vmul.f32 %v5403, %v5405
      %v5407 = vadd.f32 %v5406, 0.0036580483
      %v5408 = vmul.f32 %v5403, %v5407
      %v5409 = vadd.f32 %v5408, 0.05243302
      %v5410 = vmul.f32 %v5403, %v5409
      %v5411 = vadd.f32 %v5410, 0.18741608
      %v5412 = vmul.f32 %v5403, %v5411
      %v5413 = vadd.f32 %v5412, 1.1283791
      %v5414 = vmul.f32 %v3115, %v5413
      %v5415 = vmul.f32 %v5403, 3.8918573e-05
      %v5416 = vadd.f32 %v5415, 0.001143296
      %v5417 = vmul.f32 %v5403, %v5416
      %v5418 = vadd.f32 %v5417, 0.014752088
      %v5419 = vmul.f32 %v5403, %v5418
      %v5420 = vadd.f32 %v5419, 0.112945676
      %v5421 = vmul.f32 %v5403, %v5420
      %v5422 = vadd.f32 %v5421, 0.4994258
      %v5423 = vmul.f32 %v5403, %v5422
      %v5424 = vadd.f32 %v5423, 1.0
      %v5425 = vrcp.pop %v5424
      %v5426 = vmul.f32 %v5424, %v5425
      %v5427 = vsub.f32 1.0, %v5426
      %v5428 = vmul.f32 %v5425, %v5427
      %v5429 = vadd.f32 %v5425, %v5428
      %vm5430 = vweird.f32 %v5424
      %vm5431 = vweird.f32 %v5425
      %vm5432 = vmor %vm5430, %vm5431
      %v5433 = vsel %vm5432, %v5425, %v5429
      %v5434 = vand.u32 2147483647, %v5424
      %vm5435 = vcmp.eq.f32.partialorder %v5434, 8.507059e+37
      %v5436 = vand.u32 %v5424, 2147483648
      %v5437 = vor.u32 1.1754944e-38, %v5436
      %v5438 = vsel %vm5435, %v5437, %v5433
      %v5439 = vmul.f32 %v5414, %v5438
      %v5440 = vmin.f32 %v5439, 1.0
      %v5441 = vmax.f32 %v5440, -1.0
      %v5442 = vmul.f32 %v3116, %v3116
      %v5443 = vmin.f32 16.0, %v5442
      %v5444 = vmul.f32 %v5443, 2.1237322e-06
      %v5445 = vadd.f32 %v5444, 0.00028619796
      %v5446 = vmul.f32 %v5443, %v5445
      %v5447 = vadd.f32 %v5446, 0.0036580483
      %v5448 = vmul.f32 %v5443, %v5447
      %v5449 = vadd.f32 %v5448, 0.05243302
      %v5450 = vmul.f32 %v5443, %v5449
      %v5451 = vadd.f32 %v5450, 0.18741608
      %v5452 = vmul.f32 %v5443, %v5451
      %v5453 = vadd.f32 %v5452, 1.1283791
      %v5454 = vmul.f32 %v3116, %v5453
      %v5455 = vmul.f32 %v5443, 3.8918573e-05
      %v5456 = vadd.f32 %v5455, 0.001143296
      %v5457 = vmul.f32 %v5443, %v5456
      %v5458 = vadd.f32 %v5457, 0.014752088
      %v5459 = vmul.f32 %v5443, %v5458
      %v5460 = vadd.f32 %v5459, 0.112945676
      %v5461 = vmul.f32 %v5443, %v5460
      %v5462 = vadd.f32 %v5461, 0.4994258
      %v5463 = vmul.f32 %v5443, %v5462
      %v5464 = vadd.f32 %v5463, 1.0
      %v5465 = vrcp.pop %v5464
      %v5466 = vmul.f32 %v5464, %v5465
      %v5467 = vsub.f32 1.0, %v5466
      %v5468 = vmul.f32 %v5465, %v5467
      %v5469 = vadd.f32 %v5465, %v5468
      %vm5470 = vweird.f32 %v5464
      %vm5471 = vweird.f32 %v5465
      %vm5472 = vmor %vm5470, %vm5471
      %v5473 = vsel %vm5472, %v5465, %v5469
      %v5474 = vand.u32 2147483647, %v5464
      %vm5475 = vcmp.eq.f32.partialorder %v5474, 8.507059e+37
      %v5476 = vand.u32 %v5464, 2147483648
      %v5477 = vor.u32 1.1754944e-38, %v5476
      %v5478 = vsel %vm5475, %v5477, %v5473
      %v5479 = vmul.f32 %v5454, %v5478
      %v5480 = vmin.f32 %v5479, 1.0
      %v5481 = vmax.f32 %v5480, -1.0
      %v5482 = vmul.f32 %v3117, %v3117
      %v5483 = vmin.f32 16.0, %v5482
      %v5484 = vmul.f32 %v5483, 2.1237322e-06
      %v5485 = vadd.f32 %v5484, 0.00028619796
      %v5486 = vmul.f32 %v5483, %v5485
      %v5487 = vadd.f32 %v5486, 0.0036580483
      %v5488 = vmul.f32 %v5483, %v5487
      %v5489 = vadd.f32 %v5488, 0.05243302
      %v5490 = vmul.f32 %v5483, %v5489
      %v5491 = vadd.f32 %v5490, 0.18741608
      %v5492 = vmul.f32 %v5483, %v5491
      %v5493 = vadd.f32 %v5492, 1.1283791
      %v5494 = vmul.f32 %v3117, %v5493
      %v5495 = vmul.f32 %v5483, 3.8918573e-05
      %v5496 = vadd.f32 %v5495, 0.001143296
      %v5497 = vmul.f32 %v5483, %v5496
      %v5498 = vadd.f32 %v5497, 0.014752088
      %v5499 = vmul.f32 %v5483, %v5498
      %v5500 = vadd.f32 %v5499, 0.112945676
      %v5501 = vmul.f32 %v5483, %v5500
      %v5502 = vadd.f32 %v5501, 0.4994258
      %v5503 = vmul.f32 %v5483, %v5502
      %v5504 = vadd.f32 %v5503, 1.0
      %v5505 = vrcp.pop %v5504
      %v5506 = vmul.f32 %v5504, %v5505
      %v5507 = vsub.f32 1.0, %v5506
      %v5508 = vmul.f32 %v5505, %v5507
      %v5509 = vadd.f32 %v5505, %v5508
      %vm5510 = vweird.f32 %v5504
      %vm5511 = vweird.f32 %v5505
      %vm5512 = vmor %vm5510, %vm5511
      %v5513 = vsel %vm5512, %v5505, %v5509
      %v5514 = vand.u32 2147483647, %v5504
      %vm5515 = vcmp.eq.f32.partialorder %v5514, 8.507059e+37
      %v5516 = vand.u32 %v5504, 2147483648
      %v5517 = vor.u32 1.1754944e-38, %v5516
      %v5518 = vsel %vm5515, %v5517, %v5513
      %v5519 = vmul.f32 %v5494, %v5518
      %v5520 = vmin.f32 %v5519, 1.0
      %v5521 = vmax.f32 %v5520, -1.0
      %v5522 = vmul.f32 %v3118, %v3118
      %v5523 = vmin.f32 16.0, %v5522
      %v5524 = vmul.f32 %v5523, 2.1237322e-06
      %v5525 = vadd.f32 %v5524, 0.00028619796
      %v5526 = vmul.f32 %v5523, %v5525
      %v5527 = vadd.f32 %v5526, 0.0036580483
      %v5528 = vmul.f32 %v5523, %v5527
      %v5529 = vadd.f32 %v5528, 0.05243302
      %v5530 = vmul.f32 %v5523, %v5529
      %v5531 = vadd.f32 %v5530, 0.18741608
      %v5532 = vmul.f32 %v5523, %v5531
      %v5533 = vadd.f32 %v5532, 1.1283791
      %v5534 = vmul.f32 %v3118, %v5533
      %v5535 = vmul.f32 %v5523, 3.8918573e-05
      %v5536 = vadd.f32 %v5535, 0.001143296
      %v5537 = vmul.f32 %v5523, %v5536
      %v5538 = vadd.f32 %v5537, 0.014752088
      %v5539 = vmul.f32 %v5523, %v5538
      %v5540 = vadd.f32 %v5539, 0.112945676
      %v5541 = vmul.f32 %v5523, %v5540
      %v5542 = vadd.f32 %v5541, 0.4994258
      %v5543 = vmul.f32 %v5523, %v5542
      %v5544 = vadd.f32 %v5543, 1.0
      %v5545 = vrcp.pop %v5544
      %v5546 = vmul.f32 %v5544, %v5545
      %v5547 = vsub.f32 1.0, %v5546
      %v5548 = vmul.f32 %v5545, %v5547
      %v5549 = vadd.f32 %v5545, %v5548
      %vm5550 = vweird.f32 %v5544
      %vm5551 = vweird.f32 %v5545
      %vm5552 = vmor %vm5550, %vm5551
      %v5553 = vsel %vm5552, %v5545, %v5549
      %v5554 = vand.u32 2147483647, %v5544
      %vm5555 = vcmp.eq.f32.partialorder %v5554, 8.507059e+37
      %v5556 = vand.u32 %v5544, 2147483648
      %v5557 = vor.u32 1.1754944e-38, %v5556
      %v5558 = vsel %vm5555, %v5557, %v5553
      %v5559 = vmul.f32 %v5534, %v5558
      %v5560 = vmin.f32 %v5559, 1.0
      %v5561 = vmax.f32 %v5560, -1.0
      %v5562 = vmul.f32 %v3119, %v3119
      %v5563 = vmin.f32 16.0, %v5562
      %v5564 = vmul.f32 %v5563, 2.1237322e-06
      %v5565 = vadd.f32 %v5564, 0.00028619796
      %v5566 = vmul.f32 %v5563, %v5565
      %v5567 = vadd.f32 %v5566, 0.0036580483
      %v5568 = vmul.f32 %v5563, %v5567
      %v5569 = vadd.f32 %v5568, 0.05243302
      %v5570 = vmul.f32 %v5563, %v5569
      %v5571 = vadd.f32 %v5570, 0.18741608
      %v5572 = vmul.f32 %v5563, %v5571
      %v5573 = vadd.f32 %v5572, 1.1283791
      %v5574 = vmul.f32 %v3119, %v5573
      %v5575 = vmul.f32 %v5563, 3.8918573e-05
      %v5576 = vadd.f32 %v5575, 0.001143296
      %v5577 = vmul.f32 %v5563, %v5576
      %v5578 = vadd.f32 %v5577, 0.014752088
      %v5579 = vmul.f32 %v5563, %v5578
      %v5580 = vadd.f32 %v5579, 0.112945676
      %v5581 = vmul.f32 %v5563, %v5580
      %v5582 = vadd.f32 %v5581, 0.4994258
      %v5583 = vmul.f32 %v5563, %v5582
      %v5584 = vadd.f32 %v5583, 1.0
      %v5585 = vrcp.pop %v5584
      %v5586 = vmul.f32 %v5584, %v5585
      %v5587 = vsub.f32 1.0, %v5586
      %v5588 = vmul.f32 %v5585, %v5587
      %v5589 = vadd.f32 %v5585, %v5588
      %vm5590 = vweird.f32 %v5584
      %vm5591 = vweird.f32 %v5585
      %vm5592 = vmor %vm5590, %vm5591
      %v5593 = vsel %vm5592, %v5585, %v5589
      %v5594 = vand.u32 2147483647, %v5584
      %vm5595 = vcmp.eq.f32.partialorder %v5594, 8.507059e+37
      %v5596 = vand.u32 %v5584, 2147483648
      %v5597 = vor.u32 1.1754944e-38, %v5596
      %v5598 = vsel %vm5595, %v5597, %v5593
      %v5599 = vmul.f32 %v5574, %v5598
      %v5600 = vmin.f32 %v5599, 1.0
      %v5601 = vmax.f32 %v5600, -1.0
      %v5602 = vmul.f32 %v3120, %v3120
      %v5603 = vmin.f32 16.0, %v5602
      %v5604 = vmul.f32 %v5603, 2.1237322e-06
      %v5605 = vadd.f32 %v5604, 0.00028619796
      %v5606 = vmul.f32 %v5603, %v5605
      %v5607 = vadd.f32 %v5606, 0.0036580483
      %v5608 = vmul.f32 %v5603, %v5607
      %v5609 = vadd.f32 %v5608, 0.05243302
      %v5610 = vmul.f32 %v5603, %v5609
      %v5611 = vadd.f32 %v5610, 0.18741608
      %v5612 = vmul.f32 %v5603, %v5611
      %v5613 = vadd.f32 %v5612, 1.1283791
      %v5614 = vmul.f32 %v3120, %v5613
      %v5615 = vmul.f32 %v5603, 3.8918573e-05
      %v5616 = vadd.f32 %v5615, 0.001143296
      %v5617 = vmul.f32 %v5603, %v5616
      %v5618 = vadd.f32 %v5617, 0.014752088
      %v5619 = vmul.f32 %v5603, %v5618
      %v5620 = vadd.f32 %v5619, 0.112945676
      %v5621 = vmul.f32 %v5603, %v5620
      %v5622 = vadd.f32 %v5621, 0.4994258
      %v5623 = vmul.f32 %v5603, %v5622
      %v5624 = vadd.f32 %v5623, 1.0
      %v5625 = vrcp.pop %v5624
      %v5626 = vmul.f32 %v5624, %v5625
      %v5627 = vsub.f32 1.0, %v5626
      %v5628 = vmul.f32 %v5625, %v5627
      %v5629 = vadd.f32 %v5625, %v5628
      %vm5630 = vweird.f32 %v5624
      %vm5631 = vweird.f32 %v5625
      %vm5632 = vmor %vm5630, %vm5631
      %v5633 = vsel %vm5632, %v5625, %v5629
      %v5634 = vand.u32 2147483647, %v5624
      %vm5635 = vcmp.eq.f32.partialorder %v5634, 8.507059e+37
      %v5636 = vand.u32 %v5624, 2147483648
      %v5637 = vor.u32 1.1754944e-38, %v5636
      %v5638 = vsel %vm5635, %v5637, %v5633
      %v5639 = vmul.f32 %v5614, %v5638
      %v5640 = vmin.f32 %v5639, 1.0
      %v5641 = vmax.f32 %v5640, -1.0
      %v5642 = vmul.f32 %v3121, %v3121
      %v5643 = vmin.f32 16.0, %v5642
      %v5644 = vmul.f32 %v5643, 2.1237322e-06
      %v5645 = vadd.f32 %v5644, 0.00028619796
      %v5646 = vmul.f32 %v5643, %v5645
      %v5647 = vadd.f32 %v5646, 0.0036580483
      %v5648 = vmul.f32 %v5643, %v5647
      %v5649 = vadd.f32 %v5648, 0.05243302
      %v5650 = vmul.f32 %v5643, %v5649
      %v5651 = vadd.f32 %v5650, 0.18741608
      %v5652 = vmul.f32 %v5643, %v5651
      %v5653 = vadd.f32 %v5652, 1.1283791
      %v5654 = vmul.f32 %v3121, %v5653
      %v5655 = vmul.f32 %v5643, 3.8918573e-05
      %v5656 = vadd.f32 %v5655, 0.001143296
      %v5657 = vmul.f32 %v5643, %v5656
      %v5658 = vadd.f32 %v5657, 0.014752088
      %v5659 = vmul.f32 %v5643, %v5658
      %v5660 = vadd.f32 %v5659, 0.112945676
      %v5661 = vmul.f32 %v5643, %v5660
      %v5662 = vadd.f32 %v5661, 0.4994258
      %v5663 = vmul.f32 %v5643, %v5662
      %v5664 = vadd.f32 %v5663, 1.0
      %v5665 = vrcp.pop %v5664
      %v5666 = vmul.f32 %v5664, %v5665
      %v5667 = vsub.f32 1.0, %v5666
      %v5668 = vmul.f32 %v5665, %v5667
      %v5669 = vadd.f32 %v5665, %v5668
      %vm5670 = vweird.f32 %v5664
      %vm5671 = vweird.f32 %v5665
      %vm5672 = vmor %vm5670, %vm5671
      %v5673 = vsel %vm5672, %v5665, %v5669
      %v5674 = vand.u32 2147483647, %v5664
      %vm5675 = vcmp.eq.f32.partialorder %v5674, 8.507059e+37
      %v5676 = vand.u32 %v5664, 2147483648
      %v5677 = vor.u32 1.1754944e-38, %v5676
      %v5678 = vsel %vm5675, %v5677, %v5673
      %v5679 = vmul.f32 %v5654, %v5678
      %v5680 = vmin.f32 %v5679, 1.0
      %v5681 = vmax.f32 %v5680, -1.0
      %v5682 = vadd.f32 %v3161, 1.0
      %v5683 = vadd.f32 %v3201, 1.0
      %v5684 = vadd.f32 %v3241, 1.0
      %v5685 = vadd.f32 %v3281, 1.0
      %v5686 = vadd.f32 %v3321, 1.0
      %v5687 = vadd.f32 %v3361, 1.0
      %v5688 = vadd.f32 %v3401, 1.0
      %v5689 = vadd.f32 %v3441, 1.0
      %v5690 = vadd.f32 %v3481, 1.0
      %v5691 = vadd.f32 %v3521, 1.0
      %v5692 = vadd.f32 %v3561, 1.0
      %v5693 = vadd.f32 %v3601, 1.0
      %v5694 = vadd.f32 %v3641, 1.0
      %v5695 = vadd.f32 %v3681, 1.0
      %v5696 = vadd.f32 %v3721, 1.0
      %v5697 = vadd.f32 %v3761, 1.0
      %v5698 = vadd.f32 %v3801, 1.0
      %v5699 = vadd.f32 %v3841, 1.0
      %v5700 = vadd.f32 %v3881, 1.0
      %v5701 = vadd.f32 %v3921, 1.0
      %v5702 = vadd.f32 %v3961, 1.0
      %v5703 = vadd.f32 %v4001, 1.0
      %v5704 = vadd.f32 %v4041, 1.0
      %v5705 = vadd.f32 %v4081, 1.0
      %v5706 = vadd.f32 %v4121, 1.0
      %v5707 = vadd.f32 %v4161, 1.0
      %v5708 = vadd.f32 %v4201, 1.0
      %v5709 = vadd.f32 %v4241, 1.0
      %v5710 = vadd.f32 %v4281, 1.0
      %v5711 = vadd.f32 %v4321, 1.0
      %v5712 = vadd.f32 %v4361, 1.0
      %v5713 = vadd.f32 %v4401, 1.0
      %v5714 = vadd.f32 %v4441, 1.0
      %v5715 = vadd.f32 %v4481, 1.0
      %v5716 = vadd.f32 %v4521, 1.0
      %v5717 = vadd.f32 %v4561, 1.0
      %v5718 = vadd.f32 %v4601, 1.0
      %v5719 = vadd.f32 %v4641, 1.0
      %v5720 = vadd.f32 %v4681, 1.0
      %v5721 = vadd.f32 %v4721, 1.0
      %v5722 = vadd.f32 %v4761, 1.0
      %v5723 = vadd.f32 %v4801, 1.0
      %v5724 = vadd.f32 %v4841, 1.0
      %v5725 = vadd.f32 %v4881, 1.0
      %v5726 = vadd.f32 %v4921, 1.0
      %v5727 = vadd.f32 %v4961, 1.0
      %v5728 = vadd.f32 %v5001, 1.0
      %v5729 = vadd.f32 %v5041, 1.0
      %v5730 = vadd.f32 %v5081, 1.0
      %v5731 = vadd.f32 %v5121, 1.0
      %v5732 = vadd.f32 %v5161, 1.0
      %v5733 = vadd.f32 %v5201, 1.0
      %v5734 = vadd.f32 %v5241, 1.0
      %v5735 = vadd.f32 %v5281, 1.0
      %v5736 = vadd.f32 %v5321, 1.0
      %v5737 = vadd.f32 %v5361, 1.0
      %v5738 = vadd.f32 %v5401, 1.0
      %v5739 = vadd.f32 %v5441, 1.0
      %v5740 = vadd.f32 %v5481, 1.0
      %v5741 = vadd.f32 %v5521, 1.0
      %v5742 = vadd.f32 %v5561, 1.0
      %v5743 = vadd.f32 %v5601, 1.0
      %v5744 = vadd.f32 %v5641, 1.0
      %v5745 = vadd.f32 %v5681, 1.0
      %v5746 = vmul.f32 %v2994, %v5682
      %v5747 = vmul.f32 %v2995, %v5683
      %v5748 = vmul.f32 %v2996, %v5684
      %v5749 = vmul.f32 %v2997, %v5685
      %v5750 = vmul.f32 %v2998, %v5686
      %v5751 = vmul.f32 %v2999, %v5687
      %v5752 = vmul.f32 %v3000, %v5688
      %v5753 = vmul.f32 %v3001, %v5689
      %v5754 = vmul.f32 %v3002, %v5690
      %v5755 = vmul.f32 %v3003, %v5691
      %v5756 = vmul.f32 %v3004, %v5692
      %v5757 = vmul.f32 %v3005, %v5693
      %v5758 = vmul.f32 %v3006, %v5694
      %v5759 = vmul.f32 %v3007, %v5695
      %v5760 = vmul.f32 %v3008, %v5696
      %v5761 = vmul.f32 %v3009, %v5697
      %v5762 = vmul.f32 %v3010, %v5698
      %v5763 = vmul.f32 %v3011, %v5699
      %v5764 = vmul.f32 %v3012, %v5700
      %v5765 = vmul.f32 %v3013, %v5701
      %v5766 = vmul.f32 %v3014, %v5702
      %v5767 = vmul.f32 %v3015, %v5703
      %v5768 = vmul.f32 %v3016, %v5704
      %v5769 = vmul.f32 %v3017, %v5705
      %v5770 = vmul.f32 %v3018, %v5706
      %v5771 = vmul.f32 %v3019, %v5707
      %v5772 = vmul.f32 %v3020, %v5708
      %v5773 = vmul.f32 %v3021, %v5709
      %v5774 = vmul.f32 %v3022, %v5710
      %v5775 = vmul.f32 %v3023, %v5711
      %v5776 = vmul.f32 %v3024, %v5712
      %v5777 = vmul.f32 %v3025, %v5713
      %v5778 = vmul.f32 %v3026, %v5714
      %v5779 = vmul.f32 %v3027, %v5715
      %v5780 = vmul.f32 %v3028, %v5716
      %v5781 = vmul.f32 %v3029, %v5717
      %v5782 = vmul.f32 %v3030, %v5718
      %v5783 = vmul.f32 %v3031, %v5719
      %v5784 = vmul.f32 %v3032, %v5720
      %v5785 = vmul.f32 %v3033, %v5721
      %v5786 = vmul.f32 %v3034, %v5722
      %v5787 = vmul.f32 %v3035, %v5723
      %v5788 = vmul.f32 %v3036, %v5724
      %v5789 = vmul.f32 %v3037, %v5725
      %v5790 = vmul.f32 %v3038, %v5726
      %v5791 = vmul.f32 %v3039, %v5727
      %v5792 = vmul.f32 %v3040, %v5728
      %v5793 = vmul.f32 %v3041, %v5729
      %v5794 = vmul.f32 %v3042, %v5730
      %v5795 = vmul.f32 %v3043, %v5731
      %v5796 = vmul.f32 %v3044, %v5732
      %v5797 = vmul.f32 %v3045, %v5733
      %v5798 = vmul.f32 %v3046, %v5734
      %v5799 = vmul.f32 %v3047, %v5735
      %v5800 = vmul.f32 %v3048, %v5736
      %v5801 = vmul.f32 %v3049, %v5737
      %v5802 = vmul.f32 %v3050, %v5738
      %v5803 = vmul.f32 %v3051, %v5739
      %v5804 = vmul.f32 %v3052, %v5740
      %v5805 = vmul.f32 %v3053, %v5741
      %v5806 = vmul.f32 %v3054, %v5742
      %v5807 = vmul.f32 %v3055, %v5743
      %v5808 = vmul.f32 %v3056, %v5744
      %v5809 = vmul.f32 %v3057, %v5745
      %v5874 = vperm.slane %v5746, 0
      %v5875 = vperm.slane %v5747, 0
      %v5876 = vperm.slane %v5748, 0
      %v5877 = vperm.slane %v5749, 0
      %v5878 = vperm.slane %v5750, 0
      %v5879 = vperm.slane %v5751, 0
      %v5880 = vperm.slane %v5752, 0
      %v5881 = vperm.slane %v5753, 0
      %v5882 = vperm.slane %v5754, 0
      %v5883 = vperm.slane %v5755, 0
      %v5884 = vperm.slane %v5756, 0
      %v5885 = vperm.slane %v5757, 0
      %v5886 = vperm.slane %v5758, 0
      %v5887 = vperm.slane %v5759, 0
      %v5888 = vperm.slane %v5760, 0
      %v5889 = vperm.slane %v5761, 0
      %v5890 = vperm.slane %v5762, 0
      %v5891 = vperm.slane %v5763, 0
      %v5892 = vperm.slane %v5764, 0
      %v5893 = vperm.slane %v5765, 0
      %v5894 = vperm.slane %v5766, 0
      %v5895 = vperm.slane %v5767, 0
      %v5896 = vperm.slane %v5768, 0
      %v5897 = vperm.slane %v5769, 0
      %v5898 = vperm.slane %v5770, 0
      %v5899 = vperm.slane %v5771, 0
      %v5900 = vperm.slane %v5772, 0
      %v5901 = vperm.slane %v5773, 0
      %v5902 = vperm.slane %v5774, 0
      %v5903 = vperm.slane %v5775, 0
      %v5904 = vperm.slane %v5776, 0
      %v5905 = vperm.slane %v5777, 0
      %v5906 = vperm.slane %v5778, 0
      %v5907 = vperm.slane %v5779, 0
      %v5908 = vperm.slane %v5780, 0
      %v5909 = vperm.slane %v5781, 0
      %v5910 = vperm.slane %v5782, 0
      %v5911 = vperm.slane %v5783, 0
      %v5912 = vperm.slane %v5784, 0
      %v5913 = vperm.slane %v5785, 0
      %v5914 = vperm.slane %v5786, 0
      %v5915 = vperm.slane %v5787, 0
      %v5916 = vperm.slane %v5788, 0
      %v5917 = vperm.slane %v5789, 0
      %v5918 = vperm.slane %v5790, 0
      %v5919 = vperm.slane %v5791, 0
      %v5920 = vperm.slane %v5792, 0
      %v5921 = vperm.slane %v5793, 0
      %v5922 = vperm.slane %v5794, 0
      %v5923 = vperm.slane %v5795, 0
      %v5924 = vperm.slane %v5796, 0
      %v5925 = vperm.slane %v5797, 0
      %v5926 = vperm.slane %v5798, 0
      %v5927 = vperm.slane %v5799, 0
      %v5928 = vperm.slane %v5800, 0
      %v5929 = vperm.slane %v5801, 0
      %v5930 = vperm.slane %v5802, 0
      %v5931 = vperm.slane %v5803, 0
      %v5932 = vperm.slane %v5804, 0
      %v5933 = vperm.slane %v5805, 0
      %v5934 = vperm.slane %v5806, 0
      %v5935 = vperm.slane %v5807, 0
      %v5936 = vperm.slane %v5808, 0
      %v5937 = vperm.slane %v5809, 0
      %v5938 = vsel %vm1124, %v5875, %v5874
      %v5939 = vsel %vm1126, %v5876, %v5938
      %v5940 = vsel %vm1128, %v5877, %v5939
      %v5941 = vsel %vm1130, %v5878, %v5940
      %v5942 = vsel %vm1132, %v5879, %v5941
      %v5943 = vsel %vm1134, %v5880, %v5942
      %v5944 = vsel %vm1136, %v5881, %v5943
      %v5945 = vsel %vm1124, %v5883, %v5882
      %v5946 = vsel %vm1126, %v5884, %v5945
      %v5947 = vsel %vm1128, %v5885, %v5946
      %v5948 = vsel %vm1130, %v5886, %v5947
      %v5949 = vsel %vm1132, %v5887, %v5948
      %v5950 = vsel %vm1134, %v5888, %v5949
      %v5951 = vsel %vm1136, %v5889, %v5950
      %v5952 = vsel %vm1124, %v5891, %v5890
      %v5953 = vsel %vm1126, %v5892, %v5952
      %v5954 = vsel %vm1128, %v5893, %v5953
      %v5955 = vsel %vm1130, %v5894, %v5954
      %v5956 = vsel %vm1132, %v5895, %v5955
      %v5957 = vsel %vm1134, %v5896, %v5956
      %v5958 = vsel %vm1136, %v5897, %v5957
      %v5959 = vsel %vm1124, %v5899, %v5898
      %v5960 = vsel %vm1126, %v5900, %v5959
      %v5961 = vsel %vm1128, %v5901, %v5960
      %v5962 = vsel %vm1130, %v5902, %v5961
      %v5963 = vsel %vm1132, %v5903, %v5962
      %v5964 = vsel %vm1134, %v5904, %v5963
      %v5965 = vsel %vm1136, %v5905, %v5964
      %v5966 = vsel %vm1124, %v5907, %v5906
      %v5967 = vsel %vm1126, %v5908, %v5966
      %v5968 = vsel %vm1128, %v5909, %v5967
      %v5969 = vsel %vm1130, %v5910, %v5968
      %v5970 = vsel %vm1132, %v5911, %v5969
      %v5971 = vsel %vm1134, %v5912, %v5970
      %v5972 = vsel %vm1136, %v5913, %v5971
      %v5973 = vsel %vm1124, %v5915, %v5914
      %v5974 = vsel %vm1126, %v5916, %v5973
      %v5975 = vsel %vm1128, %v5917, %v5974
      %v5976 = vsel %vm1130, %v5918, %v5975
      %v5977 = vsel %vm1132, %v5919, %v5976
      %v5978 = vsel %vm1134, %v5920, %v5977
      %v5979 = vsel %vm1136, %v5921, %v5978
      %v5980 = vsel %vm1124, %v5923, %v5922
      %v5981 = vsel %vm1126, %v5924, %v5980
      %v5982 = vsel %vm1128, %v5925, %v5981
      %v5983 = vsel %vm1130, %v5926, %v5982
      %v5984 = vsel %vm1132, %v5927, %v5983
      %v5985 = vsel %vm1134, %v5928, %v5984
      %v5986 = vsel %vm1136, %v5929, %v5985
      %v5987 = vsel %vm1124, %v5931, %v5930
      %v5988 = vsel %vm1126, %v5932, %v5987
      %v5989 = vsel %vm1128, %v5933, %v5988
      %v5990 = vsel %vm1130, %v5934, %v5989
      %v5991 = vsel %vm1132, %v5935, %v5990
      %v5992 = vsel %vm1134, %v5936, %v5991
      %v5993 = vsel %vm1136, %v5937, %v5992
      %6002 = vst.msk [vmem:[%s1195 + $0x1] sm:$0xff] %vm952, %v5944
      %6003 = vst.msk [vmem:[%s1195 + $0x11] sm:$0xff] %vm952, %v5951
      %6004 = vst.msk [vmem:[%s1195 + $0x21] sm:$0xff] %vm952, %v5958
      %6005 = vst.msk [vmem:[%s1195 + $0x31] sm:$0xff] %vm952, %v5965
      %6006 = vst.msk [vmem:[%s1195 + $0x41] sm:$0xff] %vm952, %v5972
      %6007 = vst.msk [vmem:[%s1195 + $0x51] sm:$0xff] %vm952, %v5979
      %6008 = vst.msk [vmem:[%s1195 + $0x61] sm:$0xff] %vm952, %v5986
      %6009 = vst.msk [vmem:[%s1195 + $0x71] sm:$0xff] %vm952, %v5993
      %v6010 = vld [vmem:[#allocation2] sm:$0xff]
      %v6011 = vld [vmem:[#allocation2 + $0x10] sm:$0xff]
      %v6012 = vld [vmem:[#allocation2 + $0x20] sm:$0xff]
      %v6013 = vld [vmem:[#allocation2 + $0x30] sm:$0xff]
      %v6014 = vld [vmem:[#allocation2 + $0x40] sm:$0xff]
      %v6015 = vld [vmem:[#allocation2 + $0x50] sm:$0xff]
      %v6016 = vld [vmem:[#allocation2 + $0x60] sm:$0xff]
      %v6017 = vld [vmem:[#allocation2 + $0x70] sm:$0xff]
      %6018 = vst.msk [vmem:[#allocation4] sm:$0xff] %vm952, %v6010
      %6019 = vst.msk [vmem:[#allocation4 + $0x8] sm:$0xff] %vm952, %v6011
      %6020 = vst.msk [vmem:[#allocation4 + $0x10] sm:$0xff] %vm952, %v6012
      %6021 = vst.msk [vmem:[#allocation4 + $0x18] sm:$0xff] %vm952, %v6013
      %6022 = vst.msk [vmem:[#allocation4 + $0x20] sm:$0xff] %vm952, %v6014
      %6023 = vst.msk [vmem:[#allocation4 + $0x28] sm:$0xff] %vm952, %v6015
      %6024 = vst.msk [vmem:[#allocation4 + $0x30] sm:$0xff] %vm952, %v6016
      %6025 = vst.msk [vmem:[#allocation4 + $0x38] sm:$0xff] %vm952, %v6017
      %v6026 = vld [vmem:[#allocation2 + $0x1] sm:$0xff]
      %v6027 = vld [vmem:[#allocation2 + $0x11] sm:$0xff]
      %v6028 = vld [vmem:[#allocation2 + $0x21] sm:$0xff]
      %v6029 = vld [vmem:[#allocation2 + $0x31] sm:$0xff]
      %v6030 = vld [vmem:[#allocation2 + $0x41] sm:$0xff]
      %v6031 = vld [vmem:[#allocation2 + $0x51] sm:$0xff]
      %v6032 = vld [vmem:[#allocation2 + $0x61] sm:$0xff]
      %v6033 = vld [vmem:[#allocation2 + $0x71] sm:$0xff]
      %6042 = vrot.lane.b32.xlu0 %v6026, 4
      %v6043 = vpop.permute.xlu0 %6042
      %6044 = vrot.lane.b32.xlu0 %v6027, 4
      %v6045 = vpop.permute.xlu0 %6044
      %6046 = vrot.lane.b32.xlu0 %v6028, 4
      %v6047 = vpop.permute.xlu0 %6046
      %6048 = vrot.lane.b32.xlu0 %v6029, 4
      %v6049 = vpop.permute.xlu0 %6048
      %6050 = vrot.lane.b32.xlu0 %v6030, 4
      %v6051 = vpop.permute.xlu0 %6050
      %6052 = vrot.lane.b32.xlu0 %v6031, 4
      %v6053 = vpop.permute.xlu0 %6052
      %6054 = vrot.lane.b32.xlu0 %v6032, 4
      %v6055 = vpop.permute.xlu0 %6054
      %6056 = vrot.lane.b32.xlu0 %v6033, 4
      %v6057 = vpop.permute.xlu0 %6056
      %6066 = vst.msk [vmem:[#allocation4] sm:$0xff] %vm1260, %v6043
      %6067 = vst.msk [vmem:[#allocation4 + $0x8] sm:$0xff] %vm1260, %v6045
      %6068 = vst.msk [vmem:[#allocation4 + $0x10] sm:$0xff] %vm1260, %v6047
      %6069 = vst.msk [vmem:[#allocation4 + $0x18] sm:$0xff] %vm1260, %v6049
      %6070 = vst.msk [vmem:[#allocation4 + $0x20] sm:$0xff] %vm1260, %v6051
      %6071 = vst.msk [vmem:[#allocation4 + $0x28] sm:$0xff] %vm1260, %v6053
      %6072 = vst.msk [vmem:[#allocation4 + $0x30] sm:$0xff] %vm1260, %v6055
      %6073 = vst.msk [vmem:[#allocation4 + $0x38] sm:$0xff] %vm1260, %v6057
      %v6074 = vld [vmem:[#allocation2 + $0x2] sm:$0xff]
      %v6075 = vld [vmem:[#allocation2 + $0x12] sm:$0xff]
      %v6076 = vld [vmem:[#allocation2 + $0x22] sm:$0xff]
      %v6077 = vld [vmem:[#allocation2 + $0x32] sm:$0xff]
      %v6078 = vld [vmem:[#allocation2 + $0x42] sm:$0xff]
      %v6079 = vld [vmem:[#allocation2 + $0x52] sm:$0xff]
      %v6080 = vld [vmem:[#allocation2 + $0x62] sm:$0xff]
      %v6081 = vld [vmem:[#allocation2 + $0x72] sm:$0xff]
      %6090 = vrot.lane.b32.xlu0 %v6074, 8
      %v6091 = vpop.permute.xlu0 %6090
      %6092 = vrot.lane.b32.xlu0 %v6075, 8
      %v6093 = vpop.permute.xlu0 %6092
      %6094 = vrot.lane.b32.xlu0 %v6076, 8
      %v6095 = vpop.permute.xlu0 %6094
      %6096 = vrot.lane.b32.xlu0 %v6077, 8
      %v6097 = vpop.permute.xlu0 %6096
      %6098 = vrot.lane.b32.xlu0 %v6078, 8
      %v6099 = vpop.permute.xlu0 %6098
      %6100 = vrot.lane.b32.xlu0 %v6079, 8
      %v6101 = vpop.permute.xlu0 %6100
      %6102 = vrot.lane.b32.xlu0 %v6080, 8
      %v6103 = vpop.permute.xlu0 %6102
      %6104 = vrot.lane.b32.xlu0 %v6081, 8
      %v6105 = vpop.permute.xlu0 %6104
      %6114 = vst.msk [vmem:[#allocation4] sm:$0xff] %vm1309, %v6091
      %6115 = vst.msk [vmem:[#allocation4 + $0x8] sm:$0xff] %vm1309, %v6093
      %6116 = vst.msk [vmem:[#allocation4 + $0x10] sm:$0xff] %vm1309, %v6095
      %6117 = vst.msk [vmem:[#allocation4 + $0x18] sm:$0xff] %vm1309, %v6097
      %6118 = vst.msk [vmem:[#allocation4 + $0x20] sm:$0xff] %vm1309, %v6099
      %6119 = vst.msk [vmem:[#allocation4 + $0x28] sm:$0xff] %vm1309, %v6101
      %6120 = vst.msk [vmem:[#allocation4 + $0x30] sm:$0xff] %vm1309, %v6103
      %6121 = vst.msk [vmem:[#allocation4 + $0x38] sm:$0xff] %vm1309, %v6105
      %v6122 = vld [vmem:[%s1195] sm:$0xff]
      %v6123 = vld [vmem:[%s1195 + $0x10] sm:$0xff]
      %v6124 = vld [vmem:[%s1195 + $0x20] sm:$0xff]
      %v6125 = vld [vmem:[%s1195 + $0x30] sm:$0xff]
      %v6126 = vld [vmem:[%s1195 + $0x40] sm:$0xff]
      %v6127 = vld [vmem:[%s1195 + $0x50] sm:$0xff]
      %v6128 = vld [vmem:[%s1195 + $0x60] sm:$0xff]
      %v6129 = vld [vmem:[%s1195 + $0x70] sm:$0xff]
      %6138 = vrot.lane.b32.xlu0 %v6122, 12
      %v6139 = vpop.permute.xlu0 %6138
      %6140 = vrot.lane.b32.xlu0 %v6123, 12
      %v6141 = vpop.permute.xlu0 %6140
      %6142 = vrot.lane.b32.xlu0 %v6124, 12
      %v6143 = vpop.permute.xlu0 %6142
      %6144 = vrot.lane.b32.xlu0 %v6125, 12
      %v6145 = vpop.permute.xlu0 %6144
      %6146 = vrot.lane.b32.xlu0 %v6126, 12
      %v6147 = vpop.permute.xlu0 %6146
      %6148 = vrot.lane.b32.xlu0 %v6127, 12
      %v6149 = vpop.permute.xlu0 %6148
      %6150 = vrot.lane.b32.xlu0 %v6128, 12
      %v6151 = vpop.permute.xlu0 %6150
      %6152 = vrot.lane.b32.xlu0 %v6129, 12
      %v6153 = vpop.permute.xlu0 %6152
      %6162 = vst.msk [vmem:[#allocation4] sm:$0xff] %vm1358, %v6139
      %6163 = vst.msk [vmem:[#allocation4 + $0x8] sm:$0xff] %vm1358, %v6141
      %6164 = vst.msk [vmem:[#allocation4 + $0x10] sm:$0xff] %vm1358, %v6143
      %6165 = vst.msk [vmem:[#allocation4 + $0x18] sm:$0xff] %vm1358, %v6145
      %6166 = vst.msk [vmem:[#allocation4 + $0x20] sm:$0xff] %vm1358, %v6147
      %6167 = vst.msk [vmem:[#allocation4 + $0x28] sm:$0xff] %vm1358, %v6149
      %6168 = vst.msk [vmem:[#allocation4 + $0x30] sm:$0xff] %vm1358, %v6151
      %6169 = vst.msk [vmem:[#allocation4 + $0x38] sm:$0xff] %vm1358, %v6153
      %v6170 = vld [vmem:[%s1195 + $0x1] sm:$0xff]
      %v6171 = vld [vmem:[%s1195 + $0x11] sm:$0xff]
      %v6172 = vld [vmem:[%s1195 + $0x21] sm:$0xff]
      %v6173 = vld [vmem:[%s1195 + $0x31] sm:$0xff]
      %v6174 = vld [vmem:[%s1195 + $0x41] sm:$0xff]
      %v6175 = vld [vmem:[%s1195 + $0x51] sm:$0xff]
      %v6176 = vld [vmem:[%s1195 + $0x61] sm:$0xff]
      %v6177 = vld [vmem:[%s1195 + $0x71] sm:$0xff]
      %6186 = vrot.lane.b32.xlu0 %v6170, 16
      %v6187 = vpop.permute.xlu0 %6186
      %6188 = vrot.lane.b32.xlu0 %v6171, 16
      %v6189 = vpop.permute.xlu0 %6188
      %6190 = vrot.lane.b32.xlu0 %v6172, 16
      %v6191 = vpop.permute.xlu0 %6190
      %6192 = vrot.lane.b32.xlu0 %v6173, 16
      %v6193 = vpop.permute.xlu0 %6192
      %6194 = vrot.lane.b32.xlu0 %v6174, 16
      %v6195 = vpop.permute.xlu0 %6194
      %6196 = vrot.lane.b32.xlu0 %v6175, 16
      %v6197 = vpop.permute.xlu0 %6196
      %6198 = vrot.lane.b32.xlu0 %v6176, 16
      %v6199 = vpop.permute.xlu0 %6198
      %6200 = vrot.lane.b32.xlu0 %v6177, 16
      %v6201 = vpop.permute.xlu0 %6200
      %6210 = vst.msk [vmem:[#allocation4] sm:$0xff] %vm1407, %v6187
      %6211 = vst.msk [vmem:[#allocation4 + $0x8] sm:$0xff] %vm1407, %v6189
      %6212 = vst.msk [vmem:[#allocation4 + $0x10] sm:$0xff] %vm1407, %v6191
      %6213 = vst.msk [vmem:[#allocation4 + $0x18] sm:$0xff] %vm1407, %v6193
      %6214 = vst.msk [vmem:[#allocation4 + $0x20] sm:$0xff] %vm1407, %v6195
      %6215 = vst.msk [vmem:[#allocation4 + $0x28] sm:$0xff] %vm1407, %v6197
      %6216 = vst.msk [vmem:[#allocation4 + $0x30] sm:$0xff] %vm1407, %v6199
      %6217 = vst.msk [vmem:[#allocation4 + $0x38] sm:$0xff] %vm1407, %v6201
      %v6218 = vld [vmem:[%s1195 + $0x2] sm:$0xff]
      %v6219 = vld [vmem:[%s1195 + $0x12] sm:$0xff]
      %v6220 = vld [vmem:[%s1195 + $0x22] sm:$0xff]
      %v6221 = vld [vmem:[%s1195 + $0x32] sm:$0xff]
      %v6222 = vld [vmem:[%s1195 + $0x42] sm:$0xff]
      %v6223 = vld [vmem:[%s1195 + $0x52] sm:$0xff]
      %v6224 = vld [vmem:[%s1195 + $0x62] sm:$0xff]
      %v6225 = vld [vmem:[%s1195 + $0x72] sm:$0xff]
      %6234 = vrot.lane.b32.xlu0 %v6218, 20
      %v6235 = vpop.permute.xlu0 %6234
      %6236 = vrot.lane.b32.xlu0 %v6219, 20
      %v6237 = vpop.permute.xlu0 %6236
      %6238 = vrot.lane.b32.xlu0 %v6220, 20
      %v6239 = vpop.permute.xlu0 %6238
      %6240 = vrot.lane.b32.xlu0 %v6221, 20
      %v6241 = vpop.permute.xlu0 %6240
      %6242 = vrot.lane.b32.xlu0 %v6222, 20
      %v6243 = vpop.permute.xlu0 %6242
      %6244 = vrot.lane.b32.xlu0 %v6223, 20
      %v6245 = vpop.permute.xlu0 %6244
      %6246 = vrot.lane.b32.xlu0 %v6224, 20
      %v6247 = vpop.permute.xlu0 %6246
      %6248 = vrot.lane.b32.xlu0 %v6225, 20
      %v6249 = vpop.permute.xlu0 %6248
      %6258 = vst.msk [vmem:[#allocation4] sm:$0xff] %vm1456, %v6235
      %6259 = vst.msk [vmem:[#allocation4 + $0x8] sm:$0xff] %vm1456, %v6237
      %6260 = vst.msk [vmem:[#allocation4 + $0x10] sm:$0xff] %vm1456, %v6239
      %6261 = vst.msk [vmem:[#allocation4 + $0x18] sm:$0xff] %vm1456, %v6241
      %6262 = vst.msk [vmem:[#allocation4 + $0x20] sm:$0xff] %vm1456, %v6243
      %6263 = vst.msk [vmem:[#allocation4 + $0x28] sm:$0xff] %vm1456, %v6245
      %6264 = vst.msk [vmem:[#allocation4 + $0x30] sm:$0xff] %vm1456, %v6247
      %6265 = vst.msk [vmem:[#allocation4 + $0x38] sm:$0xff] %vm1456, %v6249
      %v6266 = vld [vmem:[%s1465] sm:$0xff]
      %v6267 = vld [vmem:[%s1465 + $0x10] sm:$0xff]
      %v6268 = vld [vmem:[%s1465 + $0x20] sm:$0xff]
      %v6269 = vld [vmem:[%s1465 + $0x30] sm:$0xff]
      %v6270 = vld [vmem:[%s1465 + $0x40] sm:$0xff]
      %v6271 = vld [vmem:[%s1465 + $0x50] sm:$0xff]
      %v6272 = vld [vmem:[%s1465 + $0x60] sm:$0xff]
      %v6273 = vld [vmem:[%s1465 + $0x70] sm:$0xff]
      %6282 = vrot.lane.b32.xlu0 %v6266, 24
      %v6283 = vpop.permute.xlu0 %6282
      %6284 = vrot.lane.b32.xlu0 %v6267, 24
      %v6285 = vpop.permute.xlu0 %6284
      %6286 = vrot.lane.b32.xlu0 %v6268, 24
      %v6287 = vpop.permute.xlu0 %6286
      %6288 = vrot.lane.b32.xlu0 %v6269, 24
      %v6289 = vpop.permute.xlu0 %6288
      %6290 = vrot.lane.b32.xlu0 %v6270, 24
      %v6291 = vpop.permute.xlu0 %6290
      %6292 = vrot.lane.b32.xlu0 %v6271, 24
      %v6293 = vpop.permute.xlu0 %6292
      %6294 = vrot.lane.b32.xlu0 %v6272, 24
      %v6295 = vpop.permute.xlu0 %6294
      %6296 = vrot.lane.b32.xlu0 %v6273, 24
      %v6297 = vpop.permute.xlu0 %6296
      %6306 = vst.msk [vmem:[#allocation4] sm:$0xff] %vm1506, %v6283
      %6307 = vst.msk [vmem:[#allocation4 + $0x8] sm:$0xff] %vm1506, %v6285
      %6308 = vst.msk [vmem:[#allocation4 + $0x10] sm:$0xff] %vm1506, %v6287
      %6309 = vst.msk [vmem:[#allocation4 + $0x18] sm:$0xff] %vm1506, %v6289
      %6310 = vst.msk [vmem:[#allocation4 + $0x20] sm:$0xff] %vm1506, %v6291
      %6311 = vst.msk [vmem:[#allocation4 + $0x28] sm:$0xff] %vm1506, %v6293
      %6312 = vst.msk [vmem:[#allocation4 + $0x30] sm:$0xff] %vm1506, %v6295
      %6313 = vst.msk [vmem:[#allocation4 + $0x38] sm:$0xff] %vm1506, %v6297
      %v6314 = vld [vmem:[%s1465 + $0x1] sm:$0xff]
      %v6315 = vld [vmem:[%s1465 + $0x11] sm:$0xff]
      %v6316 = vld [vmem:[%s1465 + $0x21] sm:$0xff]
      %v6317 = vld [vmem:[%s1465 + $0x31] sm:$0xff]
      %v6318 = vld [vmem:[%s1465 + $0x41] sm:$0xff]
      %v6319 = vld [vmem:[%s1465 + $0x51] sm:$0xff]
      %v6320 = vld [vmem:[%s1465 + $0x61] sm:$0xff]
      %v6321 = vld [vmem:[%s1465 + $0x71] sm:$0xff]
      %6330 = vrot.lane.b32.xlu0 %v6314, 28
      %v6331 = vpop.permute.xlu0 %6330
      %6332 = vrot.lane.b32.xlu0 %v6315, 28
      %v6333 = vpop.permute.xlu0 %6332
      %6334 = vrot.lane.b32.xlu0 %v6316, 28
      %v6335 = vpop.permute.xlu0 %6334
      %6336 = vrot.lane.b32.xlu0 %v6317, 28
      %v6337 = vpop.permute.xlu0 %6336
      %6338 = vrot.lane.b32.xlu0 %v6318, 28
      %v6339 = vpop.permute.xlu0 %6338
      %6340 = vrot.lane.b32.xlu0 %v6319, 28
      %v6341 = vpop.permute.xlu0 %6340
      %6342 = vrot.lane.b32.xlu0 %v6320, 28
      %v6343 = vpop.permute.xlu0 %6342
      %6344 = vrot.lane.b32.xlu0 %v6321, 28
      %v6345 = vpop.permute.xlu0 %6344
      %6354 = vst.msk [vmem:[#allocation4] sm:$0xff] %vm1555, %v6331
      %6355 = vst.msk [vmem:[#allocation4 + $0x8] sm:$0xff] %vm1555, %v6333
      %6356 = vst.msk [vmem:[#allocation4 + $0x10] sm:$0xff] %vm1555, %v6335
      %6357 = vst.msk [vmem:[#allocation4 + $0x18] sm:$0xff] %vm1555, %v6337
      %6358 = vst.msk [vmem:[#allocation4 + $0x20] sm:$0xff] %vm1555, %v6339
      %6359 = vst.msk [vmem:[#allocation4 + $0x28] sm:$0xff] %vm1555, %v6341
      %6360 = vst.msk [vmem:[#allocation4 + $0x30] sm:$0xff] %vm1555, %v6343
      %6361 = vst.msk [vmem:[#allocation4 + $0x38] sm:$0xff] %vm1555, %v6345
      %v6362 = vld [vmem:[%s1465 + $0x2] sm:$0xff]
      %v6363 = vld [vmem:[%s1465 + $0x12] sm:$0xff]
      %v6364 = vld [vmem:[%s1465 + $0x22] sm:$0xff]
      %v6365 = vld [vmem:[%s1465 + $0x32] sm:$0xff]
      %v6366 = vld [vmem:[%s1465 + $0x42] sm:$0xff]
      %v6367 = vld [vmem:[%s1465 + $0x52] sm:$0xff]
      %v6368 = vld [vmem:[%s1465 + $0x62] sm:$0xff]
      %v6369 = vld [vmem:[%s1465 + $0x72] sm:$0xff]
      %6378 = vrot.lane.b32.xlu0 %v6362, 32
      %v6379 = vpop.permute.xlu0 %6378
      %6380 = vrot.lane.b32.xlu0 %v6363, 32
      %v6381 = vpop.permute.xlu0 %6380
      %6382 = vrot.lane.b32.xlu0 %v6364, 32
      %v6383 = vpop.permute.xlu0 %6382
      %6384 = vrot.lane.b32.xlu0 %v6365, 32
      %v6385 = vpop.permute.xlu0 %6384
      %6386 = vrot.lane.b32.xlu0 %v6366, 32
      %v6387 = vpop.permute.xlu0 %6386
      %6388 = vrot.lane.b32.xlu0 %v6367, 32
      %v6389 = vpop.permute.xlu0 %6388
      %6390 = vrot.lane.b32.xlu0 %v6368, 32
      %v6391 = vpop.permute.xlu0 %6390
      %6392 = vrot.lane.b32.xlu0 %v6369, 32
      %v6393 = vpop.permute.xlu0 %6392
      %6402 = vst.msk [vmem:[#allocation4] sm:$0xff] %vm1604, %v6379
      %6403 = vst.msk [vmem:[#allocation4 + $0x8] sm:$0xff] %vm1604, %v6381
      %6404 = vst.msk [vmem:[#allocation4 + $0x10] sm:$0xff] %vm1604, %v6383
      %6405 = vst.msk [vmem:[#allocation4 + $0x18] sm:$0xff] %vm1604, %v6385
      %6406 = vst.msk [vmem:[#allocation4 + $0x20] sm:$0xff] %vm1604, %v6387
      %6407 = vst.msk [vmem:[#allocation4 + $0x28] sm:$0xff] %vm1604, %v6389
      %6408 = vst.msk [vmem:[#allocation4 + $0x30] sm:$0xff] %vm1604, %v6391
      %6409 = vst.msk [vmem:[#allocation4 + $0x38] sm:$0xff] %vm1604, %v6393
      %v6410 = vld [vmem:[#allocation4] sm:$0xff]
      %v6411 = vld [vmem:[#allocation4 + $0x8] sm:$0xff]
      %v6412 = vld [vmem:[#allocation4 + $0x10] sm:$0xff]
      %v6413 = vld [vmem:[#allocation4 + $0x18] sm:$0xff]
      %v6414 = vld [vmem:[#allocation4 + $0x20] sm:$0xff]
      %v6415 = vld [vmem:[#allocation4 + $0x28] sm:$0xff]
      %v6416 = vld [vmem:[#allocation4 + $0x30] sm:$0xff]
      %v6417 = vld [vmem:[#allocation4 + $0x38] sm:$0xff]
      %v6418 = vld [vmem:[%s8] sm:$0xff]
      %v6419 = vld [vmem:[%s8 + $0x8] sm:$0xff]
      %v6420 = vld [vmem:[%s8 + $0x10] sm:$0xff]
      %v6421 = vld [vmem:[%s8 + $0x18] sm:$0xff]
      %v6422 = vld [vmem:[%s8 + $0x20] sm:$0xf]
      %v6424 = vsel %vm1626, %v6410, 0
      %v6427 = vsel %vm1626, %v6411, 0
      %v6430 = vsel %vm1626, %v6412, 0
      %v6433 = vsel %vm1626, %v6413, 0
      %v6436 = vsel %vm1626, %v6414, 0
      %v6439 = vsel %vm1626, %v6415, 0
      %v6442 = vsel %vm1626, %v6416, 0
      %v6445 = vsel %vm1626, %v6417, 0
      %v6448 = vsel %vm1651, %v6422, 0
      %6450 = vmatpush.msra.mxu0 0.0
      %6451 = vmatpush.msra.mxu0 0.0
      %6452 = vmatpush.msra.mxu0 0.0
      %6453 = vmatpush.msra.mxu0 0.0
      %6454 = vmatpush.msra.mxu0 0.0
      %6455 = vmatpush.msra.mxu0 0.0
      %6456 = vmatpush.msra.mxu0 0.0
      %6457 = vmatpush.msra.mxu0 0.0
      %6458 = vmatpush.msra.mxu0 0.0
      %6459 = vmatpush.msra.mxu0 0.0
      %6460 = vmatpush.msra.mxu0 0.0
      %6461 = vmatpush.msra.mxu0 %v6448
      %6462 = vmatpush.msra.mxu0 %v6421
      %6463 = vmatpush.msra.mxu0 %v6420
      %6464 = vmatpush.msra.mxu0 %v6419
      %6465 = vmatpush.msra.mxu0 %v6418
      %6466 = vmatmul.f32.gmra.mxu0 %v6424
      %v6467 = vpop.f32.mrf.mxu0
      %v6468 = vadd.f32 0.0, %v6467
      %6469 = vmatmul.f32.gmra.mxu0 %v6427
      %v6470 = vpop.f32.mrf.mxu0
      %v6471 = vadd.f32 0.0, %v6470
      %6472 = vmatmul.f32.gmra.mxu0 %v6430
      %v6473 = vpop.f32.mrf.mxu0
      %v6474 = vadd.f32 0.0, %v6473
      %6475 = vmatmul.f32.gmra.mxu0 %v6433
      %v6476 = vpop.f32.mrf.mxu0
      %v6477 = vadd.f32 0.0, %v6476
      %6478 = vmatmul.f32.gmra.mxu0 %v6436
      %v6479 = vpop.f32.mrf.mxu0
      %v6480 = vadd.f32 0.0, %v6479
      %6481 = vmatmul.f32.gmra.mxu0 %v6439
      %v6482 = vpop.f32.mrf.mxu0
      %v6483 = vadd.f32 0.0, %v6482
      %6484 = vmatmul.f32.gmra.mxu0 %v6442
      %v6485 = vpop.f32.mrf.mxu0
      %v6486 = vadd.f32 0.0, %v6485
      %6487 = vmatmul.f32.gmra.mxu0 %v6445
      %v6488 = vpop.f32.mrf.mxu0
      %v6489 = vadd.f32 0.0, %v6488
      %6490 = vdwg.mxu0
      %v6491 = vsel %vm974, %v6468, 0.0
      %v6492 = vsel %vm974, %v6471, 0.0
      %v6493 = vadd.f32 %v6491, %v6492
      %v6494 = vsel %vm974, %v6474, 0.0
      %v6495 = vadd.f32 %v6493, %v6494
      %v6496 = vsel %vm974, %v6477, 0.0
      %v6497 = vadd.f32 %v6495, %v6496
      %v6498 = vsel %vm974, %v6480, 0.0
      %v6499 = vadd.f32 %v6497, %v6498
      %v6500 = vsel %vm974, %v6483, 0.0
      %v6501 = vadd.f32 %v6499, %v6500
      %v6502 = vsel %vm974, %v6486, 0.0
      %v6503 = vadd.f32 %v6501, %v6502
      %v6504 = vsel %vm974, %v6489, 0.0
      %v6505 = vadd.f32 %v6503, %v6504
      %6506 = vadd.xlane.f32.xlu0 %v6505
      %v6507 = vpop.xlane.xlu0 %6506
      %v6508 = vrot.slane %v6507, 4
      %v6509 = vadd.f32 %v6507, %v6508
      %v6510 = vrot.slane %v6509, 2
      %v6511 = vadd.f32 %v6509, %v6510
      %v6512 = vrot.slane %v6511, 1
      %v6513 = vadd.f32 %v6511, %v6512
      %s6514 = vtos %v6513
      %v6515 = vrcp.pop 512.0
      %v6516 = vmul.f32 512.0, %v6515
      %v6517 = vsub.f32 1.0, %v6516
      %v6518 = vmul.f32 %v6515, %v6517
      %v6519 = vadd.f32 %v6515, %v6518
      %vm6520 = vweird.f32 %v6515
      %v6521 = vsel %vm6520, %v6515, %v6519
      %s6522 = vtos %v6521
      %s6523 = smul.f32 %s6514, %s6522
      %v6524 = vstv %s6523
      %v6525 = vsub.f32 %v6468, %v6524
      %v6526 = vsub.f32 %v6471, %v6524
      %v6527 = vsub.f32 %v6474, %v6524
      %v6528 = vsub.f32 %v6477, %v6524
      %v6529 = vsub.f32 %v6480, %v6524
      %v6530 = vsub.f32 %v6483, %v6524
      %v6531 = vsub.f32 %v6486, %v6524
      %v6532 = vsub.f32 %v6489, %v6524
      %v6533 = vmul.f32 %v6525, %v6525
      %v6534 = vmul.f32 %v6526, %v6526
      %v6535 = vmul.f32 %v6527, %v6527
      %v6536 = vmul.f32 %v6528, %v6528
      %v6537 = vmul.f32 %v6529, %v6529
      %v6538 = vmul.f32 %v6530, %v6530
      %v6539 = vmul.f32 %v6531, %v6531
      %v6540 = vmul.f32 %v6532, %v6532
      %v6541 = vsel %vm974, %v6533, 0.0
      %v6542 = vsel %vm974, %v6534, 0.0
      %v6543 = vadd.f32 %v6541, %v6542
      %v6544 = vsel %vm974, %v6535, 0.0
      %v6545 = vadd.f32 %v6543, %v6544
      %v6546 = vsel %vm974, %v6536, 0.0
      %v6547 = vadd.f32 %v6545, %v6546
      %v6548 = vsel %vm974, %v6537, 0.0
      %v6549 = vadd.f32 %v6547, %v6548
      %v6550 = vsel %vm974, %v6538, 0.0
      %v6551 = vadd.f32 %v6549, %v6550
      %v6552 = vsel %vm974, %v6539, 0.0
      %v6553 = vadd.f32 %v6551, %v6552
      %v6554 = vsel %vm974, %v6540, 0.0
      %v6555 = vadd.f32 %v6553, %v6554
      %6556 = vadd.xlane.f32.xlu0 %v6555
      %v6557 = vpop.xlane.xlu0 %6556
      %v6558 = vrot.slane %v6557, 4
      %v6559 = vadd.f32 %v6557, %v6558
      %v6560 = vrot.slane %v6559, 2
      %v6561 = vadd.f32 %v6559, %v6560
      %v6562 = vrot.slane %v6561, 1
      %v6563 = vadd.f32 %v6561, %v6562
      %s6564 = vtos %v6563
      %v6565 = vrcp.pop 512.0
      %v6566 = vmul.f32 512.0, %v6565
      %v6567 = vsub.f32 1.0, %v6566
      %v6568 = vmul.f32 %v6565, %v6567
      %v6569 = vadd.f32 %v6565, %v6568
      %vm6570 = vweird.f32 %v6565
      %v6571 = vsel %vm6570, %v6565, %v6569
      %s6572 = vtos %v6571
      %s6573 = smul.f32 %s6564, %s6572
      %s6574 = sadd.f32 %s6573, 1e-05
      %v6575 = vstv %s6574
      %v6576 = vrsqrt.pop %v6575
      %v6577 = vmul.f32 %v6576, %v6575
      %v6578 = vmul.f32 %v6577, %v6576
      %v6579 = vmul.f32 0.5, %v6578
      %v6580 = vsub.f32 1.5, %v6579
      %v6581 = vmul.f32 %v6576, %v6580
      %vm6582 = vweird.f32 %v6575
      %vm6583 = vweird.f32 %v6576
      %vm6584 = vmor %vm6582, %vm6583
      %v6585 = vsel %vm6584, %v6576, %v6581
      %s6586 = vtos %v6585
      %v6587 = vstv %s6586
      %v6588 = vmul.f32 %v6525, %v6587
      %v6589 = vmul.f32 %v6526, %v6587
      %v6590 = vmul.f32 %v6527, %v6587
      %v6591 = vmul.f32 %v6528, %v6587
      %v6592 = vmul.f32 %v6529, %v6587
      %v6593 = vmul.f32 %v6530, %v6587
      %v6594 = vmul.f32 %v6531, %v6587
      %v6595 = vmul.f32 %v6532, %v6587
      %v6596 = vld [vmem:[%s9] sm:$0x1]
      %v6598 = vperm.slane %v6596, 0
      %v6600 = vmul.f32 %v6588, %v6598
      %v6601 = vmul.f32 %v6589, %v6598
      %v6602 = vmul.f32 %v6590, %v6598
      %v6603 = vmul.f32 %v6591, %v6598
      %v6604 = vmul.f32 %v6592, %v6598
      %v6605 = vmul.f32 %v6593, %v6598
      %v6606 = vmul.f32 %v6594, %v6598
      %v6607 = vmul.f32 %v6595, %v6598
      %v6608 = vld [vmem:[%s10] sm:$0x1]
      %v6610 = vperm.slane %v6608, 0
      %v6612 = vadd.f32 %v6600, %v6610
      %v6613 = vadd.f32 %v6601, %v6610
      %v6614 = vadd.f32 %v6602, %v6610
      %v6615 = vadd.f32 %v6603, %v6610
      %v6616 = vadd.f32 %v6604, %v6610
      %v6617 = vadd.f32 %v6605, %v6610
      %v6618 = vadd.f32 %v6606, %v6610
      %v6619 = vadd.f32 %v6607, %v6610
      %v6620 = vmul.f32 %v6612, 0.5
      %v6621 = vmul.f32 %v6613, 0.5
      %v6622 = vmul.f32 %v6614, 0.5
      %v6623 = vmul.f32 %v6615, 0.5
      %v6624 = vmul.f32 %v6616, 0.5
      %v6625 = vmul.f32 %v6617, 0.5
      %v6626 = vmul.f32 %v6618, 0.5
      %v6627 = vmul.f32 %v6619, 0.5
      %v6628 = vmul.f32 %v6612, %v1839
      %v6629 = vmul.f32 %v6613, %v1839
      %v6630 = vmul.f32 %v6614, %v1839
      %v6631 = vmul.f32 %v6615, %v1839
      %v6632 = vmul.f32 %v6616, %v1839
      %v6633 = vmul.f32 %v6617, %v1839
      %v6634 = vmul.f32 %v6618, %v1839
      %v6635 = vmul.f32 %v6619, %v1839
      %v6636 = vmul.f32 %v6628, %v6628
      %v6637 = vmin.f32 16.0, %v6636
      %v6638 = vmul.f32 %v6637, 2.1237322e-06
      %v6639 = vadd.f32 %v6638, 0.00028619796
      %v6640 = vmul.f32 %v6637, %v6639
      %v6641 = vadd.f32 %v6640, 0.0036580483
      %v6642 = vmul.f32 %v6637, %v6641
      %v6643 = vadd.f32 %v6642, 0.05243302
      %v6644 = vmul.f32 %v6637, %v6643
      %v6645 = vadd.f32 %v6644, 0.18741608
      %v6646 = vmul.f32 %v6637, %v6645
      %v6647 = vadd.f32 %v6646, 1.1283791
      %v6648 = vmul.f32 %v6628, %v6647
      %v6649 = vmul.f32 %v6637, 3.8918573e-05
      %v6650 = vadd.f32 %v6649, 0.001143296
      %v6651 = vmul.f32 %v6637, %v6650
      %v6652 = vadd.f32 %v6651, 0.014752088
      %v6653 = vmul.f32 %v6637, %v6652
      %v6654 = vadd.f32 %v6653, 0.112945676
      %v6655 = vmul.f32 %v6637, %v6654
      %v6656 = vadd.f32 %v6655, 0.4994258
      %v6657 = vmul.f32 %v6637, %v6656
      %v6658 = vadd.f32 %v6657, 1.0
      %v6659 = vrcp.pop %v6658
      %v6660 = vmul.f32 %v6658, %v6659
      %v6661 = vsub.f32 1.0, %v6660
      %v6662 = vmul.f32 %v6659, %v6661
      %v6663 = vadd.f32 %v6659, %v6662
      %vm6664 = vweird.f32 %v6658
      %vm6665 = vweird.f32 %v6659
      %vm6666 = vmor %vm6664, %vm6665
      %v6667 = vsel %vm6666, %v6659, %v6663
      %v6668 = vand.u32 2147483647, %v6658
      %vm6669 = vcmp.eq.f32.partialorder %v6668, 8.507059e+37
      %v6670 = vand.u32 %v6658, 2147483648
      %v6671 = vor.u32 1.1754944e-38, %v6670
      %v6672 = vsel %vm6669, %v6671, %v6667
      %v6673 = vmul.f32 %v6648, %v6672
      %v6674 = vmin.f32 %v6673, 1.0
      %v6675 = vmax.f32 %v6674, -1.0
      %v6676 = vmul.f32 %v6629, %v6629
      %v6677 = vmin.f32 16.0, %v6676
      %v6678 = vmul.f32 %v6677, 2.1237322e-06
      %v6679 = vadd.f32 %v6678, 0.00028619796
      %v6680 = vmul.f32 %v6677, %v6679
      %v6681 = vadd.f32 %v6680, 0.0036580483
      %v6682 = vmul.f32 %v6677, %v6681
      %v6683 = vadd.f32 %v6682, 0.05243302
      %v6684 = vmul.f32 %v6677, %v6683
      %v6685 = vadd.f32 %v6684, 0.18741608
      %v6686 = vmul.f32 %v6677, %v6685
      %v6687 = vadd.f32 %v6686, 1.1283791
      %v6688 = vmul.f32 %v6629, %v6687
      %v6689 = vmul.f32 %v6677, 3.8918573e-05
      %v6690 = vadd.f32 %v6689, 0.001143296
      %v6691 = vmul.f32 %v6677, %v6690
      %v6692 = vadd.f32 %v6691, 0.014752088
      %v6693 = vmul.f32 %v6677, %v6692
      %v6694 = vadd.f32 %v6693, 0.112945676
      %v6695 = vmul.f32 %v6677, %v6694
      %v6696 = vadd.f32 %v6695, 0.4994258
      %v6697 = vmul.f32 %v6677, %v6696
      %v6698 = vadd.f32 %v6697, 1.0
      %v6699 = vrcp.pop %v6698
      %v6700 = vmul.f32 %v6698, %v6699
      %v6701 = vsub.f32 1.0, %v6700
      %v6702 = vmul.f32 %v6699, %v6701
      %v6703 = vadd.f32 %v6699, %v6702
      %vm6704 = vweird.f32 %v6698
      %vm6705 = vweird.f32 %v6699
      %vm6706 = vmor %vm6704, %vm6705
      %v6707 = vsel %vm6706, %v6699, %v6703
      %v6708 = vand.u32 2147483647, %v6698
      %vm6709 = vcmp.eq.f32.partialorder %v6708, 8.507059e+37
      %v6710 = vand.u32 %v6698, 2147483648
      %v6711 = vor.u32 1.1754944e-38, %v6710
      %v6712 = vsel %vm6709, %v6711, %v6707
      %v6713 = vmul.f32 %v6688, %v6712
      %v6714 = vmin.f32 %v6713, 1.0
      %v6715 = vmax.f32 %v6714, -1.0
      %v6716 = vmul.f32 %v6630, %v6630
      %v6717 = vmin.f32 16.0, %v6716
      %v6718 = vmul.f32 %v6717, 2.1237322e-06
      %v6719 = vadd.f32 %v6718, 0.00028619796
      %v6720 = vmul.f32 %v6717, %v6719
      %v6721 = vadd.f32 %v6720, 0.0036580483
      %v6722 = vmul.f32 %v6717, %v6721
      %v6723 = vadd.f32 %v6722, 0.05243302
      %v6724 = vmul.f32 %v6717, %v6723
      %v6725 = vadd.f32 %v6724, 0.18741608
      %v6726 = vmul.f32 %v6717, %v6725
      %v6727 = vadd.f32 %v6726, 1.1283791
      %v6728 = vmul.f32 %v6630, %v6727
      %v6729 = vmul.f32 %v6717, 3.8918573e-05
      %v6730 = vadd.f32 %v6729, 0.001143296
      %v6731 = vmul.f32 %v6717, %v6730
      %v6732 = vadd.f32 %v6731, 0.014752088
      %v6733 = vmul.f32 %v6717, %v6732
      %v6734 = vadd.f32 %v6733, 0.112945676
      %v6735 = vmul.f32 %v6717, %v6734
      %v6736 = vadd.f32 %v6735, 0.4994258
      %v6737 = vmul.f32 %v6717, %v6736
      %v6738 = vadd.f32 %v6737, 1.0
      %v6739 = vrcp.pop %v6738
      %v6740 = vmul.f32 %v6738, %v6739
      %v6741 = vsub.f32 1.0, %v6740
      %v6742 = vmul.f32 %v6739, %v6741
      %v6743 = vadd.f32 %v6739, %v6742
      %vm6744 = vweird.f32 %v6738
      %vm6745 = vweird.f32 %v6739
      %vm6746 = vmor %vm6744, %vm6745
      %v6747 = vsel %vm6746, %v6739, %v6743
      %v6748 = vand.u32 2147483647, %v6738
      %vm6749 = vcmp.eq.f32.partialorder %v6748, 8.507059e+37
      %v6750 = vand.u32 %v6738, 2147483648
      %v6751 = vor.u32 1.1754944e-38, %v6750
      %v6752 = vsel %vm6749, %v6751, %v6747
      %v6753 = vmul.f32 %v6728, %v6752
      %v6754 = vmin.f32 %v6753, 1.0
      %v6755 = vmax.f32 %v6754, -1.0
      %v6756 = vmul.f32 %v6631, %v6631
      %v6757 = vmin.f32 16.0, %v6756
      %v6758 = vmul.f32 %v6757, 2.1237322e-06
      %v6759 = vadd.f32 %v6758, 0.00028619796
      %v6760 = vmul.f32 %v6757, %v6759
      %v6761 = vadd.f32 %v6760, 0.0036580483
      %v6762 = vmul.f32 %v6757, %v6761
      %v6763 = vadd.f32 %v6762, 0.05243302
      %v6764 = vmul.f32 %v6757, %v6763
      %v6765 = vadd.f32 %v6764, 0.18741608
      %v6766 = vmul.f32 %v6757, %v6765
      %v6767 = vadd.f32 %v6766, 1.1283791
      %v6768 = vmul.f32 %v6631, %v6767
      %v6769 = vmul.f32 %v6757, 3.8918573e-05
      %v6770 = vadd.f32 %v6769, 0.001143296
      %v6771 = vmul.f32 %v6757, %v6770
      %v6772 = vadd.f32 %v6771, 0.014752088
      %v6773 = vmul.f32 %v6757, %v6772
      %v6774 = vadd.f32 %v6773, 0.112945676
      %v6775 = vmul.f32 %v6757, %v6774
      %v6776 = vadd.f32 %v6775, 0.4994258
      %v6777 = vmul.f32 %v6757, %v6776
      %v6778 = vadd.f32 %v6777, 1.0
      %v6779 = vrcp.pop %v6778
      %v6780 = vmul.f32 %v6778, %v6779
      %v6781 = vsub.f32 1.0, %v6780
      %v6782 = vmul.f32 %v6779, %v6781
      %v6783 = vadd.f32 %v6779, %v6782
      %vm6784 = vweird.f32 %v6778
      %vm6785 = vweird.f32 %v6779
      %vm6786 = vmor %vm6784, %vm6785
      %v6787 = vsel %vm6786, %v6779, %v6783
      %v6788 = vand.u32 2147483647, %v6778
      %vm6789 = vcmp.eq.f32.partialorder %v6788, 8.507059e+37
      %v6790 = vand.u32 %v6778, 2147483648
      %v6791 = vor.u32 1.1754944e-38, %v6790
      %v6792 = vsel %vm6789, %v6791, %v6787
      %v6793 = vmul.f32 %v6768, %v6792
      %v6794 = vmin.f32 %v6793, 1.0
      %v6795 = vmax.f32 %v6794, -1.0
      %v6796 = vmul.f32 %v6632, %v6632
      %v6797 = vmin.f32 16.0, %v6796
      %v6798 = vmul.f32 %v6797, 2.1237322e-06
      %v6799 = vadd.f32 %v6798, 0.00028619796
      %v6800 = vmul.f32 %v6797, %v6799
      %v6801 = vadd.f32 %v6800, 0.0036580483
      %v6802 = vmul.f32 %v6797, %v6801
      %v6803 = vadd.f32 %v6802, 0.05243302
      %v6804 = vmul.f32 %v6797, %v6803
      %v6805 = vadd.f32 %v6804, 0.18741608
      %v6806 = vmul.f32 %v6797, %v6805
      %v6807 = vadd.f32 %v6806, 1.1283791
      %v6808 = vmul.f32 %v6632, %v6807
      %v6809 = vmul.f32 %v6797, 3.8918573e-05
      %v6810 = vadd.f32 %v6809, 0.001143296
      %v6811 = vmul.f32 %v6797, %v6810
      %v6812 = vadd.f32 %v6811, 0.014752088
      %v6813 = vmul.f32 %v6797, %v6812
      %v6814 = vadd.f32 %v6813, 0.112945676
      %v6815 = vmul.f32 %v6797, %v6814
      %v6816 = vadd.f32 %v6815, 0.4994258
      %v6817 = vmul.f32 %v6797, %v6816
      %v6818 = vadd.f32 %v6817, 1.0
      %v6819 = vrcp.pop %v6818
      %v6820 = vmul.f32 %v6818, %v6819
      %v6821 = vsub.f32 1.0, %v6820
      %v6822 = vmul.f32 %v6819, %v6821
      %v6823 = vadd.f32 %v6819, %v6822
      %vm6824 = vweird.f32 %v6818
      %vm6825 = vweird.f32 %v6819
      %vm6826 = vmor %vm6824, %vm6825
      %v6827 = vsel %vm6826, %v6819, %v6823
      %v6828 = vand.u32 2147483647, %v6818
      %vm6829 = vcmp.eq.f32.partialorder %v6828, 8.507059e+37
      %v6830 = vand.u32 %v6818, 2147483648
      %v6831 = vor.u32 1.1754944e-38, %v6830
      %v6832 = vsel %vm6829, %v6831, %v6827
      %v6833 = vmul.f32 %v6808, %v6832
      %v6834 = vmin.f32 %v6833, 1.0
      %v6835 = vmax.f32 %v6834, -1.0
      %v6836 = vmul.f32 %v6633, %v6633
      %v6837 = vmin.f32 16.0, %v6836
      %v6838 = vmul.f32 %v6837, 2.1237322e-06
      %v6839 = vadd.f32 %v6838, 0.00028619796
      %v6840 = vmul.f32 %v6837, %v6839
      %v6841 = vadd.f32 %v6840, 0.0036580483
      %v6842 = vmul.f32 %v6837, %v6841
      %v6843 = vadd.f32 %v6842, 0.05243302
      %v6844 = vmul.f32 %v6837, %v6843
      %v6845 = vadd.f32 %v6844, 0.18741608
      %v6846 = vmul.f32 %v6837, %v6845
      %v6847 = vadd.f32 %v6846, 1.1283791
      %v6848 = vmul.f32 %v6633, %v6847
      %v6849 = vmul.f32 %v6837, 3.8918573e-05
      %v6850 = vadd.f32 %v6849, 0.001143296
      %v6851 = vmul.f32 %v6837, %v6850
      %v6852 = vadd.f32 %v6851, 0.014752088
      %v6853 = vmul.f32 %v6837, %v6852
      %v6854 = vadd.f32 %v6853, 0.112945676
      %v6855 = vmul.f32 %v6837, %v6854
      %v6856 = vadd.f32 %v6855, 0.4994258
      %v6857 = vmul.f32 %v6837, %v6856
      %v6858 = vadd.f32 %v6857, 1.0
      %v6859 = vrcp.pop %v6858
      %v6860 = vmul.f32 %v6858, %v6859
      %v6861 = vsub.f32 1.0, %v6860
      %v6862 = vmul.f32 %v6859, %v6861
      %v6863 = vadd.f32 %v6859, %v6862
      %vm6864 = vweird.f32 %v6858
      %vm6865 = vweird.f32 %v6859
      %vm6866 = vmor %vm6864, %vm6865
      %v6867 = vsel %vm6866, %v6859, %v6863
      %v6868 = vand.u32 2147483647, %v6858
      %vm6869 = vcmp.eq.f32.partialorder %v6868, 8.507059e+37
      %v6870 = vand.u32 %v6858, 2147483648
      %v6871 = vor.u32 1.1754944e-38, %v6870
      %v6872 = vsel %vm6869, %v6871, %v6867
      %v6873 = vmul.f32 %v6848, %v6872
      %v6874 = vmin.f32 %v6873, 1.0
      %v6875 = vmax.f32 %v6874, -1.0
      %v6876 = vmul.f32 %v6634, %v6634
      %v6877 = vmin.f32 16.0, %v6876
      %v6878 = vmul.f32 %v6877, 2.1237322e-06
      %v6879 = vadd.f32 %v6878, 0.00028619796
      %v6880 = vmul.f32 %v6877, %v6879
      %v6881 = vadd.f32 %v6880, 0.0036580483
      %v6882 = vmul.f32 %v6877, %v6881
      %v6883 = vadd.f32 %v6882, 0.05243302
      %v6884 = vmul.f32 %v6877, %v6883
      %v6885 = vadd.f32 %v6884, 0.18741608
      %v6886 = vmul.f32 %v6877, %v6885
      %v6887 = vadd.f32 %v6886, 1.1283791
      %v6888 = vmul.f32 %v6634, %v6887
      %v6889 = vmul.f32 %v6877, 3.8918573e-05
      %v6890 = vadd.f32 %v6889, 0.001143296
      %v6891 = vmul.f32 %v6877, %v6890
      %v6892 = vadd.f32 %v6891, 0.014752088
      %v6893 = vmul.f32 %v6877, %v6892
      %v6894 = vadd.f32 %v6893, 0.112945676
      %v6895 = vmul.f32 %v6877, %v6894
      %v6896 = vadd.f32 %v6895, 0.4994258
      %v6897 = vmul.f32 %v6877, %v6896
      %v6898 = vadd.f32 %v6897, 1.0
      %v6899 = vrcp.pop %v6898
      %v6900 = vmul.f32 %v6898, %v6899
      %v6901 = vsub.f32 1.0, %v6900
      %v6902 = vmul.f32 %v6899, %v6901
      %v6903 = vadd.f32 %v6899, %v6902
      %vm6904 = vweird.f32 %v6898
      %vm6905 = vweird.f32 %v6899
      %vm6906 = vmor %vm6904, %vm6905
      %v6907 = vsel %vm6906, %v6899, %v6903
      %v6908 = vand.u32 2147483647, %v6898
      %vm6909 = vcmp.eq.f32.partialorder %v6908, 8.507059e+37
      %v6910 = vand.u32 %v6898, 2147483648
      %v6911 = vor.u32 1.1754944e-38, %v6910
      %v6912 = vsel %vm6909, %v6911, %v6907
      %v6913 = vmul.f32 %v6888, %v6912
      %v6914 = vmin.f32 %v6913, 1.0
      %v6915 = vmax.f32 %v6914, -1.0
      %v6916 = vmul.f32 %v6635, %v6635
      %v6917 = vmin.f32 16.0, %v6916
      %v6918 = vmul.f32 %v6917, 2.1237322e-06
      %v6919 = vadd.f32 %v6918, 0.00028619796
      %v6920 = vmul.f32 %v6917, %v6919
      %v6921 = vadd.f32 %v6920, 0.0036580483
      %v6922 = vmul.f32 %v6917, %v6921
      %v6923 = vadd.f32 %v6922, 0.05243302
      %v6924 = vmul.f32 %v6917, %v6923
      %v6925 = vadd.f32 %v6924, 0.18741608
      %v6926 = vmul.f32 %v6917, %v6925
      %v6927 = vadd.f32 %v6926, 1.1283791
      %v6928 = vmul.f32 %v6635, %v6927
      %v6929 = vmul.f32 %v6917, 3.8918573e-05
      %v6930 = vadd.f32 %v6929, 0.001143296
      %v6931 = vmul.f32 %v6917, %v6930
      %v6932 = vadd.f32 %v6931, 0.014752088
      %v6933 = vmul.f32 %v6917, %v6932
      %v6934 = vadd.f32 %v6933, 0.112945676
      %v6935 = vmul.f32 %v6917, %v6934
      %v6936 = vadd.f32 %v6935, 0.4994258
      %v6937 = vmul.f32 %v6917, %v6936
      %v6938 = vadd.f32 %v6937, 1.0
      %v6939 = vrcp.pop %v6938
      %v6940 = vmul.f32 %v6938, %v6939
      %v6941 = vsub.f32 1.0, %v6940
      %v6942 = vmul.f32 %v6939, %v6941
      %v6943 = vadd.f32 %v6939, %v6942
      %vm6944 = vweird.f32 %v6938
      %vm6945 = vweird.f32 %v6939
      %vm6946 = vmor %vm6944, %vm6945
      %v6947 = vsel %vm6946, %v6939, %v6943
      %v6948 = vand.u32 2147483647, %v6938
      %vm6949 = vcmp.eq.f32.partialorder %v6948, 8.507059e+37
      %v6950 = vand.u32 %v6938, 2147483648
      %v6951 = vor.u32 1.1754944e-38, %v6950
      %v6952 = vsel %vm6949, %v6951, %v6947
      %v6953 = vmul.f32 %v6928, %v6952
      %v6954 = vmin.f32 %v6953, 1.0
      %v6955 = vmax.f32 %v6954, -1.0
      %v6956 = vadd.f32 %v6675, 1.0
      %v6957 = vadd.f32 %v6715, 1.0
      %v6958 = vadd.f32 %v6755, 1.0
      %v6959 = vadd.f32 %v6795, 1.0
      %v6960 = vadd.f32 %v6835, 1.0
      %v6961 = vadd.f32 %v6875, 1.0
      %v6962 = vadd.f32 %v6915, 1.0
      %v6963 = vadd.f32 %v6955, 1.0
      %v6964 = vmul.f32 %v6620, %v6956
      %v6965 = vmul.f32 %v6621, %v6957
      %v6966 = vmul.f32 %v6622, %v6958
      %v6967 = vmul.f32 %v6623, %v6959
      %v6968 = vmul.f32 %v6624, %v6960
      %v6969 = vmul.f32 %v6625, %v6961
      %v6970 = vmul.f32 %v6626, %v6962
      %v6971 = vmul.f32 %v6627, %v6963
      %s6972 = scalar_lea.vmem [#allocation3], 16
      %6973 = vst.msk [vmem:[%s6972 + $0x1] sm:$0xff] %vm974, %v6964
      %6974 = vst.msk [vmem:[%s6972 + $0x11] sm:$0xff] %vm974, %v6965
      %6975 = vst.msk [vmem:[%s6972 + $0x21] sm:$0xff] %vm974, %v6966
      %6976 = vst.msk [vmem:[%s6972 + $0x31] sm:$0xff] %vm974, %v6967
      %6977 = vst.msk [vmem:[%s6972 + $0x41] sm:$0xff] %vm974, %v6968
      %6978 = vst.msk [vmem:[%s6972 + $0x51] sm:$0xff] %vm974, %v6969
      %6979 = vst.msk [vmem:[%s6972 + $0x61] sm:$0xff] %vm974, %v6970
      %6980 = vst.msk [vmem:[%s6972 + $0x71] sm:$0xff] %vm974, %v6971
      %v6981 = vld [vmem:[#allocation3] sm:$0xff]
      %v6982 = vld [vmem:[#allocation3 + $0x10] sm:$0xff]
      %v6983 = vld [vmem:[#allocation3 + $0x20] sm:$0xff]
      %v6984 = vld [vmem:[#allocation3 + $0x30] sm:$0xff]
      %v6985 = vld [vmem:[#allocation3 + $0x40] sm:$0xff]
      %v6986 = vld [vmem:[#allocation3 + $0x50] sm:$0xff]
      %v6987 = vld [vmem:[#allocation3 + $0x60] sm:$0xff]
      %v6988 = vld [vmem:[#allocation3 + $0x70] sm:$0xff]
      %6989 = vst.msk [vmem:[#allocation5] sm:$0xff] %vm974, %v6981
      %6990 = vst.msk [vmem:[#allocation5 + $0x8] sm:$0xff] %vm974, %v6982
      %6991 = vst.msk [vmem:[#allocation5 + $0x10] sm:$0xff] %vm974, %v6983
      %6992 = vst.msk [vmem:[#allocation5 + $0x18] sm:$0xff] %vm974, %v6984
      %6993 = vst.msk [vmem:[#allocation5 + $0x20] sm:$0xff] %vm974, %v6985
      %6994 = vst.msk [vmem:[#allocation5 + $0x28] sm:$0xff] %vm974, %v6986
      %6995 = vst.msk [vmem:[#allocation5 + $0x30] sm:$0xff] %vm974, %v6987
      %6996 = vst.msk [vmem:[#allocation5 + $0x38] sm:$0xff] %vm974, %v6988
      %v6997 = vld [vmem:[#allocation3 + $0x1] sm:$0xff]
      %v6998 = vld [vmem:[#allocation3 + $0x11] sm:$0xff]
      %v6999 = vld [vmem:[#allocation3 + $0x21] sm:$0xff]
      %v7000 = vld [vmem:[#allocation3 + $0x31] sm:$0xff]
      %v7001 = vld [vmem:[#allocation3 + $0x41] sm:$0xff]
      %v7002 = vld [vmem:[#allocation3 + $0x51] sm:$0xff]
      %v7003 = vld [vmem:[#allocation3 + $0x61] sm:$0xff]
      %v7004 = vld [vmem:[#allocation3 + $0x71] sm:$0xff]
      %7013 = vrot.lane.b32.xlu0 %v6997, 8
      %v7014 = vpop.permute.xlu0 %7013
      %7015 = vrot.lane.b32.xlu0 %v6998, 8
      %v7016 = vpop.permute.xlu0 %7015
      %7017 = vrot.lane.b32.xlu0 %v6999, 8
      %v7018 = vpop.permute.xlu0 %7017
      %7019 = vrot.lane.b32.xlu0 %v7000, 8
      %v7020 = vpop.permute.xlu0 %7019
      %7021 = vrot.lane.b32.xlu0 %v7001, 8
      %v7022 = vpop.permute.xlu0 %7021
      %7023 = vrot.lane.b32.xlu0 %v7002, 8
      %v7024 = vpop.permute.xlu0 %7023
      %7025 = vrot.lane.b32.xlu0 %v7003, 8
      %v7026 = vpop.permute.xlu0 %7025
      %7027 = vrot.lane.b32.xlu0 %v7004, 8
      %v7028 = vpop.permute.xlu0 %7027
      %vm7037 = vcmask 130112
      %7038 = vst.msk [vmem:[#allocation5] sm:$0xff] %vm7037, %v7014
      %7039 = vst.msk [vmem:[#allocation5 + $0x8] sm:$0xff] %vm7037, %v7016
      %7040 = vst.msk [vmem:[#allocation5 + $0x10] sm:$0xff] %vm7037, %v7018
      %7041 = vst.msk [vmem:[#allocation5 + $0x18] sm:$0xff] %vm7037, %v7020
      %7042 = vst.msk [vmem:[#allocation5 + $0x20] sm:$0xff] %vm7037, %v7022
      %7043 = vst.msk [vmem:[#allocation5 + $0x28] sm:$0xff] %vm7037, %v7024
      %7044 = vst.msk [vmem:[#allocation5 + $0x30] sm:$0xff] %vm7037, %v7026
      %7045 = vst.msk [vmem:[#allocation5 + $0x38] sm:$0xff] %vm7037, %v7028
      %v7046 = vld [vmem:[#allocation3 + $0x2] sm:$0xff]
      %v7047 = vld [vmem:[#allocation3 + $0x12] sm:$0xff]
      %v7048 = vld [vmem:[#allocation3 + $0x22] sm:$0xff]
      %v7049 = vld [vmem:[#allocation3 + $0x32] sm:$0xff]
      %v7050 = vld [vmem:[#allocation3 + $0x42] sm:$0xff]
      %v7051 = vld [vmem:[#allocation3 + $0x52] sm:$0xff]
      %v7052 = vld [vmem:[#allocation3 + $0x62] sm:$0xff]
      %v7053 = vld [vmem:[#allocation3 + $0x72] sm:$0xff]
      %7062 = vrot.lane.b32.xlu0 %v7046, 16
      %v7063 = vpop.permute.xlu0 %7062
      %7064 = vrot.lane.b32.xlu0 %v7047, 16
      %v7065 = vpop.permute.xlu0 %7064
      %7066 = vrot.lane.b32.xlu0 %v7048, 16
      %v7067 = vpop.permute.xlu0 %7066
      %7068 = vrot.lane.b32.xlu0 %v7049, 16
      %v7069 = vpop.permute.xlu0 %7068
      %7070 = vrot.lane.b32.xlu0 %v7050, 16
      %v7071 = vpop.permute.xlu0 %7070
      %7072 = vrot.lane.b32.xlu0 %v7051, 16
      %v7073 = vpop.permute.xlu0 %7072
      %7074 = vrot.lane.b32.xlu0 %v7052, 16
      %v7075 = vpop.permute.xlu0 %7074
      %7076 = vrot.lane.b32.xlu0 %v7053, 16
      %v7077 = vpop.permute.xlu0 %7076
      %vm7086 = vcmask 195712
      %7087 = vst.msk [vmem:[#allocation5] sm:$0xff] %vm7086, %v7063
      %7088 = vst.msk [vmem:[#allocation5 + $0x8] sm:$0xff] %vm7086, %v7065
      %7089 = vst.msk [vmem:[#allocation5 + $0x10] sm:$0xff] %vm7086, %v7067
      %7090 = vst.msk [vmem:[#allocation5 + $0x18] sm:$0xff] %vm7086, %v7069
      %7091 = vst.msk [vmem:[#allocation5 + $0x20] sm:$0xff] %vm7086, %v7071
      %7092 = vst.msk [vmem:[#allocation5 + $0x28] sm:$0xff] %vm7086, %v7073
      %7093 = vst.msk [vmem:[#allocation5 + $0x30] sm:$0xff] %vm7086, %v7075
      %7094 = vst.msk [vmem:[#allocation5 + $0x38] sm:$0xff] %vm7086, %v7077
      %v7095 = vld [vmem:[%s6972] sm:$0xff]
      %v7096 = vld [vmem:[%s6972 + $0x10] sm:$0xff]
      %v7097 = vld [vmem:[%s6972 + $0x20] sm:$0xff]
      %v7098 = vld [vmem:[%s6972 + $0x30] sm:$0xff]
      %v7099 = vld [vmem:[%s6972 + $0x40] sm:$0xff]
      %v7100 = vld [vmem:[%s6972 + $0x50] sm:$0xff]
      %v7101 = vld [vmem:[%s6972 + $0x60] sm:$0xff]
      %v7102 = vld [vmem:[%s6972 + $0x70] sm:$0xff]
      %7111 = vrot.lane.b32.xlu0 %v7095, 24
      %v7112 = vpop.permute.xlu0 %7111
      %7113 = vrot.lane.b32.xlu0 %v7096, 24
      %v7114 = vpop.permute.xlu0 %7113
      %7115 = vrot.lane.b32.xlu0 %v7097, 24
      %v7116 = vpop.permute.xlu0 %7115
      %7117 = vrot.lane.b32.xlu0 %v7098, 24
      %v7118 = vpop.permute.xlu0 %7117
      %7119 = vrot.lane.b32.xlu0 %v7099, 24
      %v7120 = vpop.permute.xlu0 %7119
      %7121 = vrot.lane.b32.xlu0 %v7100, 24
      %v7122 = vpop.permute.xlu0 %7121
      %7123 = vrot.lane.b32.xlu0 %v7101, 24
      %v7124 = vpop.permute.xlu0 %7123
      %7125 = vrot.lane.b32.xlu0 %v7102, 24
      %v7126 = vpop.permute.xlu0 %7125
      %vm7135 = vcmask 261312
      %7136 = vst.msk [vmem:[#allocation5] sm:$0xff] %vm7135, %v7112
      %7137 = vst.msk [vmem:[#allocation5 + $0x8] sm:$0xff] %vm7135, %v7114
      %7138 = vst.msk [vmem:[#allocation5 + $0x10] sm:$0xff] %vm7135, %v7116
      %7139 = vst.msk [vmem:[#allocation5 + $0x18] sm:$0xff] %vm7135, %v7118
      %7140 = vst.msk [vmem:[#allocation5 + $0x20] sm:$0xff] %vm7135, %v7120
      %7141 = vst.msk [vmem:[#allocation5 + $0x28] sm:$0xff] %vm7135, %v7122
      %7142 = vst.msk [vmem:[#allocation5 + $0x30] sm:$0xff] %vm7135, %v7124
      %7143 = vst.msk [vmem:[#allocation5 + $0x38] sm:$0xff] %vm7135, %v7126
      %v7144 = vld [vmem:[%s6972 + $0x1] sm:$0xff]
      %v7145 = vld [vmem:[%s6972 + $0x11] sm:$0xff]
      %v7146 = vld [vmem:[%s6972 + $0x21] sm:$0xff]
      %v7147 = vld [vmem:[%s6972 + $0x31] sm:$0xff]
      %v7148 = vld [vmem:[%s6972 + $0x41] sm:$0xff]
      %v7149 = vld [vmem:[%s6972 + $0x51] sm:$0xff]
      %v7150 = vld [vmem:[%s6972 + $0x61] sm:$0xff]
      %v7151 = vld [vmem:[%s6972 + $0x71] sm:$0xff]
      %7160 = vrot.lane.b32.xlu0 %v7144, 32
      %v7161 = vpop.permute.xlu0 %7160
      %7162 = vrot.lane.b32.xlu0 %v7145, 32
      %v7163 = vpop.permute.xlu0 %7162
      %7164 = vrot.lane.b32.xlu0 %v7146, 32
      %v7165 = vpop.permute.xlu0 %7164
      %7166 = vrot.lane.b32.xlu0 %v7147, 32
      %v7167 = vpop.permute.xlu0 %7166
      %7168 = vrot.lane.b32.xlu0 %v7148, 32
      %v7169 = vpop.permute.xlu0 %7168
      %7170 = vrot.lane.b32.xlu0 %v7149, 32
      %v7171 = vpop.permute.xlu0 %7170
      %7172 = vrot.lane.b32.xlu0 %v7150, 32
      %v7173 = vpop.permute.xlu0 %7172
      %7174 = vrot.lane.b32.xlu0 %v7151, 32
      %v7175 = vpop.permute.xlu0 %7174
      %vm7184 = vcmask 326912
      %7185 = vst.msk [vmem:[#allocation5] sm:$0xff] %vm7184, %v7161
      %7186 = vst.msk [vmem:[#allocation5 + $0x8] sm:$0xff] %vm7184, %v7163
      %7187 = vst.msk [vmem:[#allocation5 + $0x10] sm:$0xff] %vm7184, %v7165
      %7188 = vst.msk [vmem:[#allocation5 + $0x18] sm:$0xff] %vm7184, %v7167
      %7189 = vst.msk [vmem:[#allocation5 + $0x20] sm:$0xff] %vm7184, %v7169
      %7190 = vst.msk [vmem:[#allocation5 + $0x28] sm:$0xff] %vm7184, %v7171
      %7191 = vst.msk [vmem:[#allocation5 + $0x30] sm:$0xff] %vm7184, %v7173
      %7192 = vst.msk [vmem:[#allocation5 + $0x38] sm:$0xff] %vm7184, %v7175
      %v7193 = vld [vmem:[%s6972 + $0x2] sm:$0xff]
      %v7194 = vld [vmem:[%s6972 + $0x12] sm:$0xff]
      %v7195 = vld [vmem:[%s6972 + $0x22] sm:$0xff]
      %v7196 = vld [vmem:[%s6972 + $0x32] sm:$0xff]
      %v7197 = vld [vmem:[%s6972 + $0x42] sm:$0xff]
      %v7198 = vld [vmem:[%s6972 + $0x52] sm:$0xff]
      %v7199 = vld [vmem:[%s6972 + $0x62] sm:$0xff]
      %v7200 = vld [vmem:[%s6972 + $0x72] sm:$0xff]
      %7209 = vrot.lane.b32.xlu0 %v7193, 40
      %v7210 = vpop.permute.xlu0 %7209
      %7211 = vrot.lane.b32.xlu0 %v7194, 40
      %v7212 = vpop.permute.xlu0 %7211
      %7213 = vrot.lane.b32.xlu0 %v7195, 40
      %v7214 = vpop.permute.xlu0 %7213
      %7215 = vrot.lane.b32.xlu0 %v7196, 40
      %v7216 = vpop.permute.xlu0 %7215
      %7217 = vrot.lane.b32.xlu0 %v7197, 40
      %v7218 = vpop.permute.xlu0 %7217
      %7219 = vrot.lane.b32.xlu0 %v7198, 40
      %v7220 = vpop.permute.xlu0 %7219
      %7221 = vrot.lane.b32.xlu0 %v7199, 40
      %v7222 = vpop.permute.xlu0 %7221
      %7223 = vrot.lane.b32.xlu0 %v7200, 40
      %v7224 = vpop.permute.xlu0 %7223
      %vm7233 = vcmask 392512
      %7234 = vst.msk [vmem:[#allocation5] sm:$0xff] %vm7233, %v7210
      %7235 = vst.msk [vmem:[#allocation5 + $0x8] sm:$0xff] %vm7233, %v7212
      %7236 = vst.msk [vmem:[#allocation5 + $0x10] sm:$0xff] %vm7233, %v7214
      %7237 = vst.msk [vmem:[#allocation5 + $0x18] sm:$0xff] %vm7233, %v7216
      %7238 = vst.msk [vmem:[#allocation5 + $0x20] sm:$0xff] %vm7233, %v7218
      %7239 = vst.msk [vmem:[#allocation5 + $0x28] sm:$0xff] %vm7233, %v7220
      %7240 = vst.msk [vmem:[#allocation5 + $0x30] sm:$0xff] %vm7233, %v7222
      %7241 = vst.msk [vmem:[#allocation5 + $0x38] sm:$0xff] %vm7233, %v7224
      %s7242 = scalar_lea.vmem [#allocation3], 32
      %v7243 = vld [vmem:[%s7242] sm:$0xff]
      %v7244 = vld [vmem:[%s7242 + $0x10] sm:$0xff]
      %v7245 = vld [vmem:[%s7242 + $0x20] sm:$0xff]
      %v7246 = vld [vmem:[%s7242 + $0x30] sm:$0xff]
      %v7247 = vld [vmem:[%s7242 + $0x40] sm:$0xff]
      %v7248 = vld [vmem:[%s7242 + $0x50] sm:$0xff]
      %v7249 = vld [vmem:[%s7242 + $0x60] sm:$0xff]
      %v7250 = vld [vmem:[%s7242 + $0x70] sm:$0xff]
      %7259 = vrot.lane.b32.xlu0 %v7243, 48
      %v7260 = vpop.permute.xlu0 %7259
      %7261 = vrot.lane.b32.xlu0 %v7244, 48
      %v7262 = vpop.permute.xlu0 %7261
      %7263 = vrot.lane.b32.xlu0 %v7245, 48
      %v7264 = vpop.permute.xlu0 %7263
      %7265 = vrot.lane.b32.xlu0 %v7246, 48
      %v7266 = vpop.permute.xlu0 %7265
      %7267 = vrot.lane.b32.xlu0 %v7247, 48
      %v7268 = vpop.permute.xlu0 %7267
      %7269 = vrot.lane.b32.xlu0 %v7248, 48
      %v7270 = vpop.permute.xlu0 %7269
      %7271 = vrot.lane.b32.xlu0 %v7249, 48
      %v7272 = vpop.permute.xlu0 %7271
      %7273 = vrot.lane.b32.xlu0 %v7250, 48
      %v7274 = vpop.permute.xlu0 %7273
      %vm7283 = vcmask 458112
      %7284 = vst.msk [vmem:[#allocation5] sm:$0xff] %vm7283, %v7260
      %7285 = vst.msk [vmem:[#allocation5 + $0x8] sm:$0xff] %vm7283, %v7262
      %7286 = vst.msk [vmem:[#allocation5 + $0x10] sm:$0xff] %vm7283, %v7264
      %7287 = vst.msk [vmem:[#allocation5 + $0x18] sm:$0xff] %vm7283, %v7266
      %7288 = vst.msk [vmem:[#allocation5 + $0x20] sm:$0xff] %vm7283, %v7268
      %7289 = vst.msk [vmem:[#allocation5 + $0x28] sm:$0xff] %vm7283, %v7270
      %7290 = vst.msk [vmem:[#allocation5 + $0x30] sm:$0xff] %vm7283, %v7272
      %7291 = vst.msk [vmem:[#allocation5 + $0x38] sm:$0xff] %vm7283, %v7274
      %v7292 = vld [vmem:[%s7242 + $0x1] sm:$0xff]
      %v7293 = vld [vmem:[%s7242 + $0x11] sm:$0xff]
      %v7294 = vld [vmem:[%s7242 + $0x21] sm:$0xff]
      %v7295 = vld [vmem:[%s7242 + $0x31] sm:$0xff]
      %v7296 = vld [vmem:[%s7242 + $0x41] sm:$0xff]
      %v7297 = vld [vmem:[%s7242 + $0x51] sm:$0xff]
      %v7298 = vld [vmem:[%s7242 + $0x61] sm:$0xff]
      %v7299 = vld [vmem:[%s7242 + $0x71] sm:$0xff]
      %7308 = vrot.lane.b32.xlu0 %v7292, 56
      %v7309 = vpop.permute.xlu0 %7308
      %7310 = vrot.lane.b32.xlu0 %v7293, 56
      %v7311 = vpop.permute.xlu0 %7310
      %7312 = vrot.lane.b32.xlu0 %v7294, 56
      %v7313 = vpop.permute.xlu0 %7312
      %7314 = vrot.lane.b32.xlu0 %v7295, 56
      %v7315 = vpop.permute.xlu0 %7314
      %7316 = vrot.lane.b32.xlu0 %v7296, 56
      %v7317 = vpop.permute.xlu0 %7316
      %7318 = vrot.lane.b32.xlu0 %v7297, 56
      %v7319 = vpop.permute.xlu0 %7318
      %7320 = vrot.lane.b32.xlu0 %v7298, 56
      %v7321 = vpop.permute.xlu0 %7320
      %7322 = vrot.lane.b32.xlu0 %v7299, 56
      %v7323 = vpop.permute.xlu0 %7322
      %vm7332 = vcmask 523712
      %7333 = vst.msk [vmem:[#allocation5] sm:$0xff] %vm7332, %v7309
      %7334 = vst.msk [vmem:[#allocation5 + $0x8] sm:$0xff] %vm7332, %v7311
      %7335 = vst.msk [vmem:[#allocation5 + $0x10] sm:$0xff] %vm7332, %v7313
      %7336 = vst.msk [vmem:[#allocation5 + $0x18] sm:$0xff] %vm7332, %v7315
      %7337 = vst.msk [vmem:[#allocation5 + $0x20] sm:$0xff] %vm7332, %v7317
      %7338 = vst.msk [vmem:[#allocation5 + $0x28] sm:$0xff] %vm7332, %v7319
      %7339 = vst.msk [vmem:[#allocation5 + $0x30] sm:$0xff] %vm7332, %v7321
      %7340 = vst.msk [vmem:[#allocation5 + $0x38] sm:$0xff] %vm7332, %v7323
      %v7341 = vld [vmem:[%s7242 + $0x2] sm:$0xff]
      %v7342 = vld [vmem:[%s7242 + $0x12] sm:$0xff]
      %v7343 = vld [vmem:[%s7242 + $0x22] sm:$0xff]
      %v7344 = vld [vmem:[%s7242 + $0x32] sm:$0xff]
      %v7345 = vld [vmem:[%s7242 + $0x42] sm:$0xff]
      %v7346 = vld [vmem:[%s7242 + $0x52] sm:$0xff]
      %v7347 = vld [vmem:[%s7242 + $0x62] sm:$0xff]
      %v7348 = vld [vmem:[%s7242 + $0x72] sm:$0xff]
      %7357 = vrot.lane.b32.xlu0 %v7341, 64
      %v7358 = vpop.permute.xlu0 %7357
      %7359 = vrot.lane.b32.xlu0 %v7342, 64
      %v7360 = vpop.permute.xlu0 %7359
      %7361 = vrot.lane.b32.xlu0 %v7343, 64
      %v7362 = vpop.permute.xlu0 %7361
      %7363 = vrot.lane.b32.xlu0 %v7344, 64
      %v7364 = vpop.permute.xlu0 %7363
      %7365 = vrot.lane.b32.xlu0 %v7345, 64
      %v7366 = vpop.permute.xlu0 %7365
      %7367 = vrot.lane.b32.xlu0 %v7346, 64
      %v7368 = vpop.permute.xlu0 %7367
      %7369 = vrot.lane.b32.xlu0 %v7347, 64
      %v7370 = vpop.permute.xlu0 %7369
      %7371 = vrot.lane.b32.xlu0 %v7348, 64
      %v7372 = vpop.permute.xlu0 %7371
      %vm7381 = vcmask 589312
      %7382 = vst.msk [vmem:[#allocation5] sm:$0xff] %vm7381, %v7358
      %7383 = vst.msk [vmem:[#allocation5 + $0x8] sm:$0xff] %vm7381, %v7360
      %7384 = vst.msk [vmem:[#allocation5 + $0x10] sm:$0xff] %vm7381, %v7362
      %7385 = vst.msk [vmem:[#allocation5 + $0x18] sm:$0xff] %vm7381, %v7364
      %7386 = vst.msk [vmem:[#allocation5 + $0x20] sm:$0xff] %vm7381, %v7366
      %7387 = vst.msk [vmem:[#allocation5 + $0x28] sm:$0xff] %vm7381, %v7368
      %7388 = vst.msk [vmem:[#allocation5 + $0x30] sm:$0xff] %vm7381, %v7370
      %7389 = vst.msk [vmem:[#allocation5 + $0x38] sm:$0xff] %vm7381, %v7372
      %v7390 = vld [vmem:[#allocation5] sm:$0xff]
      %v7391 = vld [vmem:[#allocation5 + $0x8] sm:$0xff]
      %v7392 = vld [vmem:[#allocation5 + $0x10] sm:$0xff]
      %v7393 = vld [vmem:[#allocation5 + $0x18] sm:$0xff]
      %v7394 = vld [vmem:[#allocation5 + $0x20] sm:$0xff]
      %v7395 = vld [vmem:[#allocation5 + $0x28] sm:$0xff]
      %v7396 = vld [vmem:[#allocation5 + $0x30] sm:$0xff]
      %v7397 = vld [vmem:[#allocation5 + $0x38] sm:$0xff]
      %v7398 = vld [vmem:[%s11] sm:$0xff]
      %v7399 = vld [vmem:[%s11 + $0x8] sm:$0xff]
      %v7400 = vld [vmem:[%s11 + $0x10] sm:$0xff]
      %v7401 = vld [vmem:[%s11 + $0x18] sm:$0xff]
      %v7402 = vld [vmem:[%s11 + $0x20] sm:$0xff]
      %v7403 = vld [vmem:[%s11 + $0x28] sm:$0xff]
      %v7404 = vld [vmem:[%s11 + $0x30] sm:$0xff]
      %v7405 = vld [vmem:[%s11 + $0x38] sm:$0xff]
      %v7406 = vld [vmem:[%s11 + $0x40] sm:$0xff]
      %vm7407 = vcmask 588800
      %v7409 = vsel %vm7407, %v7390, 0
      %v7412 = vsel %vm7407, %v7391, 0
      %v7415 = vsel %vm7407, %v7392, 0
      %v7418 = vsel %vm7407, %v7393, 0
      %v7421 = vsel %vm7407, %v7394, 0
      %v7424 = vsel %vm7407, %v7395, 0
      %v7427 = vsel %vm7407, %v7396, 0
      %v7430 = vsel %vm7407, %v7397, 0
      %7432 = vmatpush.msra.mxu0 0.0
      %7433 = vmatpush.msra.mxu0 0.0
      %7434 = vmatpush.msra.mxu0 0.0
      %7435 = vmatpush.msra.mxu0 0.0
      %7436 = vmatpush.msra.mxu0 0.0
      %7437 = vmatpush.msra.mxu0 0.0
      %7438 = vmatpush.msra.mxu0 0.0
      %7439 = vmatpush.msra.mxu0 %v7406
      %7440 = vmatpush.msra.mxu0 %v7405
      %7441 = vmatpush.msra.mxu0 %v7404
      %7442 = vmatpush.msra.mxu0 %v7403
      %7443 = vmatpush.msra.mxu0 %v7402
      %7444 = vmatpush.msra.mxu0 %v7401
      %7445 = vmatpush.msra.mxu0 %v7400
      %7446 = vmatpush.msra.mxu0 %v7399
      %7447 = vmatpush.msra.mxu0 %v7398
      %7448 = vmatmul.f32.gmra.mxu0 %v7409
      %v7449 = vpop.f32.mrf.mxu0
      %v7450 = vadd.f32 0.0, %v7449
      %7451 = vmatmul.f32.gmra.mxu0 %v7412
      %v7452 = vpop.f32.mrf.mxu0
      %v7453 = vadd.f32 0.0, %v7452
      %7454 = vmatmul.f32.gmra.mxu0 %v7415
      %v7455 = vpop.f32.mrf.mxu0
      %v7456 = vadd.f32 0.0, %v7455
      %7457 = vmatmul.f32.gmra.mxu0 %v7418
      %v7458 = vpop.f32.mrf.mxu0
      %v7459 = vadd.f32 0.0, %v7458
      %7460 = vmatmul.f32.gmra.mxu0 %v7421
      %v7461 = vpop.f32.mrf.mxu0
      %v7462 = vadd.f32 0.0, %v7461
      %7463 = vmatmul.f32.gmra.mxu0 %v7424
      %v7464 = vpop.f32.mrf.mxu0
      %v7465 = vadd.f32 0.0, %v7464
      %7466 = vmatmul.f32.gmra.mxu0 %v7427
      %v7467 = vpop.f32.mrf.mxu0
      %v7468 = vadd.f32 0.0, %v7467
      %7469 = vmatmul.f32.gmra.mxu0 %v7430
      %v7470 = vpop.f32.mrf.mxu0
      %v7471 = vadd.f32 0.0, %v7470
      %7472 = vdwg.mxu0
      %v7473 = vsel %vm974, %v7450, 0.0
      %v7474 = vsel %vm974, %v7453, 0.0
      %v7475 = vadd.f32 %v7473, %v7474
      %v7476 = vsel %vm974, %v7456, 0.0
      %v7477 = vadd.f32 %v7475, %v7476
      %v7478 = vsel %vm974, %v7459, 0.0
      %v7479 = vadd.f32 %v7477, %v7478
      %v7480 = vsel %vm974, %v7462, 0.0
      %v7481 = vadd.f32 %v7479, %v7480
      %v7482 = vsel %vm974, %v7465, 0.0
      %v7483 = vadd.f32 %v7481, %v7482
      %v7484 = vsel %vm974, %v7468, 0.0
      %v7485 = vadd.f32 %v7483, %v7484
      %v7486 = vsel %vm974, %v7471, 0.0
      %v7487 = vadd.f32 %v7485, %v7486
      %7488 = vadd.xlane.f32.xlu0 %v7487
      %v7489 = vpop.xlane.xlu0 %7488
      %v7490 = vrot.slane %v7489, 4
      %v7491 = vadd.f32 %v7489, %v7490
      %v7492 = vrot.slane %v7491, 2
      %v7493 = vadd.f32 %v7491, %v7492
      %v7494 = vrot.slane %v7493, 1
      %v7495 = vadd.f32 %v7493, %v7494
      %s7496 = vtos %v7495
      %v7497 = vrcp.pop 512.0
      %v7498 = vmul.f32 512.0, %v7497
      %v7499 = vsub.f32 1.0, %v7498
      %v7500 = vmul.f32 %v7497, %v7499
      %v7501 = vadd.f32 %v7497, %v7500
      %vm7502 = vweird.f32 %v7497
      %v7503 = vsel %vm7502, %v7497, %v7501
      %s7504 = vtos %v7503
      %s7505 = smul.f32 %s7496, %s7504
      %v7506 = vstv %s7505
      %v7507 = vsub.f32 %v7450, %v7506
      %v7508 = vsub.f32 %v7453, %v7506
      %v7509 = vsub.f32 %v7456, %v7506
      %v7510 = vsub.f32 %v7459, %v7506
      %v7511 = vsub.f32 %v7462, %v7506
      %v7512 = vsub.f32 %v7465, %v7506
      %v7513 = vsub.f32 %v7468, %v7506
      %v7514 = vsub.f32 %v7471, %v7506
      %v7515 = vmul.f32 %v7507, %v7507
      %v7516 = vmul.f32 %v7508, %v7508
      %v7517 = vmul.f32 %v7509, %v7509
      %v7518 = vmul.f32 %v7510, %v7510
      %v7519 = vmul.f32 %v7511, %v7511
      %v7520 = vmul.f32 %v7512, %v7512
      %v7521 = vmul.f32 %v7513, %v7513
      %v7522 = vmul.f32 %v7514, %v7514
      %v7523 = vsel %vm974, %v7515, 0.0
      %v7524 = vsel %vm974, %v7516, 0.0
      %v7525 = vadd.f32 %v7523, %v7524
      %v7526 = vsel %vm974, %v7517, 0.0
      %v7527 = vadd.f32 %v7525, %v7526
      %v7528 = vsel %vm974, %v7518, 0.0
      %v7529 = vadd.f32 %v7527, %v7528
      %v7530 = vsel %vm974, %v7519, 0.0
      %v7531 = vadd.f32 %v7529, %v7530
      %v7532 = vsel %vm974, %v7520, 0.0
      %v7533 = vadd.f32 %v7531, %v7532
      %v7534 = vsel %vm974, %v7521, 0.0
      %v7535 = vadd.f32 %v7533, %v7534
      %v7536 = vsel %vm974, %v7522, 0.0
      %v7537 = vadd.f32 %v7535, %v7536
      %7538 = vadd.xlane.f32.xlu0 %v7537
      %v7539 = vpop.xlane.xlu0 %7538
      %v7540 = vrot.slane %v7539, 4
      %v7541 = vadd.f32 %v7539, %v7540
      %v7542 = vrot.slane %v7541, 2
      %v7543 = vadd.f32 %v7541, %v7542
      %v7544 = vrot.slane %v7543, 1
      %v7545 = vadd.f32 %v7543, %v7544
      %s7546 = vtos %v7545
      %v7547 = vrcp.pop 512.0
      %v7548 = vmul.f32 512.0, %v7547
      %v7549 = vsub.f32 1.0, %v7548
      %v7550 = vmul.f32 %v7547, %v7549
      %v7551 = vadd.f32 %v7547, %v7550
      %vm7552 = vweird.f32 %v7547
      %v7553 = vsel %vm7552, %v7547, %v7551
      %s7554 = vtos %v7553
      %s7555 = smul.f32 %s7546, %s7554
      %s7556 = sadd.f32 %s7555, 1e-05
      %v7557 = vstv %s7556
      %v7558 = vrsqrt.pop %v7557
      %v7559 = vmul.f32 %v7558, %v7557
      %v7560 = vmul.f32 %v7559, %v7558
      %v7561 = vmul.f32 0.5, %v7560
      %v7562 = vsub.f32 1.5, %v7561
      %v7563 = vmul.f32 %v7558, %v7562
      %vm7564 = vweird.f32 %v7557
      %vm7565 = vweird.f32 %v7558
      %vm7566 = vmor %vm7564, %vm7565
      %v7567 = vsel %vm7566, %v7558, %v7563
      %s7568 = vtos %v7567
      %v7569 = vstv %s7568
      %v7570 = vmul.f32 %v7507, %v7569
      %v7571 = vmul.f32 %v7508, %v7569
      %v7572 = vmul.f32 %v7509, %v7569
      %v7573 = vmul.f32 %v7510, %v7569
      %v7574 = vmul.f32 %v7511, %v7569
      %v7575 = vmul.f32 %v7512, %v7569
      %v7576 = vmul.f32 %v7513, %v7569
      %v7577 = vmul.f32 %v7514, %v7569
      %v7578 = vld [vmem:[%s12] sm:$0x1]
      %v7580 = vperm.slane %v7578, 0
      %v7582 = vmul.f32 %v7570, %v7580
      %v7583 = vmul.f32 %v7571, %v7580
      %v7584 = vmul.f32 %v7572, %v7580
      %v7585 = vmul.f32 %v7573, %v7580
      %v7586 = vmul.f32 %v7574, %v7580
      %v7587 = vmul.f32 %v7575, %v7580
      %v7588 = vmul.f32 %v7576, %v7580
      %v7589 = vmul.f32 %v7577, %v7580
      %v7590 = vld [vmem:[%s13] sm:$0x1]
      %v7592 = vperm.slane %v7590, 0
      %v7594 = vadd.f32 %v7582, %v7592
      %v7595 = vadd.f32 %v7583, %v7592
      %v7596 = vadd.f32 %v7584, %v7592
      %v7597 = vadd.f32 %v7585, %v7592
      %v7598 = vadd.f32 %v7586, %v7592
      %v7599 = vadd.f32 %v7587, %v7592
      %v7600 = vadd.f32 %v7588, %v7592
      %v7601 = vadd.f32 %v7589, %v7592
      %v7602 = vld [vmem:[%s530] sm:$0x1]
      %v7603 = vxor.u32 %v7602, 2147483648
      %v7604 = vmul.f32 %v7603, 1.442695
      %v7605 = vpow.pop %v7604
      %v7606 = vadd.f32 %v7605, 1.0
      %v7607 = vrcp.pop %v7606
      %v7608 = vmul.f32 %v7606, %v7607
      %v7609 = vsub.f32 1.0, %v7608
      %v7610 = vmul.f32 %v7607, %v7609
      %v7611 = vadd.f32 %v7607, %v7610
      %vm7612 = vweird.f32 %v7606
      %vm7613 = vweird.f32 %v7607
      %vm7614 = vmor %vm7612, %vm7613
      %v7615 = vsel %vm7614, %v7607, %v7611
      %v7616 = vand.u32 2147483647, %v7606
      %vm7617 = vcmp.eq.f32.partialorder %v7616, 8.507059e+37
      %v7618 = vand.u32 %v7606, 2147483648
      %v7619 = vor.u32 1.1754944e-38, %v7618
      %v7620 = vsel %vm7617, %v7619, %v7615
      %v7621 = vmul.f32 1.0, %v7620
      %v7622 = vmul.f32 %v7602, %v7621
      %v7623 = vld [vmem:[%s14] sm:$0xff]
      %v7624 = vld [vmem:[%s14 + $0x8] sm:$0xff]
      %v7625 = vld [vmem:[%s14 + $0x10] sm:$0xff]
      %v7626 = vld [vmem:[%s14 + $0x18] sm:$0xff]
      %v7627 = vld [vmem:[%s15] sm:$0x1]
      %vm7628 = vcmask 261120
      %v7630 = vsel %vm7628, %v7622, 0
      %7632 = vmatpush.msra.mxu0 0.0
      %7633 = vmatpush.msra.mxu0 0.0
      %7634 = vmatpush.msra.mxu0 0.0
      %7635 = vmatpush.msra.mxu0 0.0
      %7636 = vmatpush.msra.mxu0 0.0
      %7637 = vmatpush.msra.mxu0 0.0
      %7638 = vmatpush.msra.mxu0 0.0
      %7639 = vmatpush.msra.mxu0 0.0
      %7640 = vmatpush.msra.mxu0 0.0
      %7641 = vmatpush.msra.mxu0 0.0
      %7642 = vmatpush.msra.mxu0 0.0
      %7643 = vmatpush.msra.mxu0 0.0
      %7644 = vmatpush.msra.mxu0 %v7626
      %7645 = vmatpush.msra.mxu0 %v7625
      %7646 = vmatpush.msra.mxu0 %v7624
      %7647 = vmatpush.msra.mxu0 %v7623
      %7648 = vmatmul.f32.gmra.mxu0 %v7630
      %v7649 = vpop.f32.mrf.mxu0
      %v7650 = vadd.f32 %v7627, %v7649
      %7651 = vdwg.mxu0
      %v7652 = vperm.slane %v7650, 0
      %v7653 = vadd.f32 %v7594, %v7652
      %v7654 = vadd.f32 %v7595, %v7652
      %v7655 = vadd.f32 %v7596, %v7652
      %v7656 = vadd.f32 %v7597, %v7652
      %v7657 = vadd.f32 %v7598, %v7652
      %v7658 = vadd.f32 %v7599, %v7652
      %v7659 = vadd.f32 %v7600, %v7652
      %v7660 = vadd.f32 %v7601, %v7652
      %7661 = vst.msk [vmem:[%s535] sm:$0xff] %vm974, %v7653
      %7662 = vst.msk [vmem:[%s535 + $0x8] sm:$0xff] %vm974, %v7654
      %7663 = vst.msk [vmem:[%s535 + $0x10] sm:$0xff] %vm974, %v7655
      %7664 = vst.msk [vmem:[%s535 + $0x18] sm:$0xff] %vm974, %v7656
      %7665 = vst.msk [vmem:[%s535 + $0x20] sm:$0xff] %vm974, %v7657
      %7666 = vst.msk [vmem:[%s535 + $0x28] sm:$0xff] %vm974, %v7658
      %7667 = vst.msk [vmem:[%s535 + $0x30] sm:$0xff] %vm974, %v7659
      %7668 = vst.msk [vmem:[%s535 + $0x38] sm:$0xff] %vm974, %v7660
      %p7669 = scmp.lt.s32.totalorder %s27, 1
      %s7670 = scalar_select %p7669, %s27, 1
      %s7671 = smul.addr %s7670, 8
      %s7672 = smul.addr %s7671, 8
      %s7673 = scalar_lea.vmem %s16, %s7672
      // Predicated region
      $region85: #{tpu_custom_call.1} parent=83 // pred_check
        %p7674 = pneg %p391
      $region86: #{tpu_custom_call.1} parent=83 // pred_check_branch
        %7676 = sbr.rel (%p7674) target = $region88
      $region87: #{tpu_custom_call.1} parent=83 // pred_region
        _
      $region88: #{tpu_custom_call.1} parent=83 // pred_fallthru
        _
    $region84: #{tpu_custom_call.1} parent=5 // pred_fallthru
      _
    %p7677 = scmp.le.s32.totalorder 2, %s22
    // Predicated region
    $region89: #{tpu_custom_call.1} parent=5 // pred_check
      %p7678 = pneg %p7677
    $region90: #{tpu_custom_call.1} parent=5 // pred_check_branch
      %7680 = sbr.rel (%p7678) target = $region92
    $region91: #{tpu_custom_call.1} parent=5 // pred_region
      %s7681 = ssub.s32 %s22, 2
      // Predicated region
      $region93: #{tpu_custom_call.1} parent=91 // pred_check
        %p7682 = pneg %p397
      $region94: #{tpu_custom_call.1} parent=91 // pred_check_branch
        %7684 = sbr.rel (%p7682) target = $region96
      $region95: #{tpu_custom_call.1} parent=91 // pred_region
        %p7685 = scmp.lt.s32.totalorder %s28, 1
        %s7686 = scalar_select %p7685, %s28, 1
        %s7687 = smul.addr %s7686, 8
        %s7688 = smul.addr %s7687, 8
        %s7689 = scalar_lea.vmem %s16, %s7688
      $region96: #{tpu_custom_call.1} parent=91 // pred_fallthru
        _
    $region92: #{tpu_custom_call.1} parent=5 // pred_fallthru
      _
  $region6: #{tpu_custom_call.1} parent=0 // loop_footer
    %s26 = sadd.s32 1, %s22
  $region7: #{tpu_custom_call.1} parent=0 // loop_footer_branch
    %21 = sbr.rel target = $region3
  $region8: #{tpu_custom_call.1} parent=0 // loop_exit
    _

</llo_original>
